<compile_context>
chip_gen: v7x
topology: tpu7x:2x2x1
jax: 0.10.0
libtpu: 0.0.40
codegen_flags: <defaults>
</compile_context>

<pallas_src>
import functools
import math

import jax
import jax.numpy as jnp
from jax import lax
from jax.experimental import pallas as pl
from jax.experimental.pallas import tpu as pltpu


# ------------------------- in-kernel helper math ---------------------------

def _gelu(y):
    # TODO(synk): tanh-approx GELU; PyTorch's exact erf form differs at ~1e-3 level.
    return 0.5 * y * (1.0 + jnp.tanh(0.7978845608028654 * (y + 0.044715 * y * y * y)))


def _mish(y):
    return y * jnp.tanh(jnp.log(1.0 + jnp.exp(y)))


def _ln(x, g, b):
    # x [T, E], g/b [1, E]
    mu = jnp.mean(x, axis=-1, keepdims=True)
    var = jnp.mean(jnp.square(x - mu), axis=-1, keepdims=True)
    return (x - mu) * lax.rsqrt(var + 1e-5) * g + b


def _rotary(x, cos, sin, P):
    # interleaved rotary: x*cos + rot(x)*sin ; rot(x) = x @ P (signed pair swap).
    # Kept as a tiny [E,E] MXU matmul (E=32); a roll-based swizzle only pays off at large E.
    return x * cos + jnp.dot(x, P, preferred_element_type=jnp.float32) * sin


def _mha(q, k, v, wo, nhead, bias=None):
    """Multi-head attention. q already carries 1/sqrt(Dh) (folded into the projection).
    Per-head scores + softmax; head outputs concatenated once and a single [Tq,E]x[E,E]
    out-projection matmul.  q [Tq,E], k/v [Tk,E], wo [E,E] -> [Tq,E]."""
    Tq, E = q.shape
    Dh = E // nhead
    heads = []
    for h in range(nhead):
        sl = slice(h * Dh, (h + 1) * Dh)
        s = lax.dot_general(q[:, sl], k[:, sl], (((1,), (1,)), ((), ())),
                            preferred_element_type=jnp.float32)          # [Tq, Tk]
        if bias is not None:
            s = s + bias
        s = s - jnp.max(s, axis=-1, keepdims=True)
        p = jnp.exp(s)
        p = p * pl.reciprocal(jnp.sum(p, axis=-1, keepdims=True), approx=True)
        heads.append(jnp.dot(p, v[:, sl], preferred_element_type=jnp.float32))
    o = jnp.concatenate(heads, axis=-1)                                   # [Tq, E]
    return jnp.dot(o, wo, preferred_element_type=jnp.float32)


# ----------------------------- Pallas kernels ------------------------------

@functools.lru_cache(maxsize=None)
def _make_encoder_stack_kernel(nhead):
    def kernel(cond_ref, cpw_ref, cpb_ref, cos_ref, sin_ref, rotp_ref,
               ln_g_ref, ln_b_ref, wqk_ref, wv_ref, wo_ref, ab_ref,
               ffw1_ref, ffb1_ref, ffw2_ref, ffb2_ref,
               o_ref, h_ref):
        l = pl.program_id(1)
        E = o_ref.shape[-1]

        # first layer step: fuse the cond projection and seed the resident residual stream
        @pl.when(l == 0)
        def _():
            c = cond_ref[0].astype(jnp.float32)
            h_ref[...] = (jnp.dot(c, cpw_ref[...], preferred_element_type=jnp.float32)
                          + cpb_ref[...])

        x = h_ref[...]
        cos, sin, P = cos_ref[...], sin_ref[...], rotp_ref[...]
        lg, lb = ln_g_ref[0], ln_b_ref[0]
        ab = ab_ref[0]                                     # [1, 4E] = [bq*s|bk|bv|bo]

        # --- pre-norm self-attention (rotary applied to q/k input) ---
        xn = _ln(x, lg[0:1], lb[0:1])
        xr = _rotary(xn, cos, sin, P)
        qk = jnp.dot(xr, wqk_ref[0], preferred_element_type=jnp.float32) + ab[:, :2 * E]
        v = jnp.dot(xn, wv_ref[0], preferred_element_type=jnp.float32) + ab[:, 2 * E:3 * E]
        a = _mha(qk[:, :E], qk[:, E:], v, wo_ref[0], nhead) + ab[:, 3 * E:]
        x = x + a

        # --- pre-norm feed-forward (all intermediates stay in VMEM) ---
        xn = _ln(x, lg[1:2], lb[1:2])
        hh = _gelu(jnp.dot(xn, ffw1_ref[0], preferred_element_type=jnp.float32) + ffb1_ref[0])
        hh = jnp.dot(hh, ffw2_ref[0], preferred_element_type=jnp.float32) + ffb2_ref[0]
        x = x + hh

        h_ref[...] = x

        @pl.when(l == pl.num_programs(1) - 1)
        def _():
            o_ref[0] = x.astype(o_ref.dtype)
    return kernel


def encoder_stack(ep, cond, cond_proj_w, cond_proj_b, cos_m, sin_m, rot_p, nhead):
    # TODO(synk): dropout omitted (eval mode)
    B, Tc, cond_dim = cond.shape
    L, _, E = ep["wv"].shape
    kernel = _make_encoder_stack_kernel(nhead)

    def bcast(shape):
        zeros = (0,) * len(shape)
        return pl.BlockSpec(shape, lambda b, l: zeros)

    def per_layer(shape):
        zeros = (0,) * len(shape)
        return pl.BlockSpec((1,) + shape, lambda b, l: (l,) + zeros)

    in_specs = [
        pl.BlockSpec((1, Tc, cond_dim), lambda b, l: (b, 0, 0)),   # raw cond tokens
        bcast((cond_dim, E)), bcast((1, E)),                       # cond projection
        bcast((Tc, E)), bcast((Tc, E)), bcast((E, E)),             # rotary cos/sin + pair-swap
        per_layer((2, E)), per_layer((2, E)),                      # LN gains / biases
        per_layer((E, 2 * E)),                                     # wqk (q pre-scaled)
        per_layer((E, E)), per_layer((E, E)),                      # wv, wo
        per_layer((1, 4 * E)),                                     # packed attn biases
        per_layer((E, 4 * E)), per_layer((1, 4 * E)),              # ff1
        per_layer((4 * E, E)), per_layer((1, E)),                  # ff2
    ]
    return pl.pallas_call(
        kernel,
        out_shape=jax.ShapeDtypeStruct((B, Tc, E), cond.dtype),
        grid=(B, L),
        in_specs=in_specs,
        out_specs=pl.BlockSpec((1, Tc, E), lambda b, l: (b, 0, 0)),
        scratch_shapes=[pltpu.VMEM((Tc, E), jnp.float32)],
        compiler_params=pltpu.CompilerParams(
            dimension_semantics=("parallel", "arbitrary")),
    )(cond, cond_proj_w, cond_proj_b.reshape(1, E), cos_m, sin_m, rot_p,
      ep["ln_g"], ep["ln_b"], ep["wqk"], ep["wv"], ep["wo"], ep["attn_b"],
      ep["ff_w1"], ep["ff_b1"], ep["ff_w2"], ep["ff_b2"])


@functools.lru_cache(maxsize=None)
def _make_decoder_stack_kernel(nhead):
    def kernel(x_ref, mem_ref, temb_ref, mask_ref,
               cosq_ref, sinq_ref, cosm_ref, sinm_ref, rotp_ref,
               tw1_ref, tb1_ref, tw2_ref, tb2_ref,
               ln_g_ref, ln_b_ref,
               sa_wqk_ref, sa_wv_ref, sa_wo_ref, sa_b_ref,
               ca_w_ref, ca_b_ref, film_w_ref, film_b_ref,
               ff_w1_ref, ff_b1_ref, ff_w2_ref, ff_b2_ref,
               fin_w_ref, fin_b_ref,
               o_ref, h_ref, tm_ref):
        l = pl.program_id(1)
        E = h_ref.shape[-1]

        # first layer step: seed residual stream + fused time-MLP (mish(t) kept resident)
        @pl.when(l == 0)
        def _():
            h_ref[...] = x_ref[0].astype(jnp.float32)
            temb = temb_ref[0].astype(jnp.float32)               # [1, E] sinusoidal
            th = _mish(jnp.dot(temb, tw1_ref[...],
                               preferred_element_type=jnp.float32) + tb1_ref[...])
            t = jnp.dot(th, tw2_ref[...], preferred_element_type=jnp.float32) + tb2_ref[...]
            tm_ref[...] = _mish(t)                               # shared by all FiLM blocks

        x = h_ref[...]
        mem = mem_ref[0].astype(jnp.float32)                     # [Tc, E]
        mask = mask_ref[...]                                     # [Tq, Tc] additive
        cq, sq = cosq_ref[...], sinq_ref[...]
        cm, sm = cosm_ref[...], sinm_ref[...]
        P = rotp_ref[...]
        lg, lb = ln_g_ref[0], ln_b_ref[0]
        sab = sa_b_ref[0]                                        # [1, 4E]
        caw, cab = ca_w_ref[0], ca_b_ref[0]                      # [E, 4E], [1, 4E]

        # all three FiLM scale/shift pairs from ONE [1,E]x[E,6E] matmul
        fss = (jnp.dot(tm_ref[...], film_w_ref[0], preferred_element_type=jnp.float32)
               + film_b_ref[0])                                  # [1, 6E]

        def film(i, h):
            s0 = 2 * E * i
            return (fss[:, s0:s0 + E] + 1.0) * h + fss[:, s0 + E:s0 + 2 * E]

        # --- self-attention + FiLM ---
        xn = _ln(x, lg[0:1], lb[0:1])
        xr = _rotary(xn, cq, sq, P)
        qk = jnp.dot(xr, sa_wqk_ref[0], preferred_element_type=jnp.float32) + sab[:, :2 * E]
        v = jnp.dot(xn, sa_wv_ref[0], preferred_element_type=jnp.float32) + sab[:, 2 * E:3 * E]
        a = _mha(qk[:, :E], qk[:, E:], v, sa_wo_ref[0], nhead) + sab[:, 3 * E:]
        x = x + film(0, a)

        # --- cross-attention (q from x, k/v from memory) + FiLM ---
        xn = _ln(x, lg[1:2], lb[1:2])
        qr = _rotary(xn, cq, sq, P)
        mr = _rotary(mem, cm, sm, P)
        q = jnp.dot(qr, caw[:, :E], preferred_element_type=jnp.float32) + cab[:, :E]
        k = jnp.dot(mr, caw[:, E:2 * E], preferred_element_type=jnp.float32) + cab[:, E:2 * E]
        v = jnp.dot(mem, caw[:, 2 * E:3 * E], preferred_element_type=jnp.float32) + cab[:, 2 * E:3 * E]
        a = _mha(q, k, v, caw[:, 3 * E:], nhead, bias=mask) + cab[:, 3 * E:]
        x = x + film(1, a)

        # --- feed-forward + FiLM ---
        xn = _ln(x, lg[2:3], lb[2:3])
        hh = _gelu(jnp.dot(xn, ff_w1_ref[0], preferred_element_type=jnp.float32) + ff_b1_ref[0])
        hh = jnp.dot(hh, ff_w2_ref[0], preferred_element_type=jnp.float32) + ff_b2_ref[0]
        x = x + film(2, hh)

        h_ref[...] = x

        # last layer step: fused final projection
        @pl.when(l == pl.num_programs(1) - 1)
        def _():
            y = jnp.dot(x, fin_w_ref[...], preferred_element_type=jnp.float32) + fin_b_ref[...]
            o_ref[0] = y.astype(o_ref.dtype)
    return kernel


def decoder_stack(dp, x, mem, temb, mask_bias, cos_q, sin_q, cos_m, sin_m, rot_p,
                  time_w1, time_b1, time_w2, time_b2, final_w, final_b, nhead):
    # TODO(synk): dropout omitted (eval mode)
    B, Tq, E = x.shape
    Tc = mem.shape[1]
    L = dp["sa_wv"].shape[0]
    dim_out = final_w.shape[1]
    H = time_w1.shape[1]
    kernel = _make_decoder_stack_kernel(nhead)

    def bcast(shape):
        zeros = (0,) * len(shape)
        return pl.BlockSpec(shape, lambda b, l: zeros)

    def per_layer(shape):
        zeros = (0,) * len(shape)
        return pl.BlockSpec((1,) + shape, lambda b, l: (l,) + zeros)

    in_specs = [
        pl.BlockSpec((1, Tq, E), lambda b, l: (b, 0, 0)),          # x
        pl.BlockSpec((1, Tc, E), lambda b, l: (b, 0, 0)),          # memory (cond tokens)
        pl.BlockSpec((1, 1, E), lambda b, l: (b, 0, 0)),           # sinusoidal time emb
        bcast((Tq, Tc)),                                           # cross-attn mask bias
        bcast((Tq, E)), bcast((Tq, E)),                            # cos_q, sin_q
        bcast((Tc, E)), bcast((Tc, E)),                            # cos_m, sin_m
        bcast((E, E)),                                             # rotary pair-swap matrix
        bcast((E, H)), bcast((1, H)), bcast((H, E)), bcast((1, E)),  # time-MLP weights
        per_layer((3, E)), per_layer((3, E)),                      # LN gains / biases
        per_layer((E, 2 * E)),                                     # sa_wqk (q pre-scaled)
        per_layer((E, E)), per_layer((E, E)),                      # sa_wv, sa_wo
        per_layer((1, 4 * E)),                                     # sa packed biases
        per_layer((E, 4 * E)), per_layer((1, 4 * E)),              # ca_w, ca_b (q pre-scaled)
        per_layer((E, 6 * E)), per_layer((1, 6 * E)),              # packed FiLM
        per_layer((E, 4 * E)), per_layer((1, 4 * E)),              # ff1
        per_layer((4 * E, E)), per_layer((1, E)),                  # ff2
        bcast((E, dim_out)), bcast((1, dim_out)),                  # final projection
    ]
    return pl.pallas_call(
        kernel,
        out_shape=jax.ShapeDtypeStruct((B, Tq, dim_out), x.dtype),
        grid=(B, L),
        in_specs=in_specs,
        out_specs=pl.BlockSpec((1, Tq, dim_out), lambda b, l: (b, 0, 0)),
        scratch_shapes=[pltpu.VMEM((Tq, E), jnp.float32),
                        pltpu.VMEM((1, E), jnp.float32)],
        compiler_params=pltpu.CompilerParams(
            dimension_semantics=("parallel", "arbitrary")),
    )(x, mem, temb, mask_bias, cos_q, sin_q, cos_m, sin_m, rot_p,
      time_w1, time_b1.reshape(1, H), time_w2, time_b2.reshape(1, E),
      dp["ln_g"], dp["ln_b"], dp["sa_wqk"], dp["sa_wv"], dp["sa_wo"], dp["sa_b"],
      dp["ca_w"], dp["ca_b"], dp["film_w"], dp["film_b"],
      dp["ff_w1"], dp["ff_b1"], dp["ff_w2"], dp["ff_b2"],
      final_w, final_b.reshape(1, dim_out))


# ------------------------------- JAX glue ----------------------------------

def sinusoidal_time_embedding(t, dim):
    half = dim // 2
    emb = math.log(10000.0) / (half - 1)
    freqs = jnp.exp(jnp.arange(half, dtype=jnp.float32) * -emb)
    args = t.astype(jnp.float32)[:, None] * freqs[None, :]
    return jnp.concatenate([jnp.sin(args), jnp.cos(args)], axis=-1)


def _rotary_tables(T, D):
    inv_freq = 1.0 / (10000.0 ** (jnp.arange(0, D, 2, dtype=jnp.float32) / D))
    freqs = jnp.arange(T, dtype=jnp.float32)[:, None] * inv_freq[None, :]   # [T, D/2]
    cos = jnp.repeat(jnp.cos(freqs), 2, axis=-1)
    sin = jnp.repeat(jnp.sin(freqs), 2, axis=-1)
    return cos.astype(jnp.float32), sin.astype(jnp.float32)


def _rotary_perm(D):
    # rot(x) = x @ P  with rot[2k] = -x[2k+1], rot[2k+1] = x[2k]   (interleaved rotary)
    idx = jnp.arange(D)
    src = jnp.where(idx % 2 == 0, idx + 1, idx - 1)
    sign = jnp.where(idx % 2 == 0, -1.0, 1.0).astype(jnp.float32)
    return jnp.zeros((D, D), jnp.float32).at[src, idx].set(sign)


def pm_transformer_forward(params, x, cond, time, padding_mask, nhead, cond_drop_prob=0.0):
    B, Tq, E = x.shape
    _, Tc, cond_dim = cond.shape

    # cond keep mask (torch.rand(B) > p); deterministic for p in {0.0, 1.0}
    if cond_drop_prob <= 0.0:
        cond_keep = jnp.ones((B, 1), dtype=bool)
    elif cond_drop_prob >= 1.0:
        cond_keep = jnp.zeros((B, 1), dtype=bool)
    else:  # TODO(synk): stochastic classifier-free dropout uses torch.rand; not exercised here
        cond_keep = jnp.ones((B, 1), dtype=bool)
    keep_mask = jnp.logical_and(cond_keep, jnp.logical_not(padding_mask))   # [B, Tc]
    cond = jnp.where(keep_mask[..., None], cond, params["null_cond"][None, None, :])

    # abs_pe is Identity (use_rotary=True); rotary applied inside the fused stack kernels.
    cond_tokens = encoder_stack(params["encoder"], cond,
                                params["cond_proj_w"], params["cond_proj_b"],
                                params["rot_cos_m"], params["rot_sin_m"],
                                params["rot_p"], nhead)

    temb = sinusoidal_time_embedding(time, E).reshape(B, 1, E)

    return decoder_stack(params["decoder"], x, cond_tokens, temb,
                         params["attn_mask_bias"],
                         params["rot_cos_q"], params["rot_sin_q"],
                         params["rot_cos_m"], params["rot_sin_m"],
                         params["rot_p"],
                         params["time_w1"], params["time_b1"],
                         params["time_w2"], params["time_b2"],
                         params["final_w"], params["final_b"], nhead)


# ---------------------------- parameter init --------------------------------

def init_pm_transformer(seed, dim, zdim, cond_dim, seq_n, pre_k, nhead,
                        encoder_layers, decoder_layers):
    key = [jax.random.PRNGKey(seed)]

    def nk():
        key[0], sub = jax.random.split(key[0])
        return sub

    def lin_p(fi, fo):
        w = jax.random.normal(nk(), (fi, fo), jnp.float32) * (1.0 / math.sqrt(fi))
        return w, jnp.zeros((fo,), jnp.float32)

    E = zdim
    scale = 1.0 / math.sqrt(E // nhead)   # folded into the q projections (perf review #12)

    def enc_p():
        wq, bq = lin_p(E, E); wk, bk = lin_p(E, E); wv, bv = lin_p(E, E); wo, bo = lin_p(E, E)
        w1, b1 = lin_p(E, 4 * E); w2, b2 = lin_p(4 * E, E)
        return dict(
            ln_g=jnp.ones((2, E), jnp.float32), ln_b=jnp.zeros((2, E), jnp.float32),
            wqk=jnp.concatenate([wq * scale, wk], axis=1), wv=wv, wo=wo,
            attn_b=jnp.concatenate([bq * scale, bk, bv, bo])[None, :],
            ff_w1=w1, ff_b1=b1[None, :], ff_w2=w2, ff_b2=b2[None, :])

    def dec_p():
        wq, bq = lin_p(E, E); wk, bk = lin_p(E, E); wv, bv = lin_p(E, E); wo, bo = lin_p(E, E)
        cwq, cbq = lin_p(E, E); cwk, cbk = lin_p(E, E); cwv, cbv = lin_p(E, E); cwo, cbo = lin_p(E, E)
        f1w, f1b = lin_p(E, 2 * E); f2w, f2b = lin_p(E, 2 * E); f3w, f3b = lin_p(E, 2 * E)
        w1, b1 = lin_p(E, 4 * E); w2, b2 = lin_p(4 * E, E)
        return dict(
            ln_g=jnp.ones((3, E), jnp.float32), ln_b=jnp.zeros((3, E), jnp.float32),
            sa_wqk=jnp.concatenate([wq * scale, wk], axis=1), sa_wv=wv, sa_wo=wo,
            sa_b=jnp.concatenate([bq * scale, bk, bv, bo])[None, :],
            ca_w=jnp.concatenate([cwq * scale, cwk, cwv, cwo], axis=1),
            ca_b=jnp.concatenate([cbq * scale, cbk, cbv, cbo])[None, :],
            film_w=jnp.concatenate([f1w, f2w, f3w], axis=1),      # [E, 6E] packed
            film_b=jnp.concatenate([f1b, f2b, f3b])[None, :],     # [1, 6E]
            ff_w1=w1, ff_b1=b1[None, :], ff_w2=w2, ff_b2=b2[None, :])

    def stack_layers(layers):
        return jax.tree_util.tree_map(lambda *xs: jnp.stack(xs, axis=0), *layers)

    cond_w, cond_b = lin_p(cond_dim, E)
    tw1, tb1 = lin_p(E, 4 * E)
    tw2, tb2 = lin_p(4 * E, E)
    fw, fb = lin_p(E, dim)

    Tc = seq_n + pre_k
    # attn_mask buffer: row i allows memory positions i .. i+pre_k  (True = masked)
    base = jnp.concatenate([jnp.zeros((pre_k + 1,), bool), jnp.ones((seq_n - 1,), bool)])
    mask = jnp.stack([jnp.roll(base, i) for i in range(seq_n)], axis=0)     # [seq_n, Tc]
    attn_mask_bias = jnp.where(mask, -1e9, 0.0).astype(jnp.float32)

    cos_q, sin_q = _rotary_tables(seq_n, E)
    cos_m, sin_m = _rotary_tables(Tc, E)
    rot_p = _rotary_perm(E)

    return dict(
        null_cond=jax.random.normal(nk(), (cond_dim,), jnp.float32),
        cond_proj_w=cond_w, cond_proj_b=cond_b,
        time_w1=tw1, time_b1=tb1, time_w2=tw2, time_b2=tb2,
        encoder=stack_layers([enc_p() for _ in range(encoder_layers)]),
        decoder=stack_layers([dec_p() for _ in range(decoder_layers)]),
        final_w=fw, final_b=fb,
        attn_mask_bias=attn_mask_bias,
        rot_cos_q=cos_q, rot_sin_q=sin_q,
        rot_cos_m=cos_m, rot_sin_m=sin_m,
        rot_p=rot_p)


# --------------------------------- main -------------------------------------

if __name__ == "__main__":
    # small config consistent with the module
    dim, zdim, cond_dim = 16, 32, 24
    seq_n, pre_k, nhead = 8, 2, 4
    encoder_layers, decoder_layers = 2, 2
    B = 2
    Tc = seq_n + pre_k   # memory length implied by the attn_mask buffer

    params = init_pm_transformer(0, dim, zdim, cond_dim, seq_n, pre_k, nhead,
                                 encoder_layers, decoder_layers)

    rk = jax.random.PRNGKey(0)
    k1, k2, k3 = jax.random.split(rk, 3)
    x = jax.random.normal(k1, (B, seq_n, zdim), jnp.float32)
    cond = jax.random.normal(k2, (B, Tc, cond_dim), jnp.float32)
    time = jnp.array([3.0, 7.0], jnp.float32)
    padding_mask = jnp.zeros((B, Tc), bool)

    fwd = jax.jit(lambda p, xx, cc, tt, pm: pm_transformer_forward(
        p, xx, cc, tt, pm, nhead=nhead, cond_drop_prob=0.0))

    out = fwd(params, x, cond, time, padding_mask)
    out = jax.block_until_ready(out)
    assert out.shape == (B, seq_n, dim)
    assert bool(jnp.all(jnp.isfinite(out)))
    print("KERNEL_OK")
</pallas_src>

<mosaic_0001>
module attributes {stable_mosaic.version = 11 : i64} {
  func.func @kernel(%arg0: i32, %arg1: i32, %arg2: memref<1x10x24xf32, #tpu.memory_space<vmem>>, %arg3: memref<24x32xf32, #tpu.memory_space<vmem>>, %arg4: memref<1x32xf32, #tpu.memory_space<vmem>>, %arg5: memref<10x32xf32, #tpu.memory_space<vmem>>, %arg6: memref<10x32xf32, #tpu.memory_space<vmem>>, %arg7: memref<32x32xf32, #tpu.memory_space<vmem>>, %arg8: memref<1x2x32xf32, #tpu.memory_space<vmem>>, %arg9: memref<1x2x32xf32, #tpu.memory_space<vmem>>, %arg10: memref<1x32x64xf32, #tpu.memory_space<vmem>>, %arg11: memref<1x32x32xf32, #tpu.memory_space<vmem>>, %arg12: memref<1x32x32xf32, #tpu.memory_space<vmem>>, %arg13: memref<1x1x128xf32, #tpu.memory_space<vmem>>, %arg14: memref<1x32x128xf32, #tpu.memory_space<vmem>>, %arg15: memref<1x1x128xf32, #tpu.memory_space<vmem>>, %arg16: memref<1x128x32xf32, #tpu.memory_space<vmem>>, %arg17: memref<1x1x32xf32, #tpu.memory_space<vmem>>, %arg18: memref<1x10x32xf32, #tpu.memory_space<vmem>>, %arg19: memref<10x32xf32, #tpu.memory_space<vmem>>) attributes {dimension_semantics = [#tpu.dimension_semantics<parallel>, #tpu.dimension_semantics<arbitrary>], iteration_bounds = array<i64: 2, 2>, scalar_prefetch = 0 : i64, scratch_operands = 1 : i64, tpu.core_type = #tpu.core_type<tc>, window_params = [{transform_indices = @transform_0, window_bounds = array<i64: 1, 10, 24>}, {pipeline_mode = #tpu.pipeline_mode<synchronous>, transform_indices = @transform_1, window_bounds = array<i64: 24, 32>}, {pipeline_mode = #tpu.pipeline_mode<synchronous>, transform_indices = @transform_2, window_bounds = array<i64: 1, 32>}, {pipeline_mode = #tpu.pipeline_mode<synchronous>, transform_indices = @transform_3, window_bounds = array<i64: 10, 32>}, {pipeline_mode = #tpu.pipeline_mode<synchronous>, transform_indices = @transform_4, window_bounds = array<i64: 10, 32>}, {pipeline_mode = #tpu.pipeline_mode<synchronous>, transform_indices = @transform_5, window_bounds = array<i64: 32, 32>}, {transform_indices = @transform_6, window_bounds = array<i64: 1, 2, 32>}, {transform_indices = @transform_7, window_bounds = array<i64: 1, 2, 32>}, {transform_indices = @transform_8, window_bounds = array<i64: 1, 32, 64>}, {transform_indices = @transform_9, window_bounds = array<i64: 1, 32, 32>}, {transform_indices = @transform_10, window_bounds = array<i64: 1, 32, 32>}, {transform_indices = @transform_11, window_bounds = array<i64: 1, 1, 128>}, {transform_indices = @transform_12, window_bounds = array<i64: 1, 32, 128>}, {transform_indices = @transform_13, window_bounds = array<i64: 1, 1, 128>}, {transform_indices = @transform_14, window_bounds = array<i64: 1, 128, 32>}, {transform_indices = @transform_15, window_bounds = array<i64: 1, 1, 32>}, {transform_indices = @transform_16, window_bounds = array<i64: 1, 10, 32>}]} {
    %c0_i32 = arith.constant 0 : i32
    %0 = arith.cmpi eq, %arg1, %c0_i32 : i32
    %1 = arith.extui %0 : i1 to i32
    %c0_i32_0 = arith.constant 0 : i32
    %2 = arith.cmpi ne, %1, %c0_i32_0 : i32
    scf.if %2 {
      %c0_76 = arith.constant 0 : index
      %c0_77 = arith.constant 0 : index
      %c0_78 = arith.constant 0 : index
      %179 = vector.load %arg2[%c0_76, %c0_77, %c0_78] : memref<1x10x24xf32, #tpu.memory_space<vmem>>, vector<1x10x24xf32>
      %180 = vector.shape_cast %179 : vector<1x10x24xf32> to vector<10x24xf32>
      %c0_79 = arith.constant 0 : index
      %c0_80 = arith.constant 0 : index
      %181 = vector.load %arg3[%c0_79, %c0_80] : memref<24x32xf32, #tpu.memory_space<vmem>>, vector<24x32xf32>
      %cst_81 = arith.constant dense<0.000000e+00> : vector<10x32xf32>
      %182 = tpu.matmul %180, %181, %cst_81 {dimension_numbers = #tpu.dot_dimension_numbers<[1], [0], [0], [1], [0, 0, 1, 1], [], []>} : vector<10x24xf32>, vector<24x32xf32>, vector<10x32xf32> -> vector<10x32xf32>
      %c0_82 = arith.constant 0 : index
      %c0_83 = arith.constant 0 : index
      %183 = vector.load %arg4[%c0_82, %c0_83] : memref<1x32xf32, #tpu.memory_space<vmem>>, vector<1x32xf32>
      %184 = vector.broadcast %183 : vector<1x32xf32> to vector<10x32xf32>
      %185 = arith.addf %182, %184 : vector<10x32xf32>
      %c0_84 = arith.constant 0 : index
      %c0_85 = arith.constant 0 : index
      %186 = vector.load %arg19[%c0_84, %c0_85] : memref<10x32xf32, #tpu.memory_space<vmem>>, vector<10x32xf32>
      tpu.vector_store %arg19[%c0_84, %c0_85], %185 {strides = array<i32>} : memref<10x32xf32, #tpu.memory_space<vmem>>, vector<10x32xf32>,
    } else {
    }
    %c0 = arith.constant 0 : index
    %c0_1 = arith.constant 0 : index
    %3 = vector.load %arg19[%c0, %c0_1] : memref<10x32xf32, #tpu.memory_space<vmem>>, vector<10x32xf32>
    %c0_2 = arith.constant 0 : index
    %c0_3 = arith.constant 0 : index
    %4 = vector.load %arg5[%c0_2, %c0_3] : memref<10x32xf32, #tpu.memory_space<vmem>>, vector<10x32xf32>
    %c0_4 = arith.constant 0 : index
    %c0_5 = arith.constant 0 : index
    %5 = vector.load %arg6[%c0_4, %c0_5] : memref<10x32xf32, #tpu.memory_space<vmem>>, vector<10x32xf32>
    %c0_6 = arith.constant 0 : index
    %c0_7 = arith.constant 0 : index
    %6 = vector.load %arg7[%c0_6, %c0_7] : memref<32x32xf32, #tpu.memory_space<vmem>>, vector<32x32xf32>
    %c0_8 = arith.constant 0 : index
    %c0_9 = arith.constant 0 : index
    %c0_10 = arith.constant 0 : index
    %7 = vector.load %arg8[%c0_8, %c0_9, %c0_10] : memref<1x2x32xf32, #tpu.memory_space<vmem>>, vector<1x2x32xf32>
    %8 = vector.shape_cast %7 : vector<1x2x32xf32> to vector<2x32xf32>
    %c0_11 = arith.constant 0 : index
    %c0_12 = arith.constant 0 : index
    %c0_13 = arith.constant 0 : index
    %9 = vector.load %arg9[%c0_11, %c0_12, %c0_13] : memref<1x2x32xf32, #tpu.memory_space<vmem>>, vector<1x2x32xf32>
    %10 = vector.shape_cast %9 : vector<1x2x32xf32> to vector<2x32xf32>
    %c0_14 = arith.constant 0 : index
    %c0_15 = arith.constant 0 : index
    %c0_16 = arith.constant 0 : index
    %11 = vector.load %arg13[%c0_14, %c0_15, %c0_16] : memref<1x1x128xf32, #tpu.memory_space<vmem>>, vector<1x1x128xf32>
    %12 = vector.shape_cast %11 : vector<1x1x128xf32> to vector<1x128xf32>
    %13 = vector.extract_strided_slice %8 {offsets = [0, 0], sizes = [1, 32], strides = [1, 1]} : vector<2x32xf32> to vector<1x32xf32>
    %14 = vector.extract_strided_slice %10 {offsets = [0, 0], sizes = [1, 32], strides = [1, 1]} : vector<2x32xf32> to vector<1x32xf32>
    %cst = arith.constant dense<0.000000e+00> : vector<10xf32>
    %15 = vector.multi_reduction <add>, %3, %cst [1] : vector<10x32xf32> to vector<10xf32>
    %16 = vector.shape_cast %15 : vector<10xf32> to vector<10x1xf32>
    %cst_17 = arith.constant 3.200000e+01 : f32
    %17 = vector.broadcast %cst_17 : f32 to vector<10x1xf32>
    %18 = arith.divf %16, %17 : vector<10x1xf32>
    %19 = vector.broadcast %18 : vector<10x1xf32> to vector<10x32xf32>
    %20 = arith.subf %3, %19 : vector<10x32xf32>
    %21 = arith.mulf %20, %20 : vector<10x32xf32>
    %cst_18 = arith.constant dense<0.000000e+00> : vector<10xf32>
    %22 = vector.multi_reduction <add>, %21, %cst_18 [1] : vector<10x32xf32> to vector<10xf32>
    %23 = vector.shape_cast %22 : vector<10xf32> to vector<10x1xf32>
    %cst_19 = arith.constant 3.200000e+01 : f32
    %24 = vector.broadcast %cst_19 : f32 to vector<10x1xf32>
    %25 = arith.divf %23, %24 : vector<10x1xf32>
    %26 = vector.broadcast %18 : vector<10x1xf32> to vector<10x32xf32>
    %27 = arith.subf %3, %26 : vector<10x32xf32>
    %cst_20 = arith.constant 9.99999974E-6 : f32
    %28 = vector.broadcast %cst_20 : f32 to vector<10x1xf32>
    %29 = arith.addf %25, %28 : vector<10x1xf32>
    %30 = math.rsqrt %29 : vector<10x1xf32>
    %31 = vector.broadcast %30 : vector<10x1xf32> to vector<10x32xf32>
    %32 = arith.mulf %27, %31 : vector<10x32xf32>
    %33 = vector.broadcast %13 : vector<1x32xf32> to vector<10x32xf32>
    %34 = arith.mulf %32, %33 : vector<10x32xf32>
    %35 = vector.broadcast %14 : vector<1x32xf32> to vector<10x32xf32>
    %36 = arith.addf %34, %35 : vector<10x32xf32>
    %37 = arith.mulf %36, %4 : vector<10x32xf32>
    %cst_21 = arith.constant dense<0.000000e+00> : vector<10x32xf32>
    %38 = tpu.matmul %36, %6, %cst_21 {dimension_numbers = #tpu.dot_dimension_numbers<[1], [0], [0], [1], [0, 0, 1, 1], [], []>} : vector<10x32xf32>, vector<32x32xf32>, vector<10x32xf32> -> vector<10x32xf32>
    %39 = arith.mulf %38, %5 : vector<10x32xf32>
    %40 = arith.addf %37, %39 : vector<10x32xf32>
    %c0_22 = arith.constant 0 : index
    %c0_23 = arith.constant 0 : index
    %c0_24 = arith.constant 0 : index
    %41 = vector.load %arg10[%c0_22, %c0_23, %c0_24] : memref<1x32x64xf32, #tpu.memory_space<vmem>>, vector<1x32x64xf32>
    %42 = vector.shape_cast %41 : vector<1x32x64xf32> to vector<32x64xf32>
    %cst_25 = arith.constant dense<0.000000e+00> : vector<10x64xf32>
    %43 = tpu.matmul %40, %42, %cst_25 {dimension_numbers = #tpu.dot_dimension_numbers<[1], [0], [0], [1], [0, 0, 1, 1], [], []>} : vector<10x32xf32>, vector<32x64xf32>, vector<10x64xf32> -> vector<10x64xf32>
    %44 = vector.extract_strided_slice %12 {offsets = [0, 0], sizes = [1, 64], strides = [1, 1]} : vector<1x128xf32> to vector<1x64xf32>
    %45 = vector.broadcast %44 : vector<1x64xf32> to vector<10x64xf32>
    %46 = arith.addf %43, %45 : vector<10x64xf32>
    %c0_26 = arith.constant 0 : index
    %c0_27 = arith.constant 0 : index
    %c0_28 = arith.constant 0 : index
    %47 = vector.load %arg11[%c0_26, %c0_27, %c0_28] : memref<1x32x32xf32, #tpu.memory_space<vmem>>, vector<1x32x32xf32>
    %48 = vector.shape_cast %47 : vector<1x32x32xf32> to vector<32x32xf32>
    %cst_29 = arith.constant dense<0.000000e+00> : vector<10x32xf32>
    %49 = tpu.matmul %36, %48, %cst_29 {dimension_numbers = #tpu.dot_dimension_numbers<[1], [0], [0], [1], [0, 0, 1, 1], [], []>} : vector<10x32xf32>, vector<32x32xf32>, vector<10x32xf32> -> vector<10x32xf32>
    %50 = vector.extract_strided_slice %12 {offsets = [0, 64], sizes = [1, 32], strides = [1, 1]} : vector<1x128xf32> to vector<1x32xf32>
    %51 = vector.broadcast %50 : vector<1x32xf32> to vector<10x32xf32>
    %52 = arith.addf %49, %51 : vector<10x32xf32>
    %53 = vector.extract_strided_slice %46 {offsets = [0, 0], sizes = [10, 32], strides = [1, 1]} : vector<10x64xf32> to vector<10x32xf32>
    %54 = vector.extract_strided_slice %46 {offsets = [0, 32], sizes = [10, 32], strides = [1, 1]} : vector<10x64xf32> to vector<10x32xf32>
    %c0_30 = arith.constant 0 : index
    %c0_31 = arith.constant 0 : index
    %c0_32 = arith.constant 0 : index
    %55 = vector.load %arg12[%c0_30, %c0_31, %c0_32] : memref<1x32x32xf32, #tpu.memory_space<vmem>>, vector<1x32x32xf32>
    %56 = vector.shape_cast %55 : vector<1x32x32xf32> to vector<32x32xf32>
    %57 = vector.extract_strided_slice %53 {offsets = [0, 0], sizes = [10, 8], strides = [1, 1]} : vector<10x32xf32> to vector<10x8xf32>
    %58 = vector.extract_strided_slice %54 {offsets = [0, 0], sizes = [10, 8], strides = [1, 1]} : vector<10x32xf32> to vector<10x8xf32>
    %cst_33 = arith.constant dense<0.000000e+00> : vector<10x10xf32>
    %59 = tpu.matmul %57, %58, %cst_33 {dimension_numbers = #tpu.dot_dimension_numbers<[1], [1], [0], [0], [0, 0, 1, 0], [], []>} : vector<10x8xf32>, vector<10x8xf32>, vector<10x10xf32> -> vector<10x10xf32>
    %cst_34 = arith.constant dense<0xFF800000> : vector<10xf32>
    %60 = vector.multi_reduction <maximumf>, %59, %cst_34 [1] : vector<10x10xf32> to vector<10xf32>
    %61 = vector.shape_cast %60 : vector<10xf32> to vector<10x1xf32>
    %62 = vector.broadcast %61 : vector<10x1xf32> to vector<10x10xf32>
    %63 = arith.subf %59, %62 : vector<10x10xf32>
    %64 = math.exp %63 : vector<10x10xf32>
    %cst_35 = arith.constant dense<0.000000e+00> : vector<10xf32>
    %65 = vector.multi_reduction <add>, %64, %cst_35 [1] : vector<10x10xf32> to vector<10xf32>
    %66 = vector.shape_cast %65 : vector<10xf32> to vector<10x1xf32>
    %67 = tpu.reciprocal %66 {approx = true} : vector<10x1xf32> -> vector<10x1xf32>
    %68 = vector.broadcast %67 : vector<10x1xf32> to vector<10x10xf32>
    %69 = arith.mulf %64, %68 : vector<10x10xf32>
    %70 = vector.extract_strided_slice %52 {offsets = [0, 0], sizes = [10, 8], strides = [1, 1]} : vector<10x32xf32> to vector<10x8xf32>
    %cst_36 = arith.constant dense<0.000000e+00> : vector<10x8xf32>
    %71 = tpu.matmul %69, %70, %cst_36 {dimension_numbers = #tpu.dot_dimension_numbers<[1], [0], [0], [1], [0, 0, 1, 1], [], []>} : vector<10x10xf32>, vector<10x8xf32>, vector<10x8xf32> -> vector<10x8xf32>
    %72 = vector.extract_strided_slice %53 {offsets = [0, 8], sizes = [10, 8], strides = [1, 1]} : vector<10x32xf32> to vector<10x8xf32>
    %73 = vector.extract_strided_slice %54 {offsets = [0, 8], sizes = [10, 8], strides = [1, 1]} : vector<10x32xf32> to vector<10x8xf32>
    %cst_37 = arith.constant dense<0.000000e+00> : vector<10x10xf32>
    %74 = tpu.matmul %72, %73, %cst_37 {dimension_numbers = #tpu.dot_dimension_numbers<[1], [1], [0], [0], [0, 0, 1, 0], [], []>} : vector<10x8xf32>, vector<10x8xf32>, vector<10x10xf32> -> vector<10x10xf32>
    %cst_38 = arith.constant dense<0xFF800000> : vector<10xf32>
    %75 = vector.multi_reduction <maximumf>, %74, %cst_38 [1] : vector<10x10xf32> to vector<10xf32>
    %76 = vector.shape_cast %75 : vector<10xf32> to vector<10x1xf32>
    %77 = vector.broadcast %76 : vector<10x1xf32> to vector<10x10xf32>
    %78 = arith.subf %74, %77 : vector<10x10xf32>
    %79 = math.exp %78 : vector<10x10xf32>
    %cst_39 = arith.constant dense<0.000000e+00> : vector<10xf32>
    %80 = vector.multi_reduction <add>, %79, %cst_39 [1] : vector<10x10xf32> to vector<10xf32>
    %81 = vector.shape_cast %80 : vector<10xf32> to vector<10x1xf32>
    %82 = tpu.reciprocal %81 {approx = true} : vector<10x1xf32> -> vector<10x1xf32>
    %83 = vector.broadcast %82 : vector<10x1xf32> to vector<10x10xf32>
    %84 = arith.mulf %79, %83 : vector<10x10xf32>
    %85 = vector.extract_strided_slice %52 {offsets = [0, 8], sizes = [10, 8], strides = [1, 1]} : vector<10x32xf32> to vector<10x8xf32>
    %cst_40 = arith.constant dense<0.000000e+00> : vector<10x8xf32>
    %86 = tpu.matmul %84, %85, %cst_40 {dimension_numbers = #tpu.dot_dimension_numbers<[1], [0], [0], [1], [0, 0, 1, 1], [], []>} : vector<10x10xf32>, vector<10x8xf32>, vector<10x8xf32> -> vector<10x8xf32>
    %87 = vector.extract_strided_slice %53 {offsets = [0, 16], sizes = [10, 8], strides = [1, 1]} : vector<10x32xf32> to vector<10x8xf32>
    %88 = vector.extract_strided_slice %54 {offsets = [0, 16], sizes = [10, 8], strides = [1, 1]} : vector<10x32xf32> to vector<10x8xf32>
    %cst_41 = arith.constant dense<0.000000e+00> : vector<10x10xf32>
    %89 = tpu.matmul %87, %88, %cst_41 {dimension_numbers = #tpu.dot_dimension_numbers<[1], [1], [0], [0], [0, 0, 1, 0], [], []>} : vector<10x8xf32>, vector<10x8xf32>, vector<10x10xf32> -> vector<10x10xf32>
    %cst_42 = arith.constant dense<0xFF800000> : vector<10xf32>
    %90 = vector.multi_reduction <maximumf>, %89, %cst_42 [1] : vector<10x10xf32> to vector<10xf32>
    %91 = vector.shape_cast %90 : vector<10xf32> to vector<10x1xf32>
    %92 = vector.broadcast %91 : vector<10x1xf32> to vector<10x10xf32>
    %93 = arith.subf %89, %92 : vector<10x10xf32>
    %94 = math.exp %93 : vector<10x10xf32>
    %cst_43 = arith.constant dense<0.000000e+00> : vector<10xf32>
    %95 = vector.multi_reduction <add>, %94, %cst_43 [1] : vector<10x10xf32> to vector<10xf32>
    %96 = vector.shape_cast %95 : vector<10xf32> to vector<10x1xf32>
    %97 = tpu.reciprocal %96 {approx = true} : vector<10x1xf32> -> vector<10x1xf32>
    %98 = vector.broadcast %97 : vector<10x1xf32> to vector<10x10xf32>
    %99 = arith.mulf %94, %98 : vector<10x10xf32>
    %100 = vector.extract_strided_slice %52 {offsets = [0, 16], sizes = [10, 8], strides = [1, 1]} : vector<10x32xf32> to vector<10x8xf32>
    %cst_44 = arith.constant dense<0.000000e+00> : vector<10x8xf32>
    %101 = tpu.matmul %99, %100, %cst_44 {dimension_numbers = #tpu.dot_dimension_numbers<[1], [0], [0], [1], [0, 0, 1, 1], [], []>} : vector<10x10xf32>, vector<10x8xf32>, vector<10x8xf32> -> vector<10x8xf32>
    %102 = vector.extract_strided_slice %53 {offsets = [0, 24], sizes = [10, 8], strides = [1, 1]} : vector<10x32xf32> to vector<10x8xf32>
    %103 = vector.extract_strided_slice %54 {offsets = [0, 24], sizes = [10, 8], strides = [1, 1]} : vector<10x32xf32> to vector<10x8xf32>
    %cst_45 = arith.constant dense<0.000000e+00> : vector<10x10xf32>
    %104 = tpu.matmul %102, %103, %cst_45 {dimension_numbers = #tpu.dot_dimension_numbers<[1], [1], [0], [0], [0, 0, 1, 0], [], []>} : vector<10x8xf32>, vector<10x8xf32>, vector<10x10xf32> -> vector<10x10xf32>
    %cst_46 = arith.constant dense<0xFF800000> : vector<10xf32>
    %105 = vector.multi_reduction <maximumf>, %104, %cst_46 [1] : vector<10x10xf32> to vector<10xf32>
    %106 = vector.shape_cast %105 : vector<10xf32> to vector<10x1xf32>
    %107 = vector.broadcast %106 : vector<10x1xf32> to vector<10x10xf32>
    %108 = arith.subf %104, %107 : vector<10x10xf32>
    %109 = math.exp %108 : vector<10x10xf32>
    %cst_47 = arith.constant dense<0.000000e+00> : vector<10xf32>
    %110 = vector.multi_reduction <add>, %109, %cst_47 [1] : vector<10x10xf32> to vector<10xf32>
    %111 = vector.shape_cast %110 : vector<10xf32> to vector<10x1xf32>
    %112 = tpu.reciprocal %111 {approx = true} : vector<10x1xf32> -> vector<10x1xf32>
    %113 = vector.broadcast %112 : vector<10x1xf32> to vector<10x10xf32>
    %114 = arith.mulf %109, %113 : vector<10x10xf32>
    %115 = vector.extract_strided_slice %52 {offsets = [0, 24], sizes = [10, 8], strides = [1, 1]} : vector<10x32xf32> to vector<10x8xf32>
    %cst_48 = arith.constant dense<0.000000e+00> : vector<10x8xf32>
    %116 = tpu.matmul %114, %115, %cst_48 {dimension_numbers = #tpu.dot_dimension_numbers<[1], [0], [0], [1], [0, 0, 1, 1], [], []>} : vector<10x10xf32>, vector<10x8xf32>, vector<10x8xf32> -> vector<10x8xf32>
    %117 = tpu.concatenate %71, %86, %101, %116 in 1 : vector<10x8xf32>, vector<10x8xf32>, vector<10x8xf32>, vector<10x8xf32> -> vector<10x32xf32>
    %cst_49 = arith.constant dense<0.000000e+00> : vector<10x32xf32>
    %118 = tpu.matmul %117, %56, %cst_49 {dimension_numbers = #tpu.dot_dimension_numbers<[1], [0], [0], [1], [0, 0, 1, 1], [], []>} : vector<10x32xf32>, vector<32x32xf32>, vector<10x32xf32> -> vector<10x32xf32>
    %119 = vector.extract_strided_slice %12 {offsets = [0, 96], sizes = [1, 32], strides = [1, 1]} : vector<1x128xf32> to vector<1x32xf32>
    %120 = vector.broadcast %119 : vector<1x32xf32> to vector<10x32xf32>
    %121 = arith.addf %118, %120 : vector<10x32xf32>
    %122 = arith.addf %3, %121 : vector<10x32xf32>
    %123 = vector.extract_strided_slice %8 {offsets = [1, 0], sizes = [1, 32], strides = [1, 1]} : vector<2x32xf32> to vector<1x32xf32>
    %124 = vector.extract_strided_slice %10 {offsets = [1, 0], sizes = [1, 32], strides = [1, 1]} : vector<2x32xf32> to vector<1x32xf32>
    %cst_50 = arith.constant dense<0.000000e+00> : vector<10xf32>
    %125 = vector.multi_reduction <add>, %122, %cst_50 [1] : vector<10x32xf32> to vector<10xf32>
    %126 = vector.shape_cast %125 : vector<10xf32> to vector<10x1xf32>
    %cst_51 = arith.constant 3.200000e+01 : f32
    %127 = vector.broadcast %cst_51 : f32 to vector<10x1xf32>
    %128 = arith.divf %126, %127 : vector<10x1xf32>
    %129 = vector.broadcast %128 : vector<10x1xf32> to vector<10x32xf32>
    %130 = arith.subf %122, %129 : vector<10x32xf32>
    %131 = arith.mulf %130, %130 : vector<10x32xf32>
    %cst_52 = arith.constant dense<0.000000e+00> : vector<10xf32>
    %132 = vector.multi_reduction <add>, %131, %cst_52 [1] : vector<10x32xf32> to vector<10xf32>
    %133 = vector.shape_cast %132 : vector<10xf32> to vector<10x1xf32>
    %cst_53 = arith.constant 3.200000e+01 : f32
    %134 = vector.broadcast %cst_53 : f32 to vector<10x1xf32>
    %135 = arith.divf %133, %134 : vector<10x1xf32>
    %136 = vector.broadcast %128 : vector<10x1xf32> to vector<10x32xf32>
    %137 = arith.subf %122, %136 : vector<10x32xf32>
    %cst_54 = arith.constant 9.99999974E-6 : f32
    %138 = vector.broadcast %cst_54 : f32 to vector<10x1xf32>
    %139 = arith.addf %135, %138 : vector<10x1xf32>
    %140 = math.rsqrt %139 : vector<10x1xf32>
    %141 = vector.broadcast %140 : vector<10x1xf32> to vector<10x32xf32>
    %142 = arith.mulf %137, %141 : vector<10x32xf32>
    %143 = vector.broadcast %123 : vector<1x32xf32> to vector<10x32xf32>
    %144 = arith.mulf %142, %143 : vector<10x32xf32>
    %145 = vector.broadcast %124 : vector<1x32xf32> to vector<10x32xf32>
    %146 = arith.addf %144, %145 : vector<10x32xf32>
    %c0_55 = arith.constant 0 : index
    %c0_56 = arith.constant 0 : index
    %c0_57 = arith.constant 0 : index
    %147 = vector.load %arg14[%c0_55, %c0_56, %c0_57] : memref<1x32x128xf32, #tpu.memory_space<vmem>>, vector<1x32x128xf32>
    %148 = vector.shape_cast %147 : vector<1x32x128xf32> to vector<32x128xf32>
    %cst_58 = arith.constant dense<0.000000e+00> : vector<10x128xf32>
    %149 = tpu.matmul %146, %148, %cst_58 {dimension_numbers = #tpu.dot_dimension_numbers<[1], [0], [0], [1], [0, 0, 1, 1], [], []>} : vector<10x32xf32>, vector<32x128xf32>, vector<10x128xf32> -> vector<10x128xf32>
    %c0_59 = arith.constant 0 : index
    %c0_60 = arith.constant 0 : index
    %c0_61 = arith.constant 0 : index
    %150 = vector.load %arg15[%c0_59, %c0_60, %c0_61] : memref<1x1x128xf32, #tpu.memory_space<vmem>>, vector<1x1x128xf32>
    %151 = vector.shape_cast %150 : vector<1x1x128xf32> to vector<1x128xf32>
    %152 = vector.broadcast %151 : vector<1x128xf32> to vector<10x128xf32>
    %153 = arith.addf %149, %152 : vector<10x128xf32>
    %cst_62 = arith.constant 5.000000e-01 : f32
    %154 = vector.broadcast %cst_62 : f32 to vector<10x128xf32>
    %155 = arith.mulf %154, %153 : vector<10x128xf32>
    %cst_63 = arith.constant 4.471500e-02 : f32
    %156 = vector.broadcast %cst_63 : f32 to vector<10x128xf32>
    %157 = arith.mulf %156, %153 : vector<10x128xf32>
    %158 = arith.mulf %157, %153 : vector<10x128xf32>
    %159 = arith.mulf %158, %153 : vector<10x128xf32>
    %160 = arith.addf %153, %159 : vector<10x128xf32>
    %cst_64 = arith.constant 0.797884583 : f32
    %161 = vector.broadcast %cst_64 : f32 to vector<10x128xf32>
    %162 = arith.mulf %161, %160 : vector<10x128xf32>
    %163 = math.tanh %162 : vector<10x128xf32>
    %cst_65 = arith.constant 1.000000e+00 : f32
    %164 = vector.broadcast %cst_65 : f32 to vector<10x128xf32>
    %165 = arith.addf %164, %163 : vector<10x128xf32>
    %166 = arith.mulf %155, %165 : vector<10x128xf32>
    %c0_66 = arith.constant 0 : index
    %c0_67 = arith.constant 0 : index
    %c0_68 = arith.constant 0 : index
    %167 = vector.load %arg16[%c0_66, %c0_67, %c0_68] : memref<1x128x32xf32, #tpu.memory_space<vmem>>, vector<1x128x32xf32>
    %168 = vector.shape_cast %167 : vector<1x128x32xf32> to vector<128x32xf32>
    %cst_69 = arith.constant dense<0.000000e+00> : vector<10x32xf32>
    %169 = tpu.matmul %166, %168, %cst_69 {dimension_numbers = #tpu.dot_dimension_numbers<[1], [0], [0], [1], [0, 0, 1, 1], [], []>} : vector<10x128xf32>, vector<128x32xf32>, vector<10x32xf32> -> vector<10x32xf32>
    %c0_70 = arith.constant 0 : index
    %c0_71 = arith.constant 0 : index
    %c0_72 = arith.constant 0 : index
    %170 = vector.load %arg17[%c0_70, %c0_71, %c0_72] : memref<1x1x32xf32, #tpu.memory_space<vmem>>, vector<1x1x32xf32>
    %171 = vector.shape_cast %170 : vector<1x1x32xf32> to vector<1x32xf32>
    %172 = vector.broadcast %171 : vector<1x32xf32> to vector<10x32xf32>
    %173 = arith.addf %169, %172 : vector<10x32xf32>
    %174 = arith.addf %122, %173 : vector<10x32xf32>
    %c0_73 = arith.constant 0 : index
    %c0_74 = arith.constant 0 : index
    %175 = vector.load %arg19[%c0_73, %c0_74] : memref<10x32xf32, #tpu.memory_space<vmem>>, vector<10x32xf32>
    tpu.vector_store %arg19[%c0_73, %c0_74], %174 {strides = array<i32>} : memref<10x32xf32, #tpu.memory_space<vmem>>, vector<10x32xf32>,
    %c1_i32 = arith.constant 1 : i32
    %176 = arith.cmpi eq, %arg1, %c1_i32 : i32
    %177 = arith.extui %176 : i1 to i32
    %c0_i32_75 = arith.constant 0 : i32
    %178 = arith.cmpi ne, %177, %c0_i32_75 : i32
    scf.if %178 {
      %c0_76 = arith.constant 0 : index
      %c0_77 = arith.constant 0 : index
      %c0_78 = arith.constant 0 : index
      %179 = vector.load %arg18[%c0_76, %c0_77, %c0_78] : memref<1x10x32xf32, #tpu.memory_space<vmem>>, vector<1x10x32xf32>
      %180 = vector.shape_cast %179 : vector<1x10x32xf32> to vector<10x32xf32>
      %181 = vector.shape_cast %174 : vector<10x32xf32> to vector<1x10x32xf32>
      tpu.vector_store %arg18[%c0_76, %c0_77, %c0_78], %181 {strides = array<i32>} : memref<1x10x32xf32, #tpu.memory_space<vmem>>, vector<1x10x32xf32>,
    } else {
    }
    return
  }
  func.func @transform_0(%arg0: i32, %arg1: i32) -> (i32, i32, i32) {
    %c0_i32 = arith.constant 0 : i32
    %c0_i32_0 = arith.constant 0 : i32
    %c0_i32_1 = arith.constant 0 : i32
    return %arg0, %c0_i32, %c0_i32_0 : i32, i32, i32
  }
  func.func @transform_1(%arg0: i32, %arg1: i32) -> (i32, i32) {
    %c0_i32 = arith.constant 0 : i32
    %c0_i32_0 = arith.constant 0 : i32
    %c0_i32_1 = arith.constant 0 : i32
    return %c0_i32, %c0_i32_0 : i32, i32
  }
  func.func @transform_2(%arg0: i32, %arg1: i32) -> (i32, i32) {
    %c0_i32 = arith.constant 0 : i32
    %c0_i32_0 = arith.constant 0 : i32
    %c0_i32_1 = arith.constant 0 : i32
    return %c0_i32, %c0_i32_0 : i32, i32
  }
  func.func @transform_3(%arg0: i32, %arg1: i32) -> (i32, i32) {
    %c0_i32 = arith.constant 0 : i32
    %c0_i32_0 = arith.constant 0 : i32
    %c0_i32_1 = arith.constant 0 : i32
    return %c0_i32, %c0_i32_0 : i32, i32
  }
  func.func @transform_4(%arg0: i32, %arg1: i32) -> (i32, i32) {
    %c0_i32 = arith.constant 0 : i32
    %c0_i32_0 = arith.constant 0 : i32
    %c0_i32_1 = arith.constant 0 : i32
    return %c0_i32, %c0_i32_0 : i32, i32
  }
  func.func @transform_5(%arg0: i32, %arg1: i32) -> (i32, i32) {
    %c0_i32 = arith.constant 0 : i32
    %c0_i32_0 = arith.constant 0 : i32
    %c0_i32_1 = arith.constant 0 : i32
    return %c0_i32, %c0_i32_0 : i32, i32
  }
  func.func @transform_6(%arg0: i32, %arg1: i32) -> (i32, i32, i32) {
    %c0_i32 = arith.constant 0 : i32
    %c0_i32_0 = arith.constant 0 : i32
    %c0_i32_1 = arith.constant 0 : i32
    return %arg1, %c0_i32, %c0_i32_0 : i32, i32, i32
  }
  func.func @transform_7(%arg0: i32, %arg1: i32) -> (i32, i32, i32) {
    %c0_i32 = arith.constant 0 : i32
    %c0_i32_0 = arith.constant 0 : i32
    %c0_i32_1 = arith.constant 0 : i32
    return %arg1, %c0_i32, %c0_i32_0 : i32, i32, i32
  }
  func.func @transform_8(%arg0: i32, %arg1: i32) -> (i32, i32, i32) {
    %c0_i32 = arith.constant 0 : i32
    %c0_i32_0 = arith.constant 0 : i32
    %c0_i32_1 = arith.constant 0 : i32
    return %arg1, %c0_i32, %c0_i32_0 : i32, i32, i32
  }
  func.func @transform_9(%arg0: i32, %arg1: i32) -> (i32, i32, i32) {
    %c0_i32 = arith.constant 0 : i32
    %c0_i32_0 = arith.constant 0 : i32
    %c0_i32_1 = arith.constant 0 : i32
    return %arg1, %c0_i32, %c0_i32_0 : i32, i32, i32
  }
  func.func @transform_10(%arg0: i32, %arg1: i32) -> (i32, i32, i32) {
    %c0_i32 = arith.constant 0 : i32
    %c0_i32_0 = arith.constant 0 : i32
    %c0_i32_1 = arith.constant 0 : i32
    return %arg1, %c0_i32, %c0_i32_0 : i32, i32, i32
  }
  func.func @transform_11(%arg0: i32, %arg1: i32) -> (i32, i32, i32) {
    %c0_i32 = arith.constant 0 : i32
    %c0_i32_0 = arith.constant 0 : i32
    %c0_i32_1 = arith.constant 0 : i32
    return %arg1, %c0_i32, %c0_i32_0 : i32, i32, i32
  }
  func.func @transform_12(%arg0: i32, %arg1: i32) -> (i32, i32, i32) {
    %c0_i32 = arith.constant 0 : i32
    %c0_i32_0 = arith.constant 0 : i32
    %c0_i32_1 = arith.constant 0 : i32
    return %arg1, %c0_i32, %c0_i32_0 : i32, i32, i32
  }
  func.func @transform_13(%arg0: i32, %arg1: i32) -> (i32, i32, i32) {
    %c0_i32 = arith.constant 0 : i32
    %c0_i32_0 = arith.constant 0 : i32
    %c0_i32_1 = arith.constant 0 : i32
    return %arg1, %c0_i32, %c0_i32_0 : i32, i32, i32
  }
  func.func @transform_14(%arg0: i32, %arg1: i32) -> (i32, i32, i32) {
    %c0_i32 = arith.constant 0 : i32
    %c0_i32_0 = arith.constant 0 : i32
    %c0_i32_1 = arith.constant 0 : i32
    return %arg1, %c0_i32, %c0_i32_0 : i32, i32, i32
  }
  func.func @transform_15(%arg0: i32, %arg1: i32) -> (i32, i32, i32) {
    %c0_i32 = arith.constant 0 : i32
    %c0_i32_0 = arith.constant 0 : i32
    %c0_i32_1 = arith.constant 0 : i32
    return %arg1, %c0_i32, %c0_i32_0 : i32, i32, i32
  }
  func.func @transform_16(%arg0: i32, %arg1: i32) -> (i32, i32, i32) {
    %c0_i32 = arith.constant 0 : i32
    %c0_i32_0 = arith.constant 0 : i32
    %c0_i32_1 = arith.constant 0 : i32
    return %arg0, %c0_i32, %c0_i32_0 : i32, i32, i32
  }
}

module attributes {stable_mosaic.version = 11 : i64} {
  func.func @kernel(%arg0: i32, %arg1: i32, %arg2: memref<1x8x32xf32, #tpu.memory_space<vmem>>, %arg3: memref<1x10x32xf32, #tpu.memory_space<vmem>>, %arg4: memref<1x1x32xf32, #tpu.memory_space<vmem>>, %arg5: memref<8x10xf32, #tpu.memory_space<vmem>>, %arg6: memref<8x32xf32, #tpu.memory_space<vmem>>, %arg7: memref<8x32xf32, #tpu.memory_space<vmem>>, %arg8: memref<10x32xf32, #tpu.memory_space<vmem>>, %arg9: memref<10x32xf32, #tpu.memory_space<vmem>>, %arg10: memref<32x32xf32, #tpu.memory_space<vmem>>, %arg11: memref<32x128xf32, #tpu.memory_space<vmem>>, %arg12: memref<1x128xf32, #tpu.memory_space<vmem>>, %arg13: memref<128x32xf32, #tpu.memory_space<vmem>>, %arg14: memref<1x32xf32, #tpu.memory_space<vmem>>, %arg15: memref<1x3x32xf32, #tpu.memory_space<vmem>>, %arg16: memref<1x3x32xf32, #tpu.memory_space<vmem>>, %arg17: memref<1x32x64xf32, #tpu.memory_space<vmem>>, %arg18: memref<1x32x32xf32, #tpu.memory_space<vmem>>, %arg19: memref<1x32x32xf32, #tpu.memory_space<vmem>>, %arg20: memref<1x1x128xf32, #tpu.memory_space<vmem>>, %arg21: memref<1x32x128xf32, #tpu.memory_space<vmem>>, %arg22: memref<1x1x128xf32, #tpu.memory_space<vmem>>, %arg23: memref<1x32x192xf32, #tpu.memory_space<vmem>>, %arg24: memref<1x1x192xf32, #tpu.memory_space<vmem>>, %arg25: memref<1x32x128xf32, #tpu.memory_space<vmem>>, %arg26: memref<1x1x128xf32, #tpu.memory_space<vmem>>, %arg27: memref<1x128x32xf32, #tpu.memory_space<vmem>>, %arg28: memref<1x1x32xf32, #tpu.memory_space<vmem>>, %arg29: memref<32x16xf32, #tpu.memory_space<vmem>>, %arg30: memref<1x16xf32, #tpu.memory_space<vmem>>, %arg31: memref<1x8x16xf32, #tpu.memory_space<vmem>>, %arg32: memref<8x32xf32, #tpu.memory_space<vmem>>, %arg33: memref<1x32xf32, #tpu.memory_space<vmem>>) attributes {dimension_semantics = [#tpu.dimension_semantics<parallel>, #tpu.dimension_semantics<arbitrary>], iteration_bounds = array<i64: 2, 2>, scalar_prefetch = 0 : i64, scratch_operands = 2 : i64, tpu.core_type = #tpu.core_type<tc>, window_params = [{transform_indices = @transform_0, window_bounds = array<i64: 1, 8, 32>}, {transform_indices = @transform_1, window_bounds = array<i64: 1, 10, 32>}, {transform_indices = @transform_2, window_bounds = array<i64: 1, 1, 32>}, {pipeline_mode = #tpu.pipeline_mode<synchronous>, transform_indices = @transform_3, window_bounds = array<i64: 8, 10>}, {pipeline_mode = #tpu.pipeline_mode<synchronous>, transform_indices = @transform_4, window_bounds = array<i64: 8, 32>}, {pipeline_mode = #tpu.pipeline_mode<synchronous>, transform_indices = @transform_5, window_bounds = array<i64: 8, 32>}, {pipeline_mode = #tpu.pipeline_mode<synchronous>, transform_indices = @transform_6, window_bounds = array<i64: 10, 32>}, {pipeline_mode = #tpu.pipeline_mode<synchronous>, transform_indices = @transform_7, window_bounds = array<i64: 10, 32>}, {pipeline_mode = #tpu.pipeline_mode<synchronous>, transform_indices = @transform_8, window_bounds = array<i64: 32, 32>}, {pipeline_mode = #tpu.pipeline_mode<synchronous>, transform_indices = @transform_9, window_bounds = array<i64: 32, 128>}, {pipeline_mode = #tpu.pipeline_mode<synchronous>, transform_indices = @transform_10, window_bounds = array<i64: 1, 128>}, {pipeline_mode = #tpu.pipeline_mode<synchronous>, transform_indices = @transform_11, window_bounds = array<i64: 128, 32>}, {pipeline_mode = #tpu.pipeline_mode<synchronous>, transform_indices = @transform_12, window_bounds = array<i64: 1, 32>}, {transform_indices = @transform_13, window_bounds = array<i64: 1, 3, 32>}, {transform_indices = @transform_14, window_bounds = array<i64: 1, 3, 32>}, {transform_indices = @transform_15, window_bounds = array<i64: 1, 32, 64>}, {transform_indices = @transform_16, window_bounds = array<i64: 1, 32, 32>}, {transform_indices = @transform_17, window_bounds = array<i64: 1, 32, 32>}, {transform_indices = @transform_18, window_bounds = array<i64: 1, 1, 128>}, {transform_indices = @transform_19, window_bounds = array<i64: 1, 32, 128>}, {transform_indices = @transform_20, window_bounds = array<i64: 1, 1, 128>}, {transform_indices = @transform_21, window_bounds = array<i64: 1, 32, 192>}, {transform_indices = @transform_22, window_bounds = array<i64: 1, 1, 192>}, {transform_indices = @transform_23, window_bounds = array<i64: 1, 32, 128>}, {transform_indices = @transform_24, window_bounds = array<i64: 1, 1, 128>}, {transform_indices = @transform_25, window_bounds = array<i64: 1, 128, 32>}, {transform_indices = @transform_26, window_bounds = array<i64: 1, 1, 32>}, {pipeline_mode = #tpu.pipeline_mode<synchronous>, transform_indices = @transform_27, window_bounds = array<i64: 32, 16>}, {pipeline_mode = #tpu.pipeline_mode<synchronous>, transform_indices = @transform_28, window_bounds = array<i64: 1, 16>}, {transform_indices = @transform_29, window_bounds = array<i64: 1, 8, 16>}]} {
    %c0_i32 = arith.constant 0 : i32
    %0 = arith.cmpi eq, %arg1, %c0_i32 : i32
    %1 = arith.extui %0 : i1 to i32
    %c0_i32_0 = arith.constant 0 : i32
    %2 = arith.cmpi ne, %1, %c0_i32_0 : i32
    scf.if %2 {
      %c0_130 = arith.constant 0 : index
      %c0_131 = arith.constant 0 : index
      %c0_132 = arith.constant 0 : index
      %337 = vector.load %arg2[%c0_130, %c0_131, %c0_132] : memref<1x8x32xf32, #tpu.memory_space<vmem>>, vector<1x8x32xf32>
      %338 = vector.shape_cast %337 : vector<1x8x32xf32> to vector<8x32xf32>
      %c0_133 = arith.constant 0 : index
      %c0_134 = arith.constant 0 : index
      %339 = vector.load %arg32[%c0_133, %c0_134] : memref<8x32xf32, #tpu.memory_space<vmem>>, vector<8x32xf32>
      tpu.vector_store %arg32[%c0_133, %c0_134], %338 {strides = array<i32>} : memref<8x32xf32, #tpu.memory_space<vmem>>, vector<8x32xf32>,
      %c0_135 = arith.constant 0 : index
      %c0_136 = arith.constant 0 : index
      %c0_137 = arith.constant 0 : index
      %340 = vector.load %arg4[%c0_135, %c0_136, %c0_137] : memref<1x1x32xf32, #tpu.memory_space<vmem>>, vector<1x1x32xf32>
      %341 = vector.shape_cast %340 : vector<1x1x32xf32> to vector<1x32xf32>
      %c0_138 = arith.constant 0 : index
      %c0_139 = arith.constant 0 : index
      %342 = vector.load %arg11[%c0_138, %c0_139] : memref<32x128xf32, #tpu.memory_space<vmem>>, vector<32x128xf32>
      %cst_140 = arith.constant dense<0.000000e+00> : vector<1x128xf32>
      %343 = tpu.matmul %341, %342, %cst_140 {dimension_numbers = #tpu.dot_dimension_numbers<[1], [0], [0], [1], [0, 0, 1, 1], [], []>} : vector<1x32xf32>, vector<32x128xf32>, vector<1x128xf32> -> vector<1x128xf32>
      %c0_141 = arith.constant 0 : index
      %c0_142 = arith.constant 0 : index
      %344 = vector.load %arg12[%c0_141, %c0_142] : memref<1x128xf32, #tpu.memory_space<vmem>>, vector<1x128xf32>
      %345 = arith.addf %343, %344 : vector<1x128xf32>
      %346 = math.exp %345 : vector<1x128xf32>
      %cst_143 = arith.constant 1.000000e+00 : f32
      %347 = vector.broadcast %cst_143 : f32 to vector<1x128xf32>
      %348 = arith.addf %347, %346 : vector<1x128xf32>
      %349 = math.log %348 : vector<1x128xf32>
      %350 = math.tanh %349 : vector<1x128xf32>
      %351 = arith.mulf %345, %350 : vector<1x128xf32>
      %c0_144 = arith.constant 0 : index
      %c0_145 = arith.constant 0 : index
      %352 = vector.load %arg13[%c0_144, %c0_145] : memref<128x32xf32, #tpu.memory_space<vmem>>, vector<128x32xf32>
      %cst_146 = arith.constant dense<0.000000e+00> : vector<1x32xf32>
      %353 = tpu.matmul %351, %352, %cst_146 {dimension_numbers = #tpu.dot_dimension_numbers<[1], [0], [0], [1], [0, 0, 1, 1], [], []>} : vector<1x128xf32>, vector<128x32xf32>, vector<1x32xf32> -> vector<1x32xf32>
      %c0_147 = arith.constant 0 : index
      %c0_148 = arith.constant 0 : index
      %354 = vector.load %arg14[%c0_147, %c0_148] : memref<1x32xf32, #tpu.memory_space<vmem>>, vector<1x32xf32>
      %355 = arith.addf %353, %354 : vector<1x32xf32>
      %356 = math.exp %355 : vector<1x32xf32>
      %cst_149 = arith.constant 1.000000e+00 : f32
      %357 = vector.broadcast %cst_149 : f32 to vector<1x32xf32>
      %358 = arith.addf %357, %356 : vector<1x32xf32>
      %359 = math.log %358 : vector<1x32xf32>
      %360 = math.tanh %359 : vector<1x32xf32>
      %361 = arith.mulf %355, %360 : vector<1x32xf32>
      %c0_150 = arith.constant 0 : index
      %c0_151 = arith.constant 0 : index
      %362 = vector.load %arg33[%c0_150, %c0_151] : memref<1x32xf32, #tpu.memory_space<vmem>>, vector<1x32xf32>
      tpu.vector_store %arg33[%c0_150, %c0_151], %361 {strides = array<i32>} : memref<1x32xf32, #tpu.memory_space<vmem>>, vector<1x32xf32>,
    } else {
    }
    %c0 = arith.constant 0 : index
    %c0_1 = arith.constant 0 : index
    %3 = vector.load %arg32[%c0, %c0_1] : memref<8x32xf32, #tpu.memory_space<vmem>>, vector<8x32xf32>
    %c0_2 = arith.constant 0 : index
    %c0_3 = arith.constant 0 : index
    %c0_4 = arith.constant 0 : index
    %4 = vector.load %arg3[%c0_2, %c0_3, %c0_4] : memref<1x10x32xf32, #tpu.memory_space<vmem>>, vector<1x10x32xf32>
    %5 = vector.shape_cast %4 : vector<1x10x32xf32> to vector<10x32xf32>
    %c0_5 = arith.constant 0 : index
    %c0_6 = arith.constant 0 : index
    %6 = vector.load %arg5[%c0_5, %c0_6] : memref<8x10xf32, #tpu.memory_space<vmem>>, vector<8x10xf32>
    %c0_7 = arith.constant 0 : index
    %c0_8 = arith.constant 0 : index
    %7 = vector.load %arg6[%c0_7, %c0_8] : memref<8x32xf32, #tpu.memory_space<vmem>>, vector<8x32xf32>
    %c0_9 = arith.constant 0 : index
    %c0_10 = arith.constant 0 : index
    %8 = vector.load %arg7[%c0_9, %c0_10] : memref<8x32xf32, #tpu.memory_space<vmem>>, vector<8x32xf32>
    %c0_11 = arith.constant 0 : index
    %c0_12 = arith.constant 0 : index
    %9 = vector.load %arg8[%c0_11, %c0_12] : memref<10x32xf32, #tpu.memory_space<vmem>>, vector<10x32xf32>
    %c0_13 = arith.constant 0 : index
    %c0_14 = arith.constant 0 : index
    %10 = vector.load %arg9[%c0_13, %c0_14] : memref<10x32xf32, #tpu.memory_space<vmem>>, vector<10x32xf32>
    %c0_15 = arith.constant 0 : index
    %c0_16 = arith.constant 0 : index
    %11 = vector.load %arg10[%c0_15, %c0_16] : memref<32x32xf32, #tpu.memory_space<vmem>>, vector<32x32xf32>
    %c0_17 = arith.constant 0 : index
    %c0_18 = arith.constant 0 : index
    %c0_19 = arith.constant 0 : index
    %12 = vector.load %arg15[%c0_17, %c0_18, %c0_19] : memref<1x3x32xf32, #tpu.memory_space<vmem>>, vector<1x3x32xf32>
    %13 = vector.shape_cast %12 : vector<1x3x32xf32> to vector<3x32xf32>
    %c0_20 = arith.constant 0 : index
    %c0_21 = arith.constant 0 : index
    %c0_22 = arith.constant 0 : index
    %14 = vector.load %arg16[%c0_20, %c0_21, %c0_22] : memref<1x3x32xf32, #tpu.memory_space<vmem>>, vector<1x3x32xf32>
    %15 = vector.shape_cast %14 : vector<1x3x32xf32> to vector<3x32xf32>
    %c0_23 = arith.constant 0 : index
    %c0_24 = arith.constant 0 : index
    %c0_25 = arith.constant 0 : index
    %16 = vector.load %arg20[%c0_23, %c0_24, %c0_25] : memref<1x1x128xf32, #tpu.memory_space<vmem>>, vector<1x1x128xf32>
    %17 = vector.shape_cast %16 : vector<1x1x128xf32> to vector<1x128xf32>
    %c0_26 = arith.constant 0 : index
    %c0_27 = arith.constant 0 : index
    %c0_28 = arith.constant 0 : index
    %18 = vector.load %arg21[%c0_26, %c0_27, %c0_28] : memref<1x32x128xf32, #tpu.memory_space<vmem>>, vector<1x32x128xf32>
    %19 = vector.shape_cast %18 : vector<1x32x128xf32> to vector<32x128xf32>
    %c0_29 = arith.constant 0 : index
    %c0_30 = arith.constant 0 : index
    %c0_31 = arith.constant 0 : index
    %20 = vector.load %arg22[%c0_29, %c0_30, %c0_31] : memref<1x1x128xf32, #tpu.memory_space<vmem>>, vector<1x1x128xf32>
    %21 = vector.shape_cast %20 : vector<1x1x128xf32> to vector<1x128xf32>
    %c0_32 = arith.constant 0 : index
    %c0_33 = arith.constant 0 : index
    %22 = vector.load %arg33[%c0_32, %c0_33] : memref<1x32xf32, #tpu.memory_space<vmem>>, vector<1x32xf32>
    %c0_34 = arith.constant 0 : index
    %c0_35 = arith.constant 0 : index
    %c0_36 = arith.constant 0 : index
    %23 = vector.load %arg23[%c0_34, %c0_35, %c0_36] : memref<1x32x192xf32, #tpu.memory_space<vmem>>, vector<1x32x192xf32>
    %24 = vector.shape_cast %23 : vector<1x32x192xf32> to vector<32x192xf32>
    %cst = arith.constant dense<0.000000e+00> : vector<1x192xf32>
    %25 = tpu.matmul %22, %24, %cst {dimension_numbers = #tpu.dot_dimension_numbers<[1], [0], [0], [1], [0, 0, 1, 1], [], []>} : vector<1x32xf32>, vector<32x192xf32>, vector<1x192xf32> -> vector<1x192xf32>
    %c0_37 = arith.constant 0 : index
    %c0_38 = arith.constant 0 : index
    %c0_39 = arith.constant 0 : index
    %26 = vector.load %arg24[%c0_37, %c0_38, %c0_39] : memref<1x1x192xf32, #tpu.memory_space<vmem>>, vector<1x1x192xf32>
    %27 = vector.shape_cast %26 : vector<1x1x192xf32> to vector<1x192xf32>
    %28 = arith.addf %25, %27 : vector<1x192xf32>
    %29 = vector.extract_strided_slice %13 {offsets = [0, 0], sizes = [1, 32], strides = [1, 1]} : vector<3x32xf32> to vector<1x32xf32>
    %30 = vector.extract_strided_slice %15 {offsets = [0, 0], sizes = [1, 32], strides = [1, 1]} : vector<3x32xf32> to vector<1x32xf32>
    %cst_40 = arith.constant dense<0.000000e+00> : vector<8xf32>
    %31 = vector.multi_reduction <add>, %3, %cst_40 [1] : vector<8x32xf32> to vector<8xf32>
    %32 = vector.shape_cast %31 : vector<8xf32> to vector<8x1xf32>
    %cst_41 = arith.constant 3.200000e+01 : f32
    %33 = vector.broadcast %cst_41 : f32 to vector<8x1xf32>
    %34 = arith.divf %32, %33 : vector<8x1xf32>
    %35 = vector.broadcast %34 : vector<8x1xf32> to vector<8x32xf32>
    %36 = arith.subf %3, %35 : vector<8x32xf32>
    %37 = arith.mulf %36, %36 : vector<8x32xf32>
    %cst_42 = arith.constant dense<0.000000e+00> : vector<8xf32>
    %38 = vector.multi_reduction <add>, %37, %cst_42 [1] : vector<8x32xf32> to vector<8xf32>
    %39 = vector.shape_cast %38 : vector<8xf32> to vector<8x1xf32>
    %cst_43 = arith.constant 3.200000e+01 : f32
    %40 = vector.broadcast %cst_43 : f32 to vector<8x1xf32>
    %41 = arith.divf %39, %40 : vector<8x1xf32>
    %42 = vector.broadcast %34 : vector<8x1xf32> to vector<8x32xf32>
    %43 = arith.subf %3, %42 : vector<8x32xf32>
    %cst_44 = arith.constant 9.99999974E-6 : f32
    %44 = vector.broadcast %cst_44 : f32 to vector<8x1xf32>
    %45 = arith.addf %41, %44 : vector<8x1xf32>
    %46 = math.rsqrt %45 : vector<8x1xf32>
    %47 = vector.broadcast %46 : vector<8x1xf32> to vector<8x32xf32>
    %48 = arith.mulf %43, %47 : vector<8x32xf32>
    %49 = vector.broadcast %29 : vector<1x32xf32> to vector<8x32xf32>
    %50 = arith.mulf %48, %49 : vector<8x32xf32>
    %51 = vector.broadcast %30 : vector<1x32xf32> to vector<8x32xf32>
    %52 = arith.addf %50, %51 : vector<8x32xf32>
    %53 = arith.mulf %52, %7 : vector<8x32xf32>
    %cst_45 = arith.constant dense<0.000000e+00> : vector<8x32xf32>
    %54 = tpu.matmul %52, %11, %cst_45 {dimension_numbers = #tpu.dot_dimension_numbers<[1], [0], [0], [1], [0, 0, 1, 1], [], []>} : vector<8x32xf32>, vector<32x32xf32>, vector<8x32xf32> -> vector<8x32xf32>
    %55 = arith.mulf %54, %8 : vector<8x32xf32>
    %56 = arith.addf %53, %55 : vector<8x32xf32>
    %c0_46 = arith.constant 0 : index
    %c0_47 = arith.constant 0 : index
    %c0_48 = arith.constant 0 : index
    %57 = vector.load %arg17[%c0_46, %c0_47, %c0_48] : memref<1x32x64xf32, #tpu.memory_space<vmem>>, vector<1x32x64xf32>
    %58 = vector.shape_cast %57 : vector<1x32x64xf32> to vector<32x64xf32>
    %cst_49 = arith.constant dense<0.000000e+00> : vector<8x64xf32>
    %59 = tpu.matmul %56, %58, %cst_49 {dimension_numbers = #tpu.dot_dimension_numbers<[1], [0], [0], [1], [0, 0, 1, 1], [], []>} : vector<8x32xf32>, vector<32x64xf32>, vector<8x64xf32> -> vector<8x64xf32>
    %60 = vector.extract_strided_slice %17 {offsets = [0, 0], sizes = [1, 64], strides = [1, 1]} : vector<1x128xf32> to vector<1x64xf32>
    %61 = vector.broadcast %60 : vector<1x64xf32> to vector<8x64xf32>
    %62 = arith.addf %59, %61 : vector<8x64xf32>
    %c0_50 = arith.constant 0 : index
    %c0_51 = arith.constant 0 : index
    %c0_52 = arith.constant 0 : index
    %63 = vector.load %arg18[%c0_50, %c0_51, %c0_52] : memref<1x32x32xf32, #tpu.memory_space<vmem>>, vector<1x32x32xf32>
    %64 = vector.shape_cast %63 : vector<1x32x32xf32> to vector<32x32xf32>
    %cst_53 = arith.constant dense<0.000000e+00> : vector<8x32xf32>
    %65 = tpu.matmul %52, %64, %cst_53 {dimension_numbers = #tpu.dot_dimension_numbers<[1], [0], [0], [1], [0, 0, 1, 1], [], []>} : vector<8x32xf32>, vector<32x32xf32>, vector<8x32xf32> -> vector<8x32xf32>
    %66 = vector.extract_strided_slice %17 {offsets = [0, 64], sizes = [1, 32], strides = [1, 1]} : vector<1x128xf32> to vector<1x32xf32>
    %67 = vector.broadcast %66 : vector<1x32xf32> to vector<8x32xf32>
    %68 = arith.addf %65, %67 : vector<8x32xf32>
    %69 = vector.extract_strided_slice %62 {offsets = [0, 0], sizes = [8, 32], strides = [1, 1]} : vector<8x64xf32> to vector<8x32xf32>
    %70 = vector.extract_strided_slice %62 {offsets = [0, 32], sizes = [8, 32], strides = [1, 1]} : vector<8x64xf32> to vector<8x32xf32>
    %c0_54 = arith.constant 0 : index
    %c0_55 = arith.constant 0 : index
    %c0_56 = arith.constant 0 : index
    %71 = vector.load %arg19[%c0_54, %c0_55, %c0_56] : memref<1x32x32xf32, #tpu.memory_space<vmem>>, vector<1x32x32xf32>
    %72 = vector.shape_cast %71 : vector<1x32x32xf32> to vector<32x32xf32>
    %73 = vector.extract_strided_slice %69 {offsets = [0, 0], sizes = [8, 8], strides = [1, 1]} : vector<8x32xf32> to vector<8x8xf32>
    %74 = vector.extract_strided_slice %70 {offsets = [0, 0], sizes = [8, 8], strides = [1, 1]} : vector<8x32xf32> to vector<8x8xf32>
    %cst_57 = arith.constant dense<0.000000e+00> : vector<8x8xf32>
    %75 = tpu.matmul %73, %74, %cst_57 {dimension_numbers = #tpu.dot_dimension_numbers<[1], [1], [0], [0], [0, 0, 1, 0], [], []>} : vector<8x8xf32>, vector<8x8xf32>, vector<8x8xf32> -> vector<8x8xf32>
    %cst_58 = arith.constant dense<0xFF800000> : vector<8xf32>
    %76 = vector.multi_reduction <maximumf>, %75, %cst_58 [1] : vector<8x8xf32> to vector<8xf32>
    %77 = vector.shape_cast %76 : vector<8xf32> to vector<8x1xf32>
    %78 = vector.broadcast %77 : vector<8x1xf32> to vector<8x8xf32>
    %79 = arith.subf %75, %78 : vector<8x8xf32>
    %80 = math.exp %79 : vector<8x8xf32>
    %cst_59 = arith.constant dense<0.000000e+00> : vector<8xf32>
    %81 = vector.multi_reduction <add>, %80, %cst_59 [1] : vector<8x8xf32> to vector<8xf32>
    %82 = vector.shape_cast %81 : vector<8xf32> to vector<8x1xf32>
    %83 = tpu.reciprocal %82 {approx = true} : vector<8x1xf32> -> vector<8x1xf32>
    %84 = vector.broadcast %83 : vector<8x1xf32> to vector<8x8xf32>
    %85 = arith.mulf %80, %84 : vector<8x8xf32>
    %86 = vector.extract_strided_slice %68 {offsets = [0, 0], sizes = [8, 8], strides = [1, 1]} : vector<8x32xf32> to vector<8x8xf32>
    %cst_60 = arith.constant dense<0.000000e+00> : vector<8x8xf32>
    %87 = tpu.matmul %85, %86, %cst_60 {dimension_numbers = #tpu.dot_dimension_numbers<[1], [0], [0], [1], [0, 0, 1, 1], [], []>} : vector<8x8xf32>, vector<8x8xf32>, vector<8x8xf32> -> vector<8x8xf32>
    %88 = vector.extract_strided_slice %69 {offsets = [0, 8], sizes = [8, 8], strides = [1, 1]} : vector<8x32xf32> to vector<8x8xf32>
    %89 = vector.extract_strided_slice %70 {offsets = [0, 8], sizes = [8, 8], strides = [1, 1]} : vector<8x32xf32> to vector<8x8xf32>
    %cst_61 = arith.constant dense<0.000000e+00> : vector<8x8xf32>
    %90 = tpu.matmul %88, %89, %cst_61 {dimension_numbers = #tpu.dot_dimension_numbers<[1], [1], [0], [0], [0, 0, 1, 0], [], []>} : vector<8x8xf32>, vector<8x8xf32>, vector<8x8xf32> -> vector<8x8xf32>
    %cst_62 = arith.constant dense<0xFF800000> : vector<8xf32>
    %91 = vector.multi_reduction <maximumf>, %90, %cst_62 [1] : vector<8x8xf32> to vector<8xf32>
    %92 = vector.shape_cast %91 : vector<8xf32> to vector<8x1xf32>
    %93 = vector.broadcast %92 : vector<8x1xf32> to vector<8x8xf32>
    %94 = arith.subf %90, %93 : vector<8x8xf32>
    %95 = math.exp %94 : vector<8x8xf32>
    %cst_63 = arith.constant dense<0.000000e+00> : vector<8xf32>
    %96 = vector.multi_reduction <add>, %95, %cst_63 [1] : vector<8x8xf32> to vector<8xf32>
    %97 = vector.shape_cast %96 : vector<8xf32> to vector<8x1xf32>
    %98 = tpu.reciprocal %97 {approx = true} : vector<8x1xf32> -> vector<8x1xf32>
    %99 = vector.broadcast %98 : vector<8x1xf32> to vector<8x8xf32>
    %100 = arith.mulf %95, %99 : vector<8x8xf32>
    %101 = vector.extract_strided_slice %68 {offsets = [0, 8], sizes = [8, 8], strides = [1, 1]} : vector<8x32xf32> to vector<8x8xf32>
    %cst_64 = arith.constant dense<0.000000e+00> : vector<8x8xf32>
    %102 = tpu.matmul %100, %101, %cst_64 {dimension_numbers = #tpu.dot_dimension_numbers<[1], [0], [0], [1], [0, 0, 1, 1], [], []>} : vector<8x8xf32>, vector<8x8xf32>, vector<8x8xf32> -> vector<8x8xf32>
    %103 = vector.extract_strided_slice %69 {offsets = [0, 16], sizes = [8, 8], strides = [1, 1]} : vector<8x32xf32> to vector<8x8xf32>
    %104 = vector.extract_strided_slice %70 {offsets = [0, 16], sizes = [8, 8], strides = [1, 1]} : vector<8x32xf32> to vector<8x8xf32>
    %cst_65 = arith.constant dense<0.000000e+00> : vector<8x8xf32>
    %105 = tpu.matmul %103, %104, %cst_65 {dimension_numbers = #tpu.dot_dimension_numbers<[1], [1], [0], [0], [0, 0, 1, 0], [], []>} : vector<8x8xf32>, vector<8x8xf32>, vector<8x8xf32> -> vector<8x8xf32>
    %cst_66 = arith.constant dense<0xFF800000> : vector<8xf32>
    %106 = vector.multi_reduction <maximumf>, %105, %cst_66 [1] : vector<8x8xf32> to vector<8xf32>
    %107 = vector.shape_cast %106 : vector<8xf32> to vector<8x1xf32>
    %108 = vector.broadcast %107 : vector<8x1xf32> to vector<8x8xf32>
    %109 = arith.subf %105, %108 : vector<8x8xf32>
    %110 = math.exp %109 : vector<8x8xf32>
    %cst_67 = arith.constant dense<0.000000e+00> : vector<8xf32>
    %111 = vector.multi_reduction <add>, %110, %cst_67 [1] : vector<8x8xf32> to vector<8xf32>
    %112 = vector.shape_cast %111 : vector<8xf32> to vector<8x1xf32>
    %113 = tpu.reciprocal %112 {approx = true} : vector<8x1xf32> -> vector<8x1xf32>
    %114 = vector.broadcast %113 : vector<8x1xf32> to vector<8x8xf32>
    %115 = arith.mulf %110, %114 : vector<8x8xf32>
    %116 = vector.extract_strided_slice %68 {offsets = [0, 16], sizes = [8, 8], strides = [1, 1]} : vector<8x32xf32> to vector<8x8xf32>
    %cst_68 = arith.constant dense<0.000000e+00> : vector<8x8xf32>
    %117 = tpu.matmul %115, %116, %cst_68 {dimension_numbers = #tpu.dot_dimension_numbers<[1], [0], [0], [1], [0, 0, 1, 1], [], []>} : vector<8x8xf32>, vector<8x8xf32>, vector<8x8xf32> -> vector<8x8xf32>
    %118 = vector.extract_strided_slice %69 {offsets = [0, 24], sizes = [8, 8], strides = [1, 1]} : vector<8x32xf32> to vector<8x8xf32>
    %119 = vector.extract_strided_slice %70 {offsets = [0, 24], sizes = [8, 8], strides = [1, 1]} : vector<8x32xf32> to vector<8x8xf32>
    %cst_69 = arith.constant dense<0.000000e+00> : vector<8x8xf32>
    %120 = tpu.matmul %118, %119, %cst_69 {dimension_numbers = #tpu.dot_dimension_numbers<[1], [1], [0], [0], [0, 0, 1, 0], [], []>} : vector<8x8xf32>, vector<8x8xf32>, vector<8x8xf32> -> vector<8x8xf32>
    %cst_70 = arith.constant dense<0xFF800000> : vector<8xf32>
    %121 = vector.multi_reduction <maximumf>, %120, %cst_70 [1] : vector<8x8xf32> to vector<8xf32>
    %122 = vector.shape_cast %121 : vector<8xf32> to vector<8x1xf32>
    %123 = vector.broadcast %122 : vector<8x1xf32> to vector<8x8xf32>
    %124 = arith.subf %120, %123 : vector<8x8xf32>
    %125 = math.exp %124 : vector<8x8xf32>
    %cst_71 = arith.constant dense<0.000000e+00> : vector<8xf32>
    %126 = vector.multi_reduction <add>, %125, %cst_71 [1] : vector<8x8xf32> to vector<8xf32>
    %127 = vector.shape_cast %126 : vector<8xf32> to vector<8x1xf32>
    %128 = tpu.reciprocal %127 {approx = true} : vector<8x1xf32> -> vector<8x1xf32>
    %129 = vector.broadcast %128 : vector<8x1xf32> to vector<8x8xf32>
    %130 = arith.mulf %125, %129 : vector<8x8xf32>
    %131 = vector.extract_strided_slice %68 {offsets = [0, 24], sizes = [8, 8], strides = [1, 1]} : vector<8x32xf32> to vector<8x8xf32>
    %cst_72 = arith.constant dense<0.000000e+00> : vector<8x8xf32>
    %132 = tpu.matmul %130, %131, %cst_72 {dimension_numbers = #tpu.dot_dimension_numbers<[1], [0], [0], [1], [0, 0, 1, 1], [], []>} : vector<8x8xf32>, vector<8x8xf32>, vector<8x8xf32> -> vector<8x8xf32>
    %133 = tpu.concatenate %87, %102, %117, %132 in 1 : vector<8x8xf32>, vector<8x8xf32>, vector<8x8xf32>, vector<8x8xf32> -> vector<8x32xf32>
    %cst_73 = arith.constant dense<0.000000e+00> : vector<8x32xf32>
    %134 = tpu.matmul %133, %72, %cst_73 {dimension_numbers = #tpu.dot_dimension_numbers<[1], [0], [0], [1], [0, 0, 1, 1], [], []>} : vector<8x32xf32>, vector<32x32xf32>, vector<8x32xf32> -> vector<8x32xf32>
    %135 = vector.extract_strided_slice %17 {offsets = [0, 96], sizes = [1, 32], strides = [1, 1]} : vector<1x128xf32> to vector<1x32xf32>
    %136 = vector.broadcast %135 : vector<1x32xf32> to vector<8x32xf32>
    %137 = arith.addf %134, %136 : vector<8x32xf32>
    %138 = vector.extract_strided_slice %28 {offsets = [0, 0], sizes = [1, 32], strides = [1, 1]} : vector<1x192xf32> to vector<1x32xf32>
    %cst_74 = arith.constant 1.000000e+00 : f32
    %139 = vector.broadcast %cst_74 : f32 to vector<1x32xf32>
    %140 = arith.addf %138, %139 : vector<1x32xf32>
    %141 = vector.broadcast %140 : vector<1x32xf32> to vector<8x32xf32>
    %142 = arith.mulf %141, %137 : vector<8x32xf32>
    %143 = vector.extract_strided_slice %28 {offsets = [0, 32], sizes = [1, 32], strides = [1, 1]} : vector<1x192xf32> to vector<1x32xf32>
    %144 = vector.broadcast %143 : vector<1x32xf32> to vector<8x32xf32>
    %145 = arith.addf %142, %144 : vector<8x32xf32>
    %146 = arith.addf %3, %145 : vector<8x32xf32>
    %147 = vector.extract_strided_slice %13 {offsets = [1, 0], sizes = [1, 32], strides = [1, 1]} : vector<3x32xf32> to vector<1x32xf32>
    %148 = vector.extract_strided_slice %15 {offsets = [1, 0], sizes = [1, 32], strides = [1, 1]} : vector<3x32xf32> to vector<1x32xf32>
    %cst_75 = arith.constant dense<0.000000e+00> : vector<8xf32>
    %149 = vector.multi_reduction <add>, %146, %cst_75 [1] : vector<8x32xf32> to vector<8xf32>
    %150 = vector.shape_cast %149 : vector<8xf32> to vector<8x1xf32>
    %cst_76 = arith.constant 3.200000e+01 : f32
    %151 = vector.broadcast %cst_76 : f32 to vector<8x1xf32>
    %152 = arith.divf %150, %151 : vector<8x1xf32>
    %153 = vector.broadcast %152 : vector<8x1xf32> to vector<8x32xf32>
    %154 = arith.subf %146, %153 : vector<8x32xf32>
    %155 = arith.mulf %154, %154 : vector<8x32xf32>
    %cst_77 = arith.constant dense<0.000000e+00> : vector<8xf32>
    %156 = vector.multi_reduction <add>, %155, %cst_77 [1] : vector<8x32xf32> to vector<8xf32>
    %157 = vector.shape_cast %156 : vector<8xf32> to vector<8x1xf32>
    %cst_78 = arith.constant 3.200000e+01 : f32
    %158 = vector.broadcast %cst_78 : f32 to vector<8x1xf32>
    %159 = arith.divf %157, %158 : vector<8x1xf32>
    %160 = vector.broadcast %152 : vector<8x1xf32> to vector<8x32xf32>
    %161 = arith.subf %146, %160 : vector<8x32xf32>
    %cst_79 = arith.constant 9.99999974E-6 : f32
    %162 = vector.broadcast %cst_79 : f32 to vector<8x1xf32>
    %163 = arith.addf %159, %162 : vector<8x1xf32>
    %164 = math.rsqrt %163 : vector<8x1xf32>
    %165 = vector.broadcast %164 : vector<8x1xf32> to vector<8x32xf32>
    %166 = arith.mulf %161, %165 : vector<8x32xf32>
    %167 = vector.broadcast %147 : vector<1x32xf32> to vector<8x32xf32>
    %168 = arith.mulf %166, %167 : vector<8x32xf32>
    %169 = vector.broadcast %148 : vector<1x32xf32> to vector<8x32xf32>
    %170 = arith.addf %168, %169 : vector<8x32xf32>
    %171 = arith.mulf %170, %7 : vector<8x32xf32>
    %cst_80 = arith.constant dense<0.000000e+00> : vector<8x32xf32>
    %172 = tpu.matmul %170, %11, %cst_80 {dimension_numbers = #tpu.dot_dimension_numbers<[1], [0], [0], [1], [0, 0, 1, 1], [], []>} : vector<8x32xf32>, vector<32x32xf32>, vector<8x32xf32> -> vector<8x32xf32>
    %173 = arith.mulf %172, %8 : vector<8x32xf32>
    %174 = arith.addf %171, %173 : vector<8x32xf32>
    %175 = arith.mulf %5, %9 : vector<10x32xf32>
    %cst_81 = arith.constant dense<0.000000e+00> : vector<10x32xf32>
    %176 = tpu.matmul %5, %11, %cst_81 {dimension_numbers = #tpu.dot_dimension_numbers<[1], [0], [0], [1], [0, 0, 1, 1], [], []>} : vector<10x32xf32>, vector<32x32xf32>, vector<10x32xf32> -> vector<10x32xf32>
    %177 = arith.mulf %176, %10 : vector<10x32xf32>
    %178 = arith.addf %175, %177 : vector<10x32xf32>
    %179 = vector.extract_strided_slice %19 {offsets = [0, 0], sizes = [32, 32], strides = [1, 1]} : vector<32x128xf32> to vector<32x32xf32>
    %cst_82 = arith.constant dense<0.000000e+00> : vector<8x32xf32>
    %180 = tpu.matmul %174, %179, %cst_82 {dimension_numbers = #tpu.dot_dimension_numbers<[1], [0], [0], [1], [0, 0, 1, 1], [], []>} : vector<8x32xf32>, vector<32x32xf32>, vector<8x32xf32> -> vector<8x32xf32>
    %181 = vector.extract_strided_slice %21 {offsets = [0, 0], sizes = [1, 32], strides = [1, 1]} : vector<1x128xf32> to vector<1x32xf32>
    %182 = vector.broadcast %181 : vector<1x32xf32> to vector<8x32xf32>
    %183 = arith.addf %180, %182 : vector<8x32xf32>
    %184 = vector.extract_strided_slice %19 {offsets = [0, 32], sizes = [32, 32], strides = [1, 1]} : vector<32x128xf32> to vector<32x32xf32>
    %cst_83 = arith.constant dense<0.000000e+00> : vector<10x32xf32>
    %185 = tpu.matmul %178, %184, %cst_83 {dimension_numbers = #tpu.dot_dimension_numbers<[1], [0], [0], [1], [0, 0, 1, 1], [], []>} : vector<10x32xf32>, vector<32x32xf32>, vector<10x32xf32> -> vector<10x32xf32>
    %186 = vector.extract_strided_slice %21 {offsets = [0, 32], sizes = [1, 32], strides = [1, 1]} : vector<1x128xf32> to vector<1x32xf32>
    %187 = vector.broadcast %186 : vector<1x32xf32> to vector<10x32xf32>
    %188 = arith.addf %185, %187 : vector<10x32xf32>
    %189 = vector.extract_strided_slice %19 {offsets = [0, 64], sizes = [32, 32], strides = [1, 1]} : vector<32x128xf32> to vector<32x32xf32>
    %cst_84 = arith.constant dense<0.000000e+00> : vector<10x32xf32>
    %190 = tpu.matmul %5, %189, %cst_84 {dimension_numbers = #tpu.dot_dimension_numbers<[1], [0], [0], [1], [0, 0, 1, 1], [], []>} : vector<10x32xf32>, vector<32x32xf32>, vector<10x32xf32> -> vector<10x32xf32>
    %191 = vector.extract_strided_slice %21 {offsets = [0, 64], sizes = [1, 32], strides = [1, 1]} : vector<1x128xf32> to vector<1x32xf32>
    %192 = vector.broadcast %191 : vector<1x32xf32> to vector<10x32xf32>
    %193 = arith.addf %190, %192 : vector<10x32xf32>
    %194 = vector.extract_strided_slice %19 {offsets = [0, 96], sizes = [32, 32], strides = [1, 1]} : vector<32x128xf32> to vector<32x32xf32>
    %195 = vector.extract_strided_slice %183 {offsets = [0, 0], sizes = [8, 8], strides = [1, 1]} : vector<8x32xf32> to vector<8x8xf32>
    %196 = vector.extract_strided_slice %188 {offsets = [0, 0], sizes = [10, 8], strides = [1, 1]} : vector<10x32xf32> to vector<10x8xf32>
    %cst_85 = arith.constant dense<0.000000e+00> : vector<8x10xf32>
    %197 = tpu.matmul %195, %196, %cst_85 {dimension_numbers = #tpu.dot_dimension_numbers<[1], [1], [0], [0], [0, 0, 1, 0], [], []>} : vector<8x8xf32>, vector<10x8xf32>, vector<8x10xf32> -> vector<8x10xf32>
    %198 = arith.addf %197, %6 : vector<8x10xf32>
    %cst_86 = arith.constant dense<0xFF800000> : vector<8xf32>
    %199 = vector.multi_reduction <maximumf>, %198, %cst_86 [1] : vector<8x10xf32> to vector<8xf32>
    %200 = vector.shape_cast %199 : vector<8xf32> to vector<8x1xf32>
    %201 = vector.broadcast %200 : vector<8x1xf32> to vector<8x10xf32>
    %202 = arith.subf %198, %201 : vector<8x10xf32>
    %203 = math.exp %202 : vector<8x10xf32>
    %cst_87 = arith.constant dense<0.000000e+00> : vector<8xf32>
    %204 = vector.multi_reduction <add>, %203, %cst_87 [1] : vector<8x10xf32> to vector<8xf32>
    %205 = vector.shape_cast %204 : vector<8xf32> to vector<8x1xf32>
    %206 = tpu.reciprocal %205 {approx = true} : vector<8x1xf32> -> vector<8x1xf32>
    %207 = vector.broadcast %206 : vector<8x1xf32> to vector<8x10xf32>
    %208 = arith.mulf %203, %207 : vector<8x10xf32>
    %209 = vector.extract_strided_slice %193 {offsets = [0, 0], sizes = [10, 8], strides = [1, 1]} : vector<10x32xf32> to vector<10x8xf32>
    %cst_88 = arith.constant dense<0.000000e+00> : vector<8x8xf32>
    %210 = tpu.matmul %208, %209, %cst_88 {dimension_numbers = #tpu.dot_dimension_numbers<[1], [0], [0], [1], [0, 0, 1, 1], [], []>} : vector<8x10xf32>, vector<10x8xf32>, vector<8x8xf32> -> vector<8x8xf32>
    %211 = vector.extract_strided_slice %183 {offsets = [0, 8], sizes = [8, 8], strides = [1, 1]} : vector<8x32xf32> to vector<8x8xf32>
    %212 = vector.extract_strided_slice %188 {offsets = [0, 8], sizes = [10, 8], strides = [1, 1]} : vector<10x32xf32> to vector<10x8xf32>
    %cst_89 = arith.constant dense<0.000000e+00> : vector<8x10xf32>
    %213 = tpu.matmul %211, %212, %cst_89 {dimension_numbers = #tpu.dot_dimension_numbers<[1], [1], [0], [0], [0, 0, 1, 0], [], []>} : vector<8x8xf32>, vector<10x8xf32>, vector<8x10xf32> -> vector<8x10xf32>
    %214 = arith.addf %213, %6 : vector<8x10xf32>
    %cst_90 = arith.constant dense<0xFF800000> : vector<8xf32>
    %215 = vector.multi_reduction <maximumf>, %214, %cst_90 [1] : vector<8x10xf32> to vector<8xf32>
    %216 = vector.shape_cast %215 : vector<8xf32> to vector<8x1xf32>
    %217 = vector.broadcast %216 : vector<8x1xf32> to vector<8x10xf32>
    %218 = arith.subf %214, %217 : vector<8x10xf32>
    %219 = math.exp %218 : vector<8x10xf32>
    %cst_91 = arith.constant dense<0.000000e+00> : vector<8xf32>
    %220 = vector.multi_reduction <add>, %219, %cst_91 [1] : vector<8x10xf32> to vector<8xf32>
    %221 = vector.shape_cast %220 : vector<8xf32> to vector<8x1xf32>
    %222 = tpu.reciprocal %221 {approx = true} : vector<8x1xf32> -> vector<8x1xf32>
    %223 = vector.broadcast %222 : vector<8x1xf32> to vector<8x10xf32>
    %224 = arith.mulf %219, %223 : vector<8x10xf32>
    %225 = vector.extract_strided_slice %193 {offsets = [0, 8], sizes = [10, 8], strides = [1, 1]} : vector<10x32xf32> to vector<10x8xf32>
    %cst_92 = arith.constant dense<0.000000e+00> : vector<8x8xf32>
    %226 = tpu.matmul %224, %225, %cst_92 {dimension_numbers = #tpu.dot_dimension_numbers<[1], [0], [0], [1], [0, 0, 1, 1], [], []>} : vector<8x10xf32>, vector<10x8xf32>, vector<8x8xf32> -> vector<8x8xf32>
    %227 = vector.extract_strided_slice %183 {offsets = [0, 16], sizes = [8, 8], strides = [1, 1]} : vector<8x32xf32> to vector<8x8xf32>
    %228 = vector.extract_strided_slice %188 {offsets = [0, 16], sizes = [10, 8], strides = [1, 1]} : vector<10x32xf32> to vector<10x8xf32>
    %cst_93 = arith.constant dense<0.000000e+00> : vector<8x10xf32>
    %229 = tpu.matmul %227, %228, %cst_93 {dimension_numbers = #tpu.dot_dimension_numbers<[1], [1], [0], [0], [0, 0, 1, 0], [], []>} : vector<8x8xf32>, vector<10x8xf32>, vector<8x10xf32> -> vector<8x10xf32>
    %230 = arith.addf %229, %6 : vector<8x10xf32>
    %cst_94 = arith.constant dense<0xFF800000> : vector<8xf32>
    %231 = vector.multi_reduction <maximumf>, %230, %cst_94 [1] : vector<8x10xf32> to vector<8xf32>
    %232 = vector.shape_cast %231 : vector<8xf32> to vector<8x1xf32>
    %233 = vector.broadcast %232 : vector<8x1xf32> to vector<8x10xf32>
    %234 = arith.subf %230, %233 : vector<8x10xf32>
    %235 = math.exp %234 : vector<8x10xf32>
    %cst_95 = arith.constant dense<0.000000e+00> : vector<8xf32>
    %236 = vector.multi_reduction <add>, %235, %cst_95 [1] : vector<8x10xf32> to vector<8xf32>
    %237 = vector.shape_cast %236 : vector<8xf32> to vector<8x1xf32>
    %238 = tpu.reciprocal %237 {approx = true} : vector<8x1xf32> -> vector<8x1xf32>
    %239 = vector.broadcast %238 : vector<8x1xf32> to vector<8x10xf32>
    %240 = arith.mulf %235, %239 : vector<8x10xf32>
    %241 = vector.extract_strided_slice %193 {offsets = [0, 16], sizes = [10, 8], strides = [1, 1]} : vector<10x32xf32> to vector<10x8xf32>
    %cst_96 = arith.constant dense<0.000000e+00> : vector<8x8xf32>
    %242 = tpu.matmul %240, %241, %cst_96 {dimension_numbers = #tpu.dot_dimension_numbers<[1], [0], [0], [1], [0, 0, 1, 1], [], []>} : vector<8x10xf32>, vector<10x8xf32>, vector<8x8xf32> -> vector<8x8xf32>
    %243 = vector.extract_strided_slice %183 {offsets = [0, 24], sizes = [8, 8], strides = [1, 1]} : vector<8x32xf32> to vector<8x8xf32>
    %244 = vector.extract_strided_slice %188 {offsets = [0, 24], sizes = [10, 8], strides = [1, 1]} : vector<10x32xf32> to vector<10x8xf32>
    %cst_97 = arith.constant dense<0.000000e+00> : vector<8x10xf32>
    %245 = tpu.matmul %243, %244, %cst_97 {dimension_numbers = #tpu.dot_dimension_numbers<[1], [1], [0], [0], [0, 0, 1, 0], [], []>} : vector<8x8xf32>, vector<10x8xf32>, vector<8x10xf32> -> vector<8x10xf32>
    %246 = arith.addf %245, %6 : vector<8x10xf32>
    %cst_98 = arith.constant dense<0xFF800000> : vector<8xf32>
    %247 = vector.multi_reduction <maximumf>, %246, %cst_98 [1] : vector<8x10xf32> to vector<8xf32>
    %248 = vector.shape_cast %247 : vector<8xf32> to vector<8x1xf32>
    %249 = vector.broadcast %248 : vector<8x1xf32> to vector<8x10xf32>
    %250 = arith.subf %246, %249 : vector<8x10xf32>
    %251 = math.exp %250 : vector<8x10xf32>
    %cst_99 = arith.constant dense<0.000000e+00> : vector<8xf32>
    %252 = vector.multi_reduction <add>, %251, %cst_99 [1] : vector<8x10xf32> to vector<8xf32>
    %253 = vector.shape_cast %252 : vector<8xf32> to vector<8x1xf32>
    %254 = tpu.reciprocal %253 {approx = true} : vector<8x1xf32> -> vector<8x1xf32>
    %255 = vector.broadcast %254 : vector<8x1xf32> to vector<8x10xf32>
    %256 = arith.mulf %251, %255 : vector<8x10xf32>
    %257 = vector.extract_strided_slice %193 {offsets = [0, 24], sizes = [10, 8], strides = [1, 1]} : vector<10x32xf32> to vector<10x8xf32>
    %cst_100 = arith.constant dense<0.000000e+00> : vector<8x8xf32>
    %258 = tpu.matmul %256, %257, %cst_100 {dimension_numbers = #tpu.dot_dimension_numbers<[1], [0], [0], [1], [0, 0, 1, 1], [], []>} : vector<8x10xf32>, vector<10x8xf32>, vector<8x8xf32> -> vector<8x8xf32>
    %259 = tpu.concatenate %210, %226, %242, %258 in 1 : vector<8x8xf32>, vector<8x8xf32>, vector<8x8xf32>, vector<8x8xf32> -> vector<8x32xf32>
    %cst_101 = arith.constant dense<0.000000e+00> : vector<8x32xf32>
    %260 = tpu.matmul %259, %194, %cst_101 {dimension_numbers = #tpu.dot_dimension_numbers<[1], [0], [0], [1], [0, 0, 1, 1], [], []>} : vector<8x32xf32>, vector<32x32xf32>, vector<8x32xf32> -> vector<8x32xf32>
    %261 = vector.extract_strided_slice %21 {offsets = [0, 96], sizes = [1, 32], strides = [1, 1]} : vector<1x128xf32> to vector<1x32xf32>
    %262 = vector.broadcast %261 : vector<1x32xf32> to vector<8x32xf32>
    %263 = arith.addf %260, %262 : vector<8x32xf32>
    %264 = vector.extract_strided_slice %28 {offsets = [0, 64], sizes = [1, 32], strides = [1, 1]} : vector<1x192xf32> to vector<1x32xf32>
    %cst_102 = arith.constant 1.000000e+00 : f32
    %265 = vector.broadcast %cst_102 : f32 to vector<1x32xf32>
    %266 = arith.addf %264, %265 : vector<1x32xf32>
    %267 = vector.broadcast %266 : vector<1x32xf32> to vector<8x32xf32>
    %268 = arith.mulf %267, %263 : vector<8x32xf32>
    %269 = vector.extract_strided_slice %28 {offsets = [0, 96], sizes = [1, 32], strides = [1, 1]} : vector<1x192xf32> to vector<1x32xf32>
    %270 = vector.broadcast %269 : vector<1x32xf32> to vector<8x32xf32>
    %271 = arith.addf %268, %270 : vector<8x32xf32>
    %272 = arith.addf %146, %271 : vector<8x32xf32>
    %273 = vector.extract_strided_slice %13 {offsets = [2, 0], sizes = [1, 32], strides = [1, 1]} : vector<3x32xf32> to vector<1x32xf32>
    %274 = vector.extract_strided_slice %15 {offsets = [2, 0], sizes = [1, 32], strides = [1, 1]} : vector<3x32xf32> to vector<1x32xf32>
    %cst_103 = arith.constant dense<0.000000e+00> : vector<8xf32>
    %275 = vector.multi_reduction <add>, %272, %cst_103 [1] : vector<8x32xf32> to vector<8xf32>
    %276 = vector.shape_cast %275 : vector<8xf32> to vector<8x1xf32>
    %cst_104 = arith.constant 3.200000e+01 : f32
    %277 = vector.broadcast %cst_104 : f32 to vector<8x1xf32>
    %278 = arith.divf %276, %277 : vector<8x1xf32>
    %279 = vector.broadcast %278 : vector<8x1xf32> to vector<8x32xf32>
    %280 = arith.subf %272, %279 : vector<8x32xf32>
    %281 = arith.mulf %280, %280 : vector<8x32xf32>
    %cst_105 = arith.constant dense<0.000000e+00> : vector<8xf32>
    %282 = vector.multi_reduction <add>, %281, %cst_105 [1] : vector<8x32xf32> to vector<8xf32>
    %283 = vector.shape_cast %282 : vector<8xf32> to vector<8x1xf32>
    %cst_106 = arith.constant 3.200000e+01 : f32
    %284 = vector.broadcast %cst_106 : f32 to vector<8x1xf32>
    %285 = arith.divf %283, %284 : vector<8x1xf32>
    %286 = vector.broadcast %278 : vector<8x1xf32> to vector<8x32xf32>
    %287 = arith.subf %272, %286 : vector<8x32xf32>
    %cst_107 = arith.constant 9.99999974E-6 : f32
    %288 = vector.broadcast %cst_107 : f32 to vector<8x1xf32>
    %289 = arith.addf %285, %288 : vector<8x1xf32>
    %290 = math.rsqrt %289 : vector<8x1xf32>
    %291 = vector.broadcast %290 : vector<8x1xf32> to vector<8x32xf32>
    %292 = arith.mulf %287, %291 : vector<8x32xf32>
    %293 = vector.broadcast %273 : vector<1x32xf32> to vector<8x32xf32>
    %294 = arith.mulf %292, %293 : vector<8x32xf32>
    %295 = vector.broadcast %274 : vector<1x32xf32> to vector<8x32xf32>
    %296 = arith.addf %294, %295 : vector<8x32xf32>
    %c0_108 = arith.constant 0 : index
    %c0_109 = arith.constant 0 : index
    %c0_110 = arith.constant 0 : index
    %297 = vector.load %arg25[%c0_108, %c0_109, %c0_110] : memref<1x32x128xf32, #tpu.memory_space<vmem>>, vector<1x32x128xf32>
    %298 = vector.shape_cast %297 : vector<1x32x128xf32> to vector<32x128xf32>
    %cst_111 = arith.constant dense<0.000000e+00> : vector<8x128xf32>
    %299 = tpu.matmul %296, %298, %cst_111 {dimension_numbers = #tpu.dot_dimension_numbers<[1], [0], [0], [1], [0, 0, 1, 1], [], []>} : vector<8x32xf32>, vector<32x128xf32>, vector<8x128xf32> -> vector<8x128xf32>
    %c0_112 = arith.constant 0 : index
    %c0_113 = arith.constant 0 : index
    %c0_114 = arith.constant 0 : index
    %300 = vector.load %arg26[%c0_112, %c0_113, %c0_114] : memref<1x1x128xf32, #tpu.memory_space<vmem>>, vector<1x1x128xf32>
    %301 = vector.shape_cast %300 : vector<1x1x128xf32> to vector<1x128xf32>
    %302 = vector.broadcast %301 : vector<1x128xf32> to vector<8x128xf32>
    %303 = arith.addf %299, %302 : vector<8x128xf32>
    %cst_115 = arith.constant 5.000000e-01 : f32
    %304 = vector.broadcast %cst_115 : f32 to vector<8x128xf32>
    %305 = arith.mulf %304, %303 : vector<8x128xf32>
    %cst_116 = arith.constant 4.471500e-02 : f32
    %306 = vector.broadcast %cst_116 : f32 to vector<8x128xf32>
    %307 = arith.mulf %306, %303 : vector<8x128xf32>
    %308 = arith.mulf %307, %303 : vector<8x128xf32>
    %309 = arith.mulf %308, %303 : vector<8x128xf32>
    %310 = arith.addf %303, %309 : vector<8x128xf32>
    %cst_117 = arith.constant 0.797884583 : f32
    %311 = vector.broadcast %cst_117 : f32 to vector<8x128xf32>
    %312 = arith.mulf %311, %310 : vector<8x128xf32>
    %313 = math.tanh %312 : vector<8x128xf32>
    %cst_118 = arith.constant 1.000000e+00 : f32
    %314 = vector.broadcast %cst_118 : f32 to vector<8x128xf32>
    %315 = arith.addf %314, %313 : vector<8x128xf32>
    %316 = arith.mulf %305, %315 : vector<8x128xf32>
    %c0_119 = arith.constant 0 : index
    %c0_120 = arith.constant 0 : index
    %c0_121 = arith.constant 0 : index
    %317 = vector.load %arg27[%c0_119, %c0_120, %c0_121] : memref<1x128x32xf32, #tpu.memory_space<vmem>>, vector<1x128x32xf32>
    %318 = vector.shape_cast %317 : vector<1x128x32xf32> to vector<128x32xf32>
    %cst_122 = arith.constant dense<0.000000e+00> : vector<8x32xf32>
    %319 = tpu.matmul %316, %318, %cst_122 {dimension_numbers = #tpu.dot_dimension_numbers<[1], [0], [0], [1], [0, 0, 1, 1], [], []>} : vector<8x128xf32>, vector<128x32xf32>, vector<8x32xf32> -> vector<8x32xf32>
    %c0_123 = arith.constant 0 : index
    %c0_124 = arith.constant 0 : index
    %c0_125 = arith.constant 0 : index
    %320 = vector.load %arg28[%c0_123, %c0_124, %c0_125] : memref<1x1x32xf32, #tpu.memory_space<vmem>>, vector<1x1x32xf32>
    %321 = vector.shape_cast %320 : vector<1x1x32xf32> to vector<1x32xf32>
    %322 = vector.broadcast %321 : vector<1x32xf32> to vector<8x32xf32>
    %323 = arith.addf %319, %322 : vector<8x32xf32>
    %324 = vector.extract_strided_slice %28 {offsets = [0, 128], sizes = [1, 32], strides = [1, 1]} : vector<1x192xf32> to vector<1x32xf32>
    %cst_126 = arith.constant 1.000000e+00 : f32
    %325 = vector.broadcast %cst_126 : f32 to vector<1x32xf32>
    %326 = arith.addf %324, %325 : vector<1x32xf32>
    %327 = vector.broadcast %326 : vector<1x32xf32> to vector<8x32xf32>
    %328 = arith.mulf %327, %323 : vector<8x32xf32>
    %329 = vector.extract_strided_slice %28 {offsets = [0, 160], sizes = [1, 32], strides = [1, 1]} : vector<1x192xf32> to vector<1x32xf32>
    %330 = vector.broadcast %329 : vector<1x32xf32> to vector<8x32xf32>
    %331 = arith.addf %328, %330 : vector<8x32xf32>
    %332 = arith.addf %272, %331 : vector<8x32xf32>
    %c0_127 = arith.constant 0 : index
    %c0_128 = arith.constant 0 : index
    %333 = vector.load %arg32[%c0_127, %c0_128] : memref<8x32xf32, #tpu.memory_space<vmem>>, vector<8x32xf32>
    tpu.vector_store %arg32[%c0_127, %c0_128], %332 {strides = array<i32>} : memref<8x32xf32, #tpu.memory_space<vmem>>, vector<8x32xf32>,
    %c1_i32 = arith.constant 1 : i32
    %334 = arith.cmpi eq, %arg1, %c1_i32 : i32
    %335 = arith.extui %334 : i1 to i32
    %c0_i32_129 = arith.constant 0 : i32
    %336 = arith.cmpi ne, %335, %c0_i32_129 : i32
    scf.if %336 {
      %c0_130 = arith.constant 0 : index
      %c0_131 = arith.constant 0 : index
      %337 = vector.load %arg29[%c0_130, %c0_131] : memref<32x16xf32, #tpu.memory_space<vmem>>, vector<32x16xf32>
      %cst_132 = arith.constant dense<0.000000e+00> : vector<8x16xf32>
      %338 = tpu.matmul %332, %337, %cst_132 {dimension_numbers = #tpu.dot_dimension_numbers<[1], [0], [0], [1], [0, 0, 1, 1], [], []>} : vector<8x32xf32>, vector<32x16xf32>, vector<8x16xf32> -> vector<8x16xf32>
      %c0_133 = arith.constant 0 : index
      %c0_134 = arith.constant 0 : index
      %339 = vector.load %arg30[%c0_133, %c0_134] : memref<1x16xf32, #tpu.memory_space<vmem>>, vector<1x16xf32>
      %340 = vector.broadcast %339 : vector<1x16xf32> to vector<8x16xf32>
      %341 = arith.addf %338, %340 : vector<8x16xf32>
      %c0_135 = arith.constant 0 : index
      %c0_136 = arith.constant 0 : index
      %c0_137 = arith.constant 0 : index
      %342 = vector.load %arg31[%c0_135, %c0_136, %c0_137] : memref<1x8x16xf32, #tpu.memory_space<vmem>>, vector<1x8x16xf32>
      %343 = vector.shape_cast %342 : vector<1x8x16xf32> to vector<8x16xf32>
      %344 = vector.shape_cast %341 : vector<8x16xf32> to vector<1x8x16xf32>
      tpu.vector_store %arg31[%c0_135, %c0_136, %c0_137], %344 {strides = array<i32>} : memref<1x8x16xf32, #tpu.memory_space<vmem>>, vector<1x8x16xf32>,
    } else {
    }
    return
  }
  func.func @transform_0(%arg0: i32, %arg1: i32) -> (i32, i32, i32) {
    %c0_i32 = arith.constant 0 : i32
    %c0_i32_0 = arith.constant 0 : i32
    %c0_i32_1 = arith.constant 0 : i32
    return %arg0, %c0_i32, %c0_i32_0 : i32, i32, i32
  }
  func.func @transform_1(%arg0: i32, %arg1: i32) -> (i32, i32, i32) {
    %c0_i32 = arith.constant 0 : i32
    %c0_i32_0 = arith.constant 0 : i32
    %c0_i32_1 = arith.constant 0 : i32
    return %arg0, %c0_i32, %c0_i32_0 : i32, i32, i32
  }
  func.func @transform_2(%arg0: i32, %arg1: i32) -> (i32, i32, i32) {
    %c0_i32 = arith.constant 0 : i32
    %c0_i32_0 = arith.constant 0 : i32
    %c0_i32_1 = arith.constant 0 : i32
    return %arg0, %c0_i32, %c0_i32_0 : i32, i32, i32
  }
  func.func @transform_3(%arg0: i32, %arg1: i32) -> (i32, i32) {
    %c0_i32 = arith.constant 0 : i32
    %c0_i32_0 = arith.constant 0 : i32
    %c0_i32_1 = arith.constant 0 : i32
    return %c0_i32, %c0_i32_0 : i32, i32
  }
  func.func @transform_4(%arg0: i32, %arg1: i32) -> (i32, i32) {
    %c0_i32 = arith.constant 0 : i32
    %c0_i32_0 = arith.constant 0 : i32
    %c0_i32_1 = arith.constant 0 : i32
    return %c0_i32, %c0_i32_0 : i32, i32
  }
  func.func @transform_5(%arg0: i32, %arg1: i32) -> (i32, i32) {
    %c0_i32 = arith.constant 0 : i32
    %c0_i32_0 = arith.constant 0 : i32
    %c0_i32_1 = arith.constant 0 : i32
    return %c0_i32, %c0_i32_0 : i32, i32
  }
  func.func @transform_6(%arg0: i32, %arg1: i32) -> (i32, i32) {
    %c0_i32 = arith.constant 0 : i32
    %c0_i32_0 = arith.constant 0 : i32
    %c0_i32_1 = arith.constant 0 : i32
    return %c0_i32, %c0_i32_0 : i32, i32
  }
  func.func @transform_7(%arg0: i32, %arg1: i32) -> (i32, i32) {
    %c0_i32 = arith.constant 0 : i32
    %c0_i32_0 = arith.constant 0 : i32
    %c0_i32_1 = arith.constant 0 : i32
    return %c0_i32, %c0_i32_0 : i32, i32
  }
  func.func @transform_8(%arg0: i32, %arg1: i32) -> (i32, i32) {
    %c0_i32 = arith.constant 0 : i32
    %c0_i32_0 = arith.constant 0 : i32
    %c0_i32_1 = arith.constant 0 : i32
    return %c0_i32, %c0_i32_0 : i32, i32
  }
  func.func @transform_9(%arg0: i32, %arg1: i32) -> (i32, i32) {
    %c0_i32 = arith.constant 0 : i32
    %c0_i32_0 = arith.constant 0 : i32
    %c0_i32_1 = arith.constant 0 : i32
    return %c0_i32, %c0_i32_0 : i32, i32
  }
  func.func @transform_10(%arg0: i32, %arg1: i32) -> (i32, i32) {
    %c0_i32 = arith.constant 0 : i32
    %c0_i32_0 = arith.constant 0 : i32
    %c0_i32_1 = arith.constant 0 : i32
    return %c0_i32, %c0_i32_0 : i32, i32
  }
  func.func @transform_11(%arg0: i32, %arg1: i32) -> (i32, i32) {
    %c0_i32 = arith.constant 0 : i32
    %c0_i32_0 = arith.constant 0 : i32
    %c0_i32_1 = arith.constant 0 : i32
    return %c0_i32, %c0_i32_0 : i32, i32
  }
  func.func @transform_12(%arg0: i32, %arg1: i32) -> (i32, i32) {
    %c0_i32 = arith.constant 0 : i32
    %c0_i32_0 = arith.constant 0 : i32
    %c0_i32_1 = arith.constant 0 : i32
    return %c0_i32, %c0_i32_0 : i32, i32
  }
  func.func @transform_13(%arg0: i32, %arg1: i32) -> (i32, i32, i32) {
    %c0_i32 = arith.constant 0 : i32
    %c0_i32_0 = arith.constant 0 : i32
    %c0_i32_1 = arith.constant 0 : i32
    return %arg1, %c0_i32, %c0_i32_0 : i32, i32, i32
  }
  func.func @transform_14(%arg0: i32, %arg1: i32) -> (i32, i32, i32) {
    %c0_i32 = arith.constant 0 : i32
    %c0_i32_0 = arith.constant 0 : i32
    %c0_i32_1 = arith.constant 0 : i32
    return %arg1, %c0_i32, %c0_i32_0 : i32, i32, i32
  }
  func.func @transform_15(%arg0: i32, %arg1: i32) -> (i32, i32, i32) {
    %c0_i32 = arith.constant 0 : i32
    %c0_i32_0 = arith.constant 0 : i32
    %c0_i32_1 = arith.constant 0 : i32
    return %arg1, %c0_i32, %c0_i32_0 : i32, i32, i32
  }
  func.func @transform_16(%arg0: i32, %arg1: i32) -> (i32, i32, i32) {
    %c0_i32 = arith.constant 0 : i32
    %c0_i32_0 = arith.constant 0 : i32
    %c0_i32_1 = arith.constant 0 : i32
    return %arg1, %c0_i32, %c0_i32_0 : i32, i32, i32
  }
  func.func @transform_17(%arg0: i32, %arg1: i32) -> (i32, i32, i32) {
    %c0_i32 = arith.constant 0 : i32
    %c0_i32_0 = arith.constant 0 : i32
    %c0_i32_1 = arith.constant 0 : i32
    return %arg1, %c0_i32, %c0_i32_0 : i32, i32, i32
  }
  func.func @transform_18(%arg0: i32, %arg1: i32) -> (i32, i32, i32) {
    %c0_i32 = arith.constant 0 : i32
    %c0_i32_0 = arith.constant 0 : i32
    %c0_i32_1 = arith.constant 0 : i32
    return %arg1, %c0_i32, %c0_i32_0 : i32, i32, i32
  }
  func.func @transform_19(%arg0: i32, %arg1: i32) -> (i32, i32, i32) {
    %c0_i32 = arith.constant 0 : i32
    %c0_i32_0 = arith.constant 0 : i32
    %c0_i32_1 = arith.constant 0 : i32
    return %arg1, %c0_i32, %c0_i32_0 : i32, i32, i32
  }
  func.func @transform_20(%arg0: i32, %arg1: i32) -> (i32, i32, i32) {
    %c0_i32 = arith.constant 0 : i32
    %c0_i32_0 = arith.constant 0 : i32
    %c0_i32_1 = arith.constant 0 : i32
    return %arg1, %c0_i32, %c0_i32_0 : i32, i32, i32
  }
  func.func @transform_21(%arg0: i32, %arg1: i32) -> (i32, i32, i32) {
    %c0_i32 = arith.constant 0 : i32
    %c0_i32_0 = arith.constant 0 : i32
    %c0_i32_1 = arith.constant 0 : i32
    return %arg1, %c0_i32, %c0_i32_0 : i32, i32, i32
  }
  func.func @transform_22(%arg0: i32, %arg1: i32) -> (i32, i32, i32) {
    %c0_i32 = arith.constant 0 : i32
    %c0_i32_0 = arith.constant 0 : i32
    %c0_i32_1 = arith.constant 0 : i32
    return %arg1, %c0_i32, %c0_i32_0 : i32, i32, i32
  }
  func.func @transform_23(%arg0: i32, %arg1: i32) -> (i32, i32, i32) {
    %c0_i32 = arith.constant 0 : i32
    %c0_i32_0 = arith.constant 0 : i32
    %c0_i32_1 = arith.constant 0 : i32
    return %arg1, %c0_i32, %c0_i32_0 : i32, i32, i32
  }
  func.func @transform_24(%arg0: i32, %arg1: i32) -> (i32, i32, i32) {
    %c0_i32 = arith.constant 0 : i32
    %c0_i32_0 = arith.constant 0 : i32
    %c0_i32_1 = arith.constant 0 : i32
    return %arg1, %c0_i32, %c0_i32_0 : i32, i32, i32
  }
  func.func @transform_25(%arg0: i32, %arg1: i32) -> (i32, i32, i32) {
    %c0_i32 = arith.constant 0 : i32
    %c0_i32_0 = arith.constant 0 : i32
    %c0_i32_1 = arith.constant 0 : i32
    return %arg1, %c0_i32, %c0_i32_0 : i32, i32, i32
  }
  func.func @transform_26(%arg0: i32, %arg1: i32) -> (i32, i32, i32) {
    %c0_i32 = arith.constant 0 : i32
    %c0_i32_0 = arith.constant 0 : i32
    %c0_i32_1 = arith.constant 0 : i32
    return %arg1, %c0_i32, %c0_i32_0 : i32, i32, i32
  }
  func.func @transform_27(%arg0: i32, %arg1: i32) -> (i32, i32) {
    %c0_i32 = arith.constant 0 : i32
    %c0_i32_0 = arith.constant 0 : i32
    %c0_i32_1 = arith.constant 0 : i32
    return %c0_i32, %c0_i32_0 : i32, i32
  }
  func.func @transform_28(%arg0: i32, %arg1: i32) -> (i32, i32) {
    %c0_i32 = arith.constant 0 : i32
    %c0_i32_0 = arith.constant 0 : i32
    %c0_i32_1 = arith.constant 0 : i32
    return %c0_i32, %c0_i32_0 : i32, i32
  }
  func.func @transform_29(%arg0: i32, %arg1: i32) -> (i32, i32, i32) {
    %c0_i32 = arith.constant 0 : i32
    %c0_i32_0 = arith.constant 0 : i32
    %c0_i32_1 = arith.constant 0 : i32
    return %arg0, %c0_i32, %c0_i32_0 : i32, i32, i32
  }
}

</mosaic_0001>

<llo_original>
// kernel: _lambda_.2
$region0: #{_lambda_.2}
  #allocation0 [shape = 'u32[]', space=smem, size = 0x4, offset = 0x4, fixed_abs, tag = 'smem constant byte address 0x4 - core index']
  #allocation1 [shape = 'u32[144,128]{1,0:T(1,128)}', space=vmem, size = 0x12000, scoped, tag = 'internal scratch']
  #allocation2 [shape = 'f32[10,32]{1,0:T(8,128)}', space=vmem, size = 0x2000, scoped, tag = 'scratch operand']
  %s0 = inlined_call_operand.vmem [shape: f32[2,10,24], index: 0, kind: input, shape index: {}]
  %s1 = inlined_call_operand.vmem [shape: f32[24,32], index: 1, kind: input, shape index: {}]
  %s2 = inlined_call_operand.vmem [shape: f32[1,32], index: 2, kind: input, shape index: {}]
  %s3 = inlined_call_operand.vmem [shape: f32[10,32], index: 3, kind: input, shape index: {}]
  %s4 = inlined_call_operand.vmem [shape: f32[10,32], index: 4, kind: input, shape index: {}]
  %s5 = inlined_call_operand.vmem [shape: f32[32,32], index: 5, kind: input, shape index: {}]
  %s6 = inlined_call_operand.vmem [shape: f32[2,2,32], index: 6, kind: input, shape index: {}]
  %s7 = inlined_call_operand.vmem [shape: f32[2,2,32], index: 7, kind: input, shape index: {}]
  %s8 = inlined_call_operand.vmem [shape: f32[2,32,64], index: 8, kind: input, shape index: {}]
  %s9 = inlined_call_operand.vmem [shape: f32[2,32,32], index: 9, kind: input, shape index: {}]
  %s10 = inlined_call_operand.vmem [shape: f32[2,32,32], index: 10, kind: input, shape index: {}]
  %s11 = inlined_call_operand.vmem [shape: f32[2,1,128], index: 11, kind: input, shape index: {}]
  %s12 = inlined_call_operand.vmem [shape: f32[2,32,128], index: 12, kind: input, shape index: {}]
  %s13 = inlined_call_operand.vmem [shape: f32[2,1,128], index: 13, kind: input, shape index: {}]
  %s14 = inlined_call_operand.vmem [shape: f32[2,128,32], index: 14, kind: input, shape index: {}]
  %s15 = inlined_call_operand.vmem [shape: f32[2,1,32], index: 15, kind: input, shape index: {}]
  %s16 = inlined_call_operand.vmem [shape: f32[2,10,32], index: 16, kind: output, shape index: {}]
  %s17 = sld [smem:[#allocation0]]
  $region105: #{_lambda_.2} parent=0
    _
  %s19 = ssub.s32 1, %s17
  %s20 = scalar_select 0, %s19, %s17
  loop: start=0, step=1, limit=6
  $region2: #{_lambda_.2} parent=0 // loop_pre_header
    _
  $region3: #{_lambda_.2} parent=0 // loop_header
    %s22 = sphi 0, %s26
    %p23 = scmp.ge.s32.totalorder %s22, 6
    %s29 = sphi 0, %s41
    %s30 = sphi 0, %s37
    %s31 = sphi 0, %s29
    %s32 = sphi 0, %s30
    %s33 = sphi 0, %s31
    %s34 = sphi 0, %s32
    %s44 = sphi 0, %s46
    %s47 = sphi 0, %s44
    %s48 = sphi 0, %s47
    %s64 = sphi 0, %s48
    %s68 = sphi 0, %s68
    %s70 = sphi 0, %s68
    %s71 = sphi 0, %s70
    %s85 = sphi 0, %s71
    %s89 = sphi 0, %s89
    %s91 = sphi 0, %s89
    %s92 = sphi 0, %s91
    %s106 = sphi 0, %s92
    %s110 = sphi 0, %s110
    %s112 = sphi 0, %s110
    %s113 = sphi 0, %s112
    %s127 = sphi 0, %s113
    %s131 = sphi 0, %s131
    %s133 = sphi 0, %s131
    %s134 = sphi 0, %s133
    %s148 = sphi 0, %s134
    %s152 = sphi 0, %s152
    %s154 = sphi 0, %s152
    %s155 = sphi 0, %s154
    %s169 = sphi 0, %s155
    %s175 = sphi 0, %s177
    %s178 = sphi 0, %s175
    %s179 = sphi 0, %s178
    %s195 = sphi 0, %s179
    %s201 = sphi 0, %s203
    %s204 = sphi 0, %s201
    %s205 = sphi 0, %s204
    %s221 = sphi 0, %s205
    %s227 = sphi 0, %s229
    %s230 = sphi 0, %s227
    %s231 = sphi 0, %s230
    %s247 = sphi 0, %s231
    %s253 = sphi 0, %s255
    %s256 = sphi 0, %s253
    %s257 = sphi 0, %s256
    %s273 = sphi 0, %s257
    %s279 = sphi 0, %s281
    %s282 = sphi 0, %s279
    %s283 = sphi 0, %s282
    %s299 = sphi 0, %s283
    %s305 = sphi 0, %s307
    %s308 = sphi 0, %s305
    %s309 = sphi 0, %s308
    %s325 = sphi 0, %s309
    %s331 = sphi 0, %s333
    %s334 = sphi 0, %s331
    %s335 = sphi 0, %s334
    %s351 = sphi 0, %s335
    %s357 = sphi 0, %s359
    %s360 = sphi 0, %s357
    %s361 = sphi 0, %s360
    %s377 = sphi 0, %s361
    %s383 = sphi 0, %s385
    %s386 = sphi 0, %s383
    %s387 = sphi 0, %s386
    %s403 = sphi 0, %s387
    %s409 = sphi 0, %s411
    %s412 = sphi 0, %s409
    %s413 = sphi 0, %s412
    %s429 = sphi 0, %s413
    %s435 = sphi 0, %s437
    %s438 = sphi 0, %s435
    %s439 = sphi 0, %s438
    %s455 = sphi 0, %s439
  $region4: #{_lambda_.2} parent=0 // loop_header_branch
    %25 = sbr.rel (%p23) target = $region8
  $region5: #{_lambda_.2} parent=0 // loop_body
    %s27 = ssub.s32 %s22, 1
    %s28 = ssub.s32 %s22, 2
    %s35 = sadd.s32 1, %s30
    %p36 = scmp.ge.s32.totalorder %s35, 2
    %s37 = scalar_select %p36, 0, %s35
    %s38 = sadd.s32 1, %s29
    %s39 = scalar_select %p36, %s38, %s29
    %p40 = scmp.ge.s32.totalorder %s39, 2
    %s41 = scalar_select %p40, 0, %s39
    %s42 = ssub.s32 %s29, %s41
    %p43 = scmp.eq.s32.totalorder %s42, 0
    %s45 = sadd.s32 %s44, 1
    %s46 = scalar_select %p43, %s44, %s45
    %p49 = pneg %p43
    %p50 = scmp.eq.s32.totalorder %s22, 3
    %p51 = por %p49, %p50
    %p52 = scmp.ne.s32.totalorder %s44, %s47
    %p53 = scmp.eq.s32.totalorder %s22, 0
    %p54 = por %p52, %p53
    %p55 = scmp.ne.s32.totalorder %s44, %s47
    %p56 = scmp.eq.s32.totalorder %s27, 3
    %p57 = por %p55, %p56
    %p58 = scmp.ne.s32.totalorder %s47, %s48
    %p59 = scmp.eq.s32.totalorder %s27, 0
    %p60 = por %p58, %p59
    %p61 = scmp.ne.s32.totalorder %s47, %s48
    %p62 = scmp.eq.s32.totalorder %s28, 3
    %p63 = por %p61, %p62
    %p65 = scmp.ne.s32.totalorder %s48, %s64
    %p66 = scmp.eq.s32.totalorder %s28, 0
    %p67 = por %p65, %p66
    %s69 = sadd.s32 %s68, 1
    %p72 = scmp.eq.s32.totalorder %s22, 3
    %p73 = scmp.ne.s32.totalorder %s68, %s70
    %p74 = scmp.eq.s32.totalorder %s22, 0
    %p75 = por %p73, %p74
    %p76 = scmp.ne.s32.totalorder %s68, %s70
    %p77 = scmp.eq.s32.totalorder %s27, 3
    %p78 = por %p76, %p77
    %p79 = scmp.ne.s32.totalorder %s70, %s71
    %p80 = scmp.eq.s32.totalorder %s27, 0
    %p81 = por %p79, %p80
    %p82 = scmp.ne.s32.totalorder %s70, %s71
    %p83 = scmp.eq.s32.totalorder %s28, 3
    %p84 = por %p82, %p83
    %p86 = scmp.ne.s32.totalorder %s71, %s85
    %p87 = scmp.eq.s32.totalorder %s28, 0
    %p88 = por %p86, %p87
    %s90 = sadd.s32 %s89, 1
    %p93 = scmp.eq.s32.totalorder %s22, 3
    %p94 = scmp.ne.s32.totalorder %s89, %s91
    %p95 = scmp.eq.s32.totalorder %s22, 0
    %p96 = por %p94, %p95
    %p97 = scmp.ne.s32.totalorder %s89, %s91
    %p98 = scmp.eq.s32.totalorder %s27, 3
    %p99 = por %p97, %p98
    %p100 = scmp.ne.s32.totalorder %s91, %s92
    %p101 = scmp.eq.s32.totalorder %s27, 0
    %p102 = por %p100, %p101
    %p103 = scmp.ne.s32.totalorder %s91, %s92
    %p104 = scmp.eq.s32.totalorder %s28, 3
    %p105 = por %p103, %p104
    %p107 = scmp.ne.s32.totalorder %s92, %s106
    %p108 = scmp.eq.s32.totalorder %s28, 0
    %p109 = por %p107, %p108
    %s111 = sadd.s32 %s110, 1
    %p114 = scmp.eq.s32.totalorder %s22, 3
    %p115 = scmp.ne.s32.totalorder %s110, %s112
    %p116 = scmp.eq.s32.totalorder %s22, 0
    %p117 = por %p115, %p116
    %p118 = scmp.ne.s32.totalorder %s110, %s112
    %p119 = scmp.eq.s32.totalorder %s27, 3
    %p120 = por %p118, %p119
    %p121 = scmp.ne.s32.totalorder %s112, %s113
    %p122 = scmp.eq.s32.totalorder %s27, 0
    %p123 = por %p121, %p122
    %p124 = scmp.ne.s32.totalorder %s112, %s113
    %p125 = scmp.eq.s32.totalorder %s28, 3
    %p126 = por %p124, %p125
    %p128 = scmp.ne.s32.totalorder %s113, %s127
    %p129 = scmp.eq.s32.totalorder %s28, 0
    %p130 = por %p128, %p129
    %s132 = sadd.s32 %s131, 1
    %p135 = scmp.eq.s32.totalorder %s22, 3
    %p136 = scmp.ne.s32.totalorder %s131, %s133
    %p137 = scmp.eq.s32.totalorder %s22, 0
    %p138 = por %p136, %p137
    %p139 = scmp.ne.s32.totalorder %s131, %s133
    %p140 = scmp.eq.s32.totalorder %s27, 3
    %p141 = por %p139, %p140
    %p142 = scmp.ne.s32.totalorder %s133, %s134
    %p143 = scmp.eq.s32.totalorder %s27, 0
    %p144 = por %p142, %p143
    %p145 = scmp.ne.s32.totalorder %s133, %s134
    %p146 = scmp.eq.s32.totalorder %s28, 3
    %p147 = por %p145, %p146
    %p149 = scmp.ne.s32.totalorder %s134, %s148
    %p150 = scmp.eq.s32.totalorder %s28, 0
    %p151 = por %p149, %p150
    %s153 = sadd.s32 %s152, 1
    %p156 = scmp.eq.s32.totalorder %s22, 3
    %p157 = scmp.ne.s32.totalorder %s152, %s154
    %p158 = scmp.eq.s32.totalorder %s22, 0
    %p159 = por %p157, %p158
    %p160 = scmp.ne.s32.totalorder %s152, %s154
    %p161 = scmp.eq.s32.totalorder %s27, 3
    %p162 = por %p160, %p161
    %p163 = scmp.ne.s32.totalorder %s154, %s155
    %p164 = scmp.eq.s32.totalorder %s27, 0
    %p165 = por %p163, %p164
    %p166 = scmp.ne.s32.totalorder %s154, %s155
    %p167 = scmp.eq.s32.totalorder %s28, 3
    %p168 = por %p166, %p167
    %p170 = scmp.ne.s32.totalorder %s155, %s169
    %p171 = scmp.eq.s32.totalorder %s28, 0
    %p172 = por %p170, %p171
    %s173 = ssub.s32 %s30, %s37
    %p174 = scmp.eq.s32.totalorder %s173, 0
    %s176 = sadd.s32 %s175, 1
    %s177 = scalar_select %p174, %s175, %s176
    %p180 = pneg %p174
    %p181 = scmp.eq.s32.totalorder %s22, 3
    %p182 = por %p180, %p181
    %p183 = scmp.ne.s32.totalorder %s175, %s178
    %p184 = scmp.eq.s32.totalorder %s22, 0
    %p185 = por %p183, %p184
    %p186 = scmp.ne.s32.totalorder %s175, %s178
    %p187 = scmp.eq.s32.totalorder %s27, 3
    %p188 = por %p186, %p187
    %p189 = scmp.ne.s32.totalorder %s178, %s179
    %p190 = scmp.eq.s32.totalorder %s27, 0
    %p191 = por %p189, %p190
    %p192 = scmp.ne.s32.totalorder %s178, %s179
    %p193 = scmp.eq.s32.totalorder %s28, 3
    %p194 = por %p192, %p193
    %p196 = scmp.ne.s32.totalorder %s179, %s195
    %p197 = scmp.eq.s32.totalorder %s28, 0
    %p198 = por %p196, %p197
    %s199 = ssub.s32 %s30, %s37
    %p200 = scmp.eq.s32.totalorder %s199, 0
    %s202 = sadd.s32 %s201, 1
    %s203 = scalar_select %p200, %s201, %s202
    %p206 = pneg %p200
    %p207 = scmp.eq.s32.totalorder %s22, 3
    %p208 = por %p206, %p207
    %p209 = scmp.ne.s32.totalorder %s201, %s204
    %p210 = scmp.eq.s32.totalorder %s22, 0
    %p211 = por %p209, %p210
    %p212 = scmp.ne.s32.totalorder %s201, %s204
    %p213 = scmp.eq.s32.totalorder %s27, 3
    %p214 = por %p212, %p213
    %p215 = scmp.ne.s32.totalorder %s204, %s205
    %p216 = scmp.eq.s32.totalorder %s27, 0
    %p217 = por %p215, %p216
    %p218 = scmp.ne.s32.totalorder %s204, %s205
    %p219 = scmp.eq.s32.totalorder %s28, 3
    %p220 = por %p218, %p219
    %p222 = scmp.ne.s32.totalorder %s205, %s221
    %p223 = scmp.eq.s32.totalorder %s28, 0
    %p224 = por %p222, %p223
    %s225 = ssub.s32 %s30, %s37
    %p226 = scmp.eq.s32.totalorder %s225, 0
    %s228 = sadd.s32 %s227, 1
    %s229 = scalar_select %p226, %s227, %s228
    %p232 = pneg %p226
    %p233 = scmp.eq.s32.totalorder %s22, 3
    %p234 = por %p232, %p233
    %p235 = scmp.ne.s32.totalorder %s227, %s230
    %p236 = scmp.eq.s32.totalorder %s22, 0
    %p237 = por %p235, %p236
    %p238 = scmp.ne.s32.totalorder %s227, %s230
    %p239 = scmp.eq.s32.totalorder %s27, 3
    %p240 = por %p238, %p239
    %p241 = scmp.ne.s32.totalorder %s230, %s231
    %p242 = scmp.eq.s32.totalorder %s27, 0
    %p243 = por %p241, %p242
    %p244 = scmp.ne.s32.totalorder %s230, %s231
    %p245 = scmp.eq.s32.totalorder %s28, 3
    %p246 = por %p244, %p245
    %p248 = scmp.ne.s32.totalorder %s231, %s247
    %p249 = scmp.eq.s32.totalorder %s28, 0
    %p250 = por %p248, %p249
    %s251 = ssub.s32 %s30, %s37
    %p252 = scmp.eq.s32.totalorder %s251, 0
    %s254 = sadd.s32 %s253, 1
    %s255 = scalar_select %p252, %s253, %s254
    %p258 = pneg %p252
    %p259 = scmp.eq.s32.totalorder %s22, 3
    %p260 = por %p258, %p259
    %p261 = scmp.ne.s32.totalorder %s253, %s256
    %p262 = scmp.eq.s32.totalorder %s22, 0
    %p263 = por %p261, %p262
    %p264 = scmp.ne.s32.totalorder %s253, %s256
    %p265 = scmp.eq.s32.totalorder %s27, 3
    %p266 = por %p264, %p265
    %p267 = scmp.ne.s32.totalorder %s256, %s257
    %p268 = scmp.eq.s32.totalorder %s27, 0
    %p269 = por %p267, %p268
    %p270 = scmp.ne.s32.totalorder %s256, %s257
    %p271 = scmp.eq.s32.totalorder %s28, 3
    %p272 = por %p270, %p271
    %p274 = scmp.ne.s32.totalorder %s257, %s273
    %p275 = scmp.eq.s32.totalorder %s28, 0
    %p276 = por %p274, %p275
    %s277 = ssub.s32 %s30, %s37
    %p278 = scmp.eq.s32.totalorder %s277, 0
    %s280 = sadd.s32 %s279, 1
    %s281 = scalar_select %p278, %s279, %s280
    %p284 = pneg %p278
    %p285 = scmp.eq.s32.totalorder %s22, 3
    %p286 = por %p284, %p285
    %p287 = scmp.ne.s32.totalorder %s279, %s282
    %p288 = scmp.eq.s32.totalorder %s22, 0
    %p289 = por %p287, %p288
    %p290 = scmp.ne.s32.totalorder %s279, %s282
    %p291 = scmp.eq.s32.totalorder %s27, 3
    %p292 = por %p290, %p291
    %p293 = scmp.ne.s32.totalorder %s282, %s283
    %p294 = scmp.eq.s32.totalorder %s27, 0
    %p295 = por %p293, %p294
    %p296 = scmp.ne.s32.totalorder %s282, %s283
    %p297 = scmp.eq.s32.totalorder %s28, 3
    %p298 = por %p296, %p297
    %p300 = scmp.ne.s32.totalorder %s283, %s299
    %p301 = scmp.eq.s32.totalorder %s28, 0
    %p302 = por %p300, %p301
    %s303 = ssub.s32 %s30, %s37
    %p304 = scmp.eq.s32.totalorder %s303, 0
    %s306 = sadd.s32 %s305, 1
    %s307 = scalar_select %p304, %s305, %s306
    %p310 = pneg %p304
    %p311 = scmp.eq.s32.totalorder %s22, 3
    %p312 = por %p310, %p311
    %p313 = scmp.ne.s32.totalorder %s305, %s308
    %p314 = scmp.eq.s32.totalorder %s22, 0
    %p315 = por %p313, %p314
    %p316 = scmp.ne.s32.totalorder %s305, %s308
    %p317 = scmp.eq.s32.totalorder %s27, 3
    %p318 = por %p316, %p317
    %p319 = scmp.ne.s32.totalorder %s308, %s309
    %p320 = scmp.eq.s32.totalorder %s27, 0
    %p321 = por %p319, %p320
    %p322 = scmp.ne.s32.totalorder %s308, %s309
    %p323 = scmp.eq.s32.totalorder %s28, 3
    %p324 = por %p322, %p323
    %p326 = scmp.ne.s32.totalorder %s309, %s325
    %p327 = scmp.eq.s32.totalorder %s28, 0
    %p328 = por %p326, %p327
    %s329 = ssub.s32 %s30, %s37
    %p330 = scmp.eq.s32.totalorder %s329, 0
    %s332 = sadd.s32 %s331, 1
    %s333 = scalar_select %p330, %s331, %s332
    %p336 = pneg %p330
    %p337 = scmp.eq.s32.totalorder %s22, 3
    %p338 = por %p336, %p337
    %p339 = scmp.ne.s32.totalorder %s331, %s334
    %p340 = scmp.eq.s32.totalorder %s22, 0
    %p341 = por %p339, %p340
    %p342 = scmp.ne.s32.totalorder %s331, %s334
    %p343 = scmp.eq.s32.totalorder %s27, 3
    %p344 = por %p342, %p343
    %p345 = scmp.ne.s32.totalorder %s334, %s335
    %p346 = scmp.eq.s32.totalorder %s27, 0
    %p347 = por %p345, %p346
    %p348 = scmp.ne.s32.totalorder %s334, %s335
    %p349 = scmp.eq.s32.totalorder %s28, 3
    %p350 = por %p348, %p349
    %p352 = scmp.ne.s32.totalorder %s335, %s351
    %p353 = scmp.eq.s32.totalorder %s28, 0
    %p354 = por %p352, %p353
    %s355 = ssub.s32 %s30, %s37
    %p356 = scmp.eq.s32.totalorder %s355, 0
    %s358 = sadd.s32 %s357, 1
    %s359 = scalar_select %p356, %s357, %s358
    %p362 = pneg %p356
    %p363 = scmp.eq.s32.totalorder %s22, 3
    %p364 = por %p362, %p363
    %p365 = scmp.ne.s32.totalorder %s357, %s360
    %p366 = scmp.eq.s32.totalorder %s22, 0
    %p367 = por %p365, %p366
    %p368 = scmp.ne.s32.totalorder %s357, %s360
    %p369 = scmp.eq.s32.totalorder %s27, 3
    %p370 = por %p368, %p369
    %p371 = scmp.ne.s32.totalorder %s360, %s361
    %p372 = scmp.eq.s32.totalorder %s27, 0
    %p373 = por %p371, %p372
    %p374 = scmp.ne.s32.totalorder %s360, %s361
    %p375 = scmp.eq.s32.totalorder %s28, 3
    %p376 = por %p374, %p375
    %p378 = scmp.ne.s32.totalorder %s361, %s377
    %p379 = scmp.eq.s32.totalorder %s28, 0
    %p380 = por %p378, %p379
    %s381 = ssub.s32 %s30, %s37
    %p382 = scmp.eq.s32.totalorder %s381, 0
    %s384 = sadd.s32 %s383, 1
    %s385 = scalar_select %p382, %s383, %s384
    %p388 = pneg %p382
    %p389 = scmp.eq.s32.totalorder %s22, 3
    %p390 = por %p388, %p389
    %p391 = scmp.ne.s32.totalorder %s383, %s386
    %p392 = scmp.eq.s32.totalorder %s22, 0
    %p393 = por %p391, %p392
    %p394 = scmp.ne.s32.totalorder %s383, %s386
    %p395 = scmp.eq.s32.totalorder %s27, 3
    %p396 = por %p394, %p395
    %p397 = scmp.ne.s32.totalorder %s386, %s387
    %p398 = scmp.eq.s32.totalorder %s27, 0
    %p399 = por %p397, %p398
    %p400 = scmp.ne.s32.totalorder %s386, %s387
    %p401 = scmp.eq.s32.totalorder %s28, 3
    %p402 = por %p400, %p401
    %p404 = scmp.ne.s32.totalorder %s387, %s403
    %p405 = scmp.eq.s32.totalorder %s28, 0
    %p406 = por %p404, %p405
    %s407 = ssub.s32 %s30, %s37
    %p408 = scmp.eq.s32.totalorder %s407, 0
    %s410 = sadd.s32 %s409, 1
    %s411 = scalar_select %p408, %s409, %s410
    %p414 = pneg %p408
    %p415 = scmp.eq.s32.totalorder %s22, 3
    %p416 = por %p414, %p415
    %p417 = scmp.ne.s32.totalorder %s409, %s412
    %p418 = scmp.eq.s32.totalorder %s22, 0
    %p419 = por %p417, %p418
    %p420 = scmp.ne.s32.totalorder %s409, %s412
    %p421 = scmp.eq.s32.totalorder %s27, 3
    %p422 = por %p420, %p421
    %p423 = scmp.ne.s32.totalorder %s412, %s413
    %p424 = scmp.eq.s32.totalorder %s27, 0
    %p425 = por %p423, %p424
    %p426 = scmp.ne.s32.totalorder %s412, %s413
    %p427 = scmp.eq.s32.totalorder %s28, 3
    %p428 = por %p426, %p427
    %p430 = scmp.ne.s32.totalorder %s413, %s429
    %p431 = scmp.eq.s32.totalorder %s28, 0
    %p432 = por %p430, %p431
    %s433 = ssub.s32 %s29, %s41
    %p434 = scmp.eq.s32.totalorder %s433, 0
    %s436 = sadd.s32 %s435, 1
    %s437 = scalar_select %p434, %s435, %s436
    %p440 = pneg %p434
    %p441 = scmp.eq.s32.totalorder %s22, 3
    %p442 = por %p440, %p441
    %p443 = scmp.ne.s32.totalorder %s435, %s438
    %p444 = scmp.eq.s32.totalorder %s22, 0
    %p445 = por %p443, %p444
    %p446 = scmp.ne.s32.totalorder %s435, %s438
    %p447 = scmp.eq.s32.totalorder %s27, 3
    %p448 = por %p446, %p447
    %p449 = scmp.ne.s32.totalorder %s438, %s439
    %p450 = scmp.eq.s32.totalorder %s27, 0
    %p451 = por %p449, %p450
    %p452 = scmp.ne.s32.totalorder %s438, %s439
    %p453 = scmp.eq.s32.totalorder %s28, 3
    %p454 = por %p452, %p453
    %p456 = scmp.ne.s32.totalorder %s439, %s455
    %p457 = scmp.eq.s32.totalorder %s28, 0
    %p458 = por %p456, %p457
    %p459 = scmp.le.s32.totalorder 1, %s22
    %p460 = scmp.lt.s32.totalorder %s22, 5
    %p461 = pnand %p459, %p460
    %p462 = pneg %p461
    // Predicated region
    $region9: #{_lambda_.2} parent=5 // pred_check
      _
    $region10: #{_lambda_.2} parent=5 // pred_check_branch
      %464 = sbr.rel (%p461) target = $region12
    $region11: #{_lambda_.2} parent=5 // pred_region
      %s465 = ssub.s32 %s22, 1
      // Predicated region
      $region13: #{_lambda_.2} parent=11 // pred_check
        %p466 = pneg %p81
      $region14: #{_lambda_.2} parent=11 // pred_check_branch
        %468 = sbr.rel (%p466) target = $region16
      $region15: #{_lambda_.2} parent=11 // pred_region
        _
      $region16: #{_lambda_.2} parent=11 // pred_fallthru
        _
      // Predicated region
      $region17: #{_lambda_.2} parent=11 // pred_check
        %p469 = pneg %p102
      $region18: #{_lambda_.2} parent=11 // pred_check_branch
        %471 = sbr.rel (%p469) target = $region20
      $region19: #{_lambda_.2} parent=11 // pred_region
        _
      $region20: #{_lambda_.2} parent=11 // pred_fallthru
        _
      // Predicated region
      $region21: #{_lambda_.2} parent=11 // pred_check
        %p472 = pneg %p123
      $region22: #{_lambda_.2} parent=11 // pred_check_branch
        %474 = sbr.rel (%p472) target = $region24
      $region23: #{_lambda_.2} parent=11 // pred_region
        _
      $region24: #{_lambda_.2} parent=11 // pred_fallthru
        _
      // Predicated region
      $region25: #{_lambda_.2} parent=11 // pred_check
        %p475 = pneg %p144
      $region26: #{_lambda_.2} parent=11 // pred_check_branch
        %477 = sbr.rel (%p475) target = $region28
      $region27: #{_lambda_.2} parent=11 // pred_region
        _
      $region28: #{_lambda_.2} parent=11 // pred_fallthru
        _
      // Predicated region
      $region29: #{_lambda_.2} parent=11 // pred_check
        %p478 = pneg %p165
      $region30: #{_lambda_.2} parent=11 // pred_check_branch
        %480 = sbr.rel (%p478) target = $region32
      $region31: #{_lambda_.2} parent=11 // pred_region
        _
      $region32: #{_lambda_.2} parent=11 // pred_fallthru
        _
    $region12: #{_lambda_.2} parent=5 // pred_fallthru
      _
    %p481 = scmp.lt.s32.totalorder %s22, 4
    // Predicated region
    $region33: #{_lambda_.2} parent=5 // pred_check
      %p482 = pneg %p481
    $region34: #{_lambda_.2} parent=5 // pred_check_branch
      %484 = sbr.rel (%p482) target = $region36
    $region35: #{_lambda_.2} parent=5 // pred_region
      // Predicated region
      $region37: #{_lambda_.2} parent=35 // pred_check
        %p485 = pneg %p54
      $region38: #{_lambda_.2} parent=35 // pred_check_branch
        %487 = sbr.rel (%p485) target = $region40
      $region39: #{_lambda_.2} parent=35 // pred_region
        %p488 = scmp.lt.s32.totalorder %s29, 1
        %s489 = scalar_select %p488, %s29, 1
        %s490 = smul.addr %s489, 2
        %s491 = smul.addr %s490, 8
        %s492 = scalar_lea.vmem %s0, %s491
      $region40: #{_lambda_.2} parent=35 // pred_fallthru
        _
      // Predicated region
      $region41: #{_lambda_.2} parent=35 // pred_check
        %p493 = pneg %p185
      $region42: #{_lambda_.2} parent=35 // pred_check_branch
        %495 = sbr.rel (%p493) target = $region44
      $region43: #{_lambda_.2} parent=35 // pred_region
        %p496 = scmp.lt.s32.totalorder %s30, 1
        %s497 = scalar_select %p496, %s30, 1
        %s498 = smul.addr %s497, 2
        %s499 = scalar_lea.vmem %s6, %s498
      $region44: #{_lambda_.2} parent=35 // pred_fallthru
        _
      // Predicated region
      $region45: #{_lambda_.2} parent=35 // pred_check
        %p500 = pneg %p211
      $region46: #{_lambda_.2} parent=35 // pred_check_branch
        %502 = sbr.rel (%p500) target = $region48
      $region47: #{_lambda_.2} parent=35 // pred_region
        %p503 = scmp.lt.s32.totalorder %s30, 1
        %s504 = scalar_select %p503, %s30, 1
        %s505 = smul.addr %s504, 2
        %s506 = scalar_lea.vmem %s7, %s505
      $region48: #{_lambda_.2} parent=35 // pred_fallthru
        _
      // Predicated region
      $region49: #{_lambda_.2} parent=35 // pred_check
        %p507 = pneg %p237
      $region50: #{_lambda_.2} parent=35 // pred_check_branch
        %509 = sbr.rel (%p507) target = $region52
      $region51: #{_lambda_.2} parent=35 // pred_region
        %p510 = scmp.lt.s32.totalorder %s30, 1
        %s511 = scalar_select %p510, %s30, 1
        %s512 = smul.addr %s511, 4
        %s513 = smul.addr %s512, 8
        %s514 = scalar_lea.vmem %s8, %s513
      $region52: #{_lambda_.2} parent=35 // pred_fallthru
        _
      // Predicated region
      $region53: #{_lambda_.2} parent=35 // pred_check
        %p515 = pneg %p263
      $region54: #{_lambda_.2} parent=35 // pred_check_branch
        %517 = sbr.rel (%p515) target = $region56
      $region55: #{_lambda_.2} parent=35 // pred_region
        %p518 = scmp.lt.s32.totalorder %s30, 1
        %s519 = scalar_select %p518, %s30, 1
        %s520 = smul.addr %s519, 4
        %s521 = smul.addr %s520, 8
        %s522 = scalar_lea.vmem %s9, %s521
      $region56: #{_lambda_.2} parent=35 // pred_fallthru
        _
      // Predicated region
      $region57: #{_lambda_.2} parent=35 // pred_check
        %p523 = pneg %p289
      $region58: #{_lambda_.2} parent=35 // pred_check_branch
        %525 = sbr.rel (%p523) target = $region60
      $region59: #{_lambda_.2} parent=35 // pred_region
        %p526 = scmp.lt.s32.totalorder %s30, 1
        %s527 = scalar_select %p526, %s30, 1
        %s528 = smul.addr %s527, 4
        %s529 = smul.addr %s528, 8
        %s530 = scalar_lea.vmem %s10, %s529
      $region60: #{_lambda_.2} parent=35 // pred_fallthru
        _
      // Predicated region
      $region61: #{_lambda_.2} parent=35 // pred_check
        %p531 = pneg %p315
      $region62: #{_lambda_.2} parent=35 // pred_check_branch
        %533 = sbr.rel (%p531) target = $region64
      $region63: #{_lambda_.2} parent=35 // pred_region
        %p534 = scmp.lt.s32.totalorder %s30, 1
        %s535 = scalar_select %p534, %s30, 1
        %s536 = scalar_lea.vmem %s11, %s535
      $region64: #{_lambda_.2} parent=35 // pred_fallthru
        _
      // Predicated region
      $region65: #{_lambda_.2} parent=35 // pred_check
        %p537 = pneg %p341
      $region66: #{_lambda_.2} parent=35 // pred_check_branch
        %539 = sbr.rel (%p537) target = $region68
      $region67: #{_lambda_.2} parent=35 // pred_region
        %p540 = scmp.lt.s32.totalorder %s30, 1
        %s541 = scalar_select %p540, %s30, 1
        %s542 = smul.addr %s541, 4
        %s543 = smul.addr %s542, 8
        %s544 = scalar_lea.vmem %s12, %s543
      $region68: #{_lambda_.2} parent=35 // pred_fallthru
        _
      // Predicated region
      $region69: #{_lambda_.2} parent=35 // pred_check
        %p545 = pneg %p367
      $region70: #{_lambda_.2} parent=35 // pred_check_branch
        %547 = sbr.rel (%p545) target = $region72
      $region71: #{_lambda_.2} parent=35 // pred_region
        %p548 = scmp.lt.s32.totalorder %s30, 1
        %s549 = scalar_select %p548, %s30, 1
        %s550 = scalar_lea.vmem %s13, %s549
      $region72: #{_lambda_.2} parent=35 // pred_fallthru
        _
      // Predicated region
      $region73: #{_lambda_.2} parent=35 // pred_check
        %p551 = pneg %p393
      $region74: #{_lambda_.2} parent=35 // pred_check_branch
        %553 = sbr.rel (%p551) target = $region76
      $region75: #{_lambda_.2} parent=35 // pred_region
        %p554 = scmp.lt.s32.totalorder %s30, 1
        %s555 = scalar_select %p554, %s30, 1
        %s556 = smul.addr %s555, 16
        %s557 = smul.addr %s556, 8
        %s558 = scalar_lea.vmem %s14, %s557
      $region76: #{_lambda_.2} parent=35 // pred_fallthru
        _
      // Predicated region
      $region77: #{_lambda_.2} parent=35 // pred_check
        %p559 = pneg %p419
      $region78: #{_lambda_.2} parent=35 // pred_check_branch
        %561 = sbr.rel (%p559) target = $region80
      $region79: #{_lambda_.2} parent=35 // pred_region
        %p562 = scmp.lt.s32.totalorder %s30, 1
        %s563 = scalar_select %p562, %s30, 1
        %s564 = scalar_lea.vmem %s15, %s563
      $region80: #{_lambda_.2} parent=35 // pred_fallthru
        _
    $region36: #{_lambda_.2} parent=5 // pred_fallthru
      _
    %p565 = scmp.le.s32.totalorder 1, %s22
    %p566 = scmp.lt.s32.totalorder %s22, 5
    %p567 = pnand %p565, %p566
    %p568 = pneg %p567
    // Predicated region
    $region81: #{_lambda_.2} parent=5 // pred_check
      _
    $region82: #{_lambda_.2} parent=5 // pred_check_branch
      %570 = sbr.rel (%p567) target = $region84
    $region83: #{_lambda_.2} parent=5 // pred_region
      %s571 = ssub.s32 %s22, 1
      %p572 = scmp.lt.s32.totalorder %s31, 1
      %s573 = scalar_select %p572, %s31, 1
      %s574 = smul.addr %s573, 2
      %s575 = smul.addr %s574, 8
      %s576 = scalar_lea.vmem %s0, %s575
      %p577 = pneg %p60
      %p578 = pneg %p57
      %p579 = pneg %p81
      %p580 = pneg %p78
      %p581 = pneg %p102
      %p582 = pneg %p99
      %p583 = pneg %p123
      %p584 = pneg %p120
      %p585 = pneg %p144
      %p586 = pneg %p141
      %p587 = pneg %p165
      %p588 = pneg %p162
      %p589 = scmp.lt.s32.totalorder %s32, 1
      %s590 = scalar_select %p589, %s32, 1
      %s591 = smul.addr %s590, 2
      %s592 = scalar_lea.vmem %s6, %s591
      %p593 = pneg %p191
      %p594 = pneg %p188
      %p595 = scmp.lt.s32.totalorder %s32, 1
      %s596 = scalar_select %p595, %s32, 1
      %s597 = smul.addr %s596, 2
      %s598 = scalar_lea.vmem %s7, %s597
      %p599 = pneg %p217
      %p600 = pneg %p214
      %p601 = scmp.lt.s32.totalorder %s32, 1
      %s602 = scalar_select %p601, %s32, 1
      %s603 = smul.addr %s602, 4
      %s604 = smul.addr %s603, 8
      %s605 = scalar_lea.vmem %s8, %s604
      %p606 = pneg %p243
      %p607 = pneg %p240
      %p608 = scmp.lt.s32.totalorder %s32, 1
      %s609 = scalar_select %p608, %s32, 1
      %s610 = smul.addr %s609, 4
      %s611 = smul.addr %s610, 8
      %s612 = scalar_lea.vmem %s9, %s611
      %p613 = pneg %p269
      %p614 = pneg %p266
      %p615 = scmp.lt.s32.totalorder %s32, 1
      %s616 = scalar_select %p615, %s32, 1
      %s617 = smul.addr %s616, 4
      %s618 = smul.addr %s617, 8
      %s619 = scalar_lea.vmem %s10, %s618
      %p620 = pneg %p295
      %p621 = pneg %p292
      %p622 = scmp.lt.s32.totalorder %s32, 1
      %s623 = scalar_select %p622, %s32, 1
      %s624 = scalar_lea.vmem %s11, %s623
      %p625 = pneg %p321
      %p626 = pneg %p318
      %p627 = scmp.lt.s32.totalorder %s32, 1
      %s628 = scalar_select %p627, %s32, 1
      %s629 = smul.addr %s628, 4
      %s630 = smul.addr %s629, 8
      %s631 = scalar_lea.vmem %s12, %s630
      %p632 = pneg %p347
      %p633 = pneg %p344
      %p634 = scmp.lt.s32.totalorder %s32, 1
      %s635 = scalar_select %p634, %s32, 1
      %s636 = scalar_lea.vmem %s13, %s635
      %p637 = pneg %p373
      %p638 = pneg %p370
      %p639 = scmp.lt.s32.totalorder %s32, 1
      %s640 = scalar_select %p639, %s32, 1
      %s641 = smul.addr %s640, 16
      %s642 = smul.addr %s641, 8
      %s643 = scalar_lea.vmem %s14, %s642
      %p644 = pneg %p399
      %p645 = pneg %p396
      %p646 = scmp.lt.s32.totalorder %s32, 1
      %s647 = scalar_select %p646, %s32, 1
      %s648 = scalar_lea.vmem %s15, %s647
      %p649 = pneg %p425
      %p650 = pneg %p422
      %p651 = pneg %p451
      %p652 = pneg %p448
      %p653 = scmp.lt.s32.totalorder %s31, 1
      %s654 = scalar_select %p653, %s31, 1
      %s655 = smul.addr %s654, 2
      %s656 = smul.addr %s655, 8
      %s657 = scalar_lea.vmem %s16, %s656
      %p658 = scmp.lt.s32.totalorder %s31, 1
      %s659 = scalar_select %p658, %s31, 1
      %s660 = smul.addr %s659, 2
      %s661 = smul.addr %s660, 8
      %s662 = scalar_lea.vmem %s0, %s661
      %p663 = scmp.lt.s32.totalorder %s32, 1
      %s664 = scalar_select %p663, %s32, 1
      %s665 = smul.addr %s664, 2
      %s666 = scalar_lea.vmem %s6, %s665
      %p667 = scmp.lt.s32.totalorder %s32, 1
      %s668 = scalar_select %p667, %s32, 1
      %s669 = smul.addr %s668, 2
      %s670 = scalar_lea.vmem %s7, %s669
      %p671 = scmp.lt.s32.totalorder %s32, 1
      %s672 = scalar_select %p671, %s32, 1
      %s673 = smul.addr %s672, 4
      %s674 = smul.addr %s673, 8
      %s675 = scalar_lea.vmem %s8, %s674
      %p676 = scmp.lt.s32.totalorder %s32, 1
      %s677 = scalar_select %p676, %s32, 1
      %s678 = smul.addr %s677, 4
      %s679 = smul.addr %s678, 8
      %s680 = scalar_lea.vmem %s9, %s679
      %p681 = scmp.lt.s32.totalorder %s32, 1
      %s682 = scalar_select %p681, %s32, 1
      %s683 = smul.addr %s682, 4
      %s684 = smul.addr %s683, 8
      %s685 = scalar_lea.vmem %s10, %s684
      %p686 = scmp.lt.s32.totalorder %s32, 1
      %s687 = scalar_select %p686, %s32, 1
      %s688 = scalar_lea.vmem %s11, %s687
      %p689 = scmp.lt.s32.totalorder %s32, 1
      %s690 = scalar_select %p689, %s32, 1
      %s691 = smul.addr %s690, 4
      %s692 = smul.addr %s691, 8
      %s693 = scalar_lea.vmem %s12, %s692
      %p694 = scmp.lt.s32.totalorder %s32, 1
      %s695 = scalar_select %p694, %s32, 1
      %s696 = scalar_lea.vmem %s13, %s695
      %p697 = scmp.lt.s32.totalorder %s32, 1
      %s698 = scalar_select %p697, %s32, 1
      %s699 = smul.addr %s698, 16
      %s700 = smul.addr %s699, 8
      %s701 = scalar_lea.vmem %s14, %s700
      %p702 = scmp.lt.s32.totalorder %s32, 1
      %s703 = scalar_select %p702, %s32, 1
      %s704 = scalar_lea.vmem %s15, %s703
      %p705 = scmp.lt.s32.totalorder %s31, 1
      %s706 = scalar_select %p705, %s31, 1
      %s707 = smul.addr %s706, 2
      %s708 = smul.addr %s707, 8
      %s709 = scalar_lea.vmem %s16, %s708
      %p710 = scmp.eq.s32.totalorder %s32, 0
      // Predicated region
      $region85: #{_lambda_.2} parent=83 // pred_check
        %p711 = pneg %p710
      $region86: #{_lambda_.2} parent=83 // pred_check_branch
        %713 = sbr.rel (%p711) target = $region88
      $region87: #{_lambda_.2} parent=83 // pred_region
        %v714 = vld [vmem:[%s662] sm:$0xff]
        %v715 = vld [vmem:[%s662 + $0x8] sm:$0x3]
        %v716 = vld [vmem:[%s1] sm:$0xff]
        %v717 = vld [vmem:[%s1 + $0x8] sm:$0xff]
        %v718 = vld [vmem:[%s1 + $0x10] sm:$0xff]
        %v719 = vld [vmem:[%s2] sm:$0x1]
        %v721 = vlaneseq
        %v722 = vshrl.u32 %v721, 7
        %v723 = vsub.s32 0, %v722
        %v724 = vrot.slane %v719, %v723
        %vm726 = vcmask 195584
        %v728 = vsel %vm726, %v714, 0
        %v731 = vsel %vm726, %v715, 0
        %733 = vmatprep.subr.mxu0 0.0
        %734 = vmatpush1.msra.mxu0 %v716
        %735 = vmatprep.subr.mxu0 0.0
        %736 = vmatpush1.msra.mxu0 %v717
        %737 = vmatprep.subr.mxu0 0.0
        %738 = vmatpush1.msra.mxu0 %v718
        %739 = vmatprep.subr.mxu0 0.0
        %740 = vmatpush1.msra.mxu0 0.0
        %741 = vmatprep.subr.mxu0 0.0
        %742 = vmatpush1.msra.mxu0 0.0
        %743 = vmatprep.subr.mxu0 0.0
        %744 = vmatpush1.msra.mxu0 0.0
        %745 = vmatprep.subr.mxu0 0.0
        %746 = vmatpush1.msra.mxu0 0.0
        %747 = vmatprep.subr.mxu0 0.0
        %748 = vmatpush1.msra.mxu0 0.0
        %749 = vmatprep.subr.mxu0 0.0
        %750 = vmatpush1.msra.mxu0 0.0
        %751 = vmatprep.subr.mxu0 0.0
        %752 = vmatpush1.msra.mxu0 0.0
        %753 = vmatprep.subr.mxu0 0.0
        %754 = vmatpush1.msra.mxu0 0.0
        %755 = vmatprep.subr.mxu0 0.0
        %756 = vmatpush1.msra.mxu0 0.0
        %757 = vmatprep.subr.mxu0 0.0
        %758 = vmatpush1.msra.mxu0 0.0
        %759 = vmatprep.subr.mxu0 0.0
        %760 = vmatpush1.msra.mxu0 0.0
        %761 = vmatprep.subr.mxu0 0.0
        %762 = vmatpush1.msra.mxu0 0.0
        %763 = vmatprep.subr.mxu0 0.0
        %764 = vmatpush1.msra.mxu0 0.0
        %765 = vmatprep.subr.mxu0 0.0
        %766 = vmatpush1.msra.mxu0 0.0
        %767 = vmatprep.subr.mxu0 0.0
        %768 = vmatpush1.msra.mxu0 0.0
        %769 = vmatprep.subr.mxu0 0.0
        %770 = vmatpush1.msra.mxu0 0.0
        %771 = vmatprep.subr.mxu0 0.0
        %772 = vmatpush1.msra.mxu0 0.0
        %773 = vmatprep.subr.mxu0 0.0
        %774 = vmatpush1.msra.mxu0 0.0
        %775 = vmatprep.subr.mxu0 0.0
        %776 = vmatpush1.msra.mxu0 0.0
        %777 = vmatprep.subr.mxu0 0.0
        %778 = vmatpush1.msra.mxu0 0.0
        %779 = vmatprep.subr.mxu0 0.0
        %780 = vmatpush1.msra.mxu0 0.0
        %781 = vmatprep.subr.mxu0 0.0
        %782 = vmatpush1.msra.mxu0 0.0
        %783 = vmatprep.subr.mxu0 0.0
        %784 = vmatpush1.msra.mxu0 0.0
        %785 = vmatprep.subr.mxu0 0.0
        %786 = vmatpush1.msra.mxu0 0.0
        %787 = vmatprep.subr.mxu0 0.0
        %788 = vmatpush1.msra.mxu0 0.0
        %789 = vmatprep.subr.mxu0 0.0
        %790 = vmatpush1.msra.mxu0 0.0
        %791 = vmatprep.subr.mxu0 0.0
        %792 = vmatpush1.msra.mxu0 0.0
        %793 = vmatprep.subr.mxu0 0.0
        %794 = vmatpush1.msra.mxu0 0.0
        %795 = vmatprep.subr.mxu0 0.0
        %796 = vmatpush1.msra.mxu0 0.0
        %797 = vmatprep.mubr.f32.mxu0 0.0
        %798 = vmatmul.mubr.f32.gmra.mrb[0].mxu0 %v728
        %v799 = vpop.f32.mrb[0].mxu0
        %v800 = vadd.f32 %v724, %v799
        %v801 = vpop.f32.mrb[0].mxu0
        %802 = vmatprep.mubr.f32.mxu0 0.0
        %803 = vmatmul.mubr.f32.gmra.mrb[0].mxu0 %v731
        %v804 = vpop.f32.mrb[0].mxu0
        %v805 = vadd.f32 %v724, %v804
        %v806 = vpop.f32.mrb[0].mxu0
        %807 = vdwg.mxu0
        %vm808 = vcmask 261120
        %809 = vst.msk [vmem:[#allocation2] sm:$0xff] %vm808, %v800
        %vm810 = vcmask 254976
        %811 = vst.msk [vmem:[#allocation2 + $0x8] sm:$0x3] %vm810, %v805
      $region88: #{_lambda_.2} parent=83 // pred_fallthru
        _
      %v812 = vld [vmem:[#allocation2] sm:$0xff]
      %v813 = vld [vmem:[#allocation2 + $0x8] sm:$0x3]
      %v814 = vld [vmem:[%s3] sm:$0xff]
      %v815 = vld [vmem:[%s3 + $0x8] sm:$0x3]
      %v816 = vld [vmem:[%s4] sm:$0xff]
      %v817 = vld [vmem:[%s4 + $0x8] sm:$0x3]
      %v818 = vld [vmem:[%s5] sm:$0xff]
      %v819 = vld [vmem:[%s5 + $0x8] sm:$0xff]
      %v820 = vld [vmem:[%s5 + $0x10] sm:$0xff]
      %v821 = vld [vmem:[%s5 + $0x18] sm:$0xff]
      %v822 = vld [vmem:[%s666] sm:$0x3]
      %v823 = vld [vmem:[%s670] sm:$0x3]
      %v824 = vld [vmem:[%s688] sm:$0x1]
      %vm825 = vcmask 261120
      %v826 = vsel %vm825, %v812, 0.0
      %827 = vadd.xlane.f32.xlu0 %v826
      %v828 = vpop.xlane.xlu0 %827
      %vm829 = vcmask 254976
      %v830 = vsel %vm829, %v813, 0.0
      %831 = vadd.xlane.f32.xlu0 %v830
      %v832 = vpop.xlane.xlu0 %831
      %v833 = vrcp.pop 32.0
      %v834 = vmul.f32 %v828, %v833
      %v835 = vmul.f32 %v832, %v833
      %v836 = vsub.f32 %v812, %v834
      %v837 = vsub.f32 %v813, %v835
      %v838 = vmul.f32 %v836, %v836
      %v839 = vmul.f32 %v837, %v837
      %v840 = vsel %vm825, %v838, 0.0
      %841 = vadd.xlane.f32.xlu0 %v840
      %v842 = vpop.xlane.xlu0 %841
      %v843 = vsel %vm829, %v839, 0.0
      %844 = vadd.xlane.f32.xlu0 %v843
      %v845 = vpop.xlane.xlu0 %844
      %v846 = vmul.f32 %v842, %v833
      %v847 = vmul.f32 %v845, %v833
      %v848 = vadd.f32 %v846, 1e-05
      %v849 = vadd.f32 %v847, 1e-05
      %v850 = vrsqrt.pop %v848
      %v851 = vrsqrt.pop %v849
      %v852 = vmul.f32 %v836, %v850
      %v853 = vmul.f32 %v837, %v851
      %v854 = vlaneseq
      %v855 = vshrl.u32 %v854, 7
      %v856 = vsub.s32 0, %v855
      %v857 = vrot.slane %v822, %v856
      %v858 = vmul.f32 %v852, %v857
      %v859 = vmul.f32 %v853, %v857
      %v860 = vlaneseq
      %v861 = vshrl.u32 %v860, 7
      %v862 = vsub.s32 0, %v861
      %v863 = vrot.slane %v823, %v862
      %v864 = vadd.f32 %v858, %v863
      %v865 = vadd.f32 %v859, %v863
      %v866 = vmul.f32 %v864, %v814
      %v867 = vmul.f32 %v865, %v815
      %v869 = vsel %vm825, %v864, 0
      %v872 = vsel %vm825, %v865, 0
      %874 = vmatprep.subr.mxu0 0.0
      %875 = vmatpush1.msra.mxu0 %v818
      %876 = vmatprep.subr.mxu0 0.0
      %877 = vmatpush1.msra.mxu0 %v819
      %878 = vmatprep.subr.mxu0 0.0
      %879 = vmatpush1.msra.mxu0 %v820
      %880 = vmatprep.subr.mxu0 0.0
      %881 = vmatpush1.msra.mxu0 %v821
      %882 = vmatprep.subr.mxu0 0.0
      %883 = vmatpush1.msra.mxu0 0.0
      %884 = vmatprep.subr.mxu0 0.0
      %885 = vmatpush1.msra.mxu0 0.0
      %886 = vmatprep.subr.mxu0 0.0
      %887 = vmatpush1.msra.mxu0 0.0
      %888 = vmatprep.subr.mxu0 0.0
      %889 = vmatpush1.msra.mxu0 0.0
      %890 = vmatprep.subr.mxu0 0.0
      %891 = vmatpush1.msra.mxu0 0.0
      %892 = vmatprep.subr.mxu0 0.0
      %893 = vmatpush1.msra.mxu0 0.0
      %894 = vmatprep.subr.mxu0 0.0
      %895 = vmatpush1.msra.mxu0 0.0
      %896 = vmatprep.subr.mxu0 0.0
      %897 = vmatpush1.msra.mxu0 0.0
      %898 = vmatprep.subr.mxu0 0.0
      %899 = vmatpush1.msra.mxu0 0.0
      %900 = vmatprep.subr.mxu0 0.0
      %901 = vmatpush1.msra.mxu0 0.0
      %902 = vmatprep.subr.mxu0 0.0
      %903 = vmatpush1.msra.mxu0 0.0
      %904 = vmatprep.subr.mxu0 0.0
      %905 = vmatpush1.msra.mxu0 0.0
      %906 = vmatprep.subr.mxu0 0.0
      %907 = vmatpush1.msra.mxu0 0.0
      %908 = vmatprep.subr.mxu0 0.0
      %909 = vmatpush1.msra.mxu0 0.0
      %910 = vmatprep.subr.mxu0 0.0
      %911 = vmatpush1.msra.mxu0 0.0
      %912 = vmatprep.subr.mxu0 0.0
      %913 = vmatpush1.msra.mxu0 0.0
      %914 = vmatprep.subr.mxu0 0.0
      %915 = vmatpush1.msra.mxu0 0.0
      %916 = vmatprep.subr.mxu0 0.0
      %917 = vmatpush1.msra.mxu0 0.0
      %918 = vmatprep.subr.mxu0 0.0
      %919 = vmatpush1.msra.mxu0 0.0
      %920 = vmatprep.subr.mxu0 0.0
      %921 = vmatpush1.msra.mxu0 0.0
      %922 = vmatprep.subr.mxu0 0.0
      %923 = vmatpush1.msra.mxu0 0.0
      %924 = vmatprep.subr.mxu0 0.0
      %925 = vmatpush1.msra.mxu0 0.0
      %926 = vmatprep.subr.mxu0 0.0
      %927 = vmatpush1.msra.mxu0 0.0
      %928 = vmatprep.subr.mxu0 0.0
      %929 = vmatpush1.msra.mxu0 0.0
      %930 = vmatprep.subr.mxu0 0.0
      %931 = vmatpush1.msra.mxu0 0.0
      %932 = vmatprep.subr.mxu0 0.0
      %933 = vmatpush1.msra.mxu0 0.0
      %934 = vmatprep.subr.mxu0 0.0
      %935 = vmatpush1.msra.mxu0 0.0
      %936 = vmatprep.subr.mxu0 0.0
      %937 = vmatpush1.msra.mxu0 0.0
      %938 = vmatprep.mubr.f32.mxu0 0.0
      %939 = vmatmul.mubr.f32.gmra.mrb[0].mxu0 %v869
      %v940 = vpop.f32.mrb[0].mxu0
      %v941 = vadd.f32 0.0, %v940
      %v942 = vpop.f32.mrb[0].mxu0
      %943 = vmatprep.mubr.f32.mxu0 0.0
      %944 = vmatmul.mubr.f32.gmra.mrb[0].mxu0 %v872
      %v945 = vpop.f32.mrb[0].mxu0
      %v946 = vadd.f32 0.0, %v945
      %v947 = vpop.f32.mrb[0].mxu0
      %948 = vdwg.mxu0
      %v949 = vmul.f32 %v941, %v816
      %v950 = vmul.f32 %v946, %v817
      %v951 = vadd.f32 %v866, %v949
      %v952 = vadd.f32 %v867, %v950
      %v953 = vld [vmem:[%s675] sm:$0xff]
      %v954 = vld [vmem:[%s675 + $0x8] sm:$0xff]
      %v955 = vld [vmem:[%s675 + $0x10] sm:$0xff]
      %v956 = vld [vmem:[%s675 + $0x18] sm:$0xff]
      %v958 = vlaneseq
      %v959 = vshrl.u32 %v958, 7
      %v960 = vsub.s32 0, %v959
      %v961 = vrot.slane %v824, %v960
      %v964 = vsel %vm825, %v951, 0
      %v967 = vsel %vm825, %v952, 0
      %969 = vmatprep.subr.mxu0 0.0
      %970 = vmatpush1.msra.mxu0 %v953
      %971 = vmatprep.subr.mxu0 0.0
      %972 = vmatpush1.msra.mxu0 %v954
      %973 = vmatprep.subr.mxu0 0.0
      %974 = vmatpush1.msra.mxu0 %v955
      %975 = vmatprep.subr.mxu0 0.0
      %976 = vmatpush1.msra.mxu0 %v956
      %977 = vmatprep.subr.mxu0 0.0
      %978 = vmatpush1.msra.mxu0 0.0
      %979 = vmatprep.subr.mxu0 0.0
      %980 = vmatpush1.msra.mxu0 0.0
      %981 = vmatprep.subr.mxu0 0.0
      %982 = vmatpush1.msra.mxu0 0.0
      %983 = vmatprep.subr.mxu0 0.0
      %984 = vmatpush1.msra.mxu0 0.0
      %985 = vmatprep.subr.mxu0 0.0
      %986 = vmatpush1.msra.mxu0 0.0
      %987 = vmatprep.subr.mxu0 0.0
      %988 = vmatpush1.msra.mxu0 0.0
      %989 = vmatprep.subr.mxu0 0.0
      %990 = vmatpush1.msra.mxu0 0.0
      %991 = vmatprep.subr.mxu0 0.0
      %992 = vmatpush1.msra.mxu0 0.0
      %993 = vmatprep.subr.mxu0 0.0
      %994 = vmatpush1.msra.mxu0 0.0
      %995 = vmatprep.subr.mxu0 0.0
      %996 = vmatpush1.msra.mxu0 0.0
      %997 = vmatprep.subr.mxu0 0.0
      %998 = vmatpush1.msra.mxu0 0.0
      %999 = vmatprep.subr.mxu0 0.0
      %1000 = vmatpush1.msra.mxu0 0.0
      %1001 = vmatprep.subr.mxu0 0.0
      %1002 = vmatpush1.msra.mxu0 0.0
      %1003 = vmatprep.subr.mxu0 0.0
      %1004 = vmatpush1.msra.mxu0 0.0
      %1005 = vmatprep.subr.mxu0 0.0
      %1006 = vmatpush1.msra.mxu0 0.0
      %1007 = vmatprep.subr.mxu0 0.0
      %1008 = vmatpush1.msra.mxu0 0.0
      %1009 = vmatprep.subr.mxu0 0.0
      %1010 = vmatpush1.msra.mxu0 0.0
      %1011 = vmatprep.subr.mxu0 0.0
      %1012 = vmatpush1.msra.mxu0 0.0
      %1013 = vmatprep.subr.mxu0 0.0
      %1014 = vmatpush1.msra.mxu0 0.0
      %1015 = vmatprep.subr.mxu0 0.0
      %1016 = vmatpush1.msra.mxu0 0.0
      %1017 = vmatprep.subr.mxu0 0.0
      %1018 = vmatpush1.msra.mxu0 0.0
      %1019 = vmatprep.subr.mxu0 0.0
      %1020 = vmatpush1.msra.mxu0 0.0
      %1021 = vmatprep.subr.mxu0 0.0
      %1022 = vmatpush1.msra.mxu0 0.0
      %1023 = vmatprep.subr.mxu0 0.0
      %1024 = vmatpush1.msra.mxu0 0.0
      %1025 = vmatprep.subr.mxu0 0.0
      %1026 = vmatpush1.msra.mxu0 0.0
      %1027 = vmatprep.subr.mxu0 0.0
      %1028 = vmatpush1.msra.mxu0 0.0
      %1029 = vmatprep.subr.mxu0 0.0
      %1030 = vmatpush1.msra.mxu0 0.0
      %1031 = vmatprep.subr.mxu0 0.0
      %1032 = vmatpush1.msra.mxu0 0.0
      %1033 = vmatprep.mubr.f32.mxu0 0.0
      %1034 = vmatmul.mubr.f32.gmra.mrb[0].mxu0 %v964
      %v1035 = vpop.f32.mrb[0].mxu0
      %v1036 = vadd.f32 %v961, %v1035
      %v1037 = vpop.f32.mrb[0].mxu0
      %1038 = vmatprep.mubr.f32.mxu0 0.0
      %1039 = vmatmul.mubr.f32.gmra.mrb[0].mxu0 %v967
      %v1040 = vpop.f32.mrb[0].mxu0
      %v1041 = vadd.f32 %v961, %v1040
      %v1042 = vpop.f32.mrb[0].mxu0
      %1043 = vdwg.mxu0
      %v1044 = vld [vmem:[%s680] sm:$0xff]
      %v1045 = vld [vmem:[%s680 + $0x8] sm:$0xff]
      %v1046 = vld [vmem:[%s680 + $0x10] sm:$0xff]
      %v1047 = vld [vmem:[%s680 + $0x18] sm:$0xff]
      %1048 = vrot.lane.b32.xlu0 %v961, 64
      %v1049 = vpop.permute.xlu0 %1048
      %1051 = vmatprep.subr.mxu0 0.0
      %1052 = vmatpush1.msra.mxu0 %v1044
      %1053 = vmatprep.subr.mxu0 0.0
      %1054 = vmatpush1.msra.mxu0 %v1045
      %1055 = vmatprep.subr.mxu0 0.0
      %1056 = vmatpush1.msra.mxu0 %v1046
      %1057 = vmatprep.subr.mxu0 0.0
      %1058 = vmatpush1.msra.mxu0 %v1047
      %1059 = vmatprep.subr.mxu0 0.0
      %1060 = vmatpush1.msra.mxu0 0.0
      %1061 = vmatprep.subr.mxu0 0.0
      %1062 = vmatpush1.msra.mxu0 0.0
      %1063 = vmatprep.subr.mxu0 0.0
      %1064 = vmatpush1.msra.mxu0 0.0
      %1065 = vmatprep.subr.mxu0 0.0
      %1066 = vmatpush1.msra.mxu0 0.0
      %1067 = vmatprep.subr.mxu0 0.0
      %1068 = vmatpush1.msra.mxu0 0.0
      %1069 = vmatprep.subr.mxu0 0.0
      %1070 = vmatpush1.msra.mxu0 0.0
      %1071 = vmatprep.subr.mxu0 0.0
      %1072 = vmatpush1.msra.mxu0 0.0
      %1073 = vmatprep.subr.mxu0 0.0
      %1074 = vmatpush1.msra.mxu0 0.0
      %1075 = vmatprep.subr.mxu0 0.0
      %1076 = vmatpush1.msra.mxu0 0.0
      %1077 = vmatprep.subr.mxu0 0.0
      %1078 = vmatpush1.msra.mxu0 0.0
      %1079 = vmatprep.subr.mxu0 0.0
      %1080 = vmatpush1.msra.mxu0 0.0
      %1081 = vmatprep.subr.mxu0 0.0
      %1082 = vmatpush1.msra.mxu0 0.0
      %1083 = vmatprep.subr.mxu0 0.0
      %1084 = vmatpush1.msra.mxu0 0.0
      %1085 = vmatprep.subr.mxu0 0.0
      %1086 = vmatpush1.msra.mxu0 0.0
      %1087 = vmatprep.subr.mxu0 0.0
      %1088 = vmatpush1.msra.mxu0 0.0
      %1089 = vmatprep.subr.mxu0 0.0
      %1090 = vmatpush1.msra.mxu0 0.0
      %1091 = vmatprep.subr.mxu0 0.0
      %1092 = vmatpush1.msra.mxu0 0.0
      %1093 = vmatprep.subr.mxu0 0.0
      %1094 = vmatpush1.msra.mxu0 0.0
      %1095 = vmatprep.subr.mxu0 0.0
      %1096 = vmatpush1.msra.mxu0 0.0
      %1097 = vmatprep.subr.mxu0 0.0
      %1098 = vmatpush1.msra.mxu0 0.0
      %1099 = vmatprep.subr.mxu0 0.0
      %1100 = vmatpush1.msra.mxu0 0.0
      %1101 = vmatprep.subr.mxu0 0.0
      %1102 = vmatpush1.msra.mxu0 0.0
      %1103 = vmatprep.subr.mxu0 0.0
      %1104 = vmatpush1.msra.mxu0 0.0
      %1105 = vmatprep.subr.mxu0 0.0
      %1106 = vmatpush1.msra.mxu0 0.0
      %1107 = vmatprep.subr.mxu0 0.0
      %1108 = vmatpush1.msra.mxu0 0.0
      %1109 = vmatprep.subr.mxu0 0.0
      %1110 = vmatpush1.msra.mxu0 0.0
      %1111 = vmatprep.subr.mxu0 0.0
      %1112 = vmatpush1.msra.mxu0 0.0
      %1113 = vmatprep.subr.mxu0 0.0
      %1114 = vmatpush1.msra.mxu0 0.0
      %1115 = vmatprep.mubr.f32.mxu0 0.0
      %1116 = vmatmul.mubr.f32.gmra.mrb[0].mxu0 %v869
      %v1117 = vpop.f32.mrb[0].mxu0
      %v1118 = vadd.f32 %v1049, %v1117
      %v1119 = vpop.f32.mrb[0].mxu0
      %1120 = vmatprep.mubr.f32.mxu0 0.0
      %1121 = vmatmul.mubr.f32.gmra.mrb[0].mxu0 %v872
      %v1122 = vpop.f32.mrb[0].mxu0
      %v1123 = vadd.f32 %v1049, %v1122
      %v1124 = vpop.f32.mrb[0].mxu0
      %1125 = vdwg.mxu0
      %v1126 = vld [vmem:[%s685] sm:$0xff]
      %v1127 = vld [vmem:[%s685 + $0x8] sm:$0xff]
      %v1128 = vld [vmem:[%s685 + $0x10] sm:$0xff]
      %v1129 = vld [vmem:[%s685 + $0x18] sm:$0xff]
      %1132 = vrot.lane.b32.xlu0 %v1036, 96
      %v1133 = vpop.permute.xlu0 %1132
      %1134 = vrot.lane.b32.xlu0 %v1041, 96
      %v1135 = vpop.permute.xlu0 %1134
      %vm1136 = vcmask 64512
      %v1137 = vsel %vm1136, %v1036, 0
      %v1139 = vsel %vm1136, %v1041, 0
      %v1141 = vsel %vm1136, %v1133, 0
      %v1143 = vsel %vm1136, %v1135, 0
      %1145 = vmatprep.subr.mxu0 0.0
      %1146 = vmatpush1.xpose.msra.mxu0 %v1141
      %1147 = vmatprep.subr.mxu0 0.0
      %1148 = vmatpush1.xpose.msra.mxu0 %v1143
      %1149 = vmatprep.subr.mxu0 0.0
      %1150 = vmatpush1.xpose.msra.mxu0 0.0
      %1151 = vmatprep.subr.mxu0 0.0
      %1152 = vmatpush1.xpose.msra.mxu0 0.0
      %1153 = vmatprep.subr.mxu0 0.0
      %1154 = vmatpush1.xpose.msra.mxu0 0.0
      %1155 = vmatprep.subr.mxu0 0.0
      %1156 = vmatpush1.xpose.msra.mxu0 0.0
      %1157 = vmatprep.subr.mxu0 0.0
      %1158 = vmatpush1.xpose.msra.mxu0 0.0
      %1159 = vmatprep.subr.mxu0 0.0
      %1160 = vmatpush1.xpose.msra.mxu0 0.0
      %1161 = vmatprep.subr.mxu0 0.0
      %1162 = vmatpush1.xpose.msra.mxu0 0.0
      %1163 = vmatprep.subr.mxu0 0.0
      %1164 = vmatpush1.xpose.msra.mxu0 0.0
      %1165 = vmatprep.subr.mxu0 0.0
      %1166 = vmatpush1.xpose.msra.mxu0 0.0
      %1167 = vmatprep.subr.mxu0 0.0
      %1168 = vmatpush1.xpose.msra.mxu0 0.0
      %1169 = vmatprep.subr.mxu0 0.0
      %1170 = vmatpush1.xpose.msra.mxu0 0.0
      %1171 = vmatprep.subr.mxu0 0.0
      %1172 = vmatpush1.xpose.msra.mxu0 0.0
      %1173 = vmatprep.subr.mxu0 0.0
      %1174 = vmatpush1.xpose.msra.mxu0 0.0
      %1175 = vmatprep.subr.mxu0 0.0
      %1176 = vmatpush1.xpose.msra.mxu0 0.0
      %1177 = vmatprep.subr.mxu0 0.0
      %1178 = vmatpush1.xpose.msra.mxu0 0.0
      %1179 = vmatprep.subr.mxu0 0.0
      %1180 = vmatpush1.xpose.msra.mxu0 0.0
      %1181 = vmatprep.subr.mxu0 0.0
      %1182 = vmatpush1.xpose.msra.mxu0 0.0
      %1183 = vmatprep.subr.mxu0 0.0
      %1184 = vmatpush1.xpose.msra.mxu0 0.0
      %1185 = vmatprep.subr.mxu0 0.0
      %1186 = vmatpush1.xpose.msra.mxu0 0.0
      %1187 = vmatprep.subr.mxu0 0.0
      %1188 = vmatpush1.xpose.msra.mxu0 0.0
      %1189 = vmatprep.subr.mxu0 0.0
      %1190 = vmatpush1.xpose.msra.mxu0 0.0
      %1191 = vmatprep.subr.mxu0 0.0
      %1192 = vmatpush1.xpose.msra.mxu0 0.0
      %1193 = vmatprep.subr.mxu0 0.0
      %1194 = vmatpush1.xpose.msra.mxu0 0.0
      %1195 = vmatprep.subr.mxu0 0.0
      %1196 = vmatpush1.xpose.msra.mxu0 0.0
      %1197 = vmatprep.subr.mxu0 0.0
      %1198 = vmatpush1.xpose.msra.mxu0 0.0
      %1199 = vmatprep.subr.mxu0 0.0
      %1200 = vmatpush1.xpose.msra.mxu0 0.0
      %1201 = vmatprep.subr.mxu0 0.0
      %1202 = vmatpush1.xpose.msra.mxu0 0.0
      %1203 = vmatprep.subr.mxu0 0.0
      %1204 = vmatpush1.xpose.msra.mxu0 0.0
      %1205 = vmatprep.subr.mxu0 0.0
      %1206 = vmatpush1.xpose.msra.mxu0 0.0
      %1207 = vmatprep.subr.mxu0 0.0
      %1208 = vmatpush1.xpose.msra.mxu0 0.0
      %1209 = vmatprep.mubr.f32.mxu0 0.0
      %1210 = vmatmul.mubr.f32.gmra.mrb[0].mxu0 %v1137
      %v1211 = vpop.f32.mrb[0].mxu0
      %v1212 = vadd.f32 0.0, %v1211
      %v1213 = vpop.f32.mrb[0].mxu0
      %1214 = vmatprep.mubr.f32.mxu0 0.0
      %1215 = vmatmul.mubr.f32.gmra.mrb[0].mxu0 %v1139
      %v1216 = vpop.f32.mrb[0].mxu0
      %v1217 = vadd.f32 0.0, %v1216
      %v1218 = vpop.f32.mrb[0].mxu0
      %1219 = vdwg.mxu0
      %vm1220 = vcmask 80896
      %v1221 = vsel %vm1220, %v1212, -inf
      %1222 = vmax.xlane.f32.xlu0 %v1221
      %v1223 = vpop.xlane.xlu0 %1222
      %vm1224 = vcmask 74752
      %v1225 = vsel %vm1224, %v1217, -inf
      %1226 = vmax.xlane.f32.xlu0 %v1225
      %v1227 = vpop.xlane.xlu0 %1226
      %v1228 = vsub.f32 %v1212, %v1223
      %v1229 = vsub.f32 %v1217, %v1227
      %v1230 = vmul.f32 %v1228, 1.442695
      %v1231 = vpow.pop %v1230
      %v1232 = vmul.f32 %v1229, 1.442695
      %v1233 = vpow.pop %v1232
      %v1234 = vsel %vm1220, %v1231, 0.0
      %1235 = vadd.xlane.f32.xlu0 %v1234
      %v1236 = vpop.xlane.xlu0 %1235
      %v1237 = vsel %vm1224, %v1233, 0.0
      %1238 = vadd.xlane.f32.xlu0 %v1237
      %v1239 = vpop.xlane.xlu0 %1238
      %v1240 = vrcp.pop %v1236
      %v1241 = vrcp.pop %v1239
      %v1242 = vmul.f32 %v1231, %v1240
      %v1243 = vmul.f32 %v1233, %v1241
      %v1245 = vsel %vm1220, %v1242, 0
      %v1248 = vsel %vm1220, %v1243, 0
      %vm1250 = vcmask 1041408
      %v1252 = vsel %vm1250, %v1123, 0
      %1254 = vmatprep.subr.mxu0 0.0
      %1255 = vmatpush1.msra.mxu0 %v1118
      %1256 = vmatprep.subr.mxu0 0.0
      %1257 = vmatpush1.msra.mxu0 %v1252
      %1258 = vmatprep.subr.mxu0 0.0
      %1259 = vmatpush1.msra.mxu0 0.0
      %1260 = vmatprep.subr.mxu0 0.0
      %1261 = vmatpush1.msra.mxu0 0.0
      %1262 = vmatprep.subr.mxu0 0.0
      %1263 = vmatpush1.msra.mxu0 0.0
      %1264 = vmatprep.subr.mxu0 0.0
      %1265 = vmatpush1.msra.mxu0 0.0
      %1266 = vmatprep.subr.mxu0 0.0
      %1267 = vmatpush1.msra.mxu0 0.0
      %1268 = vmatprep.subr.mxu0 0.0
      %1269 = vmatpush1.msra.mxu0 0.0
      %1270 = vmatprep.subr.mxu0 0.0
      %1271 = vmatpush1.msra.mxu0 0.0
      %1272 = vmatprep.subr.mxu0 0.0
      %1273 = vmatpush1.msra.mxu0 0.0
      %1274 = vmatprep.subr.mxu0 0.0
      %1275 = vmatpush1.msra.mxu0 0.0
      %1276 = vmatprep.subr.mxu0 0.0
      %1277 = vmatpush1.msra.mxu0 0.0
      %1278 = vmatprep.subr.mxu0 0.0
      %1279 = vmatpush1.msra.mxu0 0.0
      %1280 = vmatprep.subr.mxu0 0.0
      %1281 = vmatpush1.msra.mxu0 0.0
      %1282 = vmatprep.subr.mxu0 0.0
      %1283 = vmatpush1.msra.mxu0 0.0
      %1284 = vmatprep.subr.mxu0 0.0
      %1285 = vmatpush1.msra.mxu0 0.0
      %1286 = vmatprep.subr.mxu0 0.0
      %1287 = vmatpush1.msra.mxu0 0.0
      %1288 = vmatprep.subr.mxu0 0.0
      %1289 = vmatpush1.msra.mxu0 0.0
      %1290 = vmatprep.subr.mxu0 0.0
      %1291 = vmatpush1.msra.mxu0 0.0
      %1292 = vmatprep.subr.mxu0 0.0
      %1293 = vmatpush1.msra.mxu0 0.0
      %1294 = vmatprep.subr.mxu0 0.0
      %1295 = vmatpush1.msra.mxu0 0.0
      %1296 = vmatprep.subr.mxu0 0.0
      %1297 = vmatpush1.msra.mxu0 0.0
      %1298 = vmatprep.subr.mxu0 0.0
      %1299 = vmatpush1.msra.mxu0 0.0
      %1300 = vmatprep.subr.mxu0 0.0
      %1301 = vmatpush1.msra.mxu0 0.0
      %1302 = vmatprep.subr.mxu0 0.0
      %1303 = vmatpush1.msra.mxu0 0.0
      %1304 = vmatprep.subr.mxu0 0.0
      %1305 = vmatpush1.msra.mxu0 0.0
      %1306 = vmatprep.subr.mxu0 0.0
      %1307 = vmatpush1.msra.mxu0 0.0
      %1308 = vmatprep.subr.mxu0 0.0
      %1309 = vmatpush1.msra.mxu0 0.0
      %1310 = vmatprep.subr.mxu0 0.0
      %1311 = vmatpush1.msra.mxu0 0.0
      %1312 = vmatprep.subr.mxu0 0.0
      %1313 = vmatpush1.msra.mxu0 0.0
      %1314 = vmatprep.subr.mxu0 0.0
      %1315 = vmatpush1.msra.mxu0 0.0
      %1316 = vmatprep.subr.mxu0 0.0
      %1317 = vmatpush1.msra.mxu0 0.0
      %1318 = vmatprep.mubr.f32.mxu0 0.0
      %1319 = vmatmul.mubr.f32.gmra.mrb[0].mxu0 %v1245
      %v1320 = vpop.f32.mrb[0].mxu0
      %v1321 = vadd.f32 0.0, %v1320
      %v1322 = vpop.f32.mrb[0].mxu0
      %1323 = vmatprep.mubr.f32.mxu0 0.0
      %1324 = vmatmul.mubr.f32.gmra.mrb[0].mxu0 %v1248
      %v1325 = vpop.f32.mrb[0].mxu0
      %v1326 = vadd.f32 0.0, %v1325
      %v1327 = vpop.f32.mrb[0].mxu0
      %1328 = vdwg.mxu0
      %1329 = vrot.lane.b32.xlu0 %v1036, 120
      %v1330 = vpop.permute.xlu0 %1329
      %1331 = vrot.lane.b32.xlu0 %v1041, 120
      %v1332 = vpop.permute.xlu0 %1331
      %1333 = vrot.lane.b32.xlu0 %v1036, 88
      %v1334 = vpop.permute.xlu0 %1333
      %1335 = vrot.lane.b32.xlu0 %v1041, 88
      %v1336 = vpop.permute.xlu0 %1335
      %v1337 = vsel %vm1136, %v1330, 0
      %v1339 = vsel %vm1136, %v1332, 0
      %v1341 = vsel %vm1136, %v1334, 0
      %v1343 = vsel %vm1136, %v1336, 0
      %1345 = vmatprep.subr.mxu0 0.0
      %1346 = vmatpush1.xpose.msra.mxu0 %v1341
      %1347 = vmatprep.subr.mxu0 0.0
      %1348 = vmatpush1.xpose.msra.mxu0 %v1343
      %1349 = vmatprep.subr.mxu0 0.0
      %1350 = vmatpush1.xpose.msra.mxu0 0.0
      %1351 = vmatprep.subr.mxu0 0.0
      %1352 = vmatpush1.xpose.msra.mxu0 0.0
      %1353 = vmatprep.subr.mxu0 0.0
      %1354 = vmatpush1.xpose.msra.mxu0 0.0
      %1355 = vmatprep.subr.mxu0 0.0
      %1356 = vmatpush1.xpose.msra.mxu0 0.0
      %1357 = vmatprep.subr.mxu0 0.0
      %1358 = vmatpush1.xpose.msra.mxu0 0.0
      %1359 = vmatprep.subr.mxu0 0.0
      %1360 = vmatpush1.xpose.msra.mxu0 0.0
      %1361 = vmatprep.subr.mxu0 0.0
      %1362 = vmatpush1.xpose.msra.mxu0 0.0
      %1363 = vmatprep.subr.mxu0 0.0
      %1364 = vmatpush1.xpose.msra.mxu0 0.0
      %1365 = vmatprep.subr.mxu0 0.0
      %1366 = vmatpush1.xpose.msra.mxu0 0.0
      %1367 = vmatprep.subr.mxu0 0.0
      %1368 = vmatpush1.xpose.msra.mxu0 0.0
      %1369 = vmatprep.subr.mxu0 0.0
      %1370 = vmatpush1.xpose.msra.mxu0 0.0
      %1371 = vmatprep.subr.mxu0 0.0
      %1372 = vmatpush1.xpose.msra.mxu0 0.0
      %1373 = vmatprep.subr.mxu0 0.0
      %1374 = vmatpush1.xpose.msra.mxu0 0.0
      %1375 = vmatprep.subr.mxu0 0.0
      %1376 = vmatpush1.xpose.msra.mxu0 0.0
      %1377 = vmatprep.subr.mxu0 0.0
      %1378 = vmatpush1.xpose.msra.mxu0 0.0
      %1379 = vmatprep.subr.mxu0 0.0
      %1380 = vmatpush1.xpose.msra.mxu0 0.0
      %1381 = vmatprep.subr.mxu0 0.0
      %1382 = vmatpush1.xpose.msra.mxu0 0.0
      %1383 = vmatprep.subr.mxu0 0.0
      %1384 = vmatpush1.xpose.msra.mxu0 0.0
      %1385 = vmatprep.subr.mxu0 0.0
      %1386 = vmatpush1.xpose.msra.mxu0 0.0
      %1387 = vmatprep.subr.mxu0 0.0
      %1388 = vmatpush1.xpose.msra.mxu0 0.0
      %1389 = vmatprep.subr.mxu0 0.0
      %1390 = vmatpush1.xpose.msra.mxu0 0.0
      %1391 = vmatprep.subr.mxu0 0.0
      %1392 = vmatpush1.xpose.msra.mxu0 0.0
      %1393 = vmatprep.subr.mxu0 0.0
      %1394 = vmatpush1.xpose.msra.mxu0 0.0
      %1395 = vmatprep.subr.mxu0 0.0
      %1396 = vmatpush1.xpose.msra.mxu0 0.0
      %1397 = vmatprep.subr.mxu0 0.0
      %1398 = vmatpush1.xpose.msra.mxu0 0.0
      %1399 = vmatprep.subr.mxu0 0.0
      %1400 = vmatpush1.xpose.msra.mxu0 0.0
      %1401 = vmatprep.subr.mxu0 0.0
      %1402 = vmatpush1.xpose.msra.mxu0 0.0
      %1403 = vmatprep.subr.mxu0 0.0
      %1404 = vmatpush1.xpose.msra.mxu0 0.0
      %1405 = vmatprep.subr.mxu0 0.0
      %1406 = vmatpush1.xpose.msra.mxu0 0.0
      %1407 = vmatprep.subr.mxu0 0.0
      %1408 = vmatpush1.xpose.msra.mxu0 0.0
      %1409 = vmatprep.mubr.f32.mxu0 0.0
      %1410 = vmatmul.mubr.f32.gmra.mrb[0].mxu0 %v1337
      %v1411 = vpop.f32.mrb[0].mxu0
      %v1412 = vadd.f32 0.0, %v1411
      %v1413 = vpop.f32.mrb[0].mxu0
      %1414 = vmatprep.mubr.f32.mxu0 0.0
      %1415 = vmatmul.mubr.f32.gmra.mrb[0].mxu0 %v1339
      %v1416 = vpop.f32.mrb[0].mxu0
      %v1417 = vadd.f32 0.0, %v1416
      %v1418 = vpop.f32.mrb[0].mxu0
      %1419 = vdwg.mxu0
      %v1420 = vsel %vm1220, %v1412, -inf
      %1421 = vmax.xlane.f32.xlu0 %v1420
      %v1422 = vpop.xlane.xlu0 %1421
      %v1423 = vsel %vm1224, %v1417, -inf
      %1424 = vmax.xlane.f32.xlu0 %v1423
      %v1425 = vpop.xlane.xlu0 %1424
      %v1426 = vsub.f32 %v1412, %v1422
      %v1427 = vsub.f32 %v1417, %v1425
      %v1428 = vmul.f32 %v1426, 1.442695
      %v1429 = vpow.pop %v1428
      %v1430 = vmul.f32 %v1427, 1.442695
      %v1431 = vpow.pop %v1430
      %v1432 = vsel %vm1220, %v1429, 0.0
      %1433 = vadd.xlane.f32.xlu0 %v1432
      %v1434 = vpop.xlane.xlu0 %1433
      %v1435 = vsel %vm1224, %v1431, 0.0
      %1436 = vadd.xlane.f32.xlu0 %v1435
      %v1437 = vpop.xlane.xlu0 %1436
      %v1438 = vrcp.pop %v1434
      %v1439 = vrcp.pop %v1437
      %v1440 = vmul.f32 %v1429, %v1438
      %v1441 = vmul.f32 %v1431, %v1439
      %1443 = vrot.lane.b32.xlu0 %v1118, 120
      %v1444 = vpop.permute.xlu0 %1443
      %1445 = vrot.lane.b32.xlu0 %v1123, 120
      %v1446 = vpop.permute.xlu0 %1445
      %v1449 = vsel %vm1220, %v1440, 0
      %v1452 = vsel %vm1220, %v1441, 0
      %v1454 = vsel %vm1250, %v1446, 0
      %1456 = vmatprep.subr.mxu0 0.0
      %1457 = vmatpush1.msra.mxu0 %v1444
      %1458 = vmatprep.subr.mxu0 0.0
      %1459 = vmatpush1.msra.mxu0 %v1454
      %1460 = vmatprep.subr.mxu0 0.0
      %1461 = vmatpush1.msra.mxu0 0.0
      %1462 = vmatprep.subr.mxu0 0.0
      %1463 = vmatpush1.msra.mxu0 0.0
      %1464 = vmatprep.subr.mxu0 0.0
      %1465 = vmatpush1.msra.mxu0 0.0
      %1466 = vmatprep.subr.mxu0 0.0
      %1467 = vmatpush1.msra.mxu0 0.0
      %1468 = vmatprep.subr.mxu0 0.0
      %1469 = vmatpush1.msra.mxu0 0.0
      %1470 = vmatprep.subr.mxu0 0.0
      %1471 = vmatpush1.msra.mxu0 0.0
      %1472 = vmatprep.subr.mxu0 0.0
      %1473 = vmatpush1.msra.mxu0 0.0
      %1474 = vmatprep.subr.mxu0 0.0
      %1475 = vmatpush1.msra.mxu0 0.0
      %1476 = vmatprep.subr.mxu0 0.0
      %1477 = vmatpush1.msra.mxu0 0.0
      %1478 = vmatprep.subr.mxu0 0.0
      %1479 = vmatpush1.msra.mxu0 0.0
      %1480 = vmatprep.subr.mxu0 0.0
      %1481 = vmatpush1.msra.mxu0 0.0
      %1482 = vmatprep.subr.mxu0 0.0
      %1483 = vmatpush1.msra.mxu0 0.0
      %1484 = vmatprep.subr.mxu0 0.0
      %1485 = vmatpush1.msra.mxu0 0.0
      %1486 = vmatprep.subr.mxu0 0.0
      %1487 = vmatpush1.msra.mxu0 0.0
      %1488 = vmatprep.subr.mxu0 0.0
      %1489 = vmatpush1.msra.mxu0 0.0
      %1490 = vmatprep.subr.mxu0 0.0
      %1491 = vmatpush1.msra.mxu0 0.0
      %1492 = vmatprep.subr.mxu0 0.0
      %1493 = vmatpush1.msra.mxu0 0.0
      %1494 = vmatprep.subr.mxu0 0.0
      %1495 = vmatpush1.msra.mxu0 0.0
      %1496 = vmatprep.subr.mxu0 0.0
      %1497 = vmatpush1.msra.mxu0 0.0
      %1498 = vmatprep.subr.mxu0 0.0
      %1499 = vmatpush1.msra.mxu0 0.0
      %1500 = vmatprep.subr.mxu0 0.0
      %1501 = vmatpush1.msra.mxu0 0.0
      %1502 = vmatprep.subr.mxu0 0.0
      %1503 = vmatpush1.msra.mxu0 0.0
      %1504 = vmatprep.subr.mxu0 0.0
      %1505 = vmatpush1.msra.mxu0 0.0
      %1506 = vmatprep.subr.mxu0 0.0
      %1507 = vmatpush1.msra.mxu0 0.0
      %1508 = vmatprep.subr.mxu0 0.0
      %1509 = vmatpush1.msra.mxu0 0.0
      %1510 = vmatprep.subr.mxu0 0.0
      %1511 = vmatpush1.msra.mxu0 0.0
      %1512 = vmatprep.subr.mxu0 0.0
      %1513 = vmatpush1.msra.mxu0 0.0
      %1514 = vmatprep.subr.mxu0 0.0
      %1515 = vmatpush1.msra.mxu0 0.0
      %1516 = vmatprep.subr.mxu0 0.0
      %1517 = vmatpush1.msra.mxu0 0.0
      %1518 = vmatprep.subr.mxu0 0.0
      %1519 = vmatpush1.msra.mxu0 0.0
      %1520 = vmatprep.mubr.f32.mxu0 0.0
      %1521 = vmatmul.mubr.f32.gmra.mrb[0].mxu0 %v1449
      %v1522 = vpop.f32.mrb[0].mxu0
      %v1523 = vadd.f32 0.0, %v1522
      %v1524 = vpop.f32.mrb[0].mxu0
      %1525 = vmatprep.mubr.f32.mxu0 0.0
      %1526 = vmatmul.mubr.f32.gmra.mrb[0].mxu0 %v1452
      %v1527 = vpop.f32.mrb[0].mxu0
      %v1528 = vadd.f32 0.0, %v1527
      %v1529 = vpop.f32.mrb[0].mxu0
      %1530 = vdwg.mxu0
      %1531 = vrot.lane.b32.xlu0 %v1036, 112
      %v1532 = vpop.permute.xlu0 %1531
      %1533 = vrot.lane.b32.xlu0 %v1041, 112
      %v1534 = vpop.permute.xlu0 %1533
      %1535 = vrot.lane.b32.xlu0 %v1036, 80
      %v1536 = vpop.permute.xlu0 %1535
      %1537 = vrot.lane.b32.xlu0 %v1041, 80
      %v1538 = vpop.permute.xlu0 %1537
      %v1539 = vsel %vm1136, %v1532, 0
      %v1541 = vsel %vm1136, %v1534, 0
      %v1543 = vsel %vm1136, %v1536, 0
      %v1545 = vsel %vm1136, %v1538, 0
      %1547 = vmatprep.subr.mxu0 0.0
      %1548 = vmatpush1.xpose.msra.mxu0 %v1543
      %1549 = vmatprep.subr.mxu0 0.0
      %1550 = vmatpush1.xpose.msra.mxu0 %v1545
      %1551 = vmatprep.subr.mxu0 0.0
      %1552 = vmatpush1.xpose.msra.mxu0 0.0
      %1553 = vmatprep.subr.mxu0 0.0
      %1554 = vmatpush1.xpose.msra.mxu0 0.0
      %1555 = vmatprep.subr.mxu0 0.0
      %1556 = vmatpush1.xpose.msra.mxu0 0.0
      %1557 = vmatprep.subr.mxu0 0.0
      %1558 = vmatpush1.xpose.msra.mxu0 0.0
      %1559 = vmatprep.subr.mxu0 0.0
      %1560 = vmatpush1.xpose.msra.mxu0 0.0
      %1561 = vmatprep.subr.mxu0 0.0
      %1562 = vmatpush1.xpose.msra.mxu0 0.0
      %1563 = vmatprep.subr.mxu0 0.0
      %1564 = vmatpush1.xpose.msra.mxu0 0.0
      %1565 = vmatprep.subr.mxu0 0.0
      %1566 = vmatpush1.xpose.msra.mxu0 0.0
      %1567 = vmatprep.subr.mxu0 0.0
      %1568 = vmatpush1.xpose.msra.mxu0 0.0
      %1569 = vmatprep.subr.mxu0 0.0
      %1570 = vmatpush1.xpose.msra.mxu0 0.0
      %1571 = vmatprep.subr.mxu0 0.0
      %1572 = vmatpush1.xpose.msra.mxu0 0.0
      %1573 = vmatprep.subr.mxu0 0.0
      %1574 = vmatpush1.xpose.msra.mxu0 0.0
      %1575 = vmatprep.subr.mxu0 0.0
      %1576 = vmatpush1.xpose.msra.mxu0 0.0
      %1577 = vmatprep.subr.mxu0 0.0
      %1578 = vmatpush1.xpose.msra.mxu0 0.0
      %1579 = vmatprep.subr.mxu0 0.0
      %1580 = vmatpush1.xpose.msra.mxu0 0.0
      %1581 = vmatprep.subr.mxu0 0.0
      %1582 = vmatpush1.xpose.msra.mxu0 0.0
      %1583 = vmatprep.subr.mxu0 0.0
      %1584 = vmatpush1.xpose.msra.mxu0 0.0
      %1585 = vmatprep.subr.mxu0 0.0
      %1586 = vmatpush1.xpose.msra.mxu0 0.0
      %1587 = vmatprep.subr.mxu0 0.0
      %1588 = vmatpush1.xpose.msra.mxu0 0.0
      %1589 = vmatprep.subr.mxu0 0.0
      %1590 = vmatpush1.xpose.msra.mxu0 0.0
      %1591 = vmatprep.subr.mxu0 0.0
      %1592 = vmatpush1.xpose.msra.mxu0 0.0
      %1593 = vmatprep.subr.mxu0 0.0
      %1594 = vmatpush1.xpose.msra.mxu0 0.0
      %1595 = vmatprep.subr.mxu0 0.0
      %1596 = vmatpush1.xpose.msra.mxu0 0.0
      %1597 = vmatprep.subr.mxu0 0.0
      %1598 = vmatpush1.xpose.msra.mxu0 0.0
      %1599 = vmatprep.subr.mxu0 0.0
      %1600 = vmatpush1.xpose.msra.mxu0 0.0
      %1601 = vmatprep.subr.mxu0 0.0
      %1602 = vmatpush1.xpose.msra.mxu0 0.0
      %1603 = vmatprep.subr.mxu0 0.0
      %1604 = vmatpush1.xpose.msra.mxu0 0.0
      %1605 = vmatprep.subr.mxu0 0.0
      %1606 = vmatpush1.xpose.msra.mxu0 0.0
      %1607 = vmatprep.subr.mxu0 0.0
      %1608 = vmatpush1.xpose.msra.mxu0 0.0
      %1609 = vmatprep.subr.mxu0 0.0
      %1610 = vmatpush1.xpose.msra.mxu0 0.0
      %1611 = vmatprep.mubr.f32.mxu0 0.0
      %1612 = vmatmul.mubr.f32.gmra.mrb[0].mxu0 %v1539
      %v1613 = vpop.f32.mrb[0].mxu0
      %v1614 = vadd.f32 0.0, %v1613
      %v1615 = vpop.f32.mrb[0].mxu0
      %1616 = vmatprep.mubr.f32.mxu0 0.0
      %1617 = vmatmul.mubr.f32.gmra.mrb[0].mxu0 %v1541
      %v1618 = vpop.f32.mrb[0].mxu0
      %v1619 = vadd.f32 0.0, %v1618
      %v1620 = vpop.f32.mrb[0].mxu0
      %1621 = vdwg.mxu0
      %v1622 = vsel %vm1220, %v1614, -inf
      %1623 = vmax.xlane.f32.xlu0 %v1622
      %v1624 = vpop.xlane.xlu0 %1623
      %v1625 = vsel %vm1224, %v1619, -inf
      %1626 = vmax.xlane.f32.xlu0 %v1625
      %v1627 = vpop.xlane.xlu0 %1626
      %v1628 = vsub.f32 %v1614, %v1624
      %v1629 = vsub.f32 %v1619, %v1627
      %v1630 = vmul.f32 %v1628, 1.442695
      %v1631 = vpow.pop %v1630
      %v1632 = vmul.f32 %v1629, 1.442695
      %v1633 = vpow.pop %v1632
      %v1634 = vsel %vm1220, %v1631, 0.0
      %1635 = vadd.xlane.f32.xlu0 %v1634
      %v1636 = vpop.xlane.xlu0 %1635
      %v1637 = vsel %vm1224, %v1633, 0.0
      %1638 = vadd.xlane.f32.xlu0 %v1637
      %v1639 = vpop.xlane.xlu0 %1638
      %v1640 = vrcp.pop %v1636
      %v1641 = vrcp.pop %v1639
      %v1642 = vmul.f32 %v1631, %v1640
      %v1643 = vmul.f32 %v1633, %v1641
      %1644 = vrot.lane.b32.xlu0 %v1118, 112
      %v1645 = vpop.permute.xlu0 %1644
      %1646 = vrot.lane.b32.xlu0 %v1123, 112
      %v1647 = vpop.permute.xlu0 %1646
      %v1650 = vsel %vm1220, %v1642, 0
      %v1653 = vsel %vm1220, %v1643, 0
      %v1655 = vsel %vm1250, %v1647, 0
      %1657 = vmatprep.subr.mxu0 0.0
      %1658 = vmatpush1.msra.mxu0 %v1645
      %1659 = vmatprep.subr.mxu0 0.0
      %1660 = vmatpush1.msra.mxu0 %v1655
      %1661 = vmatprep.subr.mxu0 0.0
      %1662 = vmatpush1.msra.mxu0 0.0
      %1663 = vmatprep.subr.mxu0 0.0
      %1664 = vmatpush1.msra.mxu0 0.0
      %1665 = vmatprep.subr.mxu0 0.0
      %1666 = vmatpush1.msra.mxu0 0.0
      %1667 = vmatprep.subr.mxu0 0.0
      %1668 = vmatpush1.msra.mxu0 0.0
      %1669 = vmatprep.subr.mxu0 0.0
      %1670 = vmatpush1.msra.mxu0 0.0
      %1671 = vmatprep.subr.mxu0 0.0
      %1672 = vmatpush1.msra.mxu0 0.0
      %1673 = vmatprep.subr.mxu0 0.0
      %1674 = vmatpush1.msra.mxu0 0.0
      %1675 = vmatprep.subr.mxu0 0.0
      %1676 = vmatpush1.msra.mxu0 0.0
      %1677 = vmatprep.subr.mxu0 0.0
      %1678 = vmatpush1.msra.mxu0 0.0
      %1679 = vmatprep.subr.mxu0 0.0
      %1680 = vmatpush1.msra.mxu0 0.0
      %1681 = vmatprep.subr.mxu0 0.0
      %1682 = vmatpush1.msra.mxu0 0.0
      %1683 = vmatprep.subr.mxu0 0.0
      %1684 = vmatpush1.msra.mxu0 0.0
      %1685 = vmatprep.subr.mxu0 0.0
      %1686 = vmatpush1.msra.mxu0 0.0
      %1687 = vmatprep.subr.mxu0 0.0
      %1688 = vmatpush1.msra.mxu0 0.0
      %1689 = vmatprep.subr.mxu0 0.0
      %1690 = vmatpush1.msra.mxu0 0.0
      %1691 = vmatprep.subr.mxu0 0.0
      %1692 = vmatpush1.msra.mxu0 0.0
      %1693 = vmatprep.subr.mxu0 0.0
      %1694 = vmatpush1.msra.mxu0 0.0
      %1695 = vmatprep.subr.mxu0 0.0
      %1696 = vmatpush1.msra.mxu0 0.0
      %1697 = vmatprep.subr.mxu0 0.0
      %1698 = vmatpush1.msra.mxu0 0.0
      %1699 = vmatprep.subr.mxu0 0.0
      %1700 = vmatpush1.msra.mxu0 0.0
      %1701 = vmatprep.subr.mxu0 0.0
      %1702 = vmatpush1.msra.mxu0 0.0
      %1703 = vmatprep.subr.mxu0 0.0
      %1704 = vmatpush1.msra.mxu0 0.0
      %1705 = vmatprep.subr.mxu0 0.0
      %1706 = vmatpush1.msra.mxu0 0.0
      %1707 = vmatprep.subr.mxu0 0.0
      %1708 = vmatpush1.msra.mxu0 0.0
      %1709 = vmatprep.subr.mxu0 0.0
      %1710 = vmatpush1.msra.mxu0 0.0
      %1711 = vmatprep.subr.mxu0 0.0
      %1712 = vmatpush1.msra.mxu0 0.0
      %1713 = vmatprep.subr.mxu0 0.0
      %1714 = vmatpush1.msra.mxu0 0.0
      %1715 = vmatprep.subr.mxu0 0.0
      %1716 = vmatpush1.msra.mxu0 0.0
      %1717 = vmatprep.subr.mxu0 0.0
      %1718 = vmatpush1.msra.mxu0 0.0
      %1719 = vmatprep.subr.mxu0 0.0
      %1720 = vmatpush1.msra.mxu0 0.0
      %1721 = vmatprep.mubr.f32.mxu0 0.0
      %1722 = vmatmul.mubr.f32.gmra.mrb[0].mxu0 %v1650
      %v1723 = vpop.f32.mrb[0].mxu0
      %v1724 = vadd.f32 0.0, %v1723
      %v1725 = vpop.f32.mrb[0].mxu0
      %1726 = vmatprep.mubr.f32.mxu0 0.0
      %1727 = vmatmul.mubr.f32.gmra.mrb[0].mxu0 %v1653
      %v1728 = vpop.f32.mrb[0].mxu0
      %v1729 = vadd.f32 0.0, %v1728
      %v1730 = vpop.f32.mrb[0].mxu0
      %1731 = vdwg.mxu0
      %1732 = vrot.lane.b32.xlu0 %v1036, 104
      %v1733 = vpop.permute.xlu0 %1732
      %1734 = vrot.lane.b32.xlu0 %v1041, 104
      %v1735 = vpop.permute.xlu0 %1734
      %1736 = vrot.lane.b32.xlu0 %v1036, 72
      %v1737 = vpop.permute.xlu0 %1736
      %1738 = vrot.lane.b32.xlu0 %v1041, 72
      %v1739 = vpop.permute.xlu0 %1738
      %v1740 = vsel %vm1136, %v1733, 0
      %v1742 = vsel %vm1136, %v1735, 0
      %v1744 = vsel %vm1136, %v1737, 0
      %v1746 = vsel %vm1136, %v1739, 0
      %1748 = vmatprep.subr.mxu0 0.0
      %1749 = vmatpush1.xpose.msra.mxu0 %v1744
      %1750 = vmatprep.subr.mxu0 0.0
      %1751 = vmatpush1.xpose.msra.mxu0 %v1746
      %1752 = vmatprep.subr.mxu0 0.0
      %1753 = vmatpush1.xpose.msra.mxu0 0.0
      %1754 = vmatprep.subr.mxu0 0.0
      %1755 = vmatpush1.xpose.msra.mxu0 0.0
      %1756 = vmatprep.subr.mxu0 0.0
      %1757 = vmatpush1.xpose.msra.mxu0 0.0
      %1758 = vmatprep.subr.mxu0 0.0
      %1759 = vmatpush1.xpose.msra.mxu0 0.0
      %1760 = vmatprep.subr.mxu0 0.0
      %1761 = vmatpush1.xpose.msra.mxu0 0.0
      %1762 = vmatprep.subr.mxu0 0.0
      %1763 = vmatpush1.xpose.msra.mxu0 0.0
      %1764 = vmatprep.subr.mxu0 0.0
      %1765 = vmatpush1.xpose.msra.mxu0 0.0
      %1766 = vmatprep.subr.mxu0 0.0
      %1767 = vmatpush1.xpose.msra.mxu0 0.0
      %1768 = vmatprep.subr.mxu0 0.0
      %1769 = vmatpush1.xpose.msra.mxu0 0.0
      %1770 = vmatprep.subr.mxu0 0.0
      %1771 = vmatpush1.xpose.msra.mxu0 0.0
      %1772 = vmatprep.subr.mxu0 0.0
      %1773 = vmatpush1.xpose.msra.mxu0 0.0
      %1774 = vmatprep.subr.mxu0 0.0
      %1775 = vmatpush1.xpose.msra.mxu0 0.0
      %1776 = vmatprep.subr.mxu0 0.0
      %1777 = vmatpush1.xpose.msra.mxu0 0.0
      %1778 = vmatprep.subr.mxu0 0.0
      %1779 = vmatpush1.xpose.msra.mxu0 0.0
      %1780 = vmatprep.subr.mxu0 0.0
      %1781 = vmatpush1.xpose.msra.mxu0 0.0
      %1782 = vmatprep.subr.mxu0 0.0
      %1783 = vmatpush1.xpose.msra.mxu0 0.0
      %1784 = vmatprep.subr.mxu0 0.0
      %1785 = vmatpush1.xpose.msra.mxu0 0.0
      %1786 = vmatprep.subr.mxu0 0.0
      %1787 = vmatpush1.xpose.msra.mxu0 0.0
      %1788 = vmatprep.subr.mxu0 0.0
      %1789 = vmatpush1.xpose.msra.mxu0 0.0
      %1790 = vmatprep.subr.mxu0 0.0
      %1791 = vmatpush1.xpose.msra.mxu0 0.0
      %1792 = vmatprep.subr.mxu0 0.0
      %1793 = vmatpush1.xpose.msra.mxu0 0.0
      %1794 = vmatprep.subr.mxu0 0.0
      %1795 = vmatpush1.xpose.msra.mxu0 0.0
      %1796 = vmatprep.subr.mxu0 0.0
      %1797 = vmatpush1.xpose.msra.mxu0 0.0
      %1798 = vmatprep.subr.mxu0 0.0
      %1799 = vmatpush1.xpose.msra.mxu0 0.0
      %1800 = vmatprep.subr.mxu0 0.0
      %1801 = vmatpush1.xpose.msra.mxu0 0.0
      %1802 = vmatprep.subr.mxu0 0.0
      %1803 = vmatpush1.xpose.msra.mxu0 0.0
      %1804 = vmatprep.subr.mxu0 0.0
      %1805 = vmatpush1.xpose.msra.mxu0 0.0
      %1806 = vmatprep.subr.mxu0 0.0
      %1807 = vmatpush1.xpose.msra.mxu0 0.0
      %1808 = vmatprep.subr.mxu0 0.0
      %1809 = vmatpush1.xpose.msra.mxu0 0.0
      %1810 = vmatprep.subr.mxu0 0.0
      %1811 = vmatpush1.xpose.msra.mxu0 0.0
      %1812 = vmatprep.mubr.f32.mxu0 0.0
      %1813 = vmatmul.mubr.f32.gmra.mrb[0].mxu0 %v1740
      %v1814 = vpop.f32.mrb[0].mxu0
      %v1815 = vadd.f32 0.0, %v1814
      %v1816 = vpop.f32.mrb[0].mxu0
      %1817 = vmatprep.mubr.f32.mxu0 0.0
      %1818 = vmatmul.mubr.f32.gmra.mrb[0].mxu0 %v1742
      %v1819 = vpop.f32.mrb[0].mxu0
      %v1820 = vadd.f32 0.0, %v1819
      %v1821 = vpop.f32.mrb[0].mxu0
      %1822 = vdwg.mxu0
      %v1823 = vsel %vm1220, %v1815, -inf
      %1824 = vmax.xlane.f32.xlu0 %v1823
      %v1825 = vpop.xlane.xlu0 %1824
      %v1826 = vsel %vm1224, %v1820, -inf
      %1827 = vmax.xlane.f32.xlu0 %v1826
      %v1828 = vpop.xlane.xlu0 %1827
      %v1829 = vsub.f32 %v1815, %v1825
      %v1830 = vsub.f32 %v1820, %v1828
      %v1831 = vmul.f32 %v1829, 1.442695
      %v1832 = vpow.pop %v1831
      %v1833 = vmul.f32 %v1830, 1.442695
      %v1834 = vpow.pop %v1833
      %v1835 = vsel %vm1220, %v1832, 0.0
      %1836 = vadd.xlane.f32.xlu0 %v1835
      %v1837 = vpop.xlane.xlu0 %1836
      %v1838 = vsel %vm1224, %v1834, 0.0
      %1839 = vadd.xlane.f32.xlu0 %v1838
      %v1840 = vpop.xlane.xlu0 %1839
      %v1841 = vrcp.pop %v1837
      %v1842 = vrcp.pop %v1840
      %v1843 = vmul.f32 %v1832, %v1841
      %v1844 = vmul.f32 %v1834, %v1842
      %1845 = vrot.lane.b32.xlu0 %v1118, 104
      %v1846 = vpop.permute.xlu0 %1845
      %1847 = vrot.lane.b32.xlu0 %v1123, 104
      %v1848 = vpop.permute.xlu0 %1847
      %v1851 = vsel %vm1220, %v1843, 0
      %v1854 = vsel %vm1220, %v1844, 0
      %v1856 = vsel %vm1250, %v1848, 0
      %1858 = vmatprep.subr.mxu0 0.0
      %1859 = vmatpush1.msra.mxu0 %v1846
      %1860 = vmatprep.subr.mxu0 0.0
      %1861 = vmatpush1.msra.mxu0 %v1856
      %1862 = vmatprep.subr.mxu0 0.0
      %1863 = vmatpush1.msra.mxu0 0.0
      %1864 = vmatprep.subr.mxu0 0.0
      %1865 = vmatpush1.msra.mxu0 0.0
      %1866 = vmatprep.subr.mxu0 0.0
      %1867 = vmatpush1.msra.mxu0 0.0
      %1868 = vmatprep.subr.mxu0 0.0
      %1869 = vmatpush1.msra.mxu0 0.0
      %1870 = vmatprep.subr.mxu0 0.0
      %1871 = vmatpush1.msra.mxu0 0.0
      %1872 = vmatprep.subr.mxu0 0.0
      %1873 = vmatpush1.msra.mxu0 0.0
      %1874 = vmatprep.subr.mxu0 0.0
      %1875 = vmatpush1.msra.mxu0 0.0
      %1876 = vmatprep.subr.mxu0 0.0
      %1877 = vmatpush1.msra.mxu0 0.0
      %1878 = vmatprep.subr.mxu0 0.0
      %1879 = vmatpush1.msra.mxu0 0.0
      %1880 = vmatprep.subr.mxu0 0.0
      %1881 = vmatpush1.msra.mxu0 0.0
      %1882 = vmatprep.subr.mxu0 0.0
      %1883 = vmatpush1.msra.mxu0 0.0
      %1884 = vmatprep.subr.mxu0 0.0
      %1885 = vmatpush1.msra.mxu0 0.0
      %1886 = vmatprep.subr.mxu0 0.0
      %1887 = vmatpush1.msra.mxu0 0.0
      %1888 = vmatprep.subr.mxu0 0.0
      %1889 = vmatpush1.msra.mxu0 0.0
      %1890 = vmatprep.subr.mxu0 0.0
      %1891 = vmatpush1.msra.mxu0 0.0
      %1892 = vmatprep.subr.mxu0 0.0
      %1893 = vmatpush1.msra.mxu0 0.0
      %1894 = vmatprep.subr.mxu0 0.0
      %1895 = vmatpush1.msra.mxu0 0.0
      %1896 = vmatprep.subr.mxu0 0.0
      %1897 = vmatpush1.msra.mxu0 0.0
      %1898 = vmatprep.subr.mxu0 0.0
      %1899 = vmatpush1.msra.mxu0 0.0
      %1900 = vmatprep.subr.mxu0 0.0
      %1901 = vmatpush1.msra.mxu0 0.0
      %1902 = vmatprep.subr.mxu0 0.0
      %1903 = vmatpush1.msra.mxu0 0.0
      %1904 = vmatprep.subr.mxu0 0.0
      %1905 = vmatpush1.msra.mxu0 0.0
      %1906 = vmatprep.subr.mxu0 0.0
      %1907 = vmatpush1.msra.mxu0 0.0
      %1908 = vmatprep.subr.mxu0 0.0
      %1909 = vmatpush1.msra.mxu0 0.0
      %1910 = vmatprep.subr.mxu0 0.0
      %1911 = vmatpush1.msra.mxu0 0.0
      %1912 = vmatprep.subr.mxu0 0.0
      %1913 = vmatpush1.msra.mxu0 0.0
      %1914 = vmatprep.subr.mxu0 0.0
      %1915 = vmatpush1.msra.mxu0 0.0
      %1916 = vmatprep.subr.mxu0 0.0
      %1917 = vmatpush1.msra.mxu0 0.0
      %1918 = vmatprep.subr.mxu0 0.0
      %1919 = vmatpush1.msra.mxu0 0.0
      %1920 = vmatprep.subr.mxu0 0.0
      %1921 = vmatpush1.msra.mxu0 0.0
      %1922 = vmatprep.mubr.f32.mxu0 0.0
      %1923 = vmatmul.mubr.f32.gmra.mrb[0].mxu0 %v1851
      %v1924 = vpop.f32.mrb[0].mxu0
      %v1925 = vadd.f32 0.0, %v1924
      %v1926 = vpop.f32.mrb[0].mxu0
      %1927 = vmatprep.mubr.f32.mxu0 0.0
      %1928 = vmatmul.mubr.f32.gmra.mrb[0].mxu0 %v1854
      %v1929 = vpop.f32.mrb[0].mxu0
      %v1930 = vadd.f32 0.0, %v1929
      %v1931 = vpop.f32.mrb[0].mxu0
      %1932 = vdwg.mxu0
      %1935 = vrot.lane.b32.xlu0 %v1523, 8
      %v1936 = vpop.permute.xlu0 %1935
      %1937 = vrot.lane.b32.xlu0 %v1528, 8
      %v1938 = vpop.permute.xlu0 %1937
      %1943 = vrot.lane.b32.xlu0 %v1724, 16
      %v1944 = vpop.permute.xlu0 %1943
      %1945 = vrot.lane.b32.xlu0 %v1729, 16
      %v1946 = vpop.permute.xlu0 %1945
      %1951 = vrot.lane.b32.xlu0 %v1925, 24
      %v1952 = vpop.permute.xlu0 %1951
      %1953 = vrot.lane.b32.xlu0 %v1930, 24
      %v1954 = vpop.permute.xlu0 %1953
      %v1957 = vsel %vm1136, %v1321, %v1936
      %v1958 = vsel %vm1136, %v1326, %v1938
      %vm1959 = vcmask 130048
      %v1960 = vsel %vm1959, %v1957, %v1944
      %v1961 = vsel %vm1959, %v1958, %v1946
      %vm1962 = vcmask 195584
      %v1963 = vsel %vm1962, %v1960, %v1952
      %v1964 = vsel %vm1962, %v1961, %v1954
      %1965 = vrot.lane.b32.xlu0 %v961, 32
      %v1966 = vpop.permute.xlu0 %1965
      %v1969 = vsel %vm825, %v1963, 0
      %v1972 = vsel %vm825, %v1964, 0
      %1974 = vmatprep.subr.mxu0 0.0
      %1975 = vmatpush1.msra.mxu0 %v1126
      %1976 = vmatprep.subr.mxu0 0.0
      %1977 = vmatpush1.msra.mxu0 %v1127
      %1978 = vmatprep.subr.mxu0 0.0
      %1979 = vmatpush1.msra.mxu0 %v1128
      %1980 = vmatprep.subr.mxu0 0.0
      %1981 = vmatpush1.msra.mxu0 %v1129
      %1982 = vmatprep.subr.mxu0 0.0
      %1983 = vmatpush1.msra.mxu0 0.0
      %1984 = vmatprep.subr.mxu0 0.0
      %1985 = vmatpush1.msra.mxu0 0.0
      %1986 = vmatprep.subr.mxu0 0.0
      %1987 = vmatpush1.msra.mxu0 0.0
      %1988 = vmatprep.subr.mxu0 0.0
      %1989 = vmatpush1.msra.mxu0 0.0
      %1990 = vmatprep.subr.mxu0 0.0
      %1991 = vmatpush1.msra.mxu0 0.0
      %1992 = vmatprep.subr.mxu0 0.0
      %1993 = vmatpush1.msra.mxu0 0.0
      %1994 = vmatprep.subr.mxu0 0.0
      %1995 = vmatpush1.msra.mxu0 0.0
      %1996 = vmatprep.subr.mxu0 0.0
      %1997 = vmatpush1.msra.mxu0 0.0
      %1998 = vmatprep.subr.mxu0 0.0
      %1999 = vmatpush1.msra.mxu0 0.0
      %2000 = vmatprep.subr.mxu0 0.0
      %2001 = vmatpush1.msra.mxu0 0.0
      %2002 = vmatprep.subr.mxu0 0.0
      %2003 = vmatpush1.msra.mxu0 0.0
      %2004 = vmatprep.subr.mxu0 0.0
      %2005 = vmatpush1.msra.mxu0 0.0
      %2006 = vmatprep.subr.mxu0 0.0
      %2007 = vmatpush1.msra.mxu0 0.0
      %2008 = vmatprep.subr.mxu0 0.0
      %2009 = vmatpush1.msra.mxu0 0.0
      %2010 = vmatprep.subr.mxu0 0.0
      %2011 = vmatpush1.msra.mxu0 0.0
      %2012 = vmatprep.subr.mxu0 0.0
      %2013 = vmatpush1.msra.mxu0 0.0
      %2014 = vmatprep.subr.mxu0 0.0
      %2015 = vmatpush1.msra.mxu0 0.0
      %2016 = vmatprep.subr.mxu0 0.0
      %2017 = vmatpush1.msra.mxu0 0.0
      %2018 = vmatprep.subr.mxu0 0.0
      %2019 = vmatpush1.msra.mxu0 0.0
      %2020 = vmatprep.subr.mxu0 0.0
      %2021 = vmatpush1.msra.mxu0 0.0
      %2022 = vmatprep.subr.mxu0 0.0
      %2023 = vmatpush1.msra.mxu0 0.0
      %2024 = vmatprep.subr.mxu0 0.0
      %2025 = vmatpush1.msra.mxu0 0.0
      %2026 = vmatprep.subr.mxu0 0.0
      %2027 = vmatpush1.msra.mxu0 0.0
      %2028 = vmatprep.subr.mxu0 0.0
      %2029 = vmatpush1.msra.mxu0 0.0
      %2030 = vmatprep.subr.mxu0 0.0
      %2031 = vmatpush1.msra.mxu0 0.0
      %2032 = vmatprep.subr.mxu0 0.0
      %2033 = vmatpush1.msra.mxu0 0.0
      %2034 = vmatprep.subr.mxu0 0.0
      %2035 = vmatpush1.msra.mxu0 0.0
      %2036 = vmatprep.subr.mxu0 0.0
      %2037 = vmatpush1.msra.mxu0 0.0
      %2038 = vmatprep.mubr.f32.mxu0 0.0
      %2039 = vmatmul.mubr.f32.gmra.mrb[0].mxu0 %v1969
      %v2040 = vpop.f32.mrb[0].mxu0
      %v2041 = vadd.f32 %v1966, %v2040
      %v2042 = vpop.f32.mrb[0].mxu0
      %2043 = vmatprep.mubr.f32.mxu0 0.0
      %2044 = vmatmul.mubr.f32.gmra.mrb[0].mxu0 %v1972
      %v2045 = vpop.f32.mrb[0].mxu0
      %v2046 = vadd.f32 %v1966, %v2045
      %v2047 = vpop.f32.mrb[0].mxu0
      %2048 = vdwg.mxu0
      %v2049 = vadd.f32 %v812, %v2041
      %v2050 = vadd.f32 %v813, %v2046
      %v2051 = vsel %vm825, %v2049, 0.0
      %2052 = vadd.xlane.f32.xlu0 %v2051
      %v2053 = vpop.xlane.xlu0 %2052
      %v2054 = vsel %vm829, %v2050, 0.0
      %2055 = vadd.xlane.f32.xlu0 %v2054
      %v2056 = vpop.xlane.xlu0 %2055
      %v2057 = vmul.f32 %v2053, %v833
      %v2058 = vmul.f32 %v2056, %v833
      %v2059 = vsub.f32 %v2049, %v2057
      %v2060 = vsub.f32 %v2050, %v2058
      %v2061 = vmul.f32 %v2059, %v2059
      %v2062 = vmul.f32 %v2060, %v2060
      %v2063 = vsel %vm825, %v2061, 0.0
      %2064 = vadd.xlane.f32.xlu0 %v2063
      %v2065 = vpop.xlane.xlu0 %2064
      %v2066 = vsel %vm829, %v2062, 0.0
      %2067 = vadd.xlane.f32.xlu0 %v2066
      %v2068 = vpop.xlane.xlu0 %2067
      %v2069 = vmul.f32 %v2065, %v833
      %v2070 = vmul.f32 %v2068, %v833
      %v2071 = vadd.f32 %v2069, 1e-05
      %v2072 = vadd.f32 %v2070, 1e-05
      %v2073 = vrsqrt.pop %v2071
      %v2074 = vrsqrt.pop %v2072
      %v2075 = vmul.f32 %v2059, %v2073
      %v2076 = vmul.f32 %v2060, %v2074
      %v2077 = vlaneseq
      %v2078 = vshrl.u32 %v2077, 7
      %v2079 = vsub.s32 1, %v2078
      %v2080 = vrot.slane %v822, %v2079
      %v2081 = vmul.f32 %v2075, %v2080
      %v2082 = vmul.f32 %v2076, %v2080
      %v2083 = vlaneseq
      %v2084 = vshrl.u32 %v2083, 7
      %v2085 = vsub.s32 1, %v2084
      %v2086 = vrot.slane %v823, %v2085
      %v2087 = vadd.f32 %v2081, %v2086
      %v2088 = vadd.f32 %v2082, %v2086
      %v2089 = vld [vmem:[%s693] sm:$0xff]
      %v2090 = vld [vmem:[%s693 + $0x8] sm:$0xff]
      %v2091 = vld [vmem:[%s693 + $0x10] sm:$0xff]
      %v2092 = vld [vmem:[%s693 + $0x18] sm:$0xff]
      %v2093 = vld [vmem:[%s696] sm:$0x1]
      %v2095 = vlaneseq
      %v2096 = vshrl.u32 %v2095, 7
      %v2097 = vsub.s32 0, %v2096
      %v2098 = vrot.slane %v2093, %v2097
      %v2101 = vsel %vm825, %v2087, 0
      %v2104 = vsel %vm825, %v2088, 0
      %2106 = vmatprep.subr.mxu0 0.0
      %2107 = vmatpush1.msra.mxu0 %v2089
      %2108 = vmatprep.subr.mxu0 0.0
      %2109 = vmatpush1.msra.mxu0 %v2090
      %2110 = vmatprep.subr.mxu0 0.0
      %2111 = vmatpush1.msra.mxu0 %v2091
      %2112 = vmatprep.subr.mxu0 0.0
      %2113 = vmatpush1.msra.mxu0 %v2092
      %2114 = vmatprep.subr.mxu0 0.0
      %2115 = vmatpush1.msra.mxu0 0.0
      %2116 = vmatprep.subr.mxu0 0.0
      %2117 = vmatpush1.msra.mxu0 0.0
      %2118 = vmatprep.subr.mxu0 0.0
      %2119 = vmatpush1.msra.mxu0 0.0
      %2120 = vmatprep.subr.mxu0 0.0
      %2121 = vmatpush1.msra.mxu0 0.0
      %2122 = vmatprep.subr.mxu0 0.0
      %2123 = vmatpush1.msra.mxu0 0.0
      %2124 = vmatprep.subr.mxu0 0.0
      %2125 = vmatpush1.msra.mxu0 0.0
      %2126 = vmatprep.subr.mxu0 0.0
      %2127 = vmatpush1.msra.mxu0 0.0
      %2128 = vmatprep.subr.mxu0 0.0
      %2129 = vmatpush1.msra.mxu0 0.0
      %2130 = vmatprep.subr.mxu0 0.0
      %2131 = vmatpush1.msra.mxu0 0.0
      %2132 = vmatprep.subr.mxu0 0.0
      %2133 = vmatpush1.msra.mxu0 0.0
      %2134 = vmatprep.subr.mxu0 0.0
      %2135 = vmatpush1.msra.mxu0 0.0
      %2136 = vmatprep.subr.mxu0 0.0
      %2137 = vmatpush1.msra.mxu0 0.0
      %2138 = vmatprep.subr.mxu0 0.0
      %2139 = vmatpush1.msra.mxu0 0.0
      %2140 = vmatprep.subr.mxu0 0.0
      %2141 = vmatpush1.msra.mxu0 0.0
      %2142 = vmatprep.subr.mxu0 0.0
      %2143 = vmatpush1.msra.mxu0 0.0
      %2144 = vmatprep.subr.mxu0 0.0
      %2145 = vmatpush1.msra.mxu0 0.0
      %2146 = vmatprep.subr.mxu0 0.0
      %2147 = vmatpush1.msra.mxu0 0.0
      %2148 = vmatprep.subr.mxu0 0.0
      %2149 = vmatpush1.msra.mxu0 0.0
      %2150 = vmatprep.subr.mxu0 0.0
      %2151 = vmatpush1.msra.mxu0 0.0
      %2152 = vmatprep.subr.mxu0 0.0
      %2153 = vmatpush1.msra.mxu0 0.0
      %2154 = vmatprep.subr.mxu0 0.0
      %2155 = vmatpush1.msra.mxu0 0.0
      %2156 = vmatprep.subr.mxu0 0.0
      %2157 = vmatpush1.msra.mxu0 0.0
      %2158 = vmatprep.subr.mxu0 0.0
      %2159 = vmatpush1.msra.mxu0 0.0
      %2160 = vmatprep.subr.mxu0 0.0
      %2161 = vmatpush1.msra.mxu0 0.0
      %2162 = vmatprep.subr.mxu0 0.0
      %2163 = vmatpush1.msra.mxu0 0.0
      %2164 = vmatprep.subr.mxu0 0.0
      %2165 = vmatpush1.msra.mxu0 0.0
      %2166 = vmatprep.subr.mxu0 0.0
      %2167 = vmatpush1.msra.mxu0 0.0
      %2168 = vmatprep.subr.mxu0 0.0
      %2169 = vmatpush1.msra.mxu0 0.0
      %2170 = vmatprep.mubr.f32.mxu0 0.0
      %2171 = vmatmul.mubr.f32.gmra.mrb[0].mxu0 %v2101
      %v2172 = vpop.f32.mrb[0].mxu0
      %v2173 = vadd.f32 %v2098, %v2172
      %v2174 = vpop.f32.mrb[0].mxu0
      %2175 = vmatprep.mubr.f32.mxu0 0.0
      %2176 = vmatmul.mubr.f32.gmra.mrb[0].mxu0 %v2104
      %v2177 = vpop.f32.mrb[0].mxu0
      %v2178 = vadd.f32 %v2098, %v2177
      %v2179 = vpop.f32.mrb[0].mxu0
      %2180 = vdwg.mxu0
      %v2181 = vmul.f32 %v2173, 0.5
      %v2182 = vmul.f32 %v2178, 0.5
      %v2183 = vmul.f32 %v2173, 0.044715
      %v2184 = vmul.f32 %v2178, 0.044715
      %v2185 = vmul.f32 %v2183, %v2173
      %v2186 = vmul.f32 %v2184, %v2178
      %v2187 = vmul.f32 %v2185, %v2173
      %v2188 = vmul.f32 %v2186, %v2178
      %v2189 = vadd.f32 %v2173, %v2187
      %v2190 = vadd.f32 %v2178, %v2188
      %v2191 = vmul.f32 %v2189, 0.7978846
      %v2192 = vmul.f32 %v2190, 0.7978846
      %v2193 = vtanh.pop %v2191
      %v2194 = vtanh.pop %v2192
      %v2195 = vadd.f32 %v2193, 1.0
      %v2196 = vadd.f32 %v2194, 1.0
      %v2197 = vmul.f32 %v2181, %v2195
      %v2198 = vmul.f32 %v2182, %v2196
      %v2199 = vld [vmem:[%s701] sm:$0xff]
      %v2200 = vld [vmem:[%s701 + $0x8] sm:$0xff]
      %v2201 = vld [vmem:[%s701 + $0x10] sm:$0xff]
      %v2202 = vld [vmem:[%s701 + $0x18] sm:$0xff]
      %v2203 = vld [vmem:[%s701 + $0x20] sm:$0xff]
      %v2204 = vld [vmem:[%s701 + $0x28] sm:$0xff]
      %v2205 = vld [vmem:[%s701 + $0x30] sm:$0xff]
      %v2206 = vld [vmem:[%s701 + $0x38] sm:$0xff]
      %v2207 = vld [vmem:[%s701 + $0x40] sm:$0xff]
      %v2208 = vld [vmem:[%s701 + $0x48] sm:$0xff]
      %v2209 = vld [vmem:[%s701 + $0x50] sm:$0xff]
      %v2210 = vld [vmem:[%s701 + $0x58] sm:$0xff]
      %v2211 = vld [vmem:[%s701 + $0x60] sm:$0xff]
      %v2212 = vld [vmem:[%s701 + $0x68] sm:$0xff]
      %v2213 = vld [vmem:[%s701 + $0x70] sm:$0xff]
      %v2214 = vld [vmem:[%s701 + $0x78] sm:$0xff]
      %v2215 = vld [vmem:[%s704] sm:$0x1]
      %v2217 = vlaneseq
      %v2218 = vshrl.u32 %v2217, 7
      %v2219 = vsub.s32 0, %v2218
      %v2220 = vrot.slane %v2215, %v2219
      %2222 = vmatprep.subr.mxu0 0.0
      %2223 = vmatpush1.msra.mxu0 %v2199
      %2224 = vmatprep.subr.mxu0 0.0
      %2225 = vmatpush1.msra.mxu0 %v2200
      %2226 = vmatprep.subr.mxu0 0.0
      %2227 = vmatpush1.msra.mxu0 %v2201
      %2228 = vmatprep.subr.mxu0 0.0
      %2229 = vmatpush1.msra.mxu0 %v2202
      %2230 = vmatprep.subr.mxu0 0.0
      %2231 = vmatpush1.msra.mxu0 %v2203
      %2232 = vmatprep.subr.mxu0 0.0
      %2233 = vmatpush1.msra.mxu0 %v2204
      %2234 = vmatprep.subr.mxu0 0.0
      %2235 = vmatpush1.msra.mxu0 %v2205
      %2236 = vmatprep.subr.mxu0 0.0
      %2237 = vmatpush1.msra.mxu0 %v2206
      %2238 = vmatprep.subr.mxu0 0.0
      %2239 = vmatpush1.msra.mxu0 %v2207
      %2240 = vmatprep.subr.mxu0 0.0
      %2241 = vmatpush1.msra.mxu0 %v2208
      %2242 = vmatprep.subr.mxu0 0.0
      %2243 = vmatpush1.msra.mxu0 %v2209
      %2244 = vmatprep.subr.mxu0 0.0
      %2245 = vmatpush1.msra.mxu0 %v2210
      %2246 = vmatprep.subr.mxu0 0.0
      %2247 = vmatpush1.msra.mxu0 %v2211
      %2248 = vmatprep.subr.mxu0 0.0
      %2249 = vmatpush1.msra.mxu0 %v2212
      %2250 = vmatprep.subr.mxu0 0.0
      %2251 = vmatpush1.msra.mxu0 %v2213
      %2252 = vmatprep.subr.mxu0 0.0
      %2253 = vmatpush1.msra.mxu0 %v2214
      %2254 = vmatprep.subr.mxu0 0.0
      %2255 = vmatpush1.msra.mxu0 0.0
      %2256 = vmatprep.subr.mxu0 0.0
      %2257 = vmatpush1.msra.mxu0 0.0
      %2258 = vmatprep.subr.mxu0 0.0
      %2259 = vmatpush1.msra.mxu0 0.0
      %2260 = vmatprep.subr.mxu0 0.0
      %2261 = vmatpush1.msra.mxu0 0.0
      %2262 = vmatprep.subr.mxu0 0.0
      %2263 = vmatpush1.msra.mxu0 0.0
      %2264 = vmatprep.subr.mxu0 0.0
      %2265 = vmatpush1.msra.mxu0 0.0
      %2266 = vmatprep.subr.mxu0 0.0
      %2267 = vmatpush1.msra.mxu0 0.0
      %2268 = vmatprep.subr.mxu0 0.0
      %2269 = vmatpush1.msra.mxu0 0.0
      %2270 = vmatprep.subr.mxu0 0.0
      %2271 = vmatpush1.msra.mxu0 0.0
      %2272 = vmatprep.subr.mxu0 0.0
      %2273 = vmatpush1.msra.mxu0 0.0
      %2274 = vmatprep.subr.mxu0 0.0
      %2275 = vmatpush1.msra.mxu0 0.0
      %2276 = vmatprep.subr.mxu0 0.0
      %2277 = vmatpush1.msra.mxu0 0.0
      %2278 = vmatprep.subr.mxu0 0.0
      %2279 = vmatpush1.msra.mxu0 0.0
      %2280 = vmatprep.subr.mxu0 0.0
      %2281 = vmatpush1.msra.mxu0 0.0
      %2282 = vmatprep.subr.mxu0 0.0
      %2283 = vmatpush1.msra.mxu0 0.0
      %2284 = vmatprep.subr.mxu0 0.0
      %2285 = vmatpush1.msra.mxu0 0.0
      %2286 = vmatprep.mubr.f32.mxu0 0.0
      %2287 = vmatmul.mubr.f32.gmra.mrb[0].mxu0 %v2197
      %v2288 = vpop.f32.mrb[0].mxu0
      %v2289 = vadd.f32 %v2220, %v2288
      %v2290 = vpop.f32.mrb[0].mxu0
      %2291 = vmatprep.mubr.f32.mxu0 0.0
      %2292 = vmatmul.mubr.f32.gmra.mrb[0].mxu0 %v2198
      %v2293 = vpop.f32.mrb[0].mxu0
      %v2294 = vadd.f32 %v2220, %v2293
      %v2295 = vpop.f32.mrb[0].mxu0
      %2296 = vdwg.mxu0
      %v2297 = vadd.f32 %v2049, %v2289
      %v2298 = vadd.f32 %v2050, %v2294
      %2299 = vst.msk [vmem:[#allocation2] sm:$0xff] %vm825, %v2297
      %2300 = vst.msk [vmem:[#allocation2 + $0x8] sm:$0x3] %vm829, %v2298
      %p2301 = scmp.eq.s32.totalorder %s32, 1
      // Predicated region
      $region89: #{_lambda_.2} parent=83 // pred_check
        %p2302 = pneg %p2301
      $region90: #{_lambda_.2} parent=83 // pred_check_branch
        %2304 = sbr.rel (%p2302) target = $region92
      $region91: #{_lambda_.2} parent=83 // pred_region
        %2305 = vst.msk [vmem:[%s709] sm:$0xff] %vm825, %v2297
        %2306 = vst.msk [vmem:[%s709 + $0x8] sm:$0x3] %vm829, %v2298
      $region92: #{_lambda_.2} parent=83 // pred_fallthru
        _
      %p2307 = scmp.lt.s32.totalorder %s31, 1
      %s2308 = scalar_select %p2307, %s31, 1
      %s2309 = smul.addr %s2308, 2
      %s2310 = smul.addr %s2309, 8
      %s2311 = scalar_lea.vmem %s16, %s2310
      // Predicated region
      $region93: #{_lambda_.2} parent=83 // pred_check
        %p2312 = pneg %p448
      $region94: #{_lambda_.2} parent=83 // pred_check_branch
        %2314 = sbr.rel (%p2312) target = $region96
      $region95: #{_lambda_.2} parent=83 // pred_region
        _
      $region96: #{_lambda_.2} parent=83 // pred_fallthru
        _
    $region84: #{_lambda_.2} parent=5 // pred_fallthru
      _
    %p2315 = scmp.le.s32.totalorder 2, %s22
    // Predicated region
    $region97: #{_lambda_.2} parent=5 // pred_check
      %p2316 = pneg %p2315
    $region98: #{_lambda_.2} parent=5 // pred_check_branch
      %2318 = sbr.rel (%p2316) target = $region100
    $region99: #{_lambda_.2} parent=5 // pred_region
      %s2319 = ssub.s32 %s22, 2
      // Predicated region
      $region101: #{_lambda_.2} parent=99 // pred_check
        %p2320 = pneg %p454
      $region102: #{_lambda_.2} parent=99 // pred_check_branch
        %2322 = sbr.rel (%p2320) target = $region104
      $region103: #{_lambda_.2} parent=99 // pred_region
        %p2323 = scmp.lt.s32.totalorder %s33, 1
        %s2324 = scalar_select %p2323, %s33, 1
        %s2325 = smul.addr %s2324, 2
        %s2326 = smul.addr %s2325, 8
        %s2327 = scalar_lea.vmem %s16, %s2326
      $region104: #{_lambda_.2} parent=99 // pred_fallthru
        _
    $region100: #{_lambda_.2} parent=5 // pred_fallthru
      _
  $region6: #{_lambda_.2} parent=0 // loop_footer
    %s26 = sadd.s32 1, %s22
  $region7: #{_lambda_.2} parent=0 // loop_footer_branch
    %21 = sbr.rel target = $region3
  $region8: #{_lambda_.2} parent=0 // loop_exit
    _

// kernel: _lambda_.3
$region0: #{_lambda_.3}
  #allocation0 [shape = 'u32[]', space=smem, size = 0x4, offset = 0x4, fixed_abs, tag = 'smem constant byte address 0x4 - core index']
  #allocation1 [shape = 'u32[144,128]{1,0:T(1,128)}', space=vmem, size = 0x12000, scoped, tag = 'internal scratch']
  #allocation2 [shape = 'f32[8,32]{1,0:T(8,128)}', space=vmem, size = 0x1000, scoped, tag = 'scratch operand']
  #allocation3 [shape = 'f32[1,32]{1,0:T(1,128)}', space=vmem, size = 0x200, scoped, tag = 'scratch operand']
  %s0 = inlined_call_operand.smem [shape: u32[30], index: -1, kind: input, shape index: {}]
  %s1 = sld [smem:[%s0]]
  %s2 = scalar_lea.smem %s0, 1
  %s3 = sld [smem:[%s2]]
  %s4 = scalar_lea.smem %s0, 2
  %s5 = sld [smem:[%s4]]
  %s6 = scalar_lea.smem %s0, 3
  %s7 = sld [smem:[%s6]]
  %s8 = scalar_lea.smem %s0, 4
  %s9 = sld [smem:[%s8]]
  %s10 = scalar_lea.smem %s0, 5
  %s11 = sld [smem:[%s10]]
  %s12 = scalar_lea.smem %s0, 6
  %s13 = sld [smem:[%s12]]
  %s14 = scalar_lea.smem %s0, 7
  %s15 = sld [smem:[%s14]]
  %s16 = scalar_lea.smem %s0, 8
  %s17 = sld [smem:[%s16]]
  %s18 = scalar_lea.smem %s0, 9
  %s19 = sld [smem:[%s18]]
  %s20 = scalar_lea.smem %s0, 10
  %s21 = sld [smem:[%s20]]
  %s22 = scalar_lea.smem %s0, 11
  %s23 = sld [smem:[%s22]]
  %s24 = scalar_lea.smem %s0, 12
  %s25 = sld [smem:[%s24]]
  %s26 = scalar_lea.smem %s0, 13
  %s27 = sld [smem:[%s26]]
  %s28 = scalar_lea.smem %s0, 14
  %s29 = sld [smem:[%s28]]
  %s30 = scalar_lea.smem %s0, 15
  %s31 = sld [smem:[%s30]]
  %s32 = scalar_lea.smem %s0, 16
  %s33 = sld [smem:[%s32]]
  %s34 = scalar_lea.smem %s0, 17
  %s35 = sld [smem:[%s34]]
  %s36 = scalar_lea.smem %s0, 18
  %s37 = sld [smem:[%s36]]
  %s38 = scalar_lea.smem %s0, 19
  %s39 = sld [smem:[%s38]]
  %s40 = scalar_lea.smem %s0, 20
  %s41 = sld [smem:[%s40]]
  %s42 = scalar_lea.smem %s0, 21
  %s43 = sld [smem:[%s42]]
  %s44 = scalar_lea.smem %s0, 22
  %s45 = sld [smem:[%s44]]
  %s46 = scalar_lea.smem %s0, 23
  %s47 = sld [smem:[%s46]]
  %s48 = scalar_lea.smem %s0, 24
  %s49 = sld [smem:[%s48]]
  %s50 = scalar_lea.smem %s0, 25
  %s51 = sld [smem:[%s50]]
  %s52 = scalar_lea.smem %s0, 26
  %s53 = sld [smem:[%s52]]
  %s54 = scalar_lea.smem %s0, 27
  %s55 = sld [smem:[%s54]]
  %s56 = scalar_lea.smem %s0, 28
  %s57 = sld [smem:[%s56]]
  %s58 = scalar_lea.smem %s0, 29
  %s59 = sld [smem:[%s58]]
  %s60 = sld [smem:[#allocation0]]
  $region157: #{_lambda_.3} parent=0
    _
  %s62 = ssub.s32 1, %s60
  %s63 = scalar_select 0, %s62, %s60
  $region1: #{_lambda_.3} parent=0
    #allocation4 [shape = 'u8[8192]{0}', space=vmem, size = 0x2000, scoped, tag = 'output window, operand 0']
    #allocation5 [shape = 's32[2]{0}', space=sflag, size = 0x8, scoped, tag = 'scoped memory for _lambda_.3']
    %64 = vsyncpa [#allocation5], 0
    %s65 = scalar_lea.sflag [#allocation5], 1
    %66 = vsyncpa %s65, 0
    loop: start=0, step=1, limit=6
    $region2: #{_lambda_.3} parent=1 // loop_pre_header
      _
    $region3: #{_lambda_.3} parent=1 // loop_header
      %s68 = sphi 0, %s72
      %p69 = scmp.ge.s32.totalorder %s68, 6
      %s75 = sphi 0, %s87
      %s76 = sphi 0, %s83
      %s77 = sphi 0, %s75
      %s78 = sphi 0, %s76
      %s79 = sphi 0, %s77
      %s80 = sphi 0, %s78
      %s90 = sphi 0, %s92
      %s93 = sphi 0, %s90
      %s94 = sphi 0, %s93
      %s110 = sphi 0, %s94
      %s116 = sphi 0, %s118
      %s119 = sphi 0, %s116
      %s120 = sphi 0, %s119
      %s136 = sphi 0, %s120
      %s142 = sphi 0, %s144
      %s145 = sphi 0, %s142
      %s146 = sphi 0, %s145
      %s162 = sphi 0, %s146
      %s166 = sphi 0, %s166
      %s168 = sphi 0, %s166
      %s169 = sphi 0, %s168
      %s183 = sphi 0, %s169
      %s187 = sphi 0, %s187
      %s189 = sphi 0, %s187
      %s190 = sphi 0, %s189
      %s204 = sphi 0, %s190
      %s208 = sphi 0, %s208
      %s210 = sphi 0, %s208
      %s211 = sphi 0, %s210
      %s225 = sphi 0, %s211
      %s229 = sphi 0, %s229
      %s231 = sphi 0, %s229
      %s232 = sphi 0, %s231
      %s246 = sphi 0, %s232
      %s250 = sphi 0, %s250
      %s252 = sphi 0, %s250
      %s253 = sphi 0, %s252
      %s267 = sphi 0, %s253
      %s271 = sphi 0, %s271
      %s273 = sphi 0, %s271
      %s274 = sphi 0, %s273
      %s288 = sphi 0, %s274
      %s292 = sphi 0, %s292
      %s294 = sphi 0, %s292
      %s295 = sphi 0, %s294
      %s309 = sphi 0, %s295
      %s313 = sphi 0, %s313
      %s315 = sphi 0, %s313
      %s316 = sphi 0, %s315
      %s330 = sphi 0, %s316
      %s334 = sphi 0, %s334
      %s336 = sphi 0, %s334
      %s337 = sphi 0, %s336
      %s351 = sphi 0, %s337
      %s355 = sphi 0, %s355
      %s357 = sphi 0, %s355
      %s358 = sphi 0, %s357
      %s372 = sphi 0, %s358
      %s378 = sphi 0, %s380
      %s381 = sphi 0, %s378
      %s382 = sphi 0, %s381
      %s398 = sphi 0, %s382
      %s404 = sphi 0, %s406
      %s407 = sphi 0, %s404
      %s408 = sphi 0, %s407
      %s424 = sphi 0, %s408
      %s430 = sphi 0, %s432
      %s433 = sphi 0, %s430
      %s434 = sphi 0, %s433
      %s450 = sphi 0, %s434
      %s456 = sphi 0, %s458
      %s459 = sphi 0, %s456
      %s460 = sphi 0, %s459
      %s476 = sphi 0, %s460
      %s482 = sphi 0, %s484
      %s485 = sphi 0, %s482
      %s486 = sphi 0, %s485
      %s502 = sphi 0, %s486
      %s508 = sphi 0, %s510
      %s511 = sphi 0, %s508
      %s512 = sphi 0, %s511
      %s528 = sphi 0, %s512
      %s534 = sphi 0, %s536
      %s537 = sphi 0, %s534
      %s538 = sphi 0, %s537
      %s554 = sphi 0, %s538
      %s560 = sphi 0, %s562
      %s563 = sphi 0, %s560
      %s564 = sphi 0, %s563
      %s580 = sphi 0, %s564
      %s586 = sphi 0, %s588
      %s589 = sphi 0, %s586
      %s590 = sphi 0, %s589
      %s606 = sphi 0, %s590
      %s612 = sphi 0, %s614
      %s615 = sphi 0, %s612
      %s616 = sphi 0, %s615
      %s632 = sphi 0, %s616
      %s638 = sphi 0, %s640
      %s641 = sphi 0, %s638
      %s642 = sphi 0, %s641
      %s658 = sphi 0, %s642
      %s664 = sphi 0, %s666
      %s667 = sphi 0, %s664
      %s668 = sphi 0, %s667
      %s684 = sphi 0, %s668
      %s690 = sphi 0, %s692
      %s693 = sphi 0, %s690
      %s694 = sphi 0, %s693
      %s710 = sphi 0, %s694
      %s716 = sphi 0, %s718
      %s719 = sphi 0, %s716
      %s720 = sphi 0, %s719
      %s736 = sphi 0, %s720
      %s740 = sphi 0, %s740
      %s742 = sphi 0, %s740
      %s743 = sphi 0, %s742
      %s757 = sphi 0, %s743
      %s761 = sphi 0, %s761
      %s763 = sphi 0, %s761
      %s764 = sphi 0, %s763
      %s778 = sphi 0, %s764
      %s784 = sphi 0, %s786
      %s787 = sphi 0, %s784
      %s788 = sphi 0, %s787
      %s804 = sphi 0, %s788
    $region4: #{_lambda_.3} parent=1 // loop_header_branch
      %71 = sbr.rel (%p69) target = $region8
    $region5: #{_lambda_.3} parent=1 // loop_body
      %s73 = ssub.s32 %s68, 1
      %s74 = ssub.s32 %s68, 2
      %s81 = sadd.s32 1, %s76
      %p82 = scmp.ge.s32.totalorder %s81, 2
      %s83 = scalar_select %p82, 0, %s81
      %s84 = sadd.s32 1, %s75
      %s85 = scalar_select %p82, %s84, %s75
      %p86 = scmp.ge.s32.totalorder %s85, 2
      %s87 = scalar_select %p86, 0, %s85
      %s88 = ssub.s32 %s75, %s87
      %p89 = scmp.eq.s32.totalorder %s88, 0
      %s91 = sadd.s32 %s90, 1
      %s92 = scalar_select %p89, %s90, %s91
      %p95 = pneg %p89
      %p96 = scmp.eq.s32.totalorder %s68, 3
      %p97 = por %p95, %p96
      %p98 = scmp.ne.s32.totalorder %s90, %s93
      %p99 = scmp.eq.s32.totalorder %s68, 0
      %p100 = por %p98, %p99
      %p101 = scmp.ne.s32.totalorder %s90, %s93
      %p102 = scmp.eq.s32.totalorder %s73, 3
      %p103 = por %p101, %p102
      %p104 = scmp.ne.s32.totalorder %s93, %s94
      %p105 = scmp.eq.s32.totalorder %s73, 0
      %p106 = por %p104, %p105
      %p107 = scmp.ne.s32.totalorder %s93, %s94
      %p108 = scmp.eq.s32.totalorder %s74, 3
      %p109 = por %p107, %p108
      %p111 = scmp.ne.s32.totalorder %s94, %s110
      %p112 = scmp.eq.s32.totalorder %s74, 0
      %p113 = por %p111, %p112
      %s114 = ssub.s32 %s75, %s87
      %p115 = scmp.eq.s32.totalorder %s114, 0
      %s117 = sadd.s32 %s116, 1
      %s118 = scalar_select %p115, %s116, %s117
      %p121 = pneg %p115
      %p122 = scmp.eq.s32.totalorder %s68, 3
      %p123 = por %p121, %p122
      %p124 = scmp.ne.s32.totalorder %s116, %s119
      %p125 = scmp.eq.s32.totalorder %s68, 0
      %p126 = por %p124, %p125
      %p127 = scmp.ne.s32.totalorder %s116, %s119
      %p128 = scmp.eq.s32.totalorder %s73, 3
      %p129 = por %p127, %p128
      %p130 = scmp.ne.s32.totalorder %s119, %s120
      %p131 = scmp.eq.s32.totalorder %s73, 0
      %p132 = por %p130, %p131
      %p133 = scmp.ne.s32.totalorder %s119, %s120
      %p134 = scmp.eq.s32.totalorder %s74, 3
      %p135 = por %p133, %p134
      %p137 = scmp.ne.s32.totalorder %s120, %s136
      %p138 = scmp.eq.s32.totalorder %s74, 0
      %p139 = por %p137, %p138
      %s140 = ssub.s32 %s75, %s87
      %p141 = scmp.eq.s32.totalorder %s140, 0
      %s143 = sadd.s32 %s142, 1
      %s144 = scalar_select %p141, %s142, %s143
      %p147 = pneg %p141
      %p148 = scmp.eq.s32.totalorder %s68, 3
      %p149 = por %p147, %p148
      %p150 = scmp.ne.s32.totalorder %s142, %s145
      %p151 = scmp.eq.s32.totalorder %s68, 0
      %p152 = por %p150, %p151
      %p153 = scmp.ne.s32.totalorder %s142, %s145
      %p154 = scmp.eq.s32.totalorder %s73, 3
      %p155 = por %p153, %p154
      %p156 = scmp.ne.s32.totalorder %s145, %s146
      %p157 = scmp.eq.s32.totalorder %s73, 0
      %p158 = por %p156, %p157
      %p159 = scmp.ne.s32.totalorder %s145, %s146
      %p160 = scmp.eq.s32.totalorder %s74, 3
      %p161 = por %p159, %p160
      %p163 = scmp.ne.s32.totalorder %s146, %s162
      %p164 = scmp.eq.s32.totalorder %s74, 0
      %p165 = por %p163, %p164
      %s167 = sadd.s32 %s166, 1
      %p170 = scmp.eq.s32.totalorder %s68, 3
      %p171 = scmp.ne.s32.totalorder %s166, %s168
      %p172 = scmp.eq.s32.totalorder %s68, 0
      %p173 = por %p171, %p172
      %p174 = scmp.ne.s32.totalorder %s166, %s168
      %p175 = scmp.eq.s32.totalorder %s73, 3
      %p176 = por %p174, %p175
      %p177 = scmp.ne.s32.totalorder %s168, %s169
      %p178 = scmp.eq.s32.totalorder %s73, 0
      %p179 = por %p177, %p178
      %p180 = scmp.ne.s32.totalorder %s168, %s169
      %p181 = scmp.eq.s32.totalorder %s74, 3
      %p182 = por %p180, %p181
      %p184 = scmp.ne.s32.totalorder %s169, %s183
      %p185 = scmp.eq.s32.totalorder %s74, 0
      %p186 = por %p184, %p185
      %s188 = sadd.s32 %s187, 1
      %p191 = scmp.eq.s32.totalorder %s68, 3
      %p192 = scmp.ne.s32.totalorder %s187, %s189
      %p193 = scmp.eq.s32.totalorder %s68, 0
      %p194 = por %p192, %p193
      %p195 = scmp.ne.s32.totalorder %s187, %s189
      %p196 = scmp.eq.s32.totalorder %s73, 3
      %p197 = por %p195, %p196
      %p198 = scmp.ne.s32.totalorder %s189, %s190
      %p199 = scmp.eq.s32.totalorder %s73, 0
      %p200 = por %p198, %p199
      %p201 = scmp.ne.s32.totalorder %s189, %s190
      %p202 = scmp.eq.s32.totalorder %s74, 3
      %p203 = por %p201, %p202
      %p205 = scmp.ne.s32.totalorder %s190, %s204
      %p206 = scmp.eq.s32.totalorder %s74, 0
      %p207 = por %p205, %p206
      %s209 = sadd.s32 %s208, 1
      %p212 = scmp.eq.s32.totalorder %s68, 3
      %p213 = scmp.ne.s32.totalorder %s208, %s210
      %p214 = scmp.eq.s32.totalorder %s68, 0
      %p215 = por %p213, %p214
      %p216 = scmp.ne.s32.totalorder %s208, %s210
      %p217 = scmp.eq.s32.totalorder %s73, 3
      %p218 = por %p216, %p217
      %p219 = scmp.ne.s32.totalorder %s210, %s211
      %p220 = scmp.eq.s32.totalorder %s73, 0
      %p221 = por %p219, %p220
      %p222 = scmp.ne.s32.totalorder %s210, %s211
      %p223 = scmp.eq.s32.totalorder %s74, 3
      %p224 = por %p222, %p223
      %p226 = scmp.ne.s32.totalorder %s211, %s225
      %p227 = scmp.eq.s32.totalorder %s74, 0
      %p228 = por %p226, %p227
      %s230 = sadd.s32 %s229, 1
      %p233 = scmp.eq.s32.totalorder %s68, 3
      %p234 = scmp.ne.s32.totalorder %s229, %s231
      %p235 = scmp.eq.s32.totalorder %s68, 0
      %p236 = por %p234, %p235
      %p237 = scmp.ne.s32.totalorder %s229, %s231
      %p238 = scmp.eq.s32.totalorder %s73, 3
      %p239 = por %p237, %p238
      %p240 = scmp.ne.s32.totalorder %s231, %s232
      %p241 = scmp.eq.s32.totalorder %s73, 0
      %p242 = por %p240, %p241
      %p243 = scmp.ne.s32.totalorder %s231, %s232
      %p244 = scmp.eq.s32.totalorder %s74, 3
      %p245 = por %p243, %p244
      %p247 = scmp.ne.s32.totalorder %s232, %s246
      %p248 = scmp.eq.s32.totalorder %s74, 0
      %p249 = por %p247, %p248
      %s251 = sadd.s32 %s250, 1
      %p254 = scmp.eq.s32.totalorder %s68, 3
      %p255 = scmp.ne.s32.totalorder %s250, %s252
      %p256 = scmp.eq.s32.totalorder %s68, 0
      %p257 = por %p255, %p256
      %p258 = scmp.ne.s32.totalorder %s250, %s252
      %p259 = scmp.eq.s32.totalorder %s73, 3
      %p260 = por %p258, %p259
      %p261 = scmp.ne.s32.totalorder %s252, %s253
      %p262 = scmp.eq.s32.totalorder %s73, 0
      %p263 = por %p261, %p262
      %p264 = scmp.ne.s32.totalorder %s252, %s253
      %p265 = scmp.eq.s32.totalorder %s74, 3
      %p266 = por %p264, %p265
      %p268 = scmp.ne.s32.totalorder %s253, %s267
      %p269 = scmp.eq.s32.totalorder %s74, 0
      %p270 = por %p268, %p269
      %s272 = sadd.s32 %s271, 1
      %p275 = scmp.eq.s32.totalorder %s68, 3
      %p276 = scmp.ne.s32.totalorder %s271, %s273
      %p277 = scmp.eq.s32.totalorder %s68, 0
      %p278 = por %p276, %p277
      %p279 = scmp.ne.s32.totalorder %s271, %s273
      %p280 = scmp.eq.s32.totalorder %s73, 3
      %p281 = por %p279, %p280
      %p282 = scmp.ne.s32.totalorder %s273, %s274
      %p283 = scmp.eq.s32.totalorder %s73, 0
      %p284 = por %p282, %p283
      %p285 = scmp.ne.s32.totalorder %s273, %s274
      %p286 = scmp.eq.s32.totalorder %s74, 3
      %p287 = por %p285, %p286
      %p289 = scmp.ne.s32.totalorder %s274, %s288
      %p290 = scmp.eq.s32.totalorder %s74, 0
      %p291 = por %p289, %p290
      %s293 = sadd.s32 %s292, 1
      %p296 = scmp.eq.s32.totalorder %s68, 3
      %p297 = scmp.ne.s32.totalorder %s292, %s294
      %p298 = scmp.eq.s32.totalorder %s68, 0
      %p299 = por %p297, %p298
      %p300 = scmp.ne.s32.totalorder %s292, %s294
      %p301 = scmp.eq.s32.totalorder %s73, 3
      %p302 = por %p300, %p301
      %p303 = scmp.ne.s32.totalorder %s294, %s295
      %p304 = scmp.eq.s32.totalorder %s73, 0
      %p305 = por %p303, %p304
      %p306 = scmp.ne.s32.totalorder %s294, %s295
      %p307 = scmp.eq.s32.totalorder %s74, 3
      %p308 = por %p306, %p307
      %p310 = scmp.ne.s32.totalorder %s295, %s309
      %p311 = scmp.eq.s32.totalorder %s74, 0
      %p312 = por %p310, %p311
      %s314 = sadd.s32 %s313, 1
      %p317 = scmp.eq.s32.totalorder %s68, 3
      %p318 = scmp.ne.s32.totalorder %s313, %s315
      %p319 = scmp.eq.s32.totalorder %s68, 0
      %p320 = por %p318, %p319
      %p321 = scmp.ne.s32.totalorder %s313, %s315
      %p322 = scmp.eq.s32.totalorder %s73, 3
      %p323 = por %p321, %p322
      %p324 = scmp.ne.s32.totalorder %s315, %s316
      %p325 = scmp.eq.s32.totalorder %s73, 0
      %p326 = por %p324, %p325
      %p327 = scmp.ne.s32.totalorder %s315, %s316
      %p328 = scmp.eq.s32.totalorder %s74, 3
      %p329 = por %p327, %p328
      %p331 = scmp.ne.s32.totalorder %s316, %s330
      %p332 = scmp.eq.s32.totalorder %s74, 0
      %p333 = por %p331, %p332
      %s335 = sadd.s32 %s334, 1
      %p338 = scmp.eq.s32.totalorder %s68, 3
      %p339 = scmp.ne.s32.totalorder %s334, %s336
      %p340 = scmp.eq.s32.totalorder %s68, 0
      %p341 = por %p339, %p340
      %p342 = scmp.ne.s32.totalorder %s334, %s336
      %p343 = scmp.eq.s32.totalorder %s73, 3
      %p344 = por %p342, %p343
      %p345 = scmp.ne.s32.totalorder %s336, %s337
      %p346 = scmp.eq.s32.totalorder %s73, 0
      %p347 = por %p345, %p346
      %p348 = scmp.ne.s32.totalorder %s336, %s337
      %p349 = scmp.eq.s32.totalorder %s74, 3
      %p350 = por %p348, %p349
      %p352 = scmp.ne.s32.totalorder %s337, %s351
      %p353 = scmp.eq.s32.totalorder %s74, 0
      %p354 = por %p352, %p353
      %s356 = sadd.s32 %s355, 1
      %p359 = scmp.eq.s32.totalorder %s68, 3
      %p360 = scmp.ne.s32.totalorder %s355, %s357
      %p361 = scmp.eq.s32.totalorder %s68, 0
      %p362 = por %p360, %p361
      %p363 = scmp.ne.s32.totalorder %s355, %s357
      %p364 = scmp.eq.s32.totalorder %s73, 3
      %p365 = por %p363, %p364
      %p366 = scmp.ne.s32.totalorder %s357, %s358
      %p367 = scmp.eq.s32.totalorder %s73, 0
      %p368 = por %p366, %p367
      %p369 = scmp.ne.s32.totalorder %s357, %s358
      %p370 = scmp.eq.s32.totalorder %s74, 3
      %p371 = por %p369, %p370
      %p373 = scmp.ne.s32.totalorder %s358, %s372
      %p374 = scmp.eq.s32.totalorder %s74, 0
      %p375 = por %p373, %p374
      %s376 = ssub.s32 %s76, %s83
      %p377 = scmp.eq.s32.totalorder %s376, 0
      %s379 = sadd.s32 %s378, 1
      %s380 = scalar_select %p377, %s378, %s379
      %p383 = pneg %p377
      %p384 = scmp.eq.s32.totalorder %s68, 3
      %p385 = por %p383, %p384
      %p386 = scmp.ne.s32.totalorder %s378, %s381
      %p387 = scmp.eq.s32.totalorder %s68, 0
      %p388 = por %p386, %p387
      %p389 = scmp.ne.s32.totalorder %s378, %s381
      %p390 = scmp.eq.s32.totalorder %s73, 3
      %p391 = por %p389, %p390
      %p392 = scmp.ne.s32.totalorder %s381, %s382
      %p393 = scmp.eq.s32.totalorder %s73, 0
      %p394 = por %p392, %p393
      %p395 = scmp.ne.s32.totalorder %s381, %s382
      %p396 = scmp.eq.s32.totalorder %s74, 3
      %p397 = por %p395, %p396
      %p399 = scmp.ne.s32.totalorder %s382, %s398
      %p400 = scmp.eq.s32.totalorder %s74, 0
      %p401 = por %p399, %p400
      %s402 = ssub.s32 %s76, %s83
      %p403 = scmp.eq.s32.totalorder %s402, 0
      %s405 = sadd.s32 %s404, 1
      %s406 = scalar_select %p403, %s404, %s405
      %p409 = pneg %p403
      %p410 = scmp.eq.s32.totalorder %s68, 3
      %p411 = por %p409, %p410
      %p412 = scmp.ne.s32.totalorder %s404, %s407
      %p413 = scmp.eq.s32.totalorder %s68, 0
      %p414 = por %p412, %p413
      %p415 = scmp.ne.s32.totalorder %s404, %s407
      %p416 = scmp.eq.s32.totalorder %s73, 3
      %p417 = por %p415, %p416
      %p418 = scmp.ne.s32.totalorder %s407, %s408
      %p419 = scmp.eq.s32.totalorder %s73, 0
      %p420 = por %p418, %p419
      %p421 = scmp.ne.s32.totalorder %s407, %s408
      %p422 = scmp.eq.s32.totalorder %s74, 3
      %p423 = por %p421, %p422
      %p425 = scmp.ne.s32.totalorder %s408, %s424
      %p426 = scmp.eq.s32.totalorder %s74, 0
      %p427 = por %p425, %p426
      %s428 = ssub.s32 %s76, %s83
      %p429 = scmp.eq.s32.totalorder %s428, 0
      %s431 = sadd.s32 %s430, 1
      %s432 = scalar_select %p429, %s430, %s431
      %p435 = pneg %p429
      %p436 = scmp.eq.s32.totalorder %s68, 3
      %p437 = por %p435, %p436
      %p438 = scmp.ne.s32.totalorder %s430, %s433
      %p439 = scmp.eq.s32.totalorder %s68, 0
      %p440 = por %p438, %p439
      %p441 = scmp.ne.s32.totalorder %s430, %s433
      %p442 = scmp.eq.s32.totalorder %s73, 3
      %p443 = por %p441, %p442
      %p444 = scmp.ne.s32.totalorder %s433, %s434
      %p445 = scmp.eq.s32.totalorder %s73, 0
      %p446 = por %p444, %p445
      %p447 = scmp.ne.s32.totalorder %s433, %s434
      %p448 = scmp.eq.s32.totalorder %s74, 3
      %p449 = por %p447, %p448
      %p451 = scmp.ne.s32.totalorder %s434, %s450
      %p452 = scmp.eq.s32.totalorder %s74, 0
      %p453 = por %p451, %p452
      %s454 = ssub.s32 %s76, %s83
      %p455 = scmp.eq.s32.totalorder %s454, 0
      %s457 = sadd.s32 %s456, 1
      %s458 = scalar_select %p455, %s456, %s457
      %p461 = pneg %p455
      %p462 = scmp.eq.s32.totalorder %s68, 3
      %p463 = por %p461, %p462
      %p464 = scmp.ne.s32.totalorder %s456, %s459
      %p465 = scmp.eq.s32.totalorder %s68, 0
      %p466 = por %p464, %p465
      %p467 = scmp.ne.s32.totalorder %s456, %s459
      %p468 = scmp.eq.s32.totalorder %s73, 3
      %p469 = por %p467, %p468
      %p470 = scmp.ne.s32.totalorder %s459, %s460
      %p471 = scmp.eq.s32.totalorder %s73, 0
      %p472 = por %p470, %p471
      %p473 = scmp.ne.s32.totalorder %s459, %s460
      %p474 = scmp.eq.s32.totalorder %s74, 3
      %p475 = por %p473, %p474
      %p477 = scmp.ne.s32.totalorder %s460, %s476
      %p478 = scmp.eq.s32.totalorder %s74, 0
      %p479 = por %p477, %p478
      %s480 = ssub.s32 %s76, %s83
      %p481 = scmp.eq.s32.totalorder %s480, 0
      %s483 = sadd.s32 %s482, 1
      %s484 = scalar_select %p481, %s482, %s483
      %p487 = pneg %p481
      %p488 = scmp.eq.s32.totalorder %s68, 3
      %p489 = por %p487, %p488
      %p490 = scmp.ne.s32.totalorder %s482, %s485
      %p491 = scmp.eq.s32.totalorder %s68, 0
      %p492 = por %p490, %p491
      %p493 = scmp.ne.s32.totalorder %s482, %s485
      %p494 = scmp.eq.s32.totalorder %s73, 3
      %p495 = por %p493, %p494
      %p496 = scmp.ne.s32.totalorder %s485, %s486
      %p497 = scmp.eq.s32.totalorder %s73, 0
      %p498 = por %p496, %p497
      %p499 = scmp.ne.s32.totalorder %s485, %s486
      %p500 = scmp.eq.s32.totalorder %s74, 3
      %p501 = por %p499, %p500
      %p503 = scmp.ne.s32.totalorder %s486, %s502
      %p504 = scmp.eq.s32.totalorder %s74, 0
      %p505 = por %p503, %p504
      %s506 = ssub.s32 %s76, %s83
      %p507 = scmp.eq.s32.totalorder %s506, 0
      %s509 = sadd.s32 %s508, 1
      %s510 = scalar_select %p507, %s508, %s509
      %p513 = pneg %p507
      %p514 = scmp.eq.s32.totalorder %s68, 3
      %p515 = por %p513, %p514
      %p516 = scmp.ne.s32.totalorder %s508, %s511
      %p517 = scmp.eq.s32.totalorder %s68, 0
      %p518 = por %p516, %p517
      %p519 = scmp.ne.s32.totalorder %s508, %s511
      %p520 = scmp.eq.s32.totalorder %s73, 3
      %p521 = por %p519, %p520
      %p522 = scmp.ne.s32.totalorder %s511, %s512
      %p523 = scmp.eq.s32.totalorder %s73, 0
      %p524 = por %p522, %p523
      %p525 = scmp.ne.s32.totalorder %s511, %s512
      %p526 = scmp.eq.s32.totalorder %s74, 3
      %p527 = por %p525, %p526
      %p529 = scmp.ne.s32.totalorder %s512, %s528
      %p530 = scmp.eq.s32.totalorder %s74, 0
      %p531 = por %p529, %p530
      %s532 = ssub.s32 %s76, %s83
      %p533 = scmp.eq.s32.totalorder %s532, 0
      %s535 = sadd.s32 %s534, 1
      %s536 = scalar_select %p533, %s534, %s535
      %p539 = pneg %p533
      %p540 = scmp.eq.s32.totalorder %s68, 3
      %p541 = por %p539, %p540
      %p542 = scmp.ne.s32.totalorder %s534, %s537
      %p543 = scmp.eq.s32.totalorder %s68, 0
      %p544 = por %p542, %p543
      %p545 = scmp.ne.s32.totalorder %s534, %s537
      %p546 = scmp.eq.s32.totalorder %s73, 3
      %p547 = por %p545, %p546
      %p548 = scmp.ne.s32.totalorder %s537, %s538
      %p549 = scmp.eq.s32.totalorder %s73, 0
      %p550 = por %p548, %p549
      %p551 = scmp.ne.s32.totalorder %s537, %s538
      %p552 = scmp.eq.s32.totalorder %s74, 3
      %p553 = por %p551, %p552
      %p555 = scmp.ne.s32.totalorder %s538, %s554
      %p556 = scmp.eq.s32.totalorder %s74, 0
      %p557 = por %p555, %p556
      %s558 = ssub.s32 %s76, %s83
      %p559 = scmp.eq.s32.totalorder %s558, 0
      %s561 = sadd.s32 %s560, 1
      %s562 = scalar_select %p559, %s560, %s561
      %p565 = pneg %p559
      %p566 = scmp.eq.s32.totalorder %s68, 3
      %p567 = por %p565, %p566
      %p568 = scmp.ne.s32.totalorder %s560, %s563
      %p569 = scmp.eq.s32.totalorder %s68, 0
      %p570 = por %p568, %p569
      %p571 = scmp.ne.s32.totalorder %s560, %s563
      %p572 = scmp.eq.s32.totalorder %s73, 3
      %p573 = por %p571, %p572
      %p574 = scmp.ne.s32.totalorder %s563, %s564
      %p575 = scmp.eq.s32.totalorder %s73, 0
      %p576 = por %p574, %p575
      %p577 = scmp.ne.s32.totalorder %s563, %s564
      %p578 = scmp.eq.s32.totalorder %s74, 3
      %p579 = por %p577, %p578
      %p581 = scmp.ne.s32.totalorder %s564, %s580
      %p582 = scmp.eq.s32.totalorder %s74, 0
      %p583 = por %p581, %p582
      %s584 = ssub.s32 %s76, %s83
      %p585 = scmp.eq.s32.totalorder %s584, 0
      %s587 = sadd.s32 %s586, 1
      %s588 = scalar_select %p585, %s586, %s587
      %p591 = pneg %p585
      %p592 = scmp.eq.s32.totalorder %s68, 3
      %p593 = por %p591, %p592
      %p594 = scmp.ne.s32.totalorder %s586, %s589
      %p595 = scmp.eq.s32.totalorder %s68, 0
      %p596 = por %p594, %p595
      %p597 = scmp.ne.s32.totalorder %s586, %s589
      %p598 = scmp.eq.s32.totalorder %s73, 3
      %p599 = por %p597, %p598
      %p600 = scmp.ne.s32.totalorder %s589, %s590
      %p601 = scmp.eq.s32.totalorder %s73, 0
      %p602 = por %p600, %p601
      %p603 = scmp.ne.s32.totalorder %s589, %s590
      %p604 = scmp.eq.s32.totalorder %s74, 3
      %p605 = por %p603, %p604
      %p607 = scmp.ne.s32.totalorder %s590, %s606
      %p608 = scmp.eq.s32.totalorder %s74, 0
      %p609 = por %p607, %p608
      %s610 = ssub.s32 %s76, %s83
      %p611 = scmp.eq.s32.totalorder %s610, 0
      %s613 = sadd.s32 %s612, 1
      %s614 = scalar_select %p611, %s612, %s613
      %p617 = pneg %p611
      %p618 = scmp.eq.s32.totalorder %s68, 3
      %p619 = por %p617, %p618
      %p620 = scmp.ne.s32.totalorder %s612, %s615
      %p621 = scmp.eq.s32.totalorder %s68, 0
      %p622 = por %p620, %p621
      %p623 = scmp.ne.s32.totalorder %s612, %s615
      %p624 = scmp.eq.s32.totalorder %s73, 3
      %p625 = por %p623, %p624
      %p626 = scmp.ne.s32.totalorder %s615, %s616
      %p627 = scmp.eq.s32.totalorder %s73, 0
      %p628 = por %p626, %p627
      %p629 = scmp.ne.s32.totalorder %s615, %s616
      %p630 = scmp.eq.s32.totalorder %s74, 3
      %p631 = por %p629, %p630
      %p633 = scmp.ne.s32.totalorder %s616, %s632
      %p634 = scmp.eq.s32.totalorder %s74, 0
      %p635 = por %p633, %p634
      %s636 = ssub.s32 %s76, %s83
      %p637 = scmp.eq.s32.totalorder %s636, 0
      %s639 = sadd.s32 %s638, 1
      %s640 = scalar_select %p637, %s638, %s639
      %p643 = pneg %p637
      %p644 = scmp.eq.s32.totalorder %s68, 3
      %p645 = por %p643, %p644
      %p646 = scmp.ne.s32.totalorder %s638, %s641
      %p647 = scmp.eq.s32.totalorder %s68, 0
      %p648 = por %p646, %p647
      %p649 = scmp.ne.s32.totalorder %s638, %s641
      %p650 = scmp.eq.s32.totalorder %s73, 3
      %p651 = por %p649, %p650
      %p652 = scmp.ne.s32.totalorder %s641, %s642
      %p653 = scmp.eq.s32.totalorder %s73, 0
      %p654 = por %p652, %p653
      %p655 = scmp.ne.s32.totalorder %s641, %s642
      %p656 = scmp.eq.s32.totalorder %s74, 3
      %p657 = por %p655, %p656
      %p659 = scmp.ne.s32.totalorder %s642, %s658
      %p660 = scmp.eq.s32.totalorder %s74, 0
      %p661 = por %p659, %p660
      %s662 = ssub.s32 %s76, %s83
      %p663 = scmp.eq.s32.totalorder %s662, 0
      %s665 = sadd.s32 %s664, 1
      %s666 = scalar_select %p663, %s664, %s665
      %p669 = pneg %p663
      %p670 = scmp.eq.s32.totalorder %s68, 3
      %p671 = por %p669, %p670
      %p672 = scmp.ne.s32.totalorder %s664, %s667
      %p673 = scmp.eq.s32.totalorder %s68, 0
      %p674 = por %p672, %p673
      %p675 = scmp.ne.s32.totalorder %s664, %s667
      %p676 = scmp.eq.s32.totalorder %s73, 3
      %p677 = por %p675, %p676
      %p678 = scmp.ne.s32.totalorder %s667, %s668
      %p679 = scmp.eq.s32.totalorder %s73, 0
      %p680 = por %p678, %p679
      %p681 = scmp.ne.s32.totalorder %s667, %s668
      %p682 = scmp.eq.s32.totalorder %s74, 3
      %p683 = por %p681, %p682
      %p685 = scmp.ne.s32.totalorder %s668, %s684
      %p686 = scmp.eq.s32.totalorder %s74, 0
      %p687 = por %p685, %p686
      %s688 = ssub.s32 %s76, %s83
      %p689 = scmp.eq.s32.totalorder %s688, 0
      %s691 = sadd.s32 %s690, 1
      %s692 = scalar_select %p689, %s690, %s691
      %p695 = pneg %p689
      %p696 = scmp.eq.s32.totalorder %s68, 3
      %p697 = por %p695, %p696
      %p698 = scmp.ne.s32.totalorder %s690, %s693
      %p699 = scmp.eq.s32.totalorder %s68, 0
      %p700 = por %p698, %p699
      %p701 = scmp.ne.s32.totalorder %s690, %s693
      %p702 = scmp.eq.s32.totalorder %s73, 3
      %p703 = por %p701, %p702
      %p704 = scmp.ne.s32.totalorder %s693, %s694
      %p705 = scmp.eq.s32.totalorder %s73, 0
      %p706 = por %p704, %p705
      %p707 = scmp.ne.s32.totalorder %s693, %s694
      %p708 = scmp.eq.s32.totalorder %s74, 3
      %p709 = por %p707, %p708
      %p711 = scmp.ne.s32.totalorder %s694, %s710
      %p712 = scmp.eq.s32.totalorder %s74, 0
      %p713 = por %p711, %p712
      %s714 = ssub.s32 %s76, %s83
      %p715 = scmp.eq.s32.totalorder %s714, 0
      %s717 = sadd.s32 %s716, 1
      %s718 = scalar_select %p715, %s716, %s717
      %p721 = pneg %p715
      %p722 = scmp.eq.s32.totalorder %s68, 3
      %p723 = por %p721, %p722
      %p724 = scmp.ne.s32.totalorder %s716, %s719
      %p725 = scmp.eq.s32.totalorder %s68, 0
      %p726 = por %p724, %p725
      %p727 = scmp.ne.s32.totalorder %s716, %s719
      %p728 = scmp.eq.s32.totalorder %s73, 3
      %p729 = por %p727, %p728
      %p730 = scmp.ne.s32.totalorder %s719, %s720
      %p731 = scmp.eq.s32.totalorder %s73, 0
      %p732 = por %p730, %p731
      %p733 = scmp.ne.s32.totalorder %s719, %s720
      %p734 = scmp.eq.s32.totalorder %s74, 3
      %p735 = por %p733, %p734
      %p737 = scmp.ne.s32.totalorder %s720, %s736
      %p738 = scmp.eq.s32.totalorder %s74, 0
      %p739 = por %p737, %p738
      %s741 = sadd.s32 %s740, 1
      %p744 = scmp.eq.s32.totalorder %s68, 3
      %p745 = scmp.ne.s32.totalorder %s740, %s742
      %p746 = scmp.eq.s32.totalorder %s68, 0
      %p747 = por %p745, %p746
      %p748 = scmp.ne.s32.totalorder %s740, %s742
      %p749 = scmp.eq.s32.totalorder %s73, 3
      %p750 = por %p748, %p749
      %p751 = scmp.ne.s32.totalorder %s742, %s743
      %p752 = scmp.eq.s32.totalorder %s73, 0
      %p753 = por %p751, %p752
      %p754 = scmp.ne.s32.totalorder %s742, %s743
      %p755 = scmp.eq.s32.totalorder %s74, 3
      %p756 = por %p754, %p755
      %p758 = scmp.ne.s32.totalorder %s743, %s757
      %p759 = scmp.eq.s32.totalorder %s74, 0
      %p760 = por %p758, %p759
      %s762 = sadd.s32 %s761, 1
      %p765 = scmp.eq.s32.totalorder %s68, 3
      %p766 = scmp.ne.s32.totalorder %s761, %s763
      %p767 = scmp.eq.s32.totalorder %s68, 0
      %p768 = por %p766, %p767
      %p769 = scmp.ne.s32.totalorder %s761, %s763
      %p770 = scmp.eq.s32.totalorder %s73, 3
      %p771 = por %p769, %p770
      %p772 = scmp.ne.s32.totalorder %s763, %s764
      %p773 = scmp.eq.s32.totalorder %s73, 0
      %p774 = por %p772, %p773
      %p775 = scmp.ne.s32.totalorder %s763, %s764
      %p776 = scmp.eq.s32.totalorder %s74, 3
      %p777 = por %p775, %p776
      %p779 = scmp.ne.s32.totalorder %s764, %s778
      %p780 = scmp.eq.s32.totalorder %s74, 0
      %p781 = por %p779, %p780
      %s782 = ssub.s32 %s75, %s87
      %p783 = scmp.eq.s32.totalorder %s782, 0
      %s785 = sadd.s32 %s784, 1
      %s786 = scalar_select %p783, %s784, %s785
      %p789 = pneg %p783
      %p790 = scmp.eq.s32.totalorder %s68, 3
      %p791 = por %p789, %p790
      %p792 = scmp.ne.s32.totalorder %s784, %s787
      %p793 = scmp.eq.s32.totalorder %s68, 0
      %p794 = por %p792, %p793
      %p795 = scmp.ne.s32.totalorder %s784, %s787
      %p796 = scmp.eq.s32.totalorder %s73, 3
      %p797 = por %p795, %p796
      %p798 = scmp.ne.s32.totalorder %s787, %s788
      %p799 = scmp.eq.s32.totalorder %s73, 0
      %p800 = por %p798, %p799
      %p801 = scmp.ne.s32.totalorder %s787, %s788
      %p802 = scmp.eq.s32.totalorder %s74, 3
      %p803 = por %p801, %p802
      %p805 = scmp.ne.s32.totalorder %s788, %s804
      %p806 = scmp.eq.s32.totalorder %s74, 0
      %p807 = por %p805, %p806
      %p808 = scmp.le.s32.totalorder 1, %s68
      %p809 = scmp.lt.s32.totalorder %s68, 5
      %p810 = pnand %p808, %p809
      %p811 = pneg %p810
      // Predicated region
      $region9: #{_lambda_.3} parent=5 // pred_check
        _
      $region10: #{_lambda_.3} parent=5 // pred_check_branch
        %813 = sbr.rel (%p810) target = $region12
      $region11: #{_lambda_.3} parent=5 // pred_region
        %s814 = ssub.s32 %s68, 1
        // Predicated region
        $region13: #{_lambda_.3} parent=11 // pred_check
          %p815 = pneg %p179
        $region14: #{_lambda_.3} parent=11 // pred_check_branch
          %817 = sbr.rel (%p815) target = $region16
        $region15: #{_lambda_.3} parent=11 // pred_region
          _
        $region16: #{_lambda_.3} parent=11 // pred_fallthru
          _
        // Predicated region
        $region17: #{_lambda_.3} parent=11 // pred_check
          %p818 = pneg %p200
        $region18: #{_lambda_.3} parent=11 // pred_check_branch
          %820 = sbr.rel (%p818) target = $region20
        $region19: #{_lambda_.3} parent=11 // pred_region
          _
        $region20: #{_lambda_.3} parent=11 // pred_fallthru
          _
        // Predicated region
        $region21: #{_lambda_.3} parent=11 // pred_check
          %p821 = pneg %p221
        $region22: #{_lambda_.3} parent=11 // pred_check_branch
          %823 = sbr.rel (%p821) target = $region24
        $region23: #{_lambda_.3} parent=11 // pred_region
          _
        $region24: #{_lambda_.3} parent=11 // pred_fallthru
          _
        // Predicated region
        $region25: #{_lambda_.3} parent=11 // pred_check
          %p824 = pneg %p242
        $region26: #{_lambda_.3} parent=11 // pred_check_branch
          %826 = sbr.rel (%p824) target = $region28
        $region27: #{_lambda_.3} parent=11 // pred_region
          _
        $region28: #{_lambda_.3} parent=11 // pred_fallthru
          _
        // Predicated region
        $region29: #{_lambda_.3} parent=11 // pred_check
          %p827 = pneg %p263
        $region30: #{_lambda_.3} parent=11 // pred_check_branch
          %829 = sbr.rel (%p827) target = $region32
        $region31: #{_lambda_.3} parent=11 // pred_region
          _
        $region32: #{_lambda_.3} parent=11 // pred_fallthru
          _
        // Predicated region
        $region33: #{_lambda_.3} parent=11 // pred_check
          %p830 = pneg %p284
        $region34: #{_lambda_.3} parent=11 // pred_check_branch
          %832 = sbr.rel (%p830) target = $region36
        $region35: #{_lambda_.3} parent=11 // pred_region
          _
        $region36: #{_lambda_.3} parent=11 // pred_fallthru
          _
        // Predicated region
        $region37: #{_lambda_.3} parent=11 // pred_check
          %p833 = pneg %p305
        $region38: #{_lambda_.3} parent=11 // pred_check_branch
          %835 = sbr.rel (%p833) target = $region40
        $region39: #{_lambda_.3} parent=11 // pred_region
          _
        $region40: #{_lambda_.3} parent=11 // pred_fallthru
          _
        // Predicated region
        $region41: #{_lambda_.3} parent=11 // pred_check
          %p836 = pneg %p326
        $region42: #{_lambda_.3} parent=11 // pred_check_branch
          %838 = sbr.rel (%p836) target = $region44
        $region43: #{_lambda_.3} parent=11 // pred_region
          _
        $region44: #{_lambda_.3} parent=11 // pred_fallthru
          _
        // Predicated region
        $region45: #{_lambda_.3} parent=11 // pred_check
          %p839 = pneg %p347
        $region46: #{_lambda_.3} parent=11 // pred_check_branch
          %841 = sbr.rel (%p839) target = $region48
        $region47: #{_lambda_.3} parent=11 // pred_region
          _
        $region48: #{_lambda_.3} parent=11 // pred_fallthru
          _
        // Predicated region
        $region49: #{_lambda_.3} parent=11 // pred_check
          %p842 = pneg %p368
        $region50: #{_lambda_.3} parent=11 // pred_check_branch
          %844 = sbr.rel (%p842) target = $region52
        $region51: #{_lambda_.3} parent=11 // pred_region
          _
        $region52: #{_lambda_.3} parent=11 // pred_fallthru
          _
        // Predicated region
        $region53: #{_lambda_.3} parent=11 // pred_check
          %p845 = pneg %p753
        $region54: #{_lambda_.3} parent=11 // pred_check_branch
          %847 = sbr.rel (%p845) target = $region56
        $region55: #{_lambda_.3} parent=11 // pred_region
          _
        $region56: #{_lambda_.3} parent=11 // pred_fallthru
          _
        // Predicated region
        $region57: #{_lambda_.3} parent=11 // pred_check
          %p848 = pneg %p774
        $region58: #{_lambda_.3} parent=11 // pred_check_branch
          %850 = sbr.rel (%p848) target = $region60
        $region59: #{_lambda_.3} parent=11 // pred_region
          _
        $region60: #{_lambda_.3} parent=11 // pred_fallthru
          _
      $region12: #{_lambda_.3} parent=5 // pred_fallthru
        _
      %p851 = scmp.lt.s32.totalorder %s68, 4
      // Predicated region
      $region61: #{_lambda_.3} parent=5 // pred_check
        %p852 = pneg %p851
      $region62: #{_lambda_.3} parent=5 // pred_check_branch
        %854 = sbr.rel (%p852) target = $region64
      $region63: #{_lambda_.3} parent=5 // pred_region
        // Predicated region
        $region65: #{_lambda_.3} parent=63 // pred_check
          %p855 = pneg %p100
        $region66: #{_lambda_.3} parent=63 // pred_check_branch
          %857 = sbr.rel (%p855) target = $region68
        $region67: #{_lambda_.3} parent=63 // pred_region
          %p858 = scmp.lt.s32.totalorder %s75, 1
          %s859 = scalar_select %p858, %s75, 1
          %s860 = smul.addr %s859, 8
          %s861 = scalar_lea.vmem %s1, %s860
        $region68: #{_lambda_.3} parent=63 // pred_fallthru
          _
        // Predicated region
        $region69: #{_lambda_.3} parent=63 // pred_check
          %p862 = pneg %p126
        $region70: #{_lambda_.3} parent=63 // pred_check_branch
          %864 = sbr.rel (%p862) target = $region72
        $region71: #{_lambda_.3} parent=63 // pred_region
          %p865 = scmp.lt.s32.totalorder %s75, 1
          %s866 = scalar_select %p865, %s75, 1
          %s867 = smul.addr %s866, 2
          %s868 = smul.addr %s867, 8
          %s869 = scalar_lea.vmem %s3, %s868
        $region72: #{_lambda_.3} parent=63 // pred_fallthru
          _
        // Predicated region
        $region73: #{_lambda_.3} parent=63 // pred_check
          %p870 = pneg %p152
        $region74: #{_lambda_.3} parent=63 // pred_check_branch
          %872 = sbr.rel (%p870) target = $region76
        $region75: #{_lambda_.3} parent=63 // pred_region
          %p873 = scmp.lt.s32.totalorder %s75, 1
          %s874 = scalar_select %p873, %s75, 1
          %s875 = scalar_lea.vmem %s5, %s874
        $region76: #{_lambda_.3} parent=63 // pred_fallthru
          _
        // Predicated region
        $region77: #{_lambda_.3} parent=63 // pred_check
          %p876 = pneg %p388
        $region78: #{_lambda_.3} parent=63 // pred_check_branch
          %878 = sbr.rel (%p876) target = $region80
        $region79: #{_lambda_.3} parent=63 // pred_region
          %p879 = scmp.lt.s32.totalorder %s76, 1
          %s880 = scalar_select %p879, %s76, 1
          %s881 = smul.addr %s880, 4
          %s882 = scalar_lea.vmem %s27, %s881
        $region80: #{_lambda_.3} parent=63 // pred_fallthru
          _
        // Predicated region
        $region81: #{_lambda_.3} parent=63 // pred_check
          %p883 = pneg %p414
        $region82: #{_lambda_.3} parent=63 // pred_check_branch
          %885 = sbr.rel (%p883) target = $region84
        $region83: #{_lambda_.3} parent=63 // pred_region
          %p886 = scmp.lt.s32.totalorder %s76, 1
          %s887 = scalar_select %p886, %s76, 1
          %s888 = smul.addr %s887, 4
          %s889 = scalar_lea.vmem %s29, %s888
        $region84: #{_lambda_.3} parent=63 // pred_fallthru
          _
        // Predicated region
        $region85: #{_lambda_.3} parent=63 // pred_check
          %p890 = pneg %p440
        $region86: #{_lambda_.3} parent=63 // pred_check_branch
          %892 = sbr.rel (%p890) target = $region88
        $region87: #{_lambda_.3} parent=63 // pred_region
          %p893 = scmp.lt.s32.totalorder %s76, 1
          %s894 = scalar_select %p893, %s76, 1
          %s895 = smul.addr %s894, 4
          %s896 = smul.addr %s895, 8
          %s897 = scalar_lea.vmem %s31, %s896
        $region88: #{_lambda_.3} parent=63 // pred_fallthru
          _
        // Predicated region
        $region89: #{_lambda_.3} parent=63 // pred_check
          %p898 = pneg %p466
        $region90: #{_lambda_.3} parent=63 // pred_check_branch
          %900 = sbr.rel (%p898) target = $region92
        $region91: #{_lambda_.3} parent=63 // pred_region
          %p901 = scmp.lt.s32.totalorder %s76, 1
          %s902 = scalar_select %p901, %s76, 1
          %s903 = smul.addr %s902, 4
          %s904 = smul.addr %s903, 8
          %s905 = scalar_lea.vmem %s33, %s904
        $region92: #{_lambda_.3} parent=63 // pred_fallthru
          _
        // Predicated region
        $region93: #{_lambda_.3} parent=63 // pred_check
          %p906 = pneg %p492
        $region94: #{_lambda_.3} parent=63 // pred_check_branch
          %908 = sbr.rel (%p906) target = $region96
        $region95: #{_lambda_.3} parent=63 // pred_region
          %p909 = scmp.lt.s32.totalorder %s76, 1
          %s910 = scalar_select %p909, %s76, 1
          %s911 = smul.addr %s910, 4
          %s912 = smul.addr %s911, 8
          %s913 = scalar_lea.vmem %s35, %s912
        $region96: #{_lambda_.3} parent=63 // pred_fallthru
          _
        // Predicated region
        $region97: #{_lambda_.3} parent=63 // pred_check
          %p914 = pneg %p518
        $region98: #{_lambda_.3} parent=63 // pred_check_branch
          %916 = sbr.rel (%p914) target = $region100
        $region99: #{_lambda_.3} parent=63 // pred_region
          %p917 = scmp.lt.s32.totalorder %s76, 1
          %s918 = scalar_select %p917, %s76, 1
          %s919 = scalar_lea.vmem %s37, %s918
        $region100: #{_lambda_.3} parent=63 // pred_fallthru
          _
        // Predicated region
        $region101: #{_lambda_.3} parent=63 // pred_check
          %p920 = pneg %p544
        $region102: #{_lambda_.3} parent=63 // pred_check_branch
          %922 = sbr.rel (%p920) target = $region104
        $region103: #{_lambda_.3} parent=63 // pred_region
          %p923 = scmp.lt.s32.totalorder %s76, 1
          %s924 = scalar_select %p923, %s76, 1
          %s925 = smul.addr %s924, 4
          %s926 = smul.addr %s925, 8
          %s927 = scalar_lea.vmem %s39, %s926
        $region104: #{_lambda_.3} parent=63 // pred_fallthru
          _
        // Predicated region
        $region105: #{_lambda_.3} parent=63 // pred_check
          %p928 = pneg %p570
        $region106: #{_lambda_.3} parent=63 // pred_check_branch
          %930 = sbr.rel (%p928) target = $region108
        $region107: #{_lambda_.3} parent=63 // pred_region
          %p931 = scmp.lt.s32.totalorder %s76, 1
          %s932 = scalar_select %p931, %s76, 1
          %s933 = scalar_lea.vmem %s41, %s932
        $region108: #{_lambda_.3} parent=63 // pred_fallthru
          _
        // Predicated region
        $region109: #{_lambda_.3} parent=63 // pred_check
          %p934 = pneg %p596
        $region110: #{_lambda_.3} parent=63 // pred_check_branch
          %936 = sbr.rel (%p934) target = $region112
        $region111: #{_lambda_.3} parent=63 // pred_region
          %p937 = scmp.lt.s32.totalorder %s76, 1
          %s938 = scalar_select %p937, %s76, 1
          %s939 = smul.addr %s938, 8
          %s940 = smul.addr %s939, 8
          %s941 = scalar_lea.vmem %s43, %s940
        $region112: #{_lambda_.3} parent=63 // pred_fallthru
          _
        // Predicated region
        $region113: #{_lambda_.3} parent=63 // pred_check
          %p942 = pneg %p622
        $region114: #{_lambda_.3} parent=63 // pred_check_branch
          %944 = sbr.rel (%p942) target = $region116
        $region115: #{_lambda_.3} parent=63 // pred_region
          %p945 = scmp.lt.s32.totalorder %s76, 1
          %s946 = scalar_select %p945, %s76, 1
          %s947 = smul.addr %s946, 2
          %s948 = scalar_lea.vmem %s45, %s947
        $region116: #{_lambda_.3} parent=63 // pred_fallthru
          _
        // Predicated region
        $region117: #{_lambda_.3} parent=63 // pred_check
          %p949 = pneg %p648
        $region118: #{_lambda_.3} parent=63 // pred_check_branch
          %951 = sbr.rel (%p949) target = $region120
        $region119: #{_lambda_.3} parent=63 // pred_region
          %p952 = scmp.lt.s32.totalorder %s76, 1
          %s953 = scalar_select %p952, %s76, 1
          %s954 = smul.addr %s953, 4
          %s955 = smul.addr %s954, 8
          %s956 = scalar_lea.vmem %s47, %s955
        $region120: #{_lambda_.3} parent=63 // pred_fallthru
          _
        // Predicated region
        $region121: #{_lambda_.3} parent=63 // pred_check
          %p957 = pneg %p674
        $region122: #{_lambda_.3} parent=63 // pred_check_branch
          %959 = sbr.rel (%p957) target = $region124
        $region123: #{_lambda_.3} parent=63 // pred_region
          %p960 = scmp.lt.s32.totalorder %s76, 1
          %s961 = scalar_select %p960, %s76, 1
          %s962 = scalar_lea.vmem %s49, %s961
        $region124: #{_lambda_.3} parent=63 // pred_fallthru
          _
        // Predicated region
        $region125: #{_lambda_.3} parent=63 // pred_check
          %p963 = pneg %p700
        $region126: #{_lambda_.3} parent=63 // pred_check_branch
          %965 = sbr.rel (%p963) target = $region128
        $region127: #{_lambda_.3} parent=63 // pred_region
          %p966 = scmp.lt.s32.totalorder %s76, 1
          %s967 = scalar_select %p966, %s76, 1
          %s968 = smul.addr %s967, 16
          %s969 = smul.addr %s968, 8
          %s970 = scalar_lea.vmem %s51, %s969
        $region128: #{_lambda_.3} parent=63 // pred_fallthru
          _
        // Predicated region
        $region129: #{_lambda_.3} parent=63 // pred_check
          %p971 = pneg %p726
        $region130: #{_lambda_.3} parent=63 // pred_check_branch
          %973 = sbr.rel (%p971) target = $region132
        $region131: #{_lambda_.3} parent=63 // pred_region
          %p974 = scmp.lt.s32.totalorder %s76, 1
          %s975 = scalar_select %p974, %s76, 1
          %s976 = scalar_lea.vmem %s53, %s975
        $region132: #{_lambda_.3} parent=63 // pred_fallthru
          _
      $region64: #{_lambda_.3} parent=5 // pred_fallthru
        _
      %p977 = scmp.le.s32.totalorder 1, %s68
      %p978 = scmp.lt.s32.totalorder %s68, 5
      %p979 = pnand %p977, %p978
      %p980 = pneg %p979
      // Predicated region
      $region133: #{_lambda_.3} parent=5 // pred_check
        _
      $region134: #{_lambda_.3} parent=5 // pred_check_branch
        %982 = sbr.rel (%p979) target = $region136
      $region135: #{_lambda_.3} parent=5 // pred_region
        %s983 = ssub.s32 %s68, 1
        %p984 = scmp.lt.s32.totalorder %s77, 1
        %s985 = scalar_select %p984, %s77, 1
        %s986 = smul.addr %s985, 8
        %s987 = scalar_lea.vmem %s1, %s986
        %p988 = pneg %p106
        %p989 = pneg %p103
        %p990 = scmp.lt.s32.totalorder %s77, 1
        %s991 = scalar_select %p990, %s77, 1
        %s992 = smul.addr %s991, 2
        %s993 = smul.addr %s992, 8
        %s994 = scalar_lea.vmem %s3, %s993
        %p995 = pneg %p132
        %p996 = pneg %p129
        %p997 = scmp.lt.s32.totalorder %s77, 1
        %s998 = scalar_select %p997, %s77, 1
        %s999 = scalar_lea.vmem %s5, %s998
        %p1000 = pneg %p158
        %p1001 = pneg %p155
        %p1002 = pneg %p179
        %p1003 = pneg %p176
        %p1004 = pneg %p200
        %p1005 = pneg %p197
        %p1006 = pneg %p221
        %p1007 = pneg %p218
        %p1008 = pneg %p242
        %p1009 = pneg %p239
        %p1010 = pneg %p263
        %p1011 = pneg %p260
        %p1012 = pneg %p284
        %p1013 = pneg %p281
        %p1014 = pneg %p305
        %p1015 = pneg %p302
        %p1016 = pneg %p326
        %p1017 = pneg %p323
        %p1018 = pneg %p347
        %p1019 = pneg %p344
        %p1020 = pneg %p368
        %p1021 = pneg %p365
        %p1022 = scmp.lt.s32.totalorder %s78, 1
        %s1023 = scalar_select %p1022, %s78, 1
        %s1024 = smul.addr %s1023, 4
        %s1025 = scalar_lea.vmem %s27, %s1024
        %p1026 = pneg %p394
        %p1027 = pneg %p391
        %p1028 = scmp.lt.s32.totalorder %s78, 1
        %s1029 = scalar_select %p1028, %s78, 1
        %s1030 = smul.addr %s1029, 4
        %s1031 = scalar_lea.vmem %s29, %s1030
        %p1032 = pneg %p420
        %p1033 = pneg %p417
        %p1034 = scmp.lt.s32.totalorder %s78, 1
        %s1035 = scalar_select %p1034, %s78, 1
        %s1036 = smul.addr %s1035, 4
        %s1037 = smul.addr %s1036, 8
        %s1038 = scalar_lea.vmem %s31, %s1037
        %p1039 = pneg %p446
        %p1040 = pneg %p443
        %p1041 = scmp.lt.s32.totalorder %s78, 1
        %s1042 = scalar_select %p1041, %s78, 1
        %s1043 = smul.addr %s1042, 4
        %s1044 = smul.addr %s1043, 8
        %s1045 = scalar_lea.vmem %s33, %s1044
        %p1046 = pneg %p472
        %p1047 = pneg %p469
        %p1048 = scmp.lt.s32.totalorder %s78, 1
        %s1049 = scalar_select %p1048, %s78, 1
        %s1050 = smul.addr %s1049, 4
        %s1051 = smul.addr %s1050, 8
        %s1052 = scalar_lea.vmem %s35, %s1051
        %p1053 = pneg %p498
        %p1054 = pneg %p495
        %p1055 = scmp.lt.s32.totalorder %s78, 1
        %s1056 = scalar_select %p1055, %s78, 1
        %s1057 = scalar_lea.vmem %s37, %s1056
        %p1058 = pneg %p524
        %p1059 = pneg %p521
        %p1060 = scmp.lt.s32.totalorder %s78, 1
        %s1061 = scalar_select %p1060, %s78, 1
        %s1062 = smul.addr %s1061, 4
        %s1063 = smul.addr %s1062, 8
        %s1064 = scalar_lea.vmem %s39, %s1063
        %p1065 = pneg %p550
        %p1066 = pneg %p547
        %p1067 = scmp.lt.s32.totalorder %s78, 1
        %s1068 = scalar_select %p1067, %s78, 1
        %s1069 = scalar_lea.vmem %s41, %s1068
        %p1070 = pneg %p576
        %p1071 = pneg %p573
        %p1072 = scmp.lt.s32.totalorder %s78, 1
        %s1073 = scalar_select %p1072, %s78, 1
        %s1074 = smul.addr %s1073, 8
        %s1075 = smul.addr %s1074, 8
        %s1076 = scalar_lea.vmem %s43, %s1075
        %p1077 = pneg %p602
        %p1078 = pneg %p599
        %p1079 = scmp.lt.s32.totalorder %s78, 1
        %s1080 = scalar_select %p1079, %s78, 1
        %s1081 = smul.addr %s1080, 2
        %s1082 = scalar_lea.vmem %s45, %s1081
        %p1083 = pneg %p628
        %p1084 = pneg %p625
        %p1085 = scmp.lt.s32.totalorder %s78, 1
        %s1086 = scalar_select %p1085, %s78, 1
        %s1087 = smul.addr %s1086, 4
        %s1088 = smul.addr %s1087, 8
        %s1089 = scalar_lea.vmem %s47, %s1088
        %p1090 = pneg %p654
        %p1091 = pneg %p651
        %p1092 = scmp.lt.s32.totalorder %s78, 1
        %s1093 = scalar_select %p1092, %s78, 1
        %s1094 = scalar_lea.vmem %s49, %s1093
        %p1095 = pneg %p680
        %p1096 = pneg %p677
        %p1097 = scmp.lt.s32.totalorder %s78, 1
        %s1098 = scalar_select %p1097, %s78, 1
        %s1099 = smul.addr %s1098, 16
        %s1100 = smul.addr %s1099, 8
        %s1101 = scalar_lea.vmem %s51, %s1100
        %p1102 = pneg %p706
        %p1103 = pneg %p703
        %p1104 = scmp.lt.s32.totalorder %s78, 1
        %s1105 = scalar_select %p1104, %s78, 1
        %s1106 = scalar_lea.vmem %s53, %s1105
        %p1107 = pneg %p732
        %p1108 = pneg %p729
        %p1109 = pneg %p753
        %p1110 = pneg %p750
        %p1111 = pneg %p774
        %p1112 = pneg %p771
        %p1113 = pneg %p800
        %p1114 = pneg %p797
        %s1115 = sand.u32 %s787, 1
        %s1116 = scalar_lea.sflag [#allocation5], %s1115
        %s1117 = sand.u32 %s787, 1
        %s1118 = smul.addr %s1117, 8
        %s1119 = scalar_lea.vmem [#allocation4], %s1118
        %p1120 = scmp.lt.s32.totalorder %s77, 1
        %s1121 = scalar_select %p1120, %s77, 1
        %s1122 = smul.addr %s1121, 8
        %s1123 = scalar_lea.vmem %s1, %s1122
        %p1124 = scmp.lt.s32.totalorder %s77, 1
        %s1125 = scalar_select %p1124, %s77, 1
        %s1126 = smul.addr %s1125, 2
        %s1127 = smul.addr %s1126, 8
        %s1128 = scalar_lea.vmem %s3, %s1127
        %p1129 = scmp.lt.s32.totalorder %s77, 1
        %s1130 = scalar_select %p1129, %s77, 1
        %s1131 = scalar_lea.vmem %s5, %s1130
        %p1132 = scmp.lt.s32.totalorder %s78, 1
        %s1133 = scalar_select %p1132, %s78, 1
        %s1134 = smul.addr %s1133, 4
        %s1135 = scalar_lea.vmem %s27, %s1134
        %p1136 = scmp.lt.s32.totalorder %s78, 1
        %s1137 = scalar_select %p1136, %s78, 1
        %s1138 = smul.addr %s1137, 4
        %s1139 = scalar_lea.vmem %s29, %s1138
        %p1140 = scmp.lt.s32.totalorder %s78, 1
        %s1141 = scalar_select %p1140, %s78, 1
        %s1142 = smul.addr %s1141, 4
        %s1143 = smul.addr %s1142, 8
        %s1144 = scalar_lea.vmem %s31, %s1143
        %p1145 = scmp.lt.s32.totalorder %s78, 1
        %s1146 = scalar_select %p1145, %s78, 1
        %s1147 = smul.addr %s1146, 4
        %s1148 = smul.addr %s1147, 8
        %s1149 = scalar_lea.vmem %s33, %s1148
        %p1150 = scmp.lt.s32.totalorder %s78, 1
        %s1151 = scalar_select %p1150, %s78, 1
        %s1152 = smul.addr %s1151, 4
        %s1153 = smul.addr %s1152, 8
        %s1154 = scalar_lea.vmem %s35, %s1153
        %p1155 = scmp.lt.s32.totalorder %s78, 1
        %s1156 = scalar_select %p1155, %s78, 1
        %s1157 = scalar_lea.vmem %s37, %s1156
        %p1158 = scmp.lt.s32.totalorder %s78, 1
        %s1159 = scalar_select %p1158, %s78, 1
        %s1160 = smul.addr %s1159, 4
        %s1161 = smul.addr %s1160, 8
        %s1162 = scalar_lea.vmem %s39, %s1161
        %p1163 = scmp.lt.s32.totalorder %s78, 1
        %s1164 = scalar_select %p1163, %s78, 1
        %s1165 = scalar_lea.vmem %s41, %s1164
        %p1166 = scmp.lt.s32.totalorder %s78, 1
        %s1167 = scalar_select %p1166, %s78, 1
        %s1168 = smul.addr %s1167, 8
        %s1169 = smul.addr %s1168, 8
        %s1170 = scalar_lea.vmem %s43, %s1169
        %p1171 = scmp.lt.s32.totalorder %s78, 1
        %s1172 = scalar_select %p1171, %s78, 1
        %s1173 = smul.addr %s1172, 2
        %s1174 = scalar_lea.vmem %s45, %s1173
        %p1175 = scmp.lt.s32.totalorder %s78, 1
        %s1176 = scalar_select %p1175, %s78, 1
        %s1177 = smul.addr %s1176, 4
        %s1178 = smul.addr %s1177, 8
        %s1179 = scalar_lea.vmem %s47, %s1178
        %p1180 = scmp.lt.s32.totalorder %s78, 1
        %s1181 = scalar_select %p1180, %s78, 1
        %s1182 = scalar_lea.vmem %s49, %s1181
        %p1183 = scmp.lt.s32.totalorder %s78, 1
        %s1184 = scalar_select %p1183, %s78, 1
        %s1185 = smul.addr %s1184, 16
        %s1186 = smul.addr %s1185, 8
        %s1187 = scalar_lea.vmem %s51, %s1186
        %p1188 = scmp.lt.s32.totalorder %s78, 1
        %s1189 = scalar_select %p1188, %s78, 1
        %s1190 = scalar_lea.vmem %s53, %s1189
        %p1191 = scmp.eq.s32.totalorder %s78, 0
        // Predicated region
        $region137: #{_lambda_.3} parent=135 // pred_check
          %p1192 = pneg %p1191
        $region138: #{_lambda_.3} parent=135 // pred_check_branch
          %1194 = sbr.rel (%p1192) target = $region140
        $region139: #{_lambda_.3} parent=135 // pred_region
          %v1195 = vld [vmem:[%s1123] sm:$0xff]
          %vm1196 = vcmask 261120
          %1197 = vst.msk [vmem:[#allocation2] sm:$0xff] %vm1196, %v1195
          %v1198 = vld [vmem:[%s1131] sm:$0x1]
          %v1199 = vld [vmem:[%s19] sm:$0xff]
          %v1200 = vld [vmem:[%s19 + $0x8] sm:$0xff]
          %v1201 = vld [vmem:[%s19 + $0x10] sm:$0xff]
          %v1202 = vld [vmem:[%s19 + $0x18] sm:$0xff]
          %v1203 = vld [vmem:[%s21] sm:$0x1]
          %v1205 = vsel %vm1196, %v1198, 0
          %1207 = vmatprep.subr.mxu0 0.0
          %1208 = vmatpush1.msra.mxu0 %v1199
          %1209 = vmatprep.subr.mxu0 0.0
          %1210 = vmatpush1.msra.mxu0 %v1200
          %1211 = vmatprep.subr.mxu0 0.0
          %1212 = vmatpush1.msra.mxu0 %v1201
          %1213 = vmatprep.subr.mxu0 0.0
          %1214 = vmatpush1.msra.mxu0 %v1202
          %1215 = vmatprep.subr.mxu0 0.0
          %1216 = vmatpush1.msra.mxu0 0.0
          %1217 = vmatprep.subr.mxu0 0.0
          %1218 = vmatpush1.msra.mxu0 0.0
          %1219 = vmatprep.subr.mxu0 0.0
          %1220 = vmatpush1.msra.mxu0 0.0
          %1221 = vmatprep.subr.mxu0 0.0
          %1222 = vmatpush1.msra.mxu0 0.0
          %1223 = vmatprep.subr.mxu0 0.0
          %1224 = vmatpush1.msra.mxu0 0.0
          %1225 = vmatprep.subr.mxu0 0.0
          %1226 = vmatpush1.msra.mxu0 0.0
          %1227 = vmatprep.subr.mxu0 0.0
          %1228 = vmatpush1.msra.mxu0 0.0
          %1229 = vmatprep.subr.mxu0 0.0
          %1230 = vmatpush1.msra.mxu0 0.0
          %1231 = vmatprep.subr.mxu0 0.0
          %1232 = vmatpush1.msra.mxu0 0.0
          %1233 = vmatprep.subr.mxu0 0.0
          %1234 = vmatpush1.msra.mxu0 0.0
          %1235 = vmatprep.subr.mxu0 0.0
          %1236 = vmatpush1.msra.mxu0 0.0
          %1237 = vmatprep.subr.mxu0 0.0
          %1238 = vmatpush1.msra.mxu0 0.0
          %1239 = vmatprep.subr.mxu0 0.0
          %1240 = vmatpush1.msra.mxu0 0.0
          %1241 = vmatprep.subr.mxu0 0.0
          %1242 = vmatpush1.msra.mxu0 0.0
          %1243 = vmatprep.subr.mxu0 0.0
          %1244 = vmatpush1.msra.mxu0 0.0
          %1245 = vmatprep.subr.mxu0 0.0
          %1246 = vmatpush1.msra.mxu0 0.0
          %1247 = vmatprep.subr.mxu0 0.0
          %1248 = vmatpush1.msra.mxu0 0.0
          %1249 = vmatprep.subr.mxu0 0.0
          %1250 = vmatpush1.msra.mxu0 0.0
          %1251 = vmatprep.subr.mxu0 0.0
          %1252 = vmatpush1.msra.mxu0 0.0
          %1253 = vmatprep.subr.mxu0 0.0
          %1254 = vmatpush1.msra.mxu0 0.0
          %1255 = vmatprep.subr.mxu0 0.0
          %1256 = vmatpush1.msra.mxu0 0.0
          %1257 = vmatprep.subr.mxu0 0.0
          %1258 = vmatpush1.msra.mxu0 0.0
          %1259 = vmatprep.subr.mxu0 0.0
          %1260 = vmatpush1.msra.mxu0 0.0
          %1261 = vmatprep.subr.mxu0 0.0
          %1262 = vmatpush1.msra.mxu0 0.0
          %1263 = vmatprep.subr.mxu0 0.0
          %1264 = vmatpush1.msra.mxu0 0.0
          %1265 = vmatprep.subr.mxu0 0.0
          %1266 = vmatpush1.msra.mxu0 0.0
          %1267 = vmatprep.subr.mxu0 0.0
          %1268 = vmatpush1.msra.mxu0 0.0
          %1269 = vmatprep.subr.mxu0 0.0
          %1270 = vmatpush1.msra.mxu0 0.0
          %1271 = vmatprep.mubr.f32.mxu0 0.0
          %1272 = vmatmul.mubr.f32.gmra.mrb[0].mxu0 %v1205
          %v1273 = vpop.f32.mrb[0].mxu0
          %v1274 = vadd.f32 %v1203, %v1273
          %v1275 = vpop.f32.mrb[0].mxu0
          %1276 = vdwg.mxu0
          %v1277 = vmul.f32 %v1274, 1.442695
          %v1278 = vpow.pop %v1277
          %v1279 = vadd.f32 %v1278, 1.0
          %v1280 = vlog2.pop %v1279
          %v1281 = vmul.f32 %v1280, 0.6931472
          %v1282 = vtanh.pop %v1281
          %v1283 = vmul.f32 %v1274, %v1282
          %v1284 = vld [vmem:[%s23] sm:$0xff]
          %v1285 = vld [vmem:[%s23 + $0x8] sm:$0xff]
          %v1286 = vld [vmem:[%s23 + $0x10] sm:$0xff]
          %v1287 = vld [vmem:[%s23 + $0x18] sm:$0xff]
          %v1288 = vld [vmem:[%s23 + $0x20] sm:$0xff]
          %v1289 = vld [vmem:[%s23 + $0x28] sm:$0xff]
          %v1290 = vld [vmem:[%s23 + $0x30] sm:$0xff]
          %v1291 = vld [vmem:[%s23 + $0x38] sm:$0xff]
          %v1292 = vld [vmem:[%s23 + $0x40] sm:$0xff]
          %v1293 = vld [vmem:[%s23 + $0x48] sm:$0xff]
          %v1294 = vld [vmem:[%s23 + $0x50] sm:$0xff]
          %v1295 = vld [vmem:[%s23 + $0x58] sm:$0xff]
          %v1296 = vld [vmem:[%s23 + $0x60] sm:$0xff]
          %v1297 = vld [vmem:[%s23 + $0x68] sm:$0xff]
          %v1298 = vld [vmem:[%s23 + $0x70] sm:$0xff]
          %v1299 = vld [vmem:[%s23 + $0x78] sm:$0xff]
          %v1300 = vld [vmem:[%s25] sm:$0x1]
          %1301 = vmatprep.subr.mxu0 0.0
          %1302 = vmatpush1.msra.mxu0 %v1284
          %1303 = vmatprep.subr.mxu0 0.0
          %1304 = vmatpush1.msra.mxu0 %v1285
          %1305 = vmatprep.subr.mxu0 0.0
          %1306 = vmatpush1.msra.mxu0 %v1286
          %1307 = vmatprep.subr.mxu0 0.0
          %1308 = vmatpush1.msra.mxu0 %v1287
          %1309 = vmatprep.subr.mxu0 0.0
          %1310 = vmatpush1.msra.mxu0 %v1288
          %1311 = vmatprep.subr.mxu0 0.0
          %1312 = vmatpush1.msra.mxu0 %v1289
          %1313 = vmatprep.subr.mxu0 0.0
          %1314 = vmatpush1.msra.mxu0 %v1290
          %1315 = vmatprep.subr.mxu0 0.0
          %1316 = vmatpush1.msra.mxu0 %v1291
          %1317 = vmatprep.subr.mxu0 0.0
          %1318 = vmatpush1.msra.mxu0 %v1292
          %1319 = vmatprep.subr.mxu0 0.0
          %1320 = vmatpush1.msra.mxu0 %v1293
          %1321 = vmatprep.subr.mxu0 0.0
          %1322 = vmatpush1.msra.mxu0 %v1294
          %1323 = vmatprep.subr.mxu0 0.0
          %1324 = vmatpush1.msra.mxu0 %v1295
          %1325 = vmatprep.subr.mxu0 0.0
          %1326 = vmatpush1.msra.mxu0 %v1296
          %1327 = vmatprep.subr.mxu0 0.0
          %1328 = vmatpush1.msra.mxu0 %v1297
          %1329 = vmatprep.subr.mxu0 0.0
          %1330 = vmatpush1.msra.mxu0 %v1298
          %1331 = vmatprep.subr.mxu0 0.0
          %1332 = vmatpush1.msra.mxu0 %v1299
          %1333 = vmatprep.subr.mxu0 0.0
          %1334 = vmatpush1.msra.mxu0 0.0
          %1335 = vmatprep.subr.mxu0 0.0
          %1336 = vmatpush1.msra.mxu0 0.0
          %1337 = vmatprep.subr.mxu0 0.0
          %1338 = vmatpush1.msra.mxu0 0.0
          %1339 = vmatprep.subr.mxu0 0.0
          %1340 = vmatpush1.msra.mxu0 0.0
          %1341 = vmatprep.subr.mxu0 0.0
          %1342 = vmatpush1.msra.mxu0 0.0
          %1343 = vmatprep.subr.mxu0 0.0
          %1344 = vmatpush1.msra.mxu0 0.0
          %1345 = vmatprep.subr.mxu0 0.0
          %1346 = vmatpush1.msra.mxu0 0.0
          %1347 = vmatprep.subr.mxu0 0.0
          %1348 = vmatpush1.msra.mxu0 0.0
          %1349 = vmatprep.subr.mxu0 0.0
          %1350 = vmatpush1.msra.mxu0 0.0
          %1351 = vmatprep.subr.mxu0 0.0
          %1352 = vmatpush1.msra.mxu0 0.0
          %1353 = vmatprep.subr.mxu0 0.0
          %1354 = vmatpush1.msra.mxu0 0.0
          %1355 = vmatprep.subr.mxu0 0.0
          %1356 = vmatpush1.msra.mxu0 0.0
          %1357 = vmatprep.subr.mxu0 0.0
          %1358 = vmatpush1.msra.mxu0 0.0
          %1359 = vmatprep.subr.mxu0 0.0
          %1360 = vmatpush1.msra.mxu0 0.0
          %1361 = vmatprep.subr.mxu0 0.0
          %1362 = vmatpush1.msra.mxu0 0.0
          %1363 = vmatprep.subr.mxu0 0.0
          %1364 = vmatpush1.msra.mxu0 0.0
          %1365 = vmatprep.mubr.f32.mxu0 0.0
          %1366 = vmatmul.mubr.f32.gmra.mrb[0].mxu0 %v1283
          %v1367 = vpop.f32.mrb[0].mxu0
          %v1368 = vadd.f32 %v1300, %v1367
          %v1369 = vpop.f32.mrb[0].mxu0
          %1370 = vdwg.mxu0
          %v1371 = vmul.f32 %v1368, 1.442695
          %v1372 = vpow.pop %v1371
          %v1373 = vadd.f32 %v1372, 1.0
          %v1374 = vlog2.pop %v1373
          %v1375 = vmul.f32 %v1374, 0.6931472
          %v1376 = vtanh.pop %v1375
          %v1377 = vmul.f32 %v1368, %v1376
          %vm1378 = vcmask 253952
          %1379 = vst.msk [vmem:[#allocation3] sm:$0x1] %vm1378, %v1377
        $region140: #{_lambda_.3} parent=135 // pred_fallthru
          _
        %v1380 = vld [vmem:[#allocation2] sm:$0xff]
        %v1381 = vld [vmem:[%s1128] sm:$0xff]
        %v1382 = vld [vmem:[%s1128 + $0x8] sm:$0x3]
        %v1383 = vld [vmem:[%s7] sm:$0xff]
        %v1384 = vld [vmem:[%s9] sm:$0xff]
        %v1385 = vld [vmem:[%s11] sm:$0xff]
        %v1386 = vld [vmem:[%s13] sm:$0xff]
        %v1387 = vld [vmem:[%s13 + $0x8] sm:$0x3]
        %v1388 = vld [vmem:[%s15] sm:$0xff]
        %v1389 = vld [vmem:[%s15 + $0x8] sm:$0x3]
        %v1390 = vld [vmem:[%s17] sm:$0xff]
        %v1391 = vld [vmem:[%s17 + $0x8] sm:$0xff]
        %v1392 = vld [vmem:[%s17 + $0x10] sm:$0xff]
        %v1393 = vld [vmem:[%s17 + $0x18] sm:$0xff]
        %v1394 = vld [vmem:[%s1135] sm:$0x7]
        %v1395 = vld [vmem:[%s1139] sm:$0x7]
        %v1396 = vld [vmem:[%s1157] sm:$0x1]
        %v1397 = vld [vmem:[%s1162] sm:$0xff]
        %v1398 = vld [vmem:[%s1162 + $0x8] sm:$0xff]
        %v1399 = vld [vmem:[%s1162 + $0x10] sm:$0xff]
        %v1400 = vld [vmem:[%s1162 + $0x18] sm:$0xff]
        %v1401 = vld [vmem:[%s1165] sm:$0x1]
        %v1402 = vld [vmem:[#allocation3] sm:$0x1]
        %v1403 = vld [vmem:[%s1170] sm:$0xff]
        %v1404 = vld [vmem:[%s1170 + $0x8] sm:$0xff]
        %v1405 = vld [vmem:[%s1170 + $0x10] sm:$0xff]
        %v1406 = vld [vmem:[%s1170 + $0x18] sm:$0xff]
        %v1407 = vld [vmem:[%s1170 + $0x20] sm:$0xff]
        %v1408 = vld [vmem:[%s1170 + $0x28] sm:$0xff]
        %v1409 = vld [vmem:[%s1170 + $0x30] sm:$0xff]
        %v1410 = vld [vmem:[%s1170 + $0x38] sm:$0xff]
        %v1411 = vld [vmem:[%s1174] sm:$0x3]
        %v1413 = vlaneseq
        %v1414 = vshrl.u32 %v1413, 7
        %v1415 = vsub.s32 0, %v1414
        %v1416 = vrot.slane %v1411, %v1415
        %v1417 = vlaneseq
        %v1418 = vshrl.u32 %v1417, 7
        %v1419 = vsub.s32 1, %v1418
        %v1420 = vrot.slane %v1411, %v1419
        %vm1423 = vcmask 261120
        %v1425 = vsel %vm1423, %v1402, 0
        %1427 = vmatprep.subr.mxu0 %v1404
        %1428 = vmatpush1.msra.mxu0 %v1403
        %1429 = vmatprep.subr.mxu0 %v1406
        %1430 = vmatpush1.msra.mxu0 %v1405
        %1431 = vmatprep.subr.mxu0 %v1408
        %1432 = vmatpush1.msra.mxu0 %v1407
        %1433 = vmatprep.subr.mxu0 %v1410
        %1434 = vmatpush1.msra.mxu0 %v1409
        %1435 = vmatprep.subr.mxu0 0.0
        %1436 = vmatpush1.msra.mxu0 0.0
        %1437 = vmatprep.subr.mxu0 0.0
        %1438 = vmatpush1.msra.mxu0 0.0
        %1439 = vmatprep.subr.mxu0 0.0
        %1440 = vmatpush1.msra.mxu0 0.0
        %1441 = vmatprep.subr.mxu0 0.0
        %1442 = vmatpush1.msra.mxu0 0.0
        %1443 = vmatprep.subr.mxu0 0.0
        %1444 = vmatpush1.msra.mxu0 0.0
        %1445 = vmatprep.subr.mxu0 0.0
        %1446 = vmatpush1.msra.mxu0 0.0
        %1447 = vmatprep.subr.mxu0 0.0
        %1448 = vmatpush1.msra.mxu0 0.0
        %1449 = vmatprep.subr.mxu0 0.0
        %1450 = vmatpush1.msra.mxu0 0.0
        %1451 = vmatprep.subr.mxu0 0.0
        %1452 = vmatpush1.msra.mxu0 0.0
        %1453 = vmatprep.subr.mxu0 0.0
        %1454 = vmatpush1.msra.mxu0 0.0
        %1455 = vmatprep.subr.mxu0 0.0
        %1456 = vmatpush1.msra.mxu0 0.0
        %1457 = vmatprep.subr.mxu0 0.0
        %1458 = vmatpush1.msra.mxu0 0.0
        %1459 = vmatprep.subr.mxu0 0.0
        %1460 = vmatpush1.msra.mxu0 0.0
        %1461 = vmatprep.subr.mxu0 0.0
        %1462 = vmatpush1.msra.mxu0 0.0
        %1463 = vmatprep.subr.mxu0 0.0
        %1464 = vmatpush1.msra.mxu0 0.0
        %1465 = vmatprep.subr.mxu0 0.0
        %1466 = vmatpush1.msra.mxu0 0.0
        %1467 = vmatprep.subr.mxu0 0.0
        %1468 = vmatpush1.msra.mxu0 0.0
        %1469 = vmatprep.subr.mxu0 0.0
        %1470 = vmatpush1.msra.mxu0 0.0
        %1471 = vmatprep.subr.mxu0 0.0
        %1472 = vmatpush1.msra.mxu0 0.0
        %1473 = vmatprep.subr.mxu0 0.0
        %1474 = vmatpush1.msra.mxu0 0.0
        %1475 = vmatprep.subr.mxu0 0.0
        %1476 = vmatpush1.msra.mxu0 0.0
        %1477 = vmatprep.subr.mxu0 0.0
        %1478 = vmatpush1.msra.mxu0 0.0
        %1479 = vmatprep.subr.mxu0 0.0
        %1480 = vmatpush1.msra.mxu0 0.0
        %1481 = vmatprep.subr.mxu0 0.0
        %1482 = vmatpush1.msra.mxu0 0.0
        %1483 = vmatprep.subr.mxu0 0.0
        %1484 = vmatpush1.msra.mxu0 0.0
        %1485 = vmatprep.subr.mxu0 0.0
        %1486 = vmatpush1.msra.mxu0 0.0
        %1487 = vmatprep.subr.mxu0 0.0
        %1488 = vmatpush1.msra.mxu0 0.0
        %1489 = vmatprep.subr.mxu0 0.0
        %1490 = vmatpush1.msra.mxu0 0.0
        %1491 = vmatprep.mubr.f32.mxu0 0.0
        %1492 = vmatmul.mubr.f32.gmra.mrb[0].mxu0 %v1425
        %v1493 = vpop.f32.mrb[0].mxu0
        %v1494 = vadd.f32 %v1416, %v1493
        %v1495 = vpop.f32.mrb[0].mxu0
        %v1496 = vadd.f32 %v1420, %v1495
        %1497 = vdwg.mxu0
        %v1498 = vsel %vm1423, %v1380, 0.0
        %1499 = vadd.xlane.f32.xlu0 %v1498
        %v1500 = vpop.xlane.xlu0 %1499
        %v1501 = vrcp.pop 32.0
        %v1502 = vmul.f32 %v1500, %v1501
        %v1503 = vsub.f32 %v1380, %v1502
        %v1504 = vmul.f32 %v1503, %v1503
        %v1505 = vsel %vm1423, %v1504, 0.0
        %1506 = vadd.xlane.f32.xlu0 %v1505
        %v1507 = vpop.xlane.xlu0 %1506
        %v1508 = vmul.f32 %v1507, %v1501
        %v1509 = vadd.f32 %v1508, 1e-05
        %v1510 = vrsqrt.pop %v1509
        %v1511 = vmul.f32 %v1503, %v1510
        %v1512 = vlaneseq
        %v1513 = vshrl.u32 %v1512, 7
        %v1514 = vsub.s32 0, %v1513
        %v1515 = vrot.slane %v1394, %v1514
        %v1516 = vmul.f32 %v1511, %v1515
        %v1517 = vlaneseq
        %v1518 = vshrl.u32 %v1517, 7
        %v1519 = vsub.s32 0, %v1518
        %v1520 = vrot.slane %v1395, %v1519
        %v1521 = vadd.f32 %v1516, %v1520
        %v1522 = vmul.f32 %v1521, %v1384
        %v1524 = vsel %vm1423, %v1521, 0
        %1526 = vmatprep.subr.mxu0 0.0
        %1527 = vmatpush1.msra.mxu0 %v1390
        %1528 = vmatprep.subr.mxu0 0.0
        %1529 = vmatpush1.msra.mxu0 %v1391
        %1530 = vmatprep.subr.mxu0 0.0
        %1531 = vmatpush1.msra.mxu0 %v1392
        %1532 = vmatprep.subr.mxu0 0.0
        %1533 = vmatpush1.msra.mxu0 %v1393
        %1534 = vmatprep.subr.mxu0 0.0
        %1535 = vmatpush1.msra.mxu0 0.0
        %1536 = vmatprep.subr.mxu0 0.0
        %1537 = vmatpush1.msra.mxu0 0.0
        %1538 = vmatprep.subr.mxu0 0.0
        %1539 = vmatpush1.msra.mxu0 0.0
        %1540 = vmatprep.subr.mxu0 0.0
        %1541 = vmatpush1.msra.mxu0 0.0
        %1542 = vmatprep.subr.mxu0 0.0
        %1543 = vmatpush1.msra.mxu0 0.0
        %1544 = vmatprep.subr.mxu0 0.0
        %1545 = vmatpush1.msra.mxu0 0.0
        %1546 = vmatprep.subr.mxu0 0.0
        %1547 = vmatpush1.msra.mxu0 0.0
        %1548 = vmatprep.subr.mxu0 0.0
        %1549 = vmatpush1.msra.mxu0 0.0
        %1550 = vmatprep.subr.mxu0 0.0
        %1551 = vmatpush1.msra.mxu0 0.0
        %1552 = vmatprep.subr.mxu0 0.0
        %1553 = vmatpush1.msra.mxu0 0.0
        %1554 = vmatprep.subr.mxu0 0.0
        %1555 = vmatpush1.msra.mxu0 0.0
        %1556 = vmatprep.subr.mxu0 0.0
        %1557 = vmatpush1.msra.mxu0 0.0
        %1558 = vmatprep.subr.mxu0 0.0
        %1559 = vmatpush1.msra.mxu0 0.0
        %1560 = vmatprep.subr.mxu0 0.0
        %1561 = vmatpush1.msra.mxu0 0.0
        %1562 = vmatprep.subr.mxu0 0.0
        %1563 = vmatpush1.msra.mxu0 0.0
        %1564 = vmatprep.subr.mxu0 0.0
        %1565 = vmatpush1.msra.mxu0 0.0
        %1566 = vmatprep.subr.mxu0 0.0
        %1567 = vmatpush1.msra.mxu0 0.0
        %1568 = vmatprep.subr.mxu0 0.0
        %1569 = vmatpush1.msra.mxu0 0.0
        %1570 = vmatprep.subr.mxu0 0.0
        %1571 = vmatpush1.msra.mxu0 0.0
        %1572 = vmatprep.subr.mxu0 0.0
        %1573 = vmatpush1.msra.mxu0 0.0
        %1574 = vmatprep.subr.mxu0 0.0
        %1575 = vmatpush1.msra.mxu0 0.0
        %1576 = vmatprep.subr.mxu0 0.0
        %1577 = vmatpush1.msra.mxu0 0.0
        %1578 = vmatprep.subr.mxu0 0.0
        %1579 = vmatpush1.msra.mxu0 0.0
        %1580 = vmatprep.subr.mxu0 0.0
        %1581 = vmatpush1.msra.mxu0 0.0
        %1582 = vmatprep.subr.mxu0 0.0
        %1583 = vmatpush1.msra.mxu0 0.0
        %1584 = vmatprep.subr.mxu0 0.0
        %1585 = vmatpush1.msra.mxu0 0.0
        %1586 = vmatprep.subr.mxu0 0.0
        %1587 = vmatpush1.msra.mxu0 0.0
        %1588 = vmatprep.subr.mxu0 0.0
        %1589 = vmatpush1.msra.mxu0 0.0
        %1590 = vmatprep.mubr.f32.mxu0 0.0
        %1591 = vmatmul.mubr.f32.gmra.mrb[0].mxu0 %v1524
        %v1592 = vpop.f32.mrb[0].mxu0
        %v1593 = vadd.f32 0.0, %v1592
        %v1594 = vpop.f32.mrb[0].mxu0
        %1595 = vdwg.mxu0
        %v1596 = vmul.f32 %v1593, %v1385
        %v1597 = vadd.f32 %v1522, %v1596
        %v1598 = vld [vmem:[%s1144] sm:$0xff]
        %v1599 = vld [vmem:[%s1144 + $0x8] sm:$0xff]
        %v1600 = vld [vmem:[%s1144 + $0x10] sm:$0xff]
        %v1601 = vld [vmem:[%s1144 + $0x18] sm:$0xff]
        %v1603 = vlaneseq
        %v1604 = vshrl.u32 %v1603, 7
        %v1605 = vsub.s32 0, %v1604
        %v1606 = vrot.slane %v1396, %v1605
        %v1609 = vsel %vm1423, %v1597, 0
        %1611 = vmatprep.subr.mxu0 0.0
        %1612 = vmatpush1.msra.mxu0 %v1598
        %1613 = vmatprep.subr.mxu0 0.0
        %1614 = vmatpush1.msra.mxu0 %v1599
        %1615 = vmatprep.subr.mxu0 0.0
        %1616 = vmatpush1.msra.mxu0 %v1600
        %1617 = vmatprep.subr.mxu0 0.0
        %1618 = vmatpush1.msra.mxu0 %v1601
        %1619 = vmatprep.subr.mxu0 0.0
        %1620 = vmatpush1.msra.mxu0 0.0
        %1621 = vmatprep.subr.mxu0 0.0
        %1622 = vmatpush1.msra.mxu0 0.0
        %1623 = vmatprep.subr.mxu0 0.0
        %1624 = vmatpush1.msra.mxu0 0.0
        %1625 = vmatprep.subr.mxu0 0.0
        %1626 = vmatpush1.msra.mxu0 0.0
        %1627 = vmatprep.subr.mxu0 0.0
        %1628 = vmatpush1.msra.mxu0 0.0
        %1629 = vmatprep.subr.mxu0 0.0
        %1630 = vmatpush1.msra.mxu0 0.0
        %1631 = vmatprep.subr.mxu0 0.0
        %1632 = vmatpush1.msra.mxu0 0.0
        %1633 = vmatprep.subr.mxu0 0.0
        %1634 = vmatpush1.msra.mxu0 0.0
        %1635 = vmatprep.subr.mxu0 0.0
        %1636 = vmatpush1.msra.mxu0 0.0
        %1637 = vmatprep.subr.mxu0 0.0
        %1638 = vmatpush1.msra.mxu0 0.0
        %1639 = vmatprep.subr.mxu0 0.0
        %1640 = vmatpush1.msra.mxu0 0.0
        %1641 = vmatprep.subr.mxu0 0.0
        %1642 = vmatpush1.msra.mxu0 0.0
        %1643 = vmatprep.subr.mxu0 0.0
        %1644 = vmatpush1.msra.mxu0 0.0
        %1645 = vmatprep.subr.mxu0 0.0
        %1646 = vmatpush1.msra.mxu0 0.0
        %1647 = vmatprep.subr.mxu0 0.0
        %1648 = vmatpush1.msra.mxu0 0.0
        %1649 = vmatprep.subr.mxu0 0.0
        %1650 = vmatpush1.msra.mxu0 0.0
        %1651 = vmatprep.subr.mxu0 0.0
        %1652 = vmatpush1.msra.mxu0 0.0
        %1653 = vmatprep.subr.mxu0 0.0
        %1654 = vmatpush1.msra.mxu0 0.0
        %1655 = vmatprep.subr.mxu0 0.0
        %1656 = vmatpush1.msra.mxu0 0.0
        %1657 = vmatprep.subr.mxu0 0.0
        %1658 = vmatpush1.msra.mxu0 0.0
        %1659 = vmatprep.subr.mxu0 0.0
        %1660 = vmatpush1.msra.mxu0 0.0
        %1661 = vmatprep.subr.mxu0 0.0
        %1662 = vmatpush1.msra.mxu0 0.0
        %1663 = vmatprep.subr.mxu0 0.0
        %1664 = vmatpush1.msra.mxu0 0.0
        %1665 = vmatprep.subr.mxu0 0.0
        %1666 = vmatpush1.msra.mxu0 0.0
        %1667 = vmatprep.subr.mxu0 0.0
        %1668 = vmatpush1.msra.mxu0 0.0
        %1669 = vmatprep.subr.mxu0 0.0
        %1670 = vmatpush1.msra.mxu0 0.0
        %1671 = vmatprep.subr.mxu0 0.0
        %1672 = vmatpush1.msra.mxu0 0.0
        %1673 = vmatprep.subr.mxu0 0.0
        %1674 = vmatpush1.msra.mxu0 0.0
        %1675 = vmatprep.mubr.f32.mxu0 0.0
        %1676 = vmatmul.mubr.f32.gmra.mrb[0].mxu0 %v1609
        %v1677 = vpop.f32.mrb[0].mxu0
        %v1678 = vadd.f32 %v1606, %v1677
        %v1679 = vpop.f32.mrb[0].mxu0
        %1680 = vdwg.mxu0
        %v1681 = vld [vmem:[%s1149] sm:$0xff]
        %v1682 = vld [vmem:[%s1149 + $0x8] sm:$0xff]
        %v1683 = vld [vmem:[%s1149 + $0x10] sm:$0xff]
        %v1684 = vld [vmem:[%s1149 + $0x18] sm:$0xff]
        %1685 = vrot.lane.b32.xlu0 %v1606, 64
        %v1686 = vpop.permute.xlu0 %1685
        %1688 = vmatprep.subr.mxu0 0.0
        %1689 = vmatpush1.msra.mxu0 %v1681
        %1690 = vmatprep.subr.mxu0 0.0
        %1691 = vmatpush1.msra.mxu0 %v1682
        %1692 = vmatprep.subr.mxu0 0.0
        %1693 = vmatpush1.msra.mxu0 %v1683
        %1694 = vmatprep.subr.mxu0 0.0
        %1695 = vmatpush1.msra.mxu0 %v1684
        %1696 = vmatprep.subr.mxu0 0.0
        %1697 = vmatpush1.msra.mxu0 0.0
        %1698 = vmatprep.subr.mxu0 0.0
        %1699 = vmatpush1.msra.mxu0 0.0
        %1700 = vmatprep.subr.mxu0 0.0
        %1701 = vmatpush1.msra.mxu0 0.0
        %1702 = vmatprep.subr.mxu0 0.0
        %1703 = vmatpush1.msra.mxu0 0.0
        %1704 = vmatprep.subr.mxu0 0.0
        %1705 = vmatpush1.msra.mxu0 0.0
        %1706 = vmatprep.subr.mxu0 0.0
        %1707 = vmatpush1.msra.mxu0 0.0
        %1708 = vmatprep.subr.mxu0 0.0
        %1709 = vmatpush1.msra.mxu0 0.0
        %1710 = vmatprep.subr.mxu0 0.0
        %1711 = vmatpush1.msra.mxu0 0.0
        %1712 = vmatprep.subr.mxu0 0.0
        %1713 = vmatpush1.msra.mxu0 0.0
        %1714 = vmatprep.subr.mxu0 0.0
        %1715 = vmatpush1.msra.mxu0 0.0
        %1716 = vmatprep.subr.mxu0 0.0
        %1717 = vmatpush1.msra.mxu0 0.0
        %1718 = vmatprep.subr.mxu0 0.0
        %1719 = vmatpush1.msra.mxu0 0.0
        %1720 = vmatprep.subr.mxu0 0.0
        %1721 = vmatpush1.msra.mxu0 0.0
        %1722 = vmatprep.subr.mxu0 0.0
        %1723 = vmatpush1.msra.mxu0 0.0
        %1724 = vmatprep.subr.mxu0 0.0
        %1725 = vmatpush1.msra.mxu0 0.0
        %1726 = vmatprep.subr.mxu0 0.0
        %1727 = vmatpush1.msra.mxu0 0.0
        %1728 = vmatprep.subr.mxu0 0.0
        %1729 = vmatpush1.msra.mxu0 0.0
        %1730 = vmatprep.subr.mxu0 0.0
        %1731 = vmatpush1.msra.mxu0 0.0
        %1732 = vmatprep.subr.mxu0 0.0
        %1733 = vmatpush1.msra.mxu0 0.0
        %1734 = vmatprep.subr.mxu0 0.0
        %1735 = vmatpush1.msra.mxu0 0.0
        %1736 = vmatprep.subr.mxu0 0.0
        %1737 = vmatpush1.msra.mxu0 0.0
        %1738 = vmatprep.subr.mxu0 0.0
        %1739 = vmatpush1.msra.mxu0 0.0
        %1740 = vmatprep.subr.mxu0 0.0
        %1741 = vmatpush1.msra.mxu0 0.0
        %1742 = vmatprep.subr.mxu0 0.0
        %1743 = vmatpush1.msra.mxu0 0.0
        %1744 = vmatprep.subr.mxu0 0.0
        %1745 = vmatpush1.msra.mxu0 0.0
        %1746 = vmatprep.subr.mxu0 0.0
        %1747 = vmatpush1.msra.mxu0 0.0
        %1748 = vmatprep.subr.mxu0 0.0
        %1749 = vmatpush1.msra.mxu0 0.0
        %1750 = vmatprep.subr.mxu0 0.0
        %1751 = vmatpush1.msra.mxu0 0.0
        %1752 = vmatprep.mubr.f32.mxu0 0.0
        %1753 = vmatmul.mubr.f32.gmra.mrb[0].mxu0 %v1524
        %v1754 = vpop.f32.mrb[0].mxu0
        %v1755 = vadd.f32 %v1686, %v1754
        %v1756 = vpop.f32.mrb[0].mxu0
        %1757 = vdwg.mxu0
        %v1758 = vld [vmem:[%s1154] sm:$0xff]
        %v1759 = vld [vmem:[%s1154 + $0x8] sm:$0xff]
        %v1760 = vld [vmem:[%s1154 + $0x10] sm:$0xff]
        %v1761 = vld [vmem:[%s1154 + $0x18] sm:$0xff]
        %1763 = vrot.lane.b32.xlu0 %v1678, 96
        %v1764 = vpop.permute.xlu0 %1763
        %vm1765 = vcmask 64512
        %v1766 = vsel %vm1765, %v1678, 0
        %v1768 = vsel %vm1765, %v1764, 0
        %1770 = vmatprep.subr.mxu0 0.0
        %1771 = vmatpush1.xpose.msra.mxu0 %v1768
        %1772 = vmatprep.subr.mxu0 0.0
        %1773 = vmatpush1.xpose.msra.mxu0 0.0
        %1774 = vmatprep.subr.mxu0 0.0
        %1775 = vmatpush1.xpose.msra.mxu0 0.0
        %1776 = vmatprep.subr.mxu0 0.0
        %1777 = vmatpush1.xpose.msra.mxu0 0.0
        %1778 = vmatprep.subr.mxu0 0.0
        %1779 = vmatpush1.xpose.msra.mxu0 0.0
        %1780 = vmatprep.subr.mxu0 0.0
        %1781 = vmatpush1.xpose.msra.mxu0 0.0
        %1782 = vmatprep.subr.mxu0 0.0
        %1783 = vmatpush1.xpose.msra.mxu0 0.0
        %1784 = vmatprep.subr.mxu0 0.0
        %1785 = vmatpush1.xpose.msra.mxu0 0.0
        %1786 = vmatprep.subr.mxu0 0.0
        %1787 = vmatpush1.xpose.msra.mxu0 0.0
        %1788 = vmatprep.subr.mxu0 0.0
        %1789 = vmatpush1.xpose.msra.mxu0 0.0
        %1790 = vmatprep.subr.mxu0 0.0
        %1791 = vmatpush1.xpose.msra.mxu0 0.0
        %1792 = vmatprep.subr.mxu0 0.0
        %1793 = vmatpush1.xpose.msra.mxu0 0.0
        %1794 = vmatprep.subr.mxu0 0.0
        %1795 = vmatpush1.xpose.msra.mxu0 0.0
        %1796 = vmatprep.subr.mxu0 0.0
        %1797 = vmatpush1.xpose.msra.mxu0 0.0
        %1798 = vmatprep.subr.mxu0 0.0
        %1799 = vmatpush1.xpose.msra.mxu0 0.0
        %1800 = vmatprep.subr.mxu0 0.0
        %1801 = vmatpush1.xpose.msra.mxu0 0.0
        %1802 = vmatprep.subr.mxu0 0.0
        %1803 = vmatpush1.xpose.msra.mxu0 0.0
        %1804 = vmatprep.subr.mxu0 0.0
        %1805 = vmatpush1.xpose.msra.mxu0 0.0
        %1806 = vmatprep.subr.mxu0 0.0
        %1807 = vmatpush1.xpose.msra.mxu0 0.0
        %1808 = vmatprep.subr.mxu0 0.0
        %1809 = vmatpush1.xpose.msra.mxu0 0.0
        %1810 = vmatprep.subr.mxu0 0.0
        %1811 = vmatpush1.xpose.msra.mxu0 0.0
        %1812 = vmatprep.subr.mxu0 0.0
        %1813 = vmatpush1.xpose.msra.mxu0 0.0
        %1814 = vmatprep.subr.mxu0 0.0
        %1815 = vmatpush1.xpose.msra.mxu0 0.0
        %1816 = vmatprep.subr.mxu0 0.0
        %1817 = vmatpush1.xpose.msra.mxu0 0.0
        %1818 = vmatprep.subr.mxu0 0.0
        %1819 = vmatpush1.xpose.msra.mxu0 0.0
        %1820 = vmatprep.subr.mxu0 0.0
        %1821 = vmatpush1.xpose.msra.mxu0 0.0
        %1822 = vmatprep.subr.mxu0 0.0
        %1823 = vmatpush1.xpose.msra.mxu0 0.0
        %1824 = vmatprep.subr.mxu0 0.0
        %1825 = vmatpush1.xpose.msra.mxu0 0.0
        %1826 = vmatprep.subr.mxu0 0.0
        %1827 = vmatpush1.xpose.msra.mxu0 0.0
        %1828 = vmatprep.subr.mxu0 0.0
        %1829 = vmatpush1.xpose.msra.mxu0 0.0
        %1830 = vmatprep.subr.mxu0 0.0
        %1831 = vmatpush1.xpose.msra.mxu0 0.0
        %1832 = vmatprep.subr.mxu0 0.0
        %1833 = vmatpush1.xpose.msra.mxu0 0.0
        %1834 = vmatprep.mubr.f32.mxu0 0.0
        %1835 = vmatmul.mubr.f32.gmra.mrb[0].mxu0 %v1766
        %v1836 = vpop.f32.mrb[0].mxu0
        %v1837 = vadd.f32 0.0, %v1836
        %v1838 = vpop.f32.mrb[0].mxu0
        %1839 = vdwg.mxu0
        %v1840 = vsel %vm1765, %v1837, -inf
        %1841 = vmax.xlane.f32.xlu0 %v1840
        %v1842 = vpop.xlane.xlu0 %1841
        %v1843 = vsub.f32 %v1837, %v1842
        %v1844 = vmul.f32 %v1843, 1.442695
        %v1845 = vpow.pop %v1844
        %v1846 = vsel %vm1765, %v1845, 0.0
        %1847 = vadd.xlane.f32.xlu0 %v1846
        %v1848 = vpop.xlane.xlu0 %1847
        %v1849 = vrcp.pop %v1848
        %v1850 = vmul.f32 %v1845, %v1849
        %v1852 = vsel %vm1765, %v1850, 0
        %1854 = vmatprep.subr.mxu0 0.0
        %1855 = vmatpush1.msra.mxu0 %v1755
        %1856 = vmatprep.subr.mxu0 0.0
        %1857 = vmatpush1.msra.mxu0 0.0
        %1858 = vmatprep.subr.mxu0 0.0
        %1859 = vmatpush1.msra.mxu0 0.0
        %1860 = vmatprep.subr.mxu0 0.0
        %1861 = vmatpush1.msra.mxu0 0.0
        %1862 = vmatprep.subr.mxu0 0.0
        %1863 = vmatpush1.msra.mxu0 0.0
        %1864 = vmatprep.subr.mxu0 0.0
        %1865 = vmatpush1.msra.mxu0 0.0
        %1866 = vmatprep.subr.mxu0 0.0
        %1867 = vmatpush1.msra.mxu0 0.0
        %1868 = vmatprep.subr.mxu0 0.0
        %1869 = vmatpush1.msra.mxu0 0.0
        %1870 = vmatprep.subr.mxu0 0.0
        %1871 = vmatpush1.msra.mxu0 0.0
        %1872 = vmatprep.subr.mxu0 0.0
        %1873 = vmatpush1.msra.mxu0 0.0
        %1874 = vmatprep.subr.mxu0 0.0
        %1875 = vmatpush1.msra.mxu0 0.0
        %1876 = vmatprep.subr.mxu0 0.0
        %1877 = vmatpush1.msra.mxu0 0.0
        %1878 = vmatprep.subr.mxu0 0.0
        %1879 = vmatpush1.msra.mxu0 0.0
        %1880 = vmatprep.subr.mxu0 0.0
        %1881 = vmatpush1.msra.mxu0 0.0
        %1882 = vmatprep.subr.mxu0 0.0
        %1883 = vmatpush1.msra.mxu0 0.0
        %1884 = vmatprep.subr.mxu0 0.0
        %1885 = vmatpush1.msra.mxu0 0.0
        %1886 = vmatprep.subr.mxu0 0.0
        %1887 = vmatpush1.msra.mxu0 0.0
        %1888 = vmatprep.subr.mxu0 0.0
        %1889 = vmatpush1.msra.mxu0 0.0
        %1890 = vmatprep.subr.mxu0 0.0
        %1891 = vmatpush1.msra.mxu0 0.0
        %1892 = vmatprep.subr.mxu0 0.0
        %1893 = vmatpush1.msra.mxu0 0.0
        %1894 = vmatprep.subr.mxu0 0.0
        %1895 = vmatpush1.msra.mxu0 0.0
        %1896 = vmatprep.subr.mxu0 0.0
        %1897 = vmatpush1.msra.mxu0 0.0
        %1898 = vmatprep.subr.mxu0 0.0
        %1899 = vmatpush1.msra.mxu0 0.0
        %1900 = vmatprep.subr.mxu0 0.0
        %1901 = vmatpush1.msra.mxu0 0.0
        %1902 = vmatprep.subr.mxu0 0.0
        %1903 = vmatpush1.msra.mxu0 0.0
        %1904 = vmatprep.subr.mxu0 0.0
        %1905 = vmatpush1.msra.mxu0 0.0
        %1906 = vmatprep.subr.mxu0 0.0
        %1907 = vmatpush1.msra.mxu0 0.0
        %1908 = vmatprep.subr.mxu0 0.0
        %1909 = vmatpush1.msra.mxu0 0.0
        %1910 = vmatprep.subr.mxu0 0.0
        %1911 = vmatpush1.msra.mxu0 0.0
        %1912 = vmatprep.subr.mxu0 0.0
        %1913 = vmatpush1.msra.mxu0 0.0
        %1914 = vmatprep.subr.mxu0 0.0
        %1915 = vmatpush1.msra.mxu0 0.0
        %1916 = vmatprep.subr.mxu0 0.0
        %1917 = vmatpush1.msra.mxu0 0.0
        %1918 = vmatprep.mubr.f32.mxu0 0.0
        %1919 = vmatmul.mubr.f32.gmra.mrb[0].mxu0 %v1852
        %v1920 = vpop.f32.mrb[0].mxu0
        %v1921 = vadd.f32 0.0, %v1920
        %v1922 = vpop.f32.mrb[0].mxu0
        %1923 = vdwg.mxu0
        %1924 = vrot.lane.b32.xlu0 %v1678, 120
        %v1925 = vpop.permute.xlu0 %1924
        %1926 = vrot.lane.b32.xlu0 %v1678, 88
        %v1927 = vpop.permute.xlu0 %1926
        %v1928 = vsel %vm1765, %v1925, 0
        %v1930 = vsel %vm1765, %v1927, 0
        %1932 = vmatprep.subr.mxu0 0.0
        %1933 = vmatpush1.xpose.msra.mxu0 %v1930
        %1934 = vmatprep.subr.mxu0 0.0
        %1935 = vmatpush1.xpose.msra.mxu0 0.0
        %1936 = vmatprep.subr.mxu0 0.0
        %1937 = vmatpush1.xpose.msra.mxu0 0.0
        %1938 = vmatprep.subr.mxu0 0.0
        %1939 = vmatpush1.xpose.msra.mxu0 0.0
        %1940 = vmatprep.subr.mxu0 0.0
        %1941 = vmatpush1.xpose.msra.mxu0 0.0
        %1942 = vmatprep.subr.mxu0 0.0
        %1943 = vmatpush1.xpose.msra.mxu0 0.0
        %1944 = vmatprep.subr.mxu0 0.0
        %1945 = vmatpush1.xpose.msra.mxu0 0.0
        %1946 = vmatprep.subr.mxu0 0.0
        %1947 = vmatpush1.xpose.msra.mxu0 0.0
        %1948 = vmatprep.subr.mxu0 0.0
        %1949 = vmatpush1.xpose.msra.mxu0 0.0
        %1950 = vmatprep.subr.mxu0 0.0
        %1951 = vmatpush1.xpose.msra.mxu0 0.0
        %1952 = vmatprep.subr.mxu0 0.0
        %1953 = vmatpush1.xpose.msra.mxu0 0.0
        %1954 = vmatprep.subr.mxu0 0.0
        %1955 = vmatpush1.xpose.msra.mxu0 0.0
        %1956 = vmatprep.subr.mxu0 0.0
        %1957 = vmatpush1.xpose.msra.mxu0 0.0
        %1958 = vmatprep.subr.mxu0 0.0
        %1959 = vmatpush1.xpose.msra.mxu0 0.0
        %1960 = vmatprep.subr.mxu0 0.0
        %1961 = vmatpush1.xpose.msra.mxu0 0.0
        %1962 = vmatprep.subr.mxu0 0.0
        %1963 = vmatpush1.xpose.msra.mxu0 0.0
        %1964 = vmatprep.subr.mxu0 0.0
        %1965 = vmatpush1.xpose.msra.mxu0 0.0
        %1966 = vmatprep.subr.mxu0 0.0
        %1967 = vmatpush1.xpose.msra.mxu0 0.0
        %1968 = vmatprep.subr.mxu0 0.0
        %1969 = vmatpush1.xpose.msra.mxu0 0.0
        %1970 = vmatprep.subr.mxu0 0.0
        %1971 = vmatpush1.xpose.msra.mxu0 0.0
        %1972 = vmatprep.subr.mxu0 0.0
        %1973 = vmatpush1.xpose.msra.mxu0 0.0
        %1974 = vmatprep.subr.mxu0 0.0
        %1975 = vmatpush1.xpose.msra.mxu0 0.0
        %1976 = vmatprep.subr.mxu0 0.0
        %1977 = vmatpush1.xpose.msra.mxu0 0.0
        %1978 = vmatprep.subr.mxu0 0.0
        %1979 = vmatpush1.xpose.msra.mxu0 0.0
        %1980 = vmatprep.subr.mxu0 0.0
        %1981 = vmatpush1.xpose.msra.mxu0 0.0
        %1982 = vmatprep.subr.mxu0 0.0
        %1983 = vmatpush1.xpose.msra.mxu0 0.0
        %1984 = vmatprep.subr.mxu0 0.0
        %1985 = vmatpush1.xpose.msra.mxu0 0.0
        %1986 = vmatprep.subr.mxu0 0.0
        %1987 = vmatpush1.xpose.msra.mxu0 0.0
        %1988 = vmatprep.subr.mxu0 0.0
        %1989 = vmatpush1.xpose.msra.mxu0 0.0
        %1990 = vmatprep.subr.mxu0 0.0
        %1991 = vmatpush1.xpose.msra.mxu0 0.0
        %1992 = vmatprep.subr.mxu0 0.0
        %1993 = vmatpush1.xpose.msra.mxu0 0.0
        %1994 = vmatprep.subr.mxu0 0.0
        %1995 = vmatpush1.xpose.msra.mxu0 0.0
        %1996 = vmatprep.mubr.f32.mxu0 0.0
        %1997 = vmatmul.mubr.f32.gmra.mrb[0].mxu0 %v1928
        %v1998 = vpop.f32.mrb[0].mxu0
        %v1999 = vadd.f32 0.0, %v1998
        %v2000 = vpop.f32.mrb[0].mxu0
        %2001 = vdwg.mxu0
        %v2002 = vsel %vm1765, %v1999, -inf
        %2003 = vmax.xlane.f32.xlu0 %v2002
        %v2004 = vpop.xlane.xlu0 %2003
        %v2005 = vsub.f32 %v1999, %v2004
        %v2006 = vmul.f32 %v2005, 1.442695
        %v2007 = vpow.pop %v2006
        %v2008 = vsel %vm1765, %v2007, 0.0
        %2009 = vadd.xlane.f32.xlu0 %v2008
        %v2010 = vpop.xlane.xlu0 %2009
        %v2011 = vrcp.pop %v2010
        %v2012 = vmul.f32 %v2007, %v2011
        %2014 = vrot.lane.b32.xlu0 %v1755, 120
        %v2015 = vpop.permute.xlu0 %2014
        %v2018 = vsel %vm1765, %v2012, 0
        %2020 = vmatprep.subr.mxu0 0.0
        %2021 = vmatpush1.msra.mxu0 %v2015
        %2022 = vmatprep.subr.mxu0 0.0
        %2023 = vmatpush1.msra.mxu0 0.0
        %2024 = vmatprep.subr.mxu0 0.0
        %2025 = vmatpush1.msra.mxu0 0.0
        %2026 = vmatprep.subr.mxu0 0.0
        %2027 = vmatpush1.msra.mxu0 0.0
        %2028 = vmatprep.subr.mxu0 0.0
        %2029 = vmatpush1.msra.mxu0 0.0
        %2030 = vmatprep.subr.mxu0 0.0
        %2031 = vmatpush1.msra.mxu0 0.0
        %2032 = vmatprep.subr.mxu0 0.0
        %2033 = vmatpush1.msra.mxu0 0.0
        %2034 = vmatprep.subr.mxu0 0.0
        %2035 = vmatpush1.msra.mxu0 0.0
        %2036 = vmatprep.subr.mxu0 0.0
        %2037 = vmatpush1.msra.mxu0 0.0
        %2038 = vmatprep.subr.mxu0 0.0
        %2039 = vmatpush1.msra.mxu0 0.0
        %2040 = vmatprep.subr.mxu0 0.0
        %2041 = vmatpush1.msra.mxu0 0.0
        %2042 = vmatprep.subr.mxu0 0.0
        %2043 = vmatpush1.msra.mxu0 0.0
        %2044 = vmatprep.subr.mxu0 0.0
        %2045 = vmatpush1.msra.mxu0 0.0
        %2046 = vmatprep.subr.mxu0 0.0
        %2047 = vmatpush1.msra.mxu0 0.0
        %2048 = vmatprep.subr.mxu0 0.0
        %2049 = vmatpush1.msra.mxu0 0.0
        %2050 = vmatprep.subr.mxu0 0.0
        %2051 = vmatpush1.msra.mxu0 0.0
        %2052 = vmatprep.subr.mxu0 0.0
        %2053 = vmatpush1.msra.mxu0 0.0
        %2054 = vmatprep.subr.mxu0 0.0
        %2055 = vmatpush1.msra.mxu0 0.0
        %2056 = vmatprep.subr.mxu0 0.0
        %2057 = vmatpush1.msra.mxu0 0.0
        %2058 = vmatprep.subr.mxu0 0.0
        %2059 = vmatpush1.msra.mxu0 0.0
        %2060 = vmatprep.subr.mxu0 0.0
        %2061 = vmatpush1.msra.mxu0 0.0
        %2062 = vmatprep.subr.mxu0 0.0
        %2063 = vmatpush1.msra.mxu0 0.0
        %2064 = vmatprep.subr.mxu0 0.0
        %2065 = vmatpush1.msra.mxu0 0.0
        %2066 = vmatprep.subr.mxu0 0.0
        %2067 = vmatpush1.msra.mxu0 0.0
        %2068 = vmatprep.subr.mxu0 0.0
        %2069 = vmatpush1.msra.mxu0 0.0
        %2070 = vmatprep.subr.mxu0 0.0
        %2071 = vmatpush1.msra.mxu0 0.0
        %2072 = vmatprep.subr.mxu0 0.0
        %2073 = vmatpush1.msra.mxu0 0.0
        %2074 = vmatprep.subr.mxu0 0.0
        %2075 = vmatpush1.msra.mxu0 0.0
        %2076 = vmatprep.subr.mxu0 0.0
        %2077 = vmatpush1.msra.mxu0 0.0
        %2078 = vmatprep.subr.mxu0 0.0
        %2079 = vmatpush1.msra.mxu0 0.0
        %2080 = vmatprep.subr.mxu0 0.0
        %2081 = vmatpush1.msra.mxu0 0.0
        %2082 = vmatprep.subr.mxu0 0.0
        %2083 = vmatpush1.msra.mxu0 0.0
        %2084 = vmatprep.mubr.f32.mxu0 0.0
        %2085 = vmatmul.mubr.f32.gmra.mrb[0].mxu0 %v2018
        %v2086 = vpop.f32.mrb[0].mxu0
        %v2087 = vadd.f32 0.0, %v2086
        %v2088 = vpop.f32.mrb[0].mxu0
        %2089 = vdwg.mxu0
        %2090 = vrot.lane.b32.xlu0 %v1678, 112
        %v2091 = vpop.permute.xlu0 %2090
        %2092 = vrot.lane.b32.xlu0 %v1678, 80
        %v2093 = vpop.permute.xlu0 %2092
        %v2094 = vsel %vm1765, %v2091, 0
        %v2096 = vsel %vm1765, %v2093, 0
        %2098 = vmatprep.subr.mxu0 0.0
        %2099 = vmatpush1.xpose.msra.mxu0 %v2096
        %2100 = vmatprep.subr.mxu0 0.0
        %2101 = vmatpush1.xpose.msra.mxu0 0.0
        %2102 = vmatprep.subr.mxu0 0.0
        %2103 = vmatpush1.xpose.msra.mxu0 0.0
        %2104 = vmatprep.subr.mxu0 0.0
        %2105 = vmatpush1.xpose.msra.mxu0 0.0
        %2106 = vmatprep.subr.mxu0 0.0
        %2107 = vmatpush1.xpose.msra.mxu0 0.0
        %2108 = vmatprep.subr.mxu0 0.0
        %2109 = vmatpush1.xpose.msra.mxu0 0.0
        %2110 = vmatprep.subr.mxu0 0.0
        %2111 = vmatpush1.xpose.msra.mxu0 0.0
        %2112 = vmatprep.subr.mxu0 0.0
        %2113 = vmatpush1.xpose.msra.mxu0 0.0
        %2114 = vmatprep.subr.mxu0 0.0
        %2115 = vmatpush1.xpose.msra.mxu0 0.0
        %2116 = vmatprep.subr.mxu0 0.0
        %2117 = vmatpush1.xpose.msra.mxu0 0.0
        %2118 = vmatprep.subr.mxu0 0.0
        %2119 = vmatpush1.xpose.msra.mxu0 0.0
        %2120 = vmatprep.subr.mxu0 0.0
        %2121 = vmatpush1.xpose.msra.mxu0 0.0
        %2122 = vmatprep.subr.mxu0 0.0
        %2123 = vmatpush1.xpose.msra.mxu0 0.0
        %2124 = vmatprep.subr.mxu0 0.0
        %2125 = vmatpush1.xpose.msra.mxu0 0.0
        %2126 = vmatprep.subr.mxu0 0.0
        %2127 = vmatpush1.xpose.msra.mxu0 0.0
        %2128 = vmatprep.subr.mxu0 0.0
        %2129 = vmatpush1.xpose.msra.mxu0 0.0
        %2130 = vmatprep.subr.mxu0 0.0
        %2131 = vmatpush1.xpose.msra.mxu0 0.0
        %2132 = vmatprep.subr.mxu0 0.0
        %2133 = vmatpush1.xpose.msra.mxu0 0.0
        %2134 = vmatprep.subr.mxu0 0.0
        %2135 = vmatpush1.xpose.msra.mxu0 0.0
        %2136 = vmatprep.subr.mxu0 0.0
        %2137 = vmatpush1.xpose.msra.mxu0 0.0
        %2138 = vmatprep.subr.mxu0 0.0
        %2139 = vmatpush1.xpose.msra.mxu0 0.0
        %2140 = vmatprep.subr.mxu0 0.0
        %2141 = vmatpush1.xpose.msra.mxu0 0.0
        %2142 = vmatprep.subr.mxu0 0.0
        %2143 = vmatpush1.xpose.msra.mxu0 0.0
        %2144 = vmatprep.subr.mxu0 0.0
        %2145 = vmatpush1.xpose.msra.mxu0 0.0
        %2146 = vmatprep.subr.mxu0 0.0
        %2147 = vmatpush1.xpose.msra.mxu0 0.0
        %2148 = vmatprep.subr.mxu0 0.0
        %2149 = vmatpush1.xpose.msra.mxu0 0.0
        %2150 = vmatprep.subr.mxu0 0.0
        %2151 = vmatpush1.xpose.msra.mxu0 0.0
        %2152 = vmatprep.subr.mxu0 0.0
        %2153 = vmatpush1.xpose.msra.mxu0 0.0
        %2154 = vmatprep.subr.mxu0 0.0
        %2155 = vmatpush1.xpose.msra.mxu0 0.0
        %2156 = vmatprep.subr.mxu0 0.0
        %2157 = vmatpush1.xpose.msra.mxu0 0.0
        %2158 = vmatprep.subr.mxu0 0.0
        %2159 = vmatpush1.xpose.msra.mxu0 0.0
        %2160 = vmatprep.subr.mxu0 0.0
        %2161 = vmatpush1.xpose.msra.mxu0 0.0
        %2162 = vmatprep.mubr.f32.mxu0 0.0
        %2163 = vmatmul.mubr.f32.gmra.mrb[0].mxu0 %v2094
        %v2164 = vpop.f32.mrb[0].mxu0
        %v2165 = vadd.f32 0.0, %v2164
        %v2166 = vpop.f32.mrb[0].mxu0
        %2167 = vdwg.mxu0
        %v2168 = vsel %vm1765, %v2165, -inf
        %2169 = vmax.xlane.f32.xlu0 %v2168
        %v2170 = vpop.xlane.xlu0 %2169
        %v2171 = vsub.f32 %v2165, %v2170
        %v2172 = vmul.f32 %v2171, 1.442695
        %v2173 = vpow.pop %v2172
        %v2174 = vsel %vm1765, %v2173, 0.0
        %2175 = vadd.xlane.f32.xlu0 %v2174
        %v2176 = vpop.xlane.xlu0 %2175
        %v2177 = vrcp.pop %v2176
        %v2178 = vmul.f32 %v2173, %v2177
        %2179 = vrot.lane.b32.xlu0 %v1755, 112
        %v2180 = vpop.permute.xlu0 %2179
        %v2183 = vsel %vm1765, %v2178, 0
        %2185 = vmatprep.subr.mxu0 0.0
        %2186 = vmatpush1.msra.mxu0 %v2180
        %2187 = vmatprep.subr.mxu0 0.0
        %2188 = vmatpush1.msra.mxu0 0.0
        %2189 = vmatprep.subr.mxu0 0.0
        %2190 = vmatpush1.msra.mxu0 0.0
        %2191 = vmatprep.subr.mxu0 0.0
        %2192 = vmatpush1.msra.mxu0 0.0
        %2193 = vmatprep.subr.mxu0 0.0
        %2194 = vmatpush1.msra.mxu0 0.0
        %2195 = vmatprep.subr.mxu0 0.0
        %2196 = vmatpush1.msra.mxu0 0.0
        %2197 = vmatprep.subr.mxu0 0.0
        %2198 = vmatpush1.msra.mxu0 0.0
        %2199 = vmatprep.subr.mxu0 0.0
        %2200 = vmatpush1.msra.mxu0 0.0
        %2201 = vmatprep.subr.mxu0 0.0
        %2202 = vmatpush1.msra.mxu0 0.0
        %2203 = vmatprep.subr.mxu0 0.0
        %2204 = vmatpush1.msra.mxu0 0.0
        %2205 = vmatprep.subr.mxu0 0.0
        %2206 = vmatpush1.msra.mxu0 0.0
        %2207 = vmatprep.subr.mxu0 0.0
        %2208 = vmatpush1.msra.mxu0 0.0
        %2209 = vmatprep.subr.mxu0 0.0
        %2210 = vmatpush1.msra.mxu0 0.0
        %2211 = vmatprep.subr.mxu0 0.0
        %2212 = vmatpush1.msra.mxu0 0.0
        %2213 = vmatprep.subr.mxu0 0.0
        %2214 = vmatpush1.msra.mxu0 0.0
        %2215 = vmatprep.subr.mxu0 0.0
        %2216 = vmatpush1.msra.mxu0 0.0
        %2217 = vmatprep.subr.mxu0 0.0
        %2218 = vmatpush1.msra.mxu0 0.0
        %2219 = vmatprep.subr.mxu0 0.0
        %2220 = vmatpush1.msra.mxu0 0.0
        %2221 = vmatprep.subr.mxu0 0.0
        %2222 = vmatpush1.msra.mxu0 0.0
        %2223 = vmatprep.subr.mxu0 0.0
        %2224 = vmatpush1.msra.mxu0 0.0
        %2225 = vmatprep.subr.mxu0 0.0
        %2226 = vmatpush1.msra.mxu0 0.0
        %2227 = vmatprep.subr.mxu0 0.0
        %2228 = vmatpush1.msra.mxu0 0.0
        %2229 = vmatprep.subr.mxu0 0.0
        %2230 = vmatpush1.msra.mxu0 0.0
        %2231 = vmatprep.subr.mxu0 0.0
        %2232 = vmatpush1.msra.mxu0 0.0
        %2233 = vmatprep.subr.mxu0 0.0
        %2234 = vmatpush1.msra.mxu0 0.0
        %2235 = vmatprep.subr.mxu0 0.0
        %2236 = vmatpush1.msra.mxu0 0.0
        %2237 = vmatprep.subr.mxu0 0.0
        %2238 = vmatpush1.msra.mxu0 0.0
        %2239 = vmatprep.subr.mxu0 0.0
        %2240 = vmatpush1.msra.mxu0 0.0
        %2241 = vmatprep.subr.mxu0 0.0
        %2242 = vmatpush1.msra.mxu0 0.0
        %2243 = vmatprep.subr.mxu0 0.0
        %2244 = vmatpush1.msra.mxu0 0.0
        %2245 = vmatprep.subr.mxu0 0.0
        %2246 = vmatpush1.msra.mxu0 0.0
        %2247 = vmatprep.subr.mxu0 0.0
        %2248 = vmatpush1.msra.mxu0 0.0
        %2249 = vmatprep.mubr.f32.mxu0 0.0
        %2250 = vmatmul.mubr.f32.gmra.mrb[0].mxu0 %v2183
        %v2251 = vpop.f32.mrb[0].mxu0
        %v2252 = vadd.f32 0.0, %v2251
        %v2253 = vpop.f32.mrb[0].mxu0
        %2254 = vdwg.mxu0
        %2255 = vrot.lane.b32.xlu0 %v1678, 104
        %v2256 = vpop.permute.xlu0 %2255
        %2257 = vrot.lane.b32.xlu0 %v1678, 72
        %v2258 = vpop.permute.xlu0 %2257
        %v2259 = vsel %vm1765, %v2256, 0
        %v2261 = vsel %vm1765, %v2258, 0
        %2263 = vmatprep.subr.mxu0 0.0
        %2264 = vmatpush1.xpose.msra.mxu0 %v2261
        %2265 = vmatprep.subr.mxu0 0.0
        %2266 = vmatpush1.xpose.msra.mxu0 0.0
        %2267 = vmatprep.subr.mxu0 0.0
        %2268 = vmatpush1.xpose.msra.mxu0 0.0
        %2269 = vmatprep.subr.mxu0 0.0
        %2270 = vmatpush1.xpose.msra.mxu0 0.0
        %2271 = vmatprep.subr.mxu0 0.0
        %2272 = vmatpush1.xpose.msra.mxu0 0.0
        %2273 = vmatprep.subr.mxu0 0.0
        %2274 = vmatpush1.xpose.msra.mxu0 0.0
        %2275 = vmatprep.subr.mxu0 0.0
        %2276 = vmatpush1.xpose.msra.mxu0 0.0
        %2277 = vmatprep.subr.mxu0 0.0
        %2278 = vmatpush1.xpose.msra.mxu0 0.0
        %2279 = vmatprep.subr.mxu0 0.0
        %2280 = vmatpush1.xpose.msra.mxu0 0.0
        %2281 = vmatprep.subr.mxu0 0.0
        %2282 = vmatpush1.xpose.msra.mxu0 0.0
        %2283 = vmatprep.subr.mxu0 0.0
        %2284 = vmatpush1.xpose.msra.mxu0 0.0
        %2285 = vmatprep.subr.mxu0 0.0
        %2286 = vmatpush1.xpose.msra.mxu0 0.0
        %2287 = vmatprep.subr.mxu0 0.0
        %2288 = vmatpush1.xpose.msra.mxu0 0.0
        %2289 = vmatprep.subr.mxu0 0.0
        %2290 = vmatpush1.xpose.msra.mxu0 0.0
        %2291 = vmatprep.subr.mxu0 0.0
        %2292 = vmatpush1.xpose.msra.mxu0 0.0
        %2293 = vmatprep.subr.mxu0 0.0
        %2294 = vmatpush1.xpose.msra.mxu0 0.0
        %2295 = vmatprep.subr.mxu0 0.0
        %2296 = vmatpush1.xpose.msra.mxu0 0.0
        %2297 = vmatprep.subr.mxu0 0.0
        %2298 = vmatpush1.xpose.msra.mxu0 0.0
        %2299 = vmatprep.subr.mxu0 0.0
        %2300 = vmatpush1.xpose.msra.mxu0 0.0
        %2301 = vmatprep.subr.mxu0 0.0
        %2302 = vmatpush1.xpose.msra.mxu0 0.0
        %2303 = vmatprep.subr.mxu0 0.0
        %2304 = vmatpush1.xpose.msra.mxu0 0.0
        %2305 = vmatprep.subr.mxu0 0.0
        %2306 = vmatpush1.xpose.msra.mxu0 0.0
        %2307 = vmatprep.subr.mxu0 0.0
        %2308 = vmatpush1.xpose.msra.mxu0 0.0
        %2309 = vmatprep.subr.mxu0 0.0
        %2310 = vmatpush1.xpose.msra.mxu0 0.0
        %2311 = vmatprep.subr.mxu0 0.0
        %2312 = vmatpush1.xpose.msra.mxu0 0.0
        %2313 = vmatprep.subr.mxu0 0.0
        %2314 = vmatpush1.xpose.msra.mxu0 0.0
        %2315 = vmatprep.subr.mxu0 0.0
        %2316 = vmatpush1.xpose.msra.mxu0 0.0
        %2317 = vmatprep.subr.mxu0 0.0
        %2318 = vmatpush1.xpose.msra.mxu0 0.0
        %2319 = vmatprep.subr.mxu0 0.0
        %2320 = vmatpush1.xpose.msra.mxu0 0.0
        %2321 = vmatprep.subr.mxu0 0.0
        %2322 = vmatpush1.xpose.msra.mxu0 0.0
        %2323 = vmatprep.subr.mxu0 0.0
        %2324 = vmatpush1.xpose.msra.mxu0 0.0
        %2325 = vmatprep.subr.mxu0 0.0
        %2326 = vmatpush1.xpose.msra.mxu0 0.0
        %2327 = vmatprep.mubr.f32.mxu0 0.0
        %2328 = vmatmul.mubr.f32.gmra.mrb[0].mxu0 %v2259
        %v2329 = vpop.f32.mrb[0].mxu0
        %v2330 = vadd.f32 0.0, %v2329
        %v2331 = vpop.f32.mrb[0].mxu0
        %2332 = vdwg.mxu0
        %v2333 = vsel %vm1765, %v2330, -inf
        %2334 = vmax.xlane.f32.xlu0 %v2333
        %v2335 = vpop.xlane.xlu0 %2334
        %v2336 = vsub.f32 %v2330, %v2335
        %v2337 = vmul.f32 %v2336, 1.442695
        %v2338 = vpow.pop %v2337
        %v2339 = vsel %vm1765, %v2338, 0.0
        %2340 = vadd.xlane.f32.xlu0 %v2339
        %v2341 = vpop.xlane.xlu0 %2340
        %v2342 = vrcp.pop %v2341
        %v2343 = vmul.f32 %v2338, %v2342
        %2344 = vrot.lane.b32.xlu0 %v1755, 104
        %v2345 = vpop.permute.xlu0 %2344
        %v2348 = vsel %vm1765, %v2343, 0
        %2350 = vmatprep.subr.mxu0 0.0
        %2351 = vmatpush1.msra.mxu0 %v2345
        %2352 = vmatprep.subr.mxu0 0.0
        %2353 = vmatpush1.msra.mxu0 0.0
        %2354 = vmatprep.subr.mxu0 0.0
        %2355 = vmatpush1.msra.mxu0 0.0
        %2356 = vmatprep.subr.mxu0 0.0
        %2357 = vmatpush1.msra.mxu0 0.0
        %2358 = vmatprep.subr.mxu0 0.0
        %2359 = vmatpush1.msra.mxu0 0.0
        %2360 = vmatprep.subr.mxu0 0.0
        %2361 = vmatpush1.msra.mxu0 0.0
        %2362 = vmatprep.subr.mxu0 0.0
        %2363 = vmatpush1.msra.mxu0 0.0
        %2364 = vmatprep.subr.mxu0 0.0
        %2365 = vmatpush1.msra.mxu0 0.0
        %2366 = vmatprep.subr.mxu0 0.0
        %2367 = vmatpush1.msra.mxu0 0.0
        %2368 = vmatprep.subr.mxu0 0.0
        %2369 = vmatpush1.msra.mxu0 0.0
        %2370 = vmatprep.subr.mxu0 0.0
        %2371 = vmatpush1.msra.mxu0 0.0
        %2372 = vmatprep.subr.mxu0 0.0
        %2373 = vmatpush1.msra.mxu0 0.0
        %2374 = vmatprep.subr.mxu0 0.0
        %2375 = vmatpush1.msra.mxu0 0.0
        %2376 = vmatprep.subr.mxu0 0.0
        %2377 = vmatpush1.msra.mxu0 0.0
        %2378 = vmatprep.subr.mxu0 0.0
        %2379 = vmatpush1.msra.mxu0 0.0
        %2380 = vmatprep.subr.mxu0 0.0
        %2381 = vmatpush1.msra.mxu0 0.0
        %2382 = vmatprep.subr.mxu0 0.0
        %2383 = vmatpush1.msra.mxu0 0.0
        %2384 = vmatprep.subr.mxu0 0.0
        %2385 = vmatpush1.msra.mxu0 0.0
        %2386 = vmatprep.subr.mxu0 0.0
        %2387 = vmatpush1.msra.mxu0 0.0
        %2388 = vmatprep.subr.mxu0 0.0
        %2389 = vmatpush1.msra.mxu0 0.0
        %2390 = vmatprep.subr.mxu0 0.0
        %2391 = vmatpush1.msra.mxu0 0.0
        %2392 = vmatprep.subr.mxu0 0.0
        %2393 = vmatpush1.msra.mxu0 0.0
        %2394 = vmatprep.subr.mxu0 0.0
        %2395 = vmatpush1.msra.mxu0 0.0
        %2396 = vmatprep.subr.mxu0 0.0
        %2397 = vmatpush1.msra.mxu0 0.0
        %2398 = vmatprep.subr.mxu0 0.0
        %2399 = vmatpush1.msra.mxu0 0.0
        %2400 = vmatprep.subr.mxu0 0.0
        %2401 = vmatpush1.msra.mxu0 0.0
        %2402 = vmatprep.subr.mxu0 0.0
        %2403 = vmatpush1.msra.mxu0 0.0
        %2404 = vmatprep.subr.mxu0 0.0
        %2405 = vmatpush1.msra.mxu0 0.0
        %2406 = vmatprep.subr.mxu0 0.0
        %2407 = vmatpush1.msra.mxu0 0.0
        %2408 = vmatprep.subr.mxu0 0.0
        %2409 = vmatpush1.msra.mxu0 0.0
        %2410 = vmatprep.subr.mxu0 0.0
        %2411 = vmatpush1.msra.mxu0 0.0
        %2412 = vmatprep.subr.mxu0 0.0
        %2413 = vmatpush1.msra.mxu0 0.0
        %2414 = vmatprep.mubr.f32.mxu0 0.0
        %2415 = vmatmul.mubr.f32.gmra.mrb[0].mxu0 %v2348
        %v2416 = vpop.f32.mrb[0].mxu0
        %v2417 = vadd.f32 0.0, %v2416
        %v2418 = vpop.f32.mrb[0].mxu0
        %2419 = vdwg.mxu0
        %2421 = vrot.lane.b32.xlu0 %v2087, 8
        %v2422 = vpop.permute.xlu0 %2421
        %2425 = vrot.lane.b32.xlu0 %v2252, 16
        %v2426 = vpop.permute.xlu0 %2425
        %2429 = vrot.lane.b32.xlu0 %v2417, 24
        %v2430 = vpop.permute.xlu0 %2429
        %v2432 = vsel %vm1765, %v1921, %v2422
        %vm2433 = vcmask 130048
        %v2434 = vsel %vm2433, %v2432, %v2426
        %vm2435 = vcmask 195584
        %v2436 = vsel %vm2435, %v2434, %v2430
        %2437 = vrot.lane.b32.xlu0 %v1606, 32
        %v2438 = vpop.permute.xlu0 %2437
        %v2441 = vsel %vm1423, %v2436, 0
        %2443 = vmatprep.subr.mxu0 0.0
        %2444 = vmatpush1.msra.mxu0 %v1758
        %2445 = vmatprep.subr.mxu0 0.0
        %2446 = vmatpush1.msra.mxu0 %v1759
        %2447 = vmatprep.subr.mxu0 0.0
        %2448 = vmatpush1.msra.mxu0 %v1760
        %2449 = vmatprep.subr.mxu0 0.0
        %2450 = vmatpush1.msra.mxu0 %v1761
        %2451 = vmatprep.subr.mxu0 0.0
        %2452 = vmatpush1.msra.mxu0 0.0
        %2453 = vmatprep.subr.mxu0 0.0
        %2454 = vmatpush1.msra.mxu0 0.0
        %2455 = vmatprep.subr.mxu0 0.0
        %2456 = vmatpush1.msra.mxu0 0.0
        %2457 = vmatprep.subr.mxu0 0.0
        %2458 = vmatpush1.msra.mxu0 0.0
        %2459 = vmatprep.subr.mxu0 0.0
        %2460 = vmatpush1.msra.mxu0 0.0
        %2461 = vmatprep.subr.mxu0 0.0
        %2462 = vmatpush1.msra.mxu0 0.0
        %2463 = vmatprep.subr.mxu0 0.0
        %2464 = vmatpush1.msra.mxu0 0.0
        %2465 = vmatprep.subr.mxu0 0.0
        %2466 = vmatpush1.msra.mxu0 0.0
        %2467 = vmatprep.subr.mxu0 0.0
        %2468 = vmatpush1.msra.mxu0 0.0
        %2469 = vmatprep.subr.mxu0 0.0
        %2470 = vmatpush1.msra.mxu0 0.0
        %2471 = vmatprep.subr.mxu0 0.0
        %2472 = vmatpush1.msra.mxu0 0.0
        %2473 = vmatprep.subr.mxu0 0.0
        %2474 = vmatpush1.msra.mxu0 0.0
        %2475 = vmatprep.subr.mxu0 0.0
        %2476 = vmatpush1.msra.mxu0 0.0
        %2477 = vmatprep.subr.mxu0 0.0
        %2478 = vmatpush1.msra.mxu0 0.0
        %2479 = vmatprep.subr.mxu0 0.0
        %2480 = vmatpush1.msra.mxu0 0.0
        %2481 = vmatprep.subr.mxu0 0.0
        %2482 = vmatpush1.msra.mxu0 0.0
        %2483 = vmatprep.subr.mxu0 0.0
        %2484 = vmatpush1.msra.mxu0 0.0
        %2485 = vmatprep.subr.mxu0 0.0
        %2486 = vmatpush1.msra.mxu0 0.0
        %2487 = vmatprep.subr.mxu0 0.0
        %2488 = vmatpush1.msra.mxu0 0.0
        %2489 = vmatprep.subr.mxu0 0.0
        %2490 = vmatpush1.msra.mxu0 0.0
        %2491 = vmatprep.subr.mxu0 0.0
        %2492 = vmatpush1.msra.mxu0 0.0
        %2493 = vmatprep.subr.mxu0 0.0
        %2494 = vmatpush1.msra.mxu0 0.0
        %2495 = vmatprep.subr.mxu0 0.0
        %2496 = vmatpush1.msra.mxu0 0.0
        %2497 = vmatprep.subr.mxu0 0.0
        %2498 = vmatpush1.msra.mxu0 0.0
        %2499 = vmatprep.subr.mxu0 0.0
        %2500 = vmatpush1.msra.mxu0 0.0
        %2501 = vmatprep.subr.mxu0 0.0
        %2502 = vmatpush1.msra.mxu0 0.0
        %2503 = vmatprep.subr.mxu0 0.0
        %2504 = vmatpush1.msra.mxu0 0.0
        %2505 = vmatprep.subr.mxu0 0.0
        %2506 = vmatpush1.msra.mxu0 0.0
        %2507 = vmatprep.mubr.f32.mxu0 0.0
        %2508 = vmatmul.mubr.f32.gmra.mrb[0].mxu0 %v2441
        %v2509 = vpop.f32.mrb[0].mxu0
        %v2510 = vadd.f32 %v2438, %v2509
        %v2511 = vpop.f32.mrb[0].mxu0
        %2512 = vdwg.mxu0
        %v2513 = vadd.f32 %v1494, 1.0
        %v2514 = vlaneseq
        %v2515 = vshrl.u32 %v2514, 7
        %v2516 = vsub.s32 0, %v2515
        %v2517 = vrot.slane %v2513, %v2516
        %v2518 = vmul.f32 %v2517, %v2510
        %v2519 = vlaneseq
        %v2520 = vshrl.u32 %v2519, 7
        %v2521 = vsub.s32 0, %v2520
        %v2522 = vrot.slane %v1494, %v2521
        %2524 = vrot.lane.b32.xlu0 %v2522, 96
        %v2525 = vpop.permute.xlu0 %2524
        %v2527 = vadd.f32 %v2518, %v2525
        %v2528 = vadd.f32 %v1380, %v2527
        %v2529 = vsel %vm1423, %v2528, 0.0
        %2530 = vadd.xlane.f32.xlu0 %v2529
        %v2531 = vpop.xlane.xlu0 %2530
        %v2532 = vmul.f32 %v2531, %v1501
        %v2533 = vsub.f32 %v2528, %v2532
        %v2534 = vmul.f32 %v2533, %v2533
        %v2535 = vsel %vm1423, %v2534, 0.0
        %2536 = vadd.xlane.f32.xlu0 %v2535
        %v2537 = vpop.xlane.xlu0 %2536
        %v2538 = vmul.f32 %v2537, %v1501
        %v2539 = vadd.f32 %v2538, 1e-05
        %v2540 = vrsqrt.pop %v2539
        %v2541 = vmul.f32 %v2533, %v2540
        %v2542 = vlaneseq
        %v2543 = vshrl.u32 %v2542, 7
        %v2544 = vsub.s32 1, %v2543
        %v2545 = vrot.slane %v1394, %v2544
        %v2546 = vmul.f32 %v2541, %v2545
        %v2547 = vlaneseq
        %v2548 = vshrl.u32 %v2547, 7
        %v2549 = vsub.s32 1, %v2548
        %v2550 = vrot.slane %v1395, %v2549
        %v2551 = vadd.f32 %v2546, %v2550
        %v2552 = vmul.f32 %v2551, %v1384
        %v2554 = vsel %vm1423, %v2551, 0
        %2556 = vmatprep.subr.mxu0 0.0
        %2557 = vmatpush1.msra.mxu0 %v1390
        %2558 = vmatprep.subr.mxu0 0.0
        %2559 = vmatpush1.msra.mxu0 %v1391
        %2560 = vmatprep.subr.mxu0 0.0
        %2561 = vmatpush1.msra.mxu0 %v1392
        %2562 = vmatprep.subr.mxu0 0.0
        %2563 = vmatpush1.msra.mxu0 %v1393
        %2564 = vmatprep.subr.mxu0 0.0
        %2565 = vmatpush1.msra.mxu0 0.0
        %2566 = vmatprep.subr.mxu0 0.0
        %2567 = vmatpush1.msra.mxu0 0.0
        %2568 = vmatprep.subr.mxu0 0.0
        %2569 = vmatpush1.msra.mxu0 0.0
        %2570 = vmatprep.subr.mxu0 0.0
        %2571 = vmatpush1.msra.mxu0 0.0
        %2572 = vmatprep.subr.mxu0 0.0
        %2573 = vmatpush1.msra.mxu0 0.0
        %2574 = vmatprep.subr.mxu0 0.0
        %2575 = vmatpush1.msra.mxu0 0.0
        %2576 = vmatprep.subr.mxu0 0.0
        %2577 = vmatpush1.msra.mxu0 0.0
        %2578 = vmatprep.subr.mxu0 0.0
        %2579 = vmatpush1.msra.mxu0 0.0
        %2580 = vmatprep.subr.mxu0 0.0
        %2581 = vmatpush1.msra.mxu0 0.0
        %2582 = vmatprep.subr.mxu0 0.0
        %2583 = vmatpush1.msra.mxu0 0.0
        %2584 = vmatprep.subr.mxu0 0.0
        %2585 = vmatpush1.msra.mxu0 0.0
        %2586 = vmatprep.subr.mxu0 0.0
        %2587 = vmatpush1.msra.mxu0 0.0
        %2588 = vmatprep.subr.mxu0 0.0
        %2589 = vmatpush1.msra.mxu0 0.0
        %2590 = vmatprep.subr.mxu0 0.0
        %2591 = vmatpush1.msra.mxu0 0.0
        %2592 = vmatprep.subr.mxu0 0.0
        %2593 = vmatpush1.msra.mxu0 0.0
        %2594 = vmatprep.subr.mxu0 0.0
        %2595 = vmatpush1.msra.mxu0 0.0
        %2596 = vmatprep.subr.mxu0 0.0
        %2597 = vmatpush1.msra.mxu0 0.0
        %2598 = vmatprep.subr.mxu0 0.0
        %2599 = vmatpush1.msra.mxu0 0.0
        %2600 = vmatprep.subr.mxu0 0.0
        %2601 = vmatpush1.msra.mxu0 0.0
        %2602 = vmatprep.subr.mxu0 0.0
        %2603 = vmatpush1.msra.mxu0 0.0
        %2604 = vmatprep.subr.mxu0 0.0
        %2605 = vmatpush1.msra.mxu0 0.0
        %2606 = vmatprep.subr.mxu0 0.0
        %2607 = vmatpush1.msra.mxu0 0.0
        %2608 = vmatprep.subr.mxu0 0.0
        %2609 = vmatpush1.msra.mxu0 0.0
        %2610 = vmatprep.subr.mxu0 0.0
        %2611 = vmatpush1.msra.mxu0 0.0
        %2612 = vmatprep.subr.mxu0 0.0
        %2613 = vmatpush1.msra.mxu0 0.0
        %2614 = vmatprep.subr.mxu0 0.0
        %2615 = vmatpush1.msra.mxu0 0.0
        %2616 = vmatprep.subr.mxu0 0.0
        %2617 = vmatpush1.msra.mxu0 0.0
        %2618 = vmatprep.subr.mxu0 0.0
        %2619 = vmatpush1.msra.mxu0 0.0
        %2620 = vmatprep.mubr.f32.mxu0 0.0
        %2621 = vmatmul.mubr.f32.gmra.mrb[0].mxu0 %v2554
        %v2622 = vpop.f32.mrb[0].mxu0
        %v2623 = vadd.f32 0.0, %v2622
        %v2624 = vpop.f32.mrb[0].mxu0
        %2625 = vdwg.mxu0
        %v2626 = vmul.f32 %v2623, %v1385
        %v2627 = vadd.f32 %v2552, %v2626
        %v2628 = vmul.f32 %v1381, %v1386
        %v2629 = vmul.f32 %v1382, %v1387
        %v2631 = vsel %vm1423, %v1381, 0
        %v2634 = vsel %vm1423, %v1382, 0
        %2636 = vmatprep.subr.mxu0 0.0
        %2637 = vmatpush1.msra.mxu0 %v1390
        %2638 = vmatprep.subr.mxu0 0.0
        %2639 = vmatpush1.msra.mxu0 %v1391
        %2640 = vmatprep.subr.mxu0 0.0
        %2641 = vmatpush1.msra.mxu0 %v1392
        %2642 = vmatprep.subr.mxu0 0.0
        %2643 = vmatpush1.msra.mxu0 %v1393
        %2644 = vmatprep.subr.mxu0 0.0
        %2645 = vmatpush1.msra.mxu0 0.0
        %2646 = vmatprep.subr.mxu0 0.0
        %2647 = vmatpush1.msra.mxu0 0.0
        %2648 = vmatprep.subr.mxu0 0.0
        %2649 = vmatpush1.msra.mxu0 0.0
        %2650 = vmatprep.subr.mxu0 0.0
        %2651 = vmatpush1.msra.mxu0 0.0
        %2652 = vmatprep.subr.mxu0 0.0
        %2653 = vmatpush1.msra.mxu0 0.0
        %2654 = vmatprep.subr.mxu0 0.0
        %2655 = vmatpush1.msra.mxu0 0.0
        %2656 = vmatprep.subr.mxu0 0.0
        %2657 = vmatpush1.msra.mxu0 0.0
        %2658 = vmatprep.subr.mxu0 0.0
        %2659 = vmatpush1.msra.mxu0 0.0
        %2660 = vmatprep.subr.mxu0 0.0
        %2661 = vmatpush1.msra.mxu0 0.0
        %2662 = vmatprep.subr.mxu0 0.0
        %2663 = vmatpush1.msra.mxu0 0.0
        %2664 = vmatprep.subr.mxu0 0.0
        %2665 = vmatpush1.msra.mxu0 0.0
        %2666 = vmatprep.subr.mxu0 0.0
        %2667 = vmatpush1.msra.mxu0 0.0
        %2668 = vmatprep.subr.mxu0 0.0
        %2669 = vmatpush1.msra.mxu0 0.0
        %2670 = vmatprep.subr.mxu0 0.0
        %2671 = vmatpush1.msra.mxu0 0.0
        %2672 = vmatprep.subr.mxu0 0.0
        %2673 = vmatpush1.msra.mxu0 0.0
        %2674 = vmatprep.subr.mxu0 0.0
        %2675 = vmatpush1.msra.mxu0 0.0
        %2676 = vmatprep.subr.mxu0 0.0
        %2677 = vmatpush1.msra.mxu0 0.0
        %2678 = vmatprep.subr.mxu0 0.0
        %2679 = vmatpush1.msra.mxu0 0.0
        %2680 = vmatprep.subr.mxu0 0.0
        %2681 = vmatpush1.msra.mxu0 0.0
        %2682 = vmatprep.subr.mxu0 0.0
        %2683 = vmatpush1.msra.mxu0 0.0
        %2684 = vmatprep.subr.mxu0 0.0
        %2685 = vmatpush1.msra.mxu0 0.0
        %2686 = vmatprep.subr.mxu0 0.0
        %2687 = vmatpush1.msra.mxu0 0.0
        %2688 = vmatprep.subr.mxu0 0.0
        %2689 = vmatpush1.msra.mxu0 0.0
        %2690 = vmatprep.subr.mxu0 0.0
        %2691 = vmatpush1.msra.mxu0 0.0
        %2692 = vmatprep.subr.mxu0 0.0
        %2693 = vmatpush1.msra.mxu0 0.0
        %2694 = vmatprep.subr.mxu0 0.0
        %2695 = vmatpush1.msra.mxu0 0.0
        %2696 = vmatprep.subr.mxu0 0.0
        %2697 = vmatpush1.msra.mxu0 0.0
        %2698 = vmatprep.subr.mxu0 0.0
        %2699 = vmatpush1.msra.mxu0 0.0
        %2700 = vmatprep.mubr.f32.mxu0 0.0
        %2701 = vmatmul.mubr.f32.gmra.mrb[0].mxu0 %v2631
        %v2702 = vpop.f32.mrb[0].mxu0
        %v2703 = vadd.f32 0.0, %v2702
        %v2704 = vpop.f32.mrb[0].mxu0
        %2705 = vmatprep.mubr.f32.mxu0 0.0
        %2706 = vmatmul.mubr.f32.gmra.mrb[0].mxu0 %v2634
        %v2707 = vpop.f32.mrb[0].mxu0
        %v2708 = vadd.f32 0.0, %v2707
        %v2709 = vpop.f32.mrb[0].mxu0
        %2710 = vdwg.mxu0
        %v2711 = vmul.f32 %v2703, %v1388
        %v2712 = vmul.f32 %v2708, %v1389
        %v2713 = vadd.f32 %v2628, %v2711
        %v2714 = vadd.f32 %v2629, %v2712
        %v2716 = vlaneseq
        %v2717 = vshrl.u32 %v2716, 7
        %v2718 = vsub.s32 0, %v2717
        %v2719 = vrot.slane %v1401, %v2718
        %v2722 = vsel %vm1423, %v2627, 0
        %2724 = vmatprep.subr.mxu0 0.0
        %2725 = vmatpush1.msra.mxu0 %v1397
        %2726 = vmatprep.subr.mxu0 0.0
        %2727 = vmatpush1.msra.mxu0 %v1398
        %2728 = vmatprep.subr.mxu0 0.0
        %2729 = vmatpush1.msra.mxu0 %v1399
        %2730 = vmatprep.subr.mxu0 0.0
        %2731 = vmatpush1.msra.mxu0 %v1400
        %2732 = vmatprep.subr.mxu0 0.0
        %2733 = vmatpush1.msra.mxu0 0.0
        %2734 = vmatprep.subr.mxu0 0.0
        %2735 = vmatpush1.msra.mxu0 0.0
        %2736 = vmatprep.subr.mxu0 0.0
        %2737 = vmatpush1.msra.mxu0 0.0
        %2738 = vmatprep.subr.mxu0 0.0
        %2739 = vmatpush1.msra.mxu0 0.0
        %2740 = vmatprep.subr.mxu0 0.0
        %2741 = vmatpush1.msra.mxu0 0.0
        %2742 = vmatprep.subr.mxu0 0.0
        %2743 = vmatpush1.msra.mxu0 0.0
        %2744 = vmatprep.subr.mxu0 0.0
        %2745 = vmatpush1.msra.mxu0 0.0
        %2746 = vmatprep.subr.mxu0 0.0
        %2747 = vmatpush1.msra.mxu0 0.0
        %2748 = vmatprep.subr.mxu0 0.0
        %2749 = vmatpush1.msra.mxu0 0.0
        %2750 = vmatprep.subr.mxu0 0.0
        %2751 = vmatpush1.msra.mxu0 0.0
        %2752 = vmatprep.subr.mxu0 0.0
        %2753 = vmatpush1.msra.mxu0 0.0
        %2754 = vmatprep.subr.mxu0 0.0
        %2755 = vmatpush1.msra.mxu0 0.0
        %2756 = vmatprep.subr.mxu0 0.0
        %2757 = vmatpush1.msra.mxu0 0.0
        %2758 = vmatprep.subr.mxu0 0.0
        %2759 = vmatpush1.msra.mxu0 0.0
        %2760 = vmatprep.subr.mxu0 0.0
        %2761 = vmatpush1.msra.mxu0 0.0
        %2762 = vmatprep.subr.mxu0 0.0
        %2763 = vmatpush1.msra.mxu0 0.0
        %2764 = vmatprep.subr.mxu0 0.0
        %2765 = vmatpush1.msra.mxu0 0.0
        %2766 = vmatprep.subr.mxu0 0.0
        %2767 = vmatpush1.msra.mxu0 0.0
        %2768 = vmatprep.subr.mxu0 0.0
        %2769 = vmatpush1.msra.mxu0 0.0
        %2770 = vmatprep.subr.mxu0 0.0
        %2771 = vmatpush1.msra.mxu0 0.0
        %2772 = vmatprep.subr.mxu0 0.0
        %2773 = vmatpush1.msra.mxu0 0.0
        %2774 = vmatprep.subr.mxu0 0.0
        %2775 = vmatpush1.msra.mxu0 0.0
        %2776 = vmatprep.subr.mxu0 0.0
        %2777 = vmatpush1.msra.mxu0 0.0
        %2778 = vmatprep.subr.mxu0 0.0
        %2779 = vmatpush1.msra.mxu0 0.0
        %2780 = vmatprep.subr.mxu0 0.0
        %2781 = vmatpush1.msra.mxu0 0.0
        %2782 = vmatprep.subr.mxu0 0.0
        %2783 = vmatpush1.msra.mxu0 0.0
        %2784 = vmatprep.subr.mxu0 0.0
        %2785 = vmatpush1.msra.mxu0 0.0
        %2786 = vmatprep.subr.mxu0 0.0
        %2787 = vmatpush1.msra.mxu0 0.0
        %2788 = vmatprep.mubr.f32.mxu0 0.0
        %2789 = vmatmul.mubr.f32.gmra.mrb[0].mxu0 %v2722
        %v2790 = vpop.f32.mrb[0].mxu0
        %v2791 = vadd.f32 %v2719, %v2790
        %v2792 = vpop.f32.mrb[0].mxu0
        %2793 = vdwg.mxu0
        %2798 = vrot.lane.b32.xlu0 %v1397, 96
        %v2799 = vpop.permute.xlu0 %2798
        %2800 = vrot.lane.b32.xlu0 %v1398, 96
        %v2801 = vpop.permute.xlu0 %2800
        %2802 = vrot.lane.b32.xlu0 %v1399, 96
        %v2803 = vpop.permute.xlu0 %2802
        %2804 = vrot.lane.b32.xlu0 %v1400, 96
        %v2805 = vpop.permute.xlu0 %2804
        %2810 = vrot.lane.b32.xlu0 %v2719, 96
        %v2811 = vpop.permute.xlu0 %2810
        %v2814 = vsel %vm1423, %v2713, 0
        %v2817 = vsel %vm1423, %v2714, 0
        %2819 = vmatprep.subr.mxu0 0.0
        %2820 = vmatpush1.msra.mxu0 %v2799
        %2821 = vmatprep.subr.mxu0 0.0
        %2822 = vmatpush1.msra.mxu0 %v2801
        %2823 = vmatprep.subr.mxu0 0.0
        %2824 = vmatpush1.msra.mxu0 %v2803
        %2825 = vmatprep.subr.mxu0 0.0
        %2826 = vmatpush1.msra.mxu0 %v2805
        %2827 = vmatprep.subr.mxu0 0.0
        %2828 = vmatpush1.msra.mxu0 0.0
        %2829 = vmatprep.subr.mxu0 0.0
        %2830 = vmatpush1.msra.mxu0 0.0
        %2831 = vmatprep.subr.mxu0 0.0
        %2832 = vmatpush1.msra.mxu0 0.0
        %2833 = vmatprep.subr.mxu0 0.0
        %2834 = vmatpush1.msra.mxu0 0.0
        %2835 = vmatprep.subr.mxu0 0.0
        %2836 = vmatpush1.msra.mxu0 0.0
        %2837 = vmatprep.subr.mxu0 0.0
        %2838 = vmatpush1.msra.mxu0 0.0
        %2839 = vmatprep.subr.mxu0 0.0
        %2840 = vmatpush1.msra.mxu0 0.0
        %2841 = vmatprep.subr.mxu0 0.0
        %2842 = vmatpush1.msra.mxu0 0.0
        %2843 = vmatprep.subr.mxu0 0.0
        %2844 = vmatpush1.msra.mxu0 0.0
        %2845 = vmatprep.subr.mxu0 0.0
        %2846 = vmatpush1.msra.mxu0 0.0
        %2847 = vmatprep.subr.mxu0 0.0
        %2848 = vmatpush1.msra.mxu0 0.0
        %2849 = vmatprep.subr.mxu0 0.0
        %2850 = vmatpush1.msra.mxu0 0.0
        %2851 = vmatprep.subr.mxu0 0.0
        %2852 = vmatpush1.msra.mxu0 0.0
        %2853 = vmatprep.subr.mxu0 0.0
        %2854 = vmatpush1.msra.mxu0 0.0
        %2855 = vmatprep.subr.mxu0 0.0
        %2856 = vmatpush1.msra.mxu0 0.0
        %2857 = vmatprep.subr.mxu0 0.0
        %2858 = vmatpush1.msra.mxu0 0.0
        %2859 = vmatprep.subr.mxu0 0.0
        %2860 = vmatpush1.msra.mxu0 0.0
        %2861 = vmatprep.subr.mxu0 0.0
        %2862 = vmatpush1.msra.mxu0 0.0
        %2863 = vmatprep.subr.mxu0 0.0
        %2864 = vmatpush1.msra.mxu0 0.0
        %2865 = vmatprep.subr.mxu0 0.0
        %2866 = vmatpush1.msra.mxu0 0.0
        %2867 = vmatprep.subr.mxu0 0.0
        %2868 = vmatpush1.msra.mxu0 0.0
        %2869 = vmatprep.subr.mxu0 0.0
        %2870 = vmatpush1.msra.mxu0 0.0
        %2871 = vmatprep.subr.mxu0 0.0
        %2872 = vmatpush1.msra.mxu0 0.0
        %2873 = vmatprep.subr.mxu0 0.0
        %2874 = vmatpush1.msra.mxu0 0.0
        %2875 = vmatprep.subr.mxu0 0.0
        %2876 = vmatpush1.msra.mxu0 0.0
        %2877 = vmatprep.subr.mxu0 0.0
        %2878 = vmatpush1.msra.mxu0 0.0
        %2879 = vmatprep.subr.mxu0 0.0
        %2880 = vmatpush1.msra.mxu0 0.0
        %2881 = vmatprep.subr.mxu0 0.0
        %2882 = vmatpush1.msra.mxu0 0.0
        %2883 = vmatprep.mubr.f32.mxu0 0.0
        %2884 = vmatmul.mubr.f32.gmra.mrb[0].mxu0 %v2814
        %v2885 = vpop.f32.mrb[0].mxu0
        %v2886 = vadd.f32 %v2811, %v2885
        %v2887 = vpop.f32.mrb[0].mxu0
        %2888 = vmatprep.mubr.f32.mxu0 0.0
        %2889 = vmatmul.mubr.f32.gmra.mrb[0].mxu0 %v2817
        %v2890 = vpop.f32.mrb[0].mxu0
        %v2891 = vadd.f32 %v2811, %v2890
        %v2892 = vpop.f32.mrb[0].mxu0
        %2893 = vdwg.mxu0
        %2894 = vrot.lane.b32.xlu0 %v1397, 64
        %v2895 = vpop.permute.xlu0 %2894
        %2896 = vrot.lane.b32.xlu0 %v1398, 64
        %v2897 = vpop.permute.xlu0 %2896
        %2898 = vrot.lane.b32.xlu0 %v1399, 64
        %v2899 = vpop.permute.xlu0 %2898
        %2900 = vrot.lane.b32.xlu0 %v1400, 64
        %v2901 = vpop.permute.xlu0 %2900
        %2906 = vrot.lane.b32.xlu0 %v2719, 64
        %v2907 = vpop.permute.xlu0 %2906
        %2909 = vmatprep.subr.mxu0 0.0
        %2910 = vmatpush1.msra.mxu0 %v2895
        %2911 = vmatprep.subr.mxu0 0.0
        %2912 = vmatpush1.msra.mxu0 %v2897
        %2913 = vmatprep.subr.mxu0 0.0
        %2914 = vmatpush1.msra.mxu0 %v2899
        %2915 = vmatprep.subr.mxu0 0.0
        %2916 = vmatpush1.msra.mxu0 %v2901
        %2917 = vmatprep.subr.mxu0 0.0
        %2918 = vmatpush1.msra.mxu0 0.0
        %2919 = vmatprep.subr.mxu0 0.0
        %2920 = vmatpush1.msra.mxu0 0.0
        %2921 = vmatprep.subr.mxu0 0.0
        %2922 = vmatpush1.msra.mxu0 0.0
        %2923 = vmatprep.subr.mxu0 0.0
        %2924 = vmatpush1.msra.mxu0 0.0
        %2925 = vmatprep.subr.mxu0 0.0
        %2926 = vmatpush1.msra.mxu0 0.0
        %2927 = vmatprep.subr.mxu0 0.0
        %2928 = vmatpush1.msra.mxu0 0.0
        %2929 = vmatprep.subr.mxu0 0.0
        %2930 = vmatpush1.msra.mxu0 0.0
        %2931 = vmatprep.subr.mxu0 0.0
        %2932 = vmatpush1.msra.mxu0 0.0
        %2933 = vmatprep.subr.mxu0 0.0
        %2934 = vmatpush1.msra.mxu0 0.0
        %2935 = vmatprep.subr.mxu0 0.0
        %2936 = vmatpush1.msra.mxu0 0.0
        %2937 = vmatprep.subr.mxu0 0.0
        %2938 = vmatpush1.msra.mxu0 0.0
        %2939 = vmatprep.subr.mxu0 0.0
        %2940 = vmatpush1.msra.mxu0 0.0
        %2941 = vmatprep.subr.mxu0 0.0
        %2942 = vmatpush1.msra.mxu0 0.0
        %2943 = vmatprep.subr.mxu0 0.0
        %2944 = vmatpush1.msra.mxu0 0.0
        %2945 = vmatprep.subr.mxu0 0.0
        %2946 = vmatpush1.msra.mxu0 0.0
        %2947 = vmatprep.subr.mxu0 0.0
        %2948 = vmatpush1.msra.mxu0 0.0
        %2949 = vmatprep.subr.mxu0 0.0
        %2950 = vmatpush1.msra.mxu0 0.0
        %2951 = vmatprep.subr.mxu0 0.0
        %2952 = vmatpush1.msra.mxu0 0.0
        %2953 = vmatprep.subr.mxu0 0.0
        %2954 = vmatpush1.msra.mxu0 0.0
        %2955 = vmatprep.subr.mxu0 0.0
        %2956 = vmatpush1.msra.mxu0 0.0
        %2957 = vmatprep.subr.mxu0 0.0
        %2958 = vmatpush1.msra.mxu0 0.0
        %2959 = vmatprep.subr.mxu0 0.0
        %2960 = vmatpush1.msra.mxu0 0.0
        %2961 = vmatprep.subr.mxu0 0.0
        %2962 = vmatpush1.msra.mxu0 0.0
        %2963 = vmatprep.subr.mxu0 0.0
        %2964 = vmatpush1.msra.mxu0 0.0
        %2965 = vmatprep.subr.mxu0 0.0
        %2966 = vmatpush1.msra.mxu0 0.0
        %2967 = vmatprep.subr.mxu0 0.0
        %2968 = vmatpush1.msra.mxu0 0.0
        %2969 = vmatprep.subr.mxu0 0.0
        %2970 = vmatpush1.msra.mxu0 0.0
        %2971 = vmatprep.subr.mxu0 0.0
        %2972 = vmatpush1.msra.mxu0 0.0
        %2973 = vmatprep.mubr.f32.mxu0 0.0
        %2974 = vmatmul.mubr.f32.gmra.mrb[0].mxu0 %v2631
        %v2975 = vpop.f32.mrb[0].mxu0
        %v2976 = vadd.f32 %v2907, %v2975
        %v2977 = vpop.f32.mrb[0].mxu0
        %2978 = vmatprep.mubr.f32.mxu0 0.0
        %2979 = vmatmul.mubr.f32.gmra.mrb[0].mxu0 %v2634
        %v2980 = vpop.f32.mrb[0].mxu0
        %v2981 = vadd.f32 %v2907, %v2980
        %v2982 = vpop.f32.mrb[0].mxu0
        %2983 = vdwg.mxu0
        %v2985 = vsel %vm1765, %v2791, 0
        %v2988 = vsel %vm1765, %v2886, 0
        %v2991 = vsel %vm1765, %v2891, 0
        %2993 = vmatprep.subr.mxu0 0.0
        %2994 = vmatpush1.xpose.msra.mxu0 %v2988
        %2995 = vmatprep.subr.mxu0 0.0
        %2996 = vmatpush1.xpose.msra.mxu0 %v2991
        %2997 = vmatprep.subr.mxu0 0.0
        %2998 = vmatpush1.xpose.msra.mxu0 0.0
        %2999 = vmatprep.subr.mxu0 0.0
        %3000 = vmatpush1.xpose.msra.mxu0 0.0
        %3001 = vmatprep.subr.mxu0 0.0
        %3002 = vmatpush1.xpose.msra.mxu0 0.0
        %3003 = vmatprep.subr.mxu0 0.0
        %3004 = vmatpush1.xpose.msra.mxu0 0.0
        %3005 = vmatprep.subr.mxu0 0.0
        %3006 = vmatpush1.xpose.msra.mxu0 0.0
        %3007 = vmatprep.subr.mxu0 0.0
        %3008 = vmatpush1.xpose.msra.mxu0 0.0
        %3009 = vmatprep.subr.mxu0 0.0
        %3010 = vmatpush1.xpose.msra.mxu0 0.0
        %3011 = vmatprep.subr.mxu0 0.0
        %3012 = vmatpush1.xpose.msra.mxu0 0.0
        %3013 = vmatprep.subr.mxu0 0.0
        %3014 = vmatpush1.xpose.msra.mxu0 0.0
        %3015 = vmatprep.subr.mxu0 0.0
        %3016 = vmatpush1.xpose.msra.mxu0 0.0
        %3017 = vmatprep.subr.mxu0 0.0
        %3018 = vmatpush1.xpose.msra.mxu0 0.0
        %3019 = vmatprep.subr.mxu0 0.0
        %3020 = vmatpush1.xpose.msra.mxu0 0.0
        %3021 = vmatprep.subr.mxu0 0.0
        %3022 = vmatpush1.xpose.msra.mxu0 0.0
        %3023 = vmatprep.subr.mxu0 0.0
        %3024 = vmatpush1.xpose.msra.mxu0 0.0
        %3025 = vmatprep.subr.mxu0 0.0
        %3026 = vmatpush1.xpose.msra.mxu0 0.0
        %3027 = vmatprep.subr.mxu0 0.0
        %3028 = vmatpush1.xpose.msra.mxu0 0.0
        %3029 = vmatprep.subr.mxu0 0.0
        %3030 = vmatpush1.xpose.msra.mxu0 0.0
        %3031 = vmatprep.subr.mxu0 0.0
        %3032 = vmatpush1.xpose.msra.mxu0 0.0
        %3033 = vmatprep.subr.mxu0 0.0
        %3034 = vmatpush1.xpose.msra.mxu0 0.0
        %3035 = vmatprep.subr.mxu0 0.0
        %3036 = vmatpush1.xpose.msra.mxu0 0.0
        %3037 = vmatprep.subr.mxu0 0.0
        %3038 = vmatpush1.xpose.msra.mxu0 0.0
        %3039 = vmatprep.subr.mxu0 0.0
        %3040 = vmatpush1.xpose.msra.mxu0 0.0
        %3041 = vmatprep.subr.mxu0 0.0
        %3042 = vmatpush1.xpose.msra.mxu0 0.0
        %3043 = vmatprep.subr.mxu0 0.0
        %3044 = vmatpush1.xpose.msra.mxu0 0.0
        %3045 = vmatprep.subr.mxu0 0.0
        %3046 = vmatpush1.xpose.msra.mxu0 0.0
        %3047 = vmatprep.subr.mxu0 0.0
        %3048 = vmatpush1.xpose.msra.mxu0 0.0
        %3049 = vmatprep.subr.mxu0 0.0
        %3050 = vmatpush1.xpose.msra.mxu0 0.0
        %3051 = vmatprep.subr.mxu0 0.0
        %3052 = vmatpush1.xpose.msra.mxu0 0.0
        %3053 = vmatprep.subr.mxu0 0.0
        %3054 = vmatpush1.xpose.msra.mxu0 0.0
        %3055 = vmatprep.subr.mxu0 0.0
        %3056 = vmatpush1.xpose.msra.mxu0 0.0
        %3057 = vmatprep.mubr.f32.mxu0 0.0
        %3058 = vmatmul.mubr.f32.gmra.mrb[0].mxu0 %v2985
        %v3059 = vpop.f32.mrb[0].mxu0
        %v3060 = vadd.f32 %v1383, %v3059
        %v3061 = vpop.f32.mrb[0].mxu0
        %3062 = vdwg.mxu0
        %vm3063 = vcmask 80896
        %v3064 = vsel %vm3063, %v3060, -inf
        %3065 = vmax.xlane.f32.xlu0 %v3064
        %v3066 = vpop.xlane.xlu0 %3065
        %v3067 = vsub.f32 %v3060, %v3066
        %v3068 = vmul.f32 %v3067, 1.442695
        %v3069 = vpow.pop %v3068
        %v3070 = vsel %vm3063, %v3069, 0.0
        %3071 = vadd.xlane.f32.xlu0 %v3070
        %v3072 = vpop.xlane.xlu0 %3071
        %v3073 = vrcp.pop %v3072
        %v3074 = vmul.f32 %v3069, %v3073
        %v3076 = vsel %vm3063, %v3074, 0
        %vm3078 = vcmask 1041408
        %v3080 = vsel %vm3078, %v2981, 0
        %3082 = vmatprep.subr.mxu0 0.0
        %3083 = vmatpush1.msra.mxu0 %v2976
        %3084 = vmatprep.subr.mxu0 0.0
        %3085 = vmatpush1.msra.mxu0 %v3080
        %3086 = vmatprep.subr.mxu0 0.0
        %3087 = vmatpush1.msra.mxu0 0.0
        %3088 = vmatprep.subr.mxu0 0.0
        %3089 = vmatpush1.msra.mxu0 0.0
        %3090 = vmatprep.subr.mxu0 0.0
        %3091 = vmatpush1.msra.mxu0 0.0
        %3092 = vmatprep.subr.mxu0 0.0
        %3093 = vmatpush1.msra.mxu0 0.0
        %3094 = vmatprep.subr.mxu0 0.0
        %3095 = vmatpush1.msra.mxu0 0.0
        %3096 = vmatprep.subr.mxu0 0.0
        %3097 = vmatpush1.msra.mxu0 0.0
        %3098 = vmatprep.subr.mxu0 0.0
        %3099 = vmatpush1.msra.mxu0 0.0
        %3100 = vmatprep.subr.mxu0 0.0
        %3101 = vmatpush1.msra.mxu0 0.0
        %3102 = vmatprep.subr.mxu0 0.0
        %3103 = vmatpush1.msra.mxu0 0.0
        %3104 = vmatprep.subr.mxu0 0.0
        %3105 = vmatpush1.msra.mxu0 0.0
        %3106 = vmatprep.subr.mxu0 0.0
        %3107 = vmatpush1.msra.mxu0 0.0
        %3108 = vmatprep.subr.mxu0 0.0
        %3109 = vmatpush1.msra.mxu0 0.0
        %3110 = vmatprep.subr.mxu0 0.0
        %3111 = vmatpush1.msra.mxu0 0.0
        %3112 = vmatprep.subr.mxu0 0.0
        %3113 = vmatpush1.msra.mxu0 0.0
        %3114 = vmatprep.subr.mxu0 0.0
        %3115 = vmatpush1.msra.mxu0 0.0
        %3116 = vmatprep.subr.mxu0 0.0
        %3117 = vmatpush1.msra.mxu0 0.0
        %3118 = vmatprep.subr.mxu0 0.0
        %3119 = vmatpush1.msra.mxu0 0.0
        %3120 = vmatprep.subr.mxu0 0.0
        %3121 = vmatpush1.msra.mxu0 0.0
        %3122 = vmatprep.subr.mxu0 0.0
        %3123 = vmatpush1.msra.mxu0 0.0
        %3124 = vmatprep.subr.mxu0 0.0
        %3125 = vmatpush1.msra.mxu0 0.0
        %3126 = vmatprep.subr.mxu0 0.0
        %3127 = vmatpush1.msra.mxu0 0.0
        %3128 = vmatprep.subr.mxu0 0.0
        %3129 = vmatpush1.msra.mxu0 0.0
        %3130 = vmatprep.subr.mxu0 0.0
        %3131 = vmatpush1.msra.mxu0 0.0
        %3132 = vmatprep.subr.mxu0 0.0
        %3133 = vmatpush1.msra.mxu0 0.0
        %3134 = vmatprep.subr.mxu0 0.0
        %3135 = vmatpush1.msra.mxu0 0.0
        %3136 = vmatprep.subr.mxu0 0.0
        %3137 = vmatpush1.msra.mxu0 0.0
        %3138 = vmatprep.subr.mxu0 0.0
        %3139 = vmatpush1.msra.mxu0 0.0
        %3140 = vmatprep.subr.mxu0 0.0
        %3141 = vmatpush1.msra.mxu0 0.0
        %3142 = vmatprep.subr.mxu0 0.0
        %3143 = vmatpush1.msra.mxu0 0.0
        %3144 = vmatprep.subr.mxu0 0.0
        %3145 = vmatpush1.msra.mxu0 0.0
        %3146 = vmatprep.mubr.f32.mxu0 0.0
        %3147 = vmatmul.mubr.f32.gmra.mrb[0].mxu0 %v3076
        %v3148 = vpop.f32.mrb[0].mxu0
        %v3149 = vadd.f32 0.0, %v3148
        %v3150 = vpop.f32.mrb[0].mxu0
        %3151 = vdwg.mxu0
        %3152 = vrot.lane.b32.xlu0 %v2791, 120
        %v3153 = vpop.permute.xlu0 %3152
        %3154 = vrot.lane.b32.xlu0 %v2886, 120
        %v3155 = vpop.permute.xlu0 %3154
        %3156 = vrot.lane.b32.xlu0 %v2891, 120
        %v3157 = vpop.permute.xlu0 %3156
        %v3158 = vsel %vm1765, %v3153, 0
        %v3160 = vsel %vm1765, %v3155, 0
        %v3162 = vsel %vm1765, %v3157, 0
        %3164 = vmatprep.subr.mxu0 0.0
        %3165 = vmatpush1.xpose.msra.mxu0 %v3160
        %3166 = vmatprep.subr.mxu0 0.0
        %3167 = vmatpush1.xpose.msra.mxu0 %v3162
        %3168 = vmatprep.subr.mxu0 0.0
        %3169 = vmatpush1.xpose.msra.mxu0 0.0
        %3170 = vmatprep.subr.mxu0 0.0
        %3171 = vmatpush1.xpose.msra.mxu0 0.0
        %3172 = vmatprep.subr.mxu0 0.0
        %3173 = vmatpush1.xpose.msra.mxu0 0.0
        %3174 = vmatprep.subr.mxu0 0.0
        %3175 = vmatpush1.xpose.msra.mxu0 0.0
        %3176 = vmatprep.subr.mxu0 0.0
        %3177 = vmatpush1.xpose.msra.mxu0 0.0
        %3178 = vmatprep.subr.mxu0 0.0
        %3179 = vmatpush1.xpose.msra.mxu0 0.0
        %3180 = vmatprep.subr.mxu0 0.0
        %3181 = vmatpush1.xpose.msra.mxu0 0.0
        %3182 = vmatprep.subr.mxu0 0.0
        %3183 = vmatpush1.xpose.msra.mxu0 0.0
        %3184 = vmatprep.subr.mxu0 0.0
        %3185 = vmatpush1.xpose.msra.mxu0 0.0
        %3186 = vmatprep.subr.mxu0 0.0
        %3187 = vmatpush1.xpose.msra.mxu0 0.0
        %3188 = vmatprep.subr.mxu0 0.0
        %3189 = vmatpush1.xpose.msra.mxu0 0.0
        %3190 = vmatprep.subr.mxu0 0.0
        %3191 = vmatpush1.xpose.msra.mxu0 0.0
        %3192 = vmatprep.subr.mxu0 0.0
        %3193 = vmatpush1.xpose.msra.mxu0 0.0
        %3194 = vmatprep.subr.mxu0 0.0
        %3195 = vmatpush1.xpose.msra.mxu0 0.0
        %3196 = vmatprep.subr.mxu0 0.0
        %3197 = vmatpush1.xpose.msra.mxu0 0.0
        %3198 = vmatprep.subr.mxu0 0.0
        %3199 = vmatpush1.xpose.msra.mxu0 0.0
        %3200 = vmatprep.subr.mxu0 0.0
        %3201 = vmatpush1.xpose.msra.mxu0 0.0
        %3202 = vmatprep.subr.mxu0 0.0
        %3203 = vmatpush1.xpose.msra.mxu0 0.0
        %3204 = vmatprep.subr.mxu0 0.0
        %3205 = vmatpush1.xpose.msra.mxu0 0.0
        %3206 = vmatprep.subr.mxu0 0.0
        %3207 = vmatpush1.xpose.msra.mxu0 0.0
        %3208 = vmatprep.subr.mxu0 0.0
        %3209 = vmatpush1.xpose.msra.mxu0 0.0
        %3210 = vmatprep.subr.mxu0 0.0
        %3211 = vmatpush1.xpose.msra.mxu0 0.0
        %3212 = vmatprep.subr.mxu0 0.0
        %3213 = vmatpush1.xpose.msra.mxu0 0.0
        %3214 = vmatprep.subr.mxu0 0.0
        %3215 = vmatpush1.xpose.msra.mxu0 0.0
        %3216 = vmatprep.subr.mxu0 0.0
        %3217 = vmatpush1.xpose.msra.mxu0 0.0
        %3218 = vmatprep.subr.mxu0 0.0
        %3219 = vmatpush1.xpose.msra.mxu0 0.0
        %3220 = vmatprep.subr.mxu0 0.0
        %3221 = vmatpush1.xpose.msra.mxu0 0.0
        %3222 = vmatprep.subr.mxu0 0.0
        %3223 = vmatpush1.xpose.msra.mxu0 0.0
        %3224 = vmatprep.subr.mxu0 0.0
        %3225 = vmatpush1.xpose.msra.mxu0 0.0
        %3226 = vmatprep.subr.mxu0 0.0
        %3227 = vmatpush1.xpose.msra.mxu0 0.0
        %3228 = vmatprep.mubr.f32.mxu0 0.0
        %3229 = vmatmul.mubr.f32.gmra.mrb[0].mxu0 %v3158
        %v3230 = vpop.f32.mrb[0].mxu0
        %v3231 = vadd.f32 %v1383, %v3230
        %v3232 = vpop.f32.mrb[0].mxu0
        %3233 = vdwg.mxu0
        %v3234 = vsel %vm3063, %v3231, -inf
        %3235 = vmax.xlane.f32.xlu0 %v3234
        %v3236 = vpop.xlane.xlu0 %3235
        %v3237 = vsub.f32 %v3231, %v3236
        %v3238 = vmul.f32 %v3237, 1.442695
        %v3239 = vpow.pop %v3238
        %v3240 = vsel %vm3063, %v3239, 0.0
        %3241 = vadd.xlane.f32.xlu0 %v3240
        %v3242 = vpop.xlane.xlu0 %3241
        %v3243 = vrcp.pop %v3242
        %v3244 = vmul.f32 %v3239, %v3243
        %3246 = vrot.lane.b32.xlu0 %v2976, 120
        %v3247 = vpop.permute.xlu0 %3246
        %3248 = vrot.lane.b32.xlu0 %v2981, 120
        %v3249 = vpop.permute.xlu0 %3248
        %v3252 = vsel %vm3063, %v3244, 0
        %v3254 = vsel %vm3078, %v3249, 0
        %3256 = vmatprep.subr.mxu0 0.0
        %3257 = vmatpush1.msra.mxu0 %v3247
        %3258 = vmatprep.subr.mxu0 0.0
        %3259 = vmatpush1.msra.mxu0 %v3254
        %3260 = vmatprep.subr.mxu0 0.0
        %3261 = vmatpush1.msra.mxu0 0.0
        %3262 = vmatprep.subr.mxu0 0.0
        %3263 = vmatpush1.msra.mxu0 0.0
        %3264 = vmatprep.subr.mxu0 0.0
        %3265 = vmatpush1.msra.mxu0 0.0
        %3266 = vmatprep.subr.mxu0 0.0
        %3267 = vmatpush1.msra.mxu0 0.0
        %3268 = vmatprep.subr.mxu0 0.0
        %3269 = vmatpush1.msra.mxu0 0.0
        %3270 = vmatprep.subr.mxu0 0.0
        %3271 = vmatpush1.msra.mxu0 0.0
        %3272 = vmatprep.subr.mxu0 0.0
        %3273 = vmatpush1.msra.mxu0 0.0
        %3274 = vmatprep.subr.mxu0 0.0
        %3275 = vmatpush1.msra.mxu0 0.0
        %3276 = vmatprep.subr.mxu0 0.0
        %3277 = vmatpush1.msra.mxu0 0.0
        %3278 = vmatprep.subr.mxu0 0.0
        %3279 = vmatpush1.msra.mxu0 0.0
        %3280 = vmatprep.subr.mxu0 0.0
        %3281 = vmatpush1.msra.mxu0 0.0
        %3282 = vmatprep.subr.mxu0 0.0
        %3283 = vmatpush1.msra.mxu0 0.0
        %3284 = vmatprep.subr.mxu0 0.0
        %3285 = vmatpush1.msra.mxu0 0.0
        %3286 = vmatprep.subr.mxu0 0.0
        %3287 = vmatpush1.msra.mxu0 0.0
        %3288 = vmatprep.subr.mxu0 0.0
        %3289 = vmatpush1.msra.mxu0 0.0
        %3290 = vmatprep.subr.mxu0 0.0
        %3291 = vmatpush1.msra.mxu0 0.0
        %3292 = vmatprep.subr.mxu0 0.0
        %3293 = vmatpush1.msra.mxu0 0.0
        %3294 = vmatprep.subr.mxu0 0.0
        %3295 = vmatpush1.msra.mxu0 0.0
        %3296 = vmatprep.subr.mxu0 0.0
        %3297 = vmatpush1.msra.mxu0 0.0
        %3298 = vmatprep.subr.mxu0 0.0
        %3299 = vmatpush1.msra.mxu0 0.0
        %3300 = vmatprep.subr.mxu0 0.0
        %3301 = vmatpush1.msra.mxu0 0.0
        %3302 = vmatprep.subr.mxu0 0.0
        %3303 = vmatpush1.msra.mxu0 0.0
        %3304 = vmatprep.subr.mxu0 0.0
        %3305 = vmatpush1.msra.mxu0 0.0
        %3306 = vmatprep.subr.mxu0 0.0
        %3307 = vmatpush1.msra.mxu0 0.0
        %3308 = vmatprep.subr.mxu0 0.0
        %3309 = vmatpush1.msra.mxu0 0.0
        %3310 = vmatprep.subr.mxu0 0.0
        %3311 = vmatpush1.msra.mxu0 0.0
        %3312 = vmatprep.subr.mxu0 0.0
        %3313 = vmatpush1.msra.mxu0 0.0
        %3314 = vmatprep.subr.mxu0 0.0
        %3315 = vmatpush1.msra.mxu0 0.0
        %3316 = vmatprep.subr.mxu0 0.0
        %3317 = vmatpush1.msra.mxu0 0.0
        %3318 = vmatprep.subr.mxu0 0.0
        %3319 = vmatpush1.msra.mxu0 0.0
        %3320 = vmatprep.mubr.f32.mxu0 0.0
        %3321 = vmatmul.mubr.f32.gmra.mrb[0].mxu0 %v3252
        %v3322 = vpop.f32.mrb[0].mxu0
        %v3323 = vadd.f32 0.0, %v3322
        %v3324 = vpop.f32.mrb[0].mxu0
        %3325 = vdwg.mxu0
        %3326 = vrot.lane.b32.xlu0 %v2791, 112
        %v3327 = vpop.permute.xlu0 %3326
        %3328 = vrot.lane.b32.xlu0 %v2886, 112
        %v3329 = vpop.permute.xlu0 %3328
        %3330 = vrot.lane.b32.xlu0 %v2891, 112
        %v3331 = vpop.permute.xlu0 %3330
        %v3332 = vsel %vm1765, %v3327, 0
        %v3334 = vsel %vm1765, %v3329, 0
        %v3336 = vsel %vm1765, %v3331, 0
        %3338 = vmatprep.subr.mxu0 0.0
        %3339 = vmatpush1.xpose.msra.mxu0 %v3334
        %3340 = vmatprep.subr.mxu0 0.0
        %3341 = vmatpush1.xpose.msra.mxu0 %v3336
        %3342 = vmatprep.subr.mxu0 0.0
        %3343 = vmatpush1.xpose.msra.mxu0 0.0
        %3344 = vmatprep.subr.mxu0 0.0
        %3345 = vmatpush1.xpose.msra.mxu0 0.0
        %3346 = vmatprep.subr.mxu0 0.0
        %3347 = vmatpush1.xpose.msra.mxu0 0.0
        %3348 = vmatprep.subr.mxu0 0.0
        %3349 = vmatpush1.xpose.msra.mxu0 0.0
        %3350 = vmatprep.subr.mxu0 0.0
        %3351 = vmatpush1.xpose.msra.mxu0 0.0
        %3352 = vmatprep.subr.mxu0 0.0
        %3353 = vmatpush1.xpose.msra.mxu0 0.0
        %3354 = vmatprep.subr.mxu0 0.0
        %3355 = vmatpush1.xpose.msra.mxu0 0.0
        %3356 = vmatprep.subr.mxu0 0.0
        %3357 = vmatpush1.xpose.msra.mxu0 0.0
        %3358 = vmatprep.subr.mxu0 0.0
        %3359 = vmatpush1.xpose.msra.mxu0 0.0
        %3360 = vmatprep.subr.mxu0 0.0
        %3361 = vmatpush1.xpose.msra.mxu0 0.0
        %3362 = vmatprep.subr.mxu0 0.0
        %3363 = vmatpush1.xpose.msra.mxu0 0.0
        %3364 = vmatprep.subr.mxu0 0.0
        %3365 = vmatpush1.xpose.msra.mxu0 0.0
        %3366 = vmatprep.subr.mxu0 0.0
        %3367 = vmatpush1.xpose.msra.mxu0 0.0
        %3368 = vmatprep.subr.mxu0 0.0
        %3369 = vmatpush1.xpose.msra.mxu0 0.0
        %3370 = vmatprep.subr.mxu0 0.0
        %3371 = vmatpush1.xpose.msra.mxu0 0.0
        %3372 = vmatprep.subr.mxu0 0.0
        %3373 = vmatpush1.xpose.msra.mxu0 0.0
        %3374 = vmatprep.subr.mxu0 0.0
        %3375 = vmatpush1.xpose.msra.mxu0 0.0
        %3376 = vmatprep.subr.mxu0 0.0
        %3377 = vmatpush1.xpose.msra.mxu0 0.0
        %3378 = vmatprep.subr.mxu0 0.0
        %3379 = vmatpush1.xpose.msra.mxu0 0.0
        %3380 = vmatprep.subr.mxu0 0.0
        %3381 = vmatpush1.xpose.msra.mxu0 0.0
        %3382 = vmatprep.subr.mxu0 0.0
        %3383 = vmatpush1.xpose.msra.mxu0 0.0
        %3384 = vmatprep.subr.mxu0 0.0
        %3385 = vmatpush1.xpose.msra.mxu0 0.0
        %3386 = vmatprep.subr.mxu0 0.0
        %3387 = vmatpush1.xpose.msra.mxu0 0.0
        %3388 = vmatprep.subr.mxu0 0.0
        %3389 = vmatpush1.xpose.msra.mxu0 0.0
        %3390 = vmatprep.subr.mxu0 0.0
        %3391 = vmatpush1.xpose.msra.mxu0 0.0
        %3392 = vmatprep.subr.mxu0 0.0
        %3393 = vmatpush1.xpose.msra.mxu0 0.0
        %3394 = vmatprep.subr.mxu0 0.0
        %3395 = vmatpush1.xpose.msra.mxu0 0.0
        %3396 = vmatprep.subr.mxu0 0.0
        %3397 = vmatpush1.xpose.msra.mxu0 0.0
        %3398 = vmatprep.subr.mxu0 0.0
        %3399 = vmatpush1.xpose.msra.mxu0 0.0
        %3400 = vmatprep.subr.mxu0 0.0
        %3401 = vmatpush1.xpose.msra.mxu0 0.0
        %3402 = vmatprep.mubr.f32.mxu0 0.0
        %3403 = vmatmul.mubr.f32.gmra.mrb[0].mxu0 %v3332
        %v3404 = vpop.f32.mrb[0].mxu0
        %v3405 = vadd.f32 %v1383, %v3404
        %v3406 = vpop.f32.mrb[0].mxu0
        %3407 = vdwg.mxu0
        %v3408 = vsel %vm3063, %v3405, -inf
        %3409 = vmax.xlane.f32.xlu0 %v3408
        %v3410 = vpop.xlane.xlu0 %3409
        %v3411 = vsub.f32 %v3405, %v3410
        %v3412 = vmul.f32 %v3411, 1.442695
        %v3413 = vpow.pop %v3412
        %v3414 = vsel %vm3063, %v3413, 0.0
        %3415 = vadd.xlane.f32.xlu0 %v3414
        %v3416 = vpop.xlane.xlu0 %3415
        %v3417 = vrcp.pop %v3416
        %v3418 = vmul.f32 %v3413, %v3417
        %3419 = vrot.lane.b32.xlu0 %v2976, 112
        %v3420 = vpop.permute.xlu0 %3419
        %3421 = vrot.lane.b32.xlu0 %v2981, 112
        %v3422 = vpop.permute.xlu0 %3421
        %v3425 = vsel %vm3063, %v3418, 0
        %v3427 = vsel %vm3078, %v3422, 0
        %3429 = vmatprep.subr.mxu0 0.0
        %3430 = vmatpush1.msra.mxu0 %v3420
        %3431 = vmatprep.subr.mxu0 0.0
        %3432 = vmatpush1.msra.mxu0 %v3427
        %3433 = vmatprep.subr.mxu0 0.0
        %3434 = vmatpush1.msra.mxu0 0.0
        %3435 = vmatprep.subr.mxu0 0.0
        %3436 = vmatpush1.msra.mxu0 0.0
        %3437 = vmatprep.subr.mxu0 0.0
        %3438 = vmatpush1.msra.mxu0 0.0
        %3439 = vmatprep.subr.mxu0 0.0
        %3440 = vmatpush1.msra.mxu0 0.0
        %3441 = vmatprep.subr.mxu0 0.0
        %3442 = vmatpush1.msra.mxu0 0.0
        %3443 = vmatprep.subr.mxu0 0.0
        %3444 = vmatpush1.msra.mxu0 0.0
        %3445 = vmatprep.subr.mxu0 0.0
        %3446 = vmatpush1.msra.mxu0 0.0
        %3447 = vmatprep.subr.mxu0 0.0
        %3448 = vmatpush1.msra.mxu0 0.0
        %3449 = vmatprep.subr.mxu0 0.0
        %3450 = vmatpush1.msra.mxu0 0.0
        %3451 = vmatprep.subr.mxu0 0.0
        %3452 = vmatpush1.msra.mxu0 0.0
        %3453 = vmatprep.subr.mxu0 0.0
        %3454 = vmatpush1.msra.mxu0 0.0
        %3455 = vmatprep.subr.mxu0 0.0
        %3456 = vmatpush1.msra.mxu0 0.0
        %3457 = vmatprep.subr.mxu0 0.0
        %3458 = vmatpush1.msra.mxu0 0.0
        %3459 = vmatprep.subr.mxu0 0.0
        %3460 = vmatpush1.msra.mxu0 0.0
        %3461 = vmatprep.subr.mxu0 0.0
        %3462 = vmatpush1.msra.mxu0 0.0
        %3463 = vmatprep.subr.mxu0 0.0
        %3464 = vmatpush1.msra.mxu0 0.0
        %3465 = vmatprep.subr.mxu0 0.0
        %3466 = vmatpush1.msra.mxu0 0.0
        %3467 = vmatprep.subr.mxu0 0.0
        %3468 = vmatpush1.msra.mxu0 0.0
        %3469 = vmatprep.subr.mxu0 0.0
        %3470 = vmatpush1.msra.mxu0 0.0
        %3471 = vmatprep.subr.mxu0 0.0
        %3472 = vmatpush1.msra.mxu0 0.0
        %3473 = vmatprep.subr.mxu0 0.0
        %3474 = vmatpush1.msra.mxu0 0.0
        %3475 = vmatprep.subr.mxu0 0.0
        %3476 = vmatpush1.msra.mxu0 0.0
        %3477 = vmatprep.subr.mxu0 0.0
        %3478 = vmatpush1.msra.mxu0 0.0
        %3479 = vmatprep.subr.mxu0 0.0
        %3480 = vmatpush1.msra.mxu0 0.0
        %3481 = vmatprep.subr.mxu0 0.0
        %3482 = vmatpush1.msra.mxu0 0.0
        %3483 = vmatprep.subr.mxu0 0.0
        %3484 = vmatpush1.msra.mxu0 0.0
        %3485 = vmatprep.subr.mxu0 0.0
        %3486 = vmatpush1.msra.mxu0 0.0
        %3487 = vmatprep.subr.mxu0 0.0
        %3488 = vmatpush1.msra.mxu0 0.0
        %3489 = vmatprep.subr.mxu0 0.0
        %3490 = vmatpush1.msra.mxu0 0.0
        %3491 = vmatprep.subr.mxu0 0.0
        %3492 = vmatpush1.msra.mxu0 0.0
        %3493 = vmatprep.mubr.f32.mxu0 0.0
        %3494 = vmatmul.mubr.f32.gmra.mrb[0].mxu0 %v3425
        %v3495 = vpop.f32.mrb[0].mxu0
        %v3496 = vadd.f32 0.0, %v3495
        %v3497 = vpop.f32.mrb[0].mxu0
        %3498 = vdwg.mxu0
        %3499 = vrot.lane.b32.xlu0 %v2791, 104
        %v3500 = vpop.permute.xlu0 %3499
        %3501 = vrot.lane.b32.xlu0 %v2886, 104
        %v3502 = vpop.permute.xlu0 %3501
        %3503 = vrot.lane.b32.xlu0 %v2891, 104
        %v3504 = vpop.permute.xlu0 %3503
        %v3505 = vsel %vm1765, %v3500, 0
        %v3507 = vsel %vm1765, %v3502, 0
        %v3509 = vsel %vm1765, %v3504, 0
        %3511 = vmatprep.subr.mxu0 0.0
        %3512 = vmatpush1.xpose.msra.mxu0 %v3507
        %3513 = vmatprep.subr.mxu0 0.0
        %3514 = vmatpush1.xpose.msra.mxu0 %v3509
        %3515 = vmatprep.subr.mxu0 0.0
        %3516 = vmatpush1.xpose.msra.mxu0 0.0
        %3517 = vmatprep.subr.mxu0 0.0
        %3518 = vmatpush1.xpose.msra.mxu0 0.0
        %3519 = vmatprep.subr.mxu0 0.0
        %3520 = vmatpush1.xpose.msra.mxu0 0.0
        %3521 = vmatprep.subr.mxu0 0.0
        %3522 = vmatpush1.xpose.msra.mxu0 0.0
        %3523 = vmatprep.subr.mxu0 0.0
        %3524 = vmatpush1.xpose.msra.mxu0 0.0
        %3525 = vmatprep.subr.mxu0 0.0
        %3526 = vmatpush1.xpose.msra.mxu0 0.0
        %3527 = vmatprep.subr.mxu0 0.0
        %3528 = vmatpush1.xpose.msra.mxu0 0.0
        %3529 = vmatprep.subr.mxu0 0.0
        %3530 = vmatpush1.xpose.msra.mxu0 0.0
        %3531 = vmatprep.subr.mxu0 0.0
        %3532 = vmatpush1.xpose.msra.mxu0 0.0
        %3533 = vmatprep.subr.mxu0 0.0
        %3534 = vmatpush1.xpose.msra.mxu0 0.0
        %3535 = vmatprep.subr.mxu0 0.0
        %3536 = vmatpush1.xpose.msra.mxu0 0.0
        %3537 = vmatprep.subr.mxu0 0.0
        %3538 = vmatpush1.xpose.msra.mxu0 0.0
        %3539 = vmatprep.subr.mxu0 0.0
        %3540 = vmatpush1.xpose.msra.mxu0 0.0
        %3541 = vmatprep.subr.mxu0 0.0
        %3542 = vmatpush1.xpose.msra.mxu0 0.0
        %3543 = vmatprep.subr.mxu0 0.0
        %3544 = vmatpush1.xpose.msra.mxu0 0.0
        %3545 = vmatprep.subr.mxu0 0.0
        %3546 = vmatpush1.xpose.msra.mxu0 0.0
        %3547 = vmatprep.subr.mxu0 0.0
        %3548 = vmatpush1.xpose.msra.mxu0 0.0
        %3549 = vmatprep.subr.mxu0 0.0
        %3550 = vmatpush1.xpose.msra.mxu0 0.0
        %3551 = vmatprep.subr.mxu0 0.0
        %3552 = vmatpush1.xpose.msra.mxu0 0.0
        %3553 = vmatprep.subr.mxu0 0.0
        %3554 = vmatpush1.xpose.msra.mxu0 0.0
        %3555 = vmatprep.subr.mxu0 0.0
        %3556 = vmatpush1.xpose.msra.mxu0 0.0
        %3557 = vmatprep.subr.mxu0 0.0
        %3558 = vmatpush1.xpose.msra.mxu0 0.0
        %3559 = vmatprep.subr.mxu0 0.0
        %3560 = vmatpush1.xpose.msra.mxu0 0.0
        %3561 = vmatprep.subr.mxu0 0.0
        %3562 = vmatpush1.xpose.msra.mxu0 0.0
        %3563 = vmatprep.subr.mxu0 0.0
        %3564 = vmatpush1.xpose.msra.mxu0 0.0
        %3565 = vmatprep.subr.mxu0 0.0
        %3566 = vmatpush1.xpose.msra.mxu0 0.0
        %3567 = vmatprep.subr.mxu0 0.0
        %3568 = vmatpush1.xpose.msra.mxu0 0.0
        %3569 = vmatprep.subr.mxu0 0.0
        %3570 = vmatpush1.xpose.msra.mxu0 0.0
        %3571 = vmatprep.subr.mxu0 0.0
        %3572 = vmatpush1.xpose.msra.mxu0 0.0
        %3573 = vmatprep.subr.mxu0 0.0
        %3574 = vmatpush1.xpose.msra.mxu0 0.0
        %3575 = vmatprep.mubr.f32.mxu0 0.0
        %3576 = vmatmul.mubr.f32.gmra.mrb[0].mxu0 %v3505
        %v3577 = vpop.f32.mrb[0].mxu0
        %v3578 = vadd.f32 %v1383, %v3577
        %v3579 = vpop.f32.mrb[0].mxu0
        %3580 = vdwg.mxu0
        %v3581 = vsel %vm3063, %v3578, -inf
        %3582 = vmax.xlane.f32.xlu0 %v3581
        %v3583 = vpop.xlane.xlu0 %3582
        %v3584 = vsub.f32 %v3578, %v3583
        %v3585 = vmul.f32 %v3584, 1.442695
        %v3586 = vpow.pop %v3585
        %v3587 = vsel %vm3063, %v3586, 0.0
        %3588 = vadd.xlane.f32.xlu0 %v3587
        %v3589 = vpop.xlane.xlu0 %3588
        %v3590 = vrcp.pop %v3589
        %v3591 = vmul.f32 %v3586, %v3590
        %3592 = vrot.lane.b32.xlu0 %v2976, 104
        %v3593 = vpop.permute.xlu0 %3592
        %3594 = vrot.lane.b32.xlu0 %v2981, 104
        %v3595 = vpop.permute.xlu0 %3594
        %v3598 = vsel %vm3063, %v3591, 0
        %v3600 = vsel %vm3078, %v3595, 0
        %3602 = vmatprep.subr.mxu0 0.0
        %3603 = vmatpush1.msra.mxu0 %v3593
        %3604 = vmatprep.subr.mxu0 0.0
        %3605 = vmatpush1.msra.mxu0 %v3600
        %3606 = vmatprep.subr.mxu0 0.0
        %3607 = vmatpush1.msra.mxu0 0.0
        %3608 = vmatprep.subr.mxu0 0.0
        %3609 = vmatpush1.msra.mxu0 0.0
        %3610 = vmatprep.subr.mxu0 0.0
        %3611 = vmatpush1.msra.mxu0 0.0
        %3612 = vmatprep.subr.mxu0 0.0
        %3613 = vmatpush1.msra.mxu0 0.0
        %3614 = vmatprep.subr.mxu0 0.0
        %3615 = vmatpush1.msra.mxu0 0.0
        %3616 = vmatprep.subr.mxu0 0.0
        %3617 = vmatpush1.msra.mxu0 0.0
        %3618 = vmatprep.subr.mxu0 0.0
        %3619 = vmatpush1.msra.mxu0 0.0
        %3620 = vmatprep.subr.mxu0 0.0
        %3621 = vmatpush1.msra.mxu0 0.0
        %3622 = vmatprep.subr.mxu0 0.0
        %3623 = vmatpush1.msra.mxu0 0.0
        %3624 = vmatprep.subr.mxu0 0.0
        %3625 = vmatpush1.msra.mxu0 0.0
        %3626 = vmatprep.subr.mxu0 0.0
        %3627 = vmatpush1.msra.mxu0 0.0
        %3628 = vmatprep.subr.mxu0 0.0
        %3629 = vmatpush1.msra.mxu0 0.0
        %3630 = vmatprep.subr.mxu0 0.0
        %3631 = vmatpush1.msra.mxu0 0.0
        %3632 = vmatprep.subr.mxu0 0.0
        %3633 = vmatpush1.msra.mxu0 0.0
        %3634 = vmatprep.subr.mxu0 0.0
        %3635 = vmatpush1.msra.mxu0 0.0
        %3636 = vmatprep.subr.mxu0 0.0
        %3637 = vmatpush1.msra.mxu0 0.0
        %3638 = vmatprep.subr.mxu0 0.0
        %3639 = vmatpush1.msra.mxu0 0.0
        %3640 = vmatprep.subr.mxu0 0.0
        %3641 = vmatpush1.msra.mxu0 0.0
        %3642 = vmatprep.subr.mxu0 0.0
        %3643 = vmatpush1.msra.mxu0 0.0
        %3644 = vmatprep.subr.mxu0 0.0
        %3645 = vmatpush1.msra.mxu0 0.0
        %3646 = vmatprep.subr.mxu0 0.0
        %3647 = vmatpush1.msra.mxu0 0.0
        %3648 = vmatprep.subr.mxu0 0.0
        %3649 = vmatpush1.msra.mxu0 0.0
        %3650 = vmatprep.subr.mxu0 0.0
        %3651 = vmatpush1.msra.mxu0 0.0
        %3652 = vmatprep.subr.mxu0 0.0
        %3653 = vmatpush1.msra.mxu0 0.0
        %3654 = vmatprep.subr.mxu0 0.0
        %3655 = vmatpush1.msra.mxu0 0.0
        %3656 = vmatprep.subr.mxu0 0.0
        %3657 = vmatpush1.msra.mxu0 0.0
        %3658 = vmatprep.subr.mxu0 0.0
        %3659 = vmatpush1.msra.mxu0 0.0
        %3660 = vmatprep.subr.mxu0 0.0
        %3661 = vmatpush1.msra.mxu0 0.0
        %3662 = vmatprep.subr.mxu0 0.0
        %3663 = vmatpush1.msra.mxu0 0.0
        %3664 = vmatprep.subr.mxu0 0.0
        %3665 = vmatpush1.msra.mxu0 0.0
        %3666 = vmatprep.mubr.f32.mxu0 0.0
        %3667 = vmatmul.mubr.f32.gmra.mrb[0].mxu0 %v3598
        %v3668 = vpop.f32.mrb[0].mxu0
        %v3669 = vadd.f32 0.0, %v3668
        %v3670 = vpop.f32.mrb[0].mxu0
        %3671 = vdwg.mxu0
        %3673 = vrot.lane.b32.xlu0 %v3323, 8
        %v3674 = vpop.permute.xlu0 %3673
        %3677 = vrot.lane.b32.xlu0 %v3496, 16
        %v3678 = vpop.permute.xlu0 %3677
        %3681 = vrot.lane.b32.xlu0 %v3669, 24
        %v3682 = vpop.permute.xlu0 %3681
        %v3684 = vsel %vm1765, %v3149, %v3674
        %v3685 = vsel %vm2433, %v3684, %v3678
        %v3686 = vsel %vm2435, %v3685, %v3682
        %3687 = vrot.lane.b32.xlu0 %v1397, 32
        %v3688 = vpop.permute.xlu0 %3687
        %3689 = vrot.lane.b32.xlu0 %v1398, 32
        %v3690 = vpop.permute.xlu0 %3689
        %3691 = vrot.lane.b32.xlu0 %v1399, 32
        %v3692 = vpop.permute.xlu0 %3691
        %3693 = vrot.lane.b32.xlu0 %v1400, 32
        %v3694 = vpop.permute.xlu0 %3693
        %3699 = vrot.lane.b32.xlu0 %v2719, 32
        %v3700 = vpop.permute.xlu0 %3699
        %v3703 = vsel %vm1423, %v3686, 0
        %3705 = vmatprep.subr.mxu0 0.0
        %3706 = vmatpush1.msra.mxu0 %v3688
        %3707 = vmatprep.subr.mxu0 0.0
        %3708 = vmatpush1.msra.mxu0 %v3690
        %3709 = vmatprep.subr.mxu0 0.0
        %3710 = vmatpush1.msra.mxu0 %v3692
        %3711 = vmatprep.subr.mxu0 0.0
        %3712 = vmatpush1.msra.mxu0 %v3694
        %3713 = vmatprep.subr.mxu0 0.0
        %3714 = vmatpush1.msra.mxu0 0.0
        %3715 = vmatprep.subr.mxu0 0.0
        %3716 = vmatpush1.msra.mxu0 0.0
        %3717 = vmatprep.subr.mxu0 0.0
        %3718 = vmatpush1.msra.mxu0 0.0
        %3719 = vmatprep.subr.mxu0 0.0
        %3720 = vmatpush1.msra.mxu0 0.0
        %3721 = vmatprep.subr.mxu0 0.0
        %3722 = vmatpush1.msra.mxu0 0.0
        %3723 = vmatprep.subr.mxu0 0.0
        %3724 = vmatpush1.msra.mxu0 0.0
        %3725 = vmatprep.subr.mxu0 0.0
        %3726 = vmatpush1.msra.mxu0 0.0
        %3727 = vmatprep.subr.mxu0 0.0
        %3728 = vmatpush1.msra.mxu0 0.0
        %3729 = vmatprep.subr.mxu0 0.0
        %3730 = vmatpush1.msra.mxu0 0.0
        %3731 = vmatprep.subr.mxu0 0.0
        %3732 = vmatpush1.msra.mxu0 0.0
        %3733 = vmatprep.subr.mxu0 0.0
        %3734 = vmatpush1.msra.mxu0 0.0
        %3735 = vmatprep.subr.mxu0 0.0
        %3736 = vmatpush1.msra.mxu0 0.0
        %3737 = vmatprep.subr.mxu0 0.0
        %3738 = vmatpush1.msra.mxu0 0.0
        %3739 = vmatprep.subr.mxu0 0.0
        %3740 = vmatpush1.msra.mxu0 0.0
        %3741 = vmatprep.subr.mxu0 0.0
        %3742 = vmatpush1.msra.mxu0 0.0
        %3743 = vmatprep.subr.mxu0 0.0
        %3744 = vmatpush1.msra.mxu0 0.0
        %3745 = vmatprep.subr.mxu0 0.0
        %3746 = vmatpush1.msra.mxu0 0.0
        %3747 = vmatprep.subr.mxu0 0.0
        %3748 = vmatpush1.msra.mxu0 0.0
        %3749 = vmatprep.subr.mxu0 0.0
        %3750 = vmatpush1.msra.mxu0 0.0
        %3751 = vmatprep.subr.mxu0 0.0
        %3752 = vmatpush1.msra.mxu0 0.0
        %3753 = vmatprep.subr.mxu0 0.0
        %3754 = vmatpush1.msra.mxu0 0.0
        %3755 = vmatprep.subr.mxu0 0.0
        %3756 = vmatpush1.msra.mxu0 0.0
        %3757 = vmatprep.subr.mxu0 0.0
        %3758 = vmatpush1.msra.mxu0 0.0
        %3759 = vmatprep.subr.mxu0 0.0
        %3760 = vmatpush1.msra.mxu0 0.0
        %3761 = vmatprep.subr.mxu0 0.0
        %3762 = vmatpush1.msra.mxu0 0.0
        %3763 = vmatprep.subr.mxu0 0.0
        %3764 = vmatpush1.msra.mxu0 0.0
        %3765 = vmatprep.subr.mxu0 0.0
        %3766 = vmatpush1.msra.mxu0 0.0
        %3767 = vmatprep.subr.mxu0 0.0
        %3768 = vmatpush1.msra.mxu0 0.0
        %3769 = vmatprep.mubr.f32.mxu0 0.0
        %3770 = vmatmul.mubr.f32.gmra.mrb[0].mxu0 %v3703
        %v3771 = vpop.f32.mrb[0].mxu0
        %v3772 = vadd.f32 %v3700, %v3771
        %v3773 = vpop.f32.mrb[0].mxu0
        %3774 = vdwg.mxu0
        %3776 = vrot.lane.b32.xlu0 %v3772, 64
        %v3777 = vpop.permute.xlu0 %3776
        %v3779 = vmul.f32 %v2517, %v3777
        %v3780 = vadd.f32 %v3779, %v2525
        %3782 = vrot.lane.b32.xlu0 %v3780, 64
        %v3783 = vpop.permute.xlu0 %3782
        %v3785 = vadd.f32 %v2528, %v3783
        %v3786 = vsel %vm1423, %v3785, 0.0
        %3787 = vadd.xlane.f32.xlu0 %v3786
        %v3788 = vpop.xlane.xlu0 %3787
        %v3789 = vmul.f32 %v3788, %v1501
        %v3790 = vsub.f32 %v3785, %v3789
        %v3791 = vmul.f32 %v3790, %v3790
        %v3792 = vsel %vm1423, %v3791, 0.0
        %3793 = vadd.xlane.f32.xlu0 %v3792
        %v3794 = vpop.xlane.xlu0 %3793
        %v3795 = vmul.f32 %v3794, %v1501
        %v3796 = vadd.f32 %v3795, 1e-05
        %v3797 = vrsqrt.pop %v3796
        %v3798 = vmul.f32 %v3790, %v3797
        %v3799 = vlaneseq
        %v3800 = vshrl.u32 %v3799, 7
        %v3801 = vsub.s32 2, %v3800
        %v3802 = vrot.slane %v1394, %v3801
        %v3803 = vmul.f32 %v3798, %v3802
        %v3804 = vlaneseq
        %v3805 = vshrl.u32 %v3804, 7
        %v3806 = vsub.s32 2, %v3805
        %v3807 = vrot.slane %v1395, %v3806
        %v3808 = vadd.f32 %v3803, %v3807
        %v3809 = vld [vmem:[%s1179] sm:$0xff]
        %v3810 = vld [vmem:[%s1179 + $0x8] sm:$0xff]
        %v3811 = vld [vmem:[%s1179 + $0x10] sm:$0xff]
        %v3812 = vld [vmem:[%s1179 + $0x18] sm:$0xff]
        %v3813 = vld [vmem:[%s1182] sm:$0x1]
        %v3815 = vlaneseq
        %v3816 = vshrl.u32 %v3815, 7
        %v3817 = vsub.s32 0, %v3816
        %v3818 = vrot.slane %v3813, %v3817
        %v3821 = vsel %vm1423, %v3808, 0
        %3823 = vmatprep.subr.mxu0 0.0
        %3824 = vmatpush1.msra.mxu0 %v3809
        %3825 = vmatprep.subr.mxu0 0.0
        %3826 = vmatpush1.msra.mxu0 %v3810
        %3827 = vmatprep.subr.mxu0 0.0
        %3828 = vmatpush1.msra.mxu0 %v3811
        %3829 = vmatprep.subr.mxu0 0.0
        %3830 = vmatpush1.msra.mxu0 %v3812
        %3831 = vmatprep.subr.mxu0 0.0
        %3832 = vmatpush1.msra.mxu0 0.0
        %3833 = vmatprep.subr.mxu0 0.0
        %3834 = vmatpush1.msra.mxu0 0.0
        %3835 = vmatprep.subr.mxu0 0.0
        %3836 = vmatpush1.msra.mxu0 0.0
        %3837 = vmatprep.subr.mxu0 0.0
        %3838 = vmatpush1.msra.mxu0 0.0
        %3839 = vmatprep.subr.mxu0 0.0
        %3840 = vmatpush1.msra.mxu0 0.0
        %3841 = vmatprep.subr.mxu0 0.0
        %3842 = vmatpush1.msra.mxu0 0.0
        %3843 = vmatprep.subr.mxu0 0.0
        %3844 = vmatpush1.msra.mxu0 0.0
        %3845 = vmatprep.subr.mxu0 0.0
        %3846 = vmatpush1.msra.mxu0 0.0
        %3847 = vmatprep.subr.mxu0 0.0
        %3848 = vmatpush1.msra.mxu0 0.0
        %3849 = vmatprep.subr.mxu0 0.0
        %3850 = vmatpush1.msra.mxu0 0.0
        %3851 = vmatprep.subr.mxu0 0.0
        %3852 = vmatpush1.msra.mxu0 0.0
        %3853 = vmatprep.subr.mxu0 0.0
        %3854 = vmatpush1.msra.mxu0 0.0
        %3855 = vmatprep.subr.mxu0 0.0
        %3856 = vmatpush1.msra.mxu0 0.0
        %3857 = vmatprep.subr.mxu0 0.0
        %3858 = vmatpush1.msra.mxu0 0.0
        %3859 = vmatprep.subr.mxu0 0.0
        %3860 = vmatpush1.msra.mxu0 0.0
        %3861 = vmatprep.subr.mxu0 0.0
        %3862 = vmatpush1.msra.mxu0 0.0
        %3863 = vmatprep.subr.mxu0 0.0
        %3864 = vmatpush1.msra.mxu0 0.0
        %3865 = vmatprep.subr.mxu0 0.0
        %3866 = vmatpush1.msra.mxu0 0.0
        %3867 = vmatprep.subr.mxu0 0.0
        %3868 = vmatpush1.msra.mxu0 0.0
        %3869 = vmatprep.subr.mxu0 0.0
        %3870 = vmatpush1.msra.mxu0 0.0
        %3871 = vmatprep.subr.mxu0 0.0
        %3872 = vmatpush1.msra.mxu0 0.0
        %3873 = vmatprep.subr.mxu0 0.0
        %3874 = vmatpush1.msra.mxu0 0.0
        %3875 = vmatprep.subr.mxu0 0.0
        %3876 = vmatpush1.msra.mxu0 0.0
        %3877 = vmatprep.subr.mxu0 0.0
        %3878 = vmatpush1.msra.mxu0 0.0
        %3879 = vmatprep.subr.mxu0 0.0
        %3880 = vmatpush1.msra.mxu0 0.0
        %3881 = vmatprep.subr.mxu0 0.0
        %3882 = vmatpush1.msra.mxu0 0.0
        %3883 = vmatprep.subr.mxu0 0.0
        %3884 = vmatpush1.msra.mxu0 0.0
        %3885 = vmatprep.subr.mxu0 0.0
        %3886 = vmatpush1.msra.mxu0 0.0
        %3887 = vmatprep.mubr.f32.mxu0 0.0
        %3888 = vmatmul.mubr.f32.gmra.mrb[0].mxu0 %v3821
        %v3889 = vpop.f32.mrb[0].mxu0
        %v3890 = vadd.f32 %v3818, %v3889
        %v3891 = vpop.f32.mrb[0].mxu0
        %3892 = vdwg.mxu0
        %v3893 = vmul.f32 %v3890, 0.5
        %v3894 = vmul.f32 %v3890, 0.044715
        %v3895 = vmul.f32 %v3894, %v3890
        %v3896 = vmul.f32 %v3895, %v3890
        %v3897 = vadd.f32 %v3890, %v3896
        %v3898 = vmul.f32 %v3897, 0.7978846
        %v3899 = vtanh.pop %v3898
        %v3900 = vadd.f32 %v3899, 1.0
        %v3901 = vmul.f32 %v3893, %v3900
        %v3902 = vld [vmem:[%s1187] sm:$0xff]
        %v3903 = vld [vmem:[%s1187 + $0x8] sm:$0xff]
        %v3904 = vld [vmem:[%s1187 + $0x10] sm:$0xff]
        %v3905 = vld [vmem:[%s1187 + $0x18] sm:$0xff]
        %v3906 = vld [vmem:[%s1187 + $0x20] sm:$0xff]
        %v3907 = vld [vmem:[%s1187 + $0x28] sm:$0xff]
        %v3908 = vld [vmem:[%s1187 + $0x30] sm:$0xff]
        %v3909 = vld [vmem:[%s1187 + $0x38] sm:$0xff]
        %v3910 = vld [vmem:[%s1187 + $0x40] sm:$0xff]
        %v3911 = vld [vmem:[%s1187 + $0x48] sm:$0xff]
        %v3912 = vld [vmem:[%s1187 + $0x50] sm:$0xff]
        %v3913 = vld [vmem:[%s1187 + $0x58] sm:$0xff]
        %v3914 = vld [vmem:[%s1187 + $0x60] sm:$0xff]
        %v3915 = vld [vmem:[%s1187 + $0x68] sm:$0xff]
        %v3916 = vld [vmem:[%s1187 + $0x70] sm:$0xff]
        %v3917 = vld [vmem:[%s1187 + $0x78] sm:$0xff]
        %v3918 = vld [vmem:[%s1190] sm:$0x1]
        %v3920 = vlaneseq
        %v3921 = vshrl.u32 %v3920, 7
        %v3922 = vsub.s32 0, %v3921
        %v3923 = vrot.slane %v3918, %v3922
        %3925 = vmatprep.subr.mxu0 0.0
        %3926 = vmatpush1.msra.mxu0 %v3902
        %3927 = vmatprep.subr.mxu0 0.0
        %3928 = vmatpush1.msra.mxu0 %v3903
        %3929 = vmatprep.subr.mxu0 0.0
        %3930 = vmatpush1.msra.mxu0 %v3904
        %3931 = vmatprep.subr.mxu0 0.0
        %3932 = vmatpush1.msra.mxu0 %v3905
        %3933 = vmatprep.subr.mxu0 0.0
        %3934 = vmatpush1.msra.mxu0 %v3906
        %3935 = vmatprep.subr.mxu0 0.0
        %3936 = vmatpush1.msra.mxu0 %v3907
        %3937 = vmatprep.subr.mxu0 0.0
        %3938 = vmatpush1.msra.mxu0 %v3908
        %3939 = vmatprep.subr.mxu0 0.0
        %3940 = vmatpush1.msra.mxu0 %v3909
        %3941 = vmatprep.subr.mxu0 0.0
        %3942 = vmatpush1.msra.mxu0 %v3910
        %3943 = vmatprep.subr.mxu0 0.0
        %3944 = vmatpush1.msra.mxu0 %v3911
        %3945 = vmatprep.subr.mxu0 0.0
        %3946 = vmatpush1.msra.mxu0 %v3912
        %3947 = vmatprep.subr.mxu0 0.0
        %3948 = vmatpush1.msra.mxu0 %v3913
        %3949 = vmatprep.subr.mxu0 0.0
        %3950 = vmatpush1.msra.mxu0 %v3914
        %3951 = vmatprep.subr.mxu0 0.0
        %3952 = vmatpush1.msra.mxu0 %v3915
        %3953 = vmatprep.subr.mxu0 0.0
        %3954 = vmatpush1.msra.mxu0 %v3916
        %3955 = vmatprep.subr.mxu0 0.0
        %3956 = vmatpush1.msra.mxu0 %v3917
        %3957 = vmatprep.subr.mxu0 0.0
        %3958 = vmatpush1.msra.mxu0 0.0
        %3959 = vmatprep.subr.mxu0 0.0
        %3960 = vmatpush1.msra.mxu0 0.0
        %3961 = vmatprep.subr.mxu0 0.0
        %3962 = vmatpush1.msra.mxu0 0.0
        %3963 = vmatprep.subr.mxu0 0.0
        %3964 = vmatpush1.msra.mxu0 0.0
        %3965 = vmatprep.subr.mxu0 0.0
        %3966 = vmatpush1.msra.mxu0 0.0
        %3967 = vmatprep.subr.mxu0 0.0
        %3968 = vmatpush1.msra.mxu0 0.0
        %3969 = vmatprep.subr.mxu0 0.0
        %3970 = vmatpush1.msra.mxu0 0.0
        %3971 = vmatprep.subr.mxu0 0.0
        %3972 = vmatpush1.msra.mxu0 0.0
        %3973 = vmatprep.subr.mxu0 0.0
        %3974 = vmatpush1.msra.mxu0 0.0
        %3975 = vmatprep.subr.mxu0 0.0
        %3976 = vmatpush1.msra.mxu0 0.0
        %3977 = vmatprep.subr.mxu0 0.0
        %3978 = vmatpush1.msra.mxu0 0.0
        %3979 = vmatprep.subr.mxu0 0.0
        %3980 = vmatpush1.msra.mxu0 0.0
        %3981 = vmatprep.subr.mxu0 0.0
        %3982 = vmatpush1.msra.mxu0 0.0
        %3983 = vmatprep.subr.mxu0 0.0
        %3984 = vmatpush1.msra.mxu0 0.0
        %3985 = vmatprep.subr.mxu0 0.0
        %3986 = vmatpush1.msra.mxu0 0.0
        %3987 = vmatprep.subr.mxu0 0.0
        %3988 = vmatpush1.msra.mxu0 0.0
        %3989 = vmatprep.mubr.f32.mxu0 0.0
        %3990 = vmatmul.mubr.f32.gmra.mrb[0].mxu0 %v3901
        %v3991 = vpop.f32.mrb[0].mxu0
        %v3992 = vadd.f32 %v3923, %v3991
        %v3993 = vpop.f32.mrb[0].mxu0
        %3994 = vdwg.mxu0
        %v3995 = vadd.f32 %v1496, 1.0
        %v3996 = vlaneseq
        %v3997 = vshrl.u32 %v3996, 7
        %v3998 = vsub.s32 0, %v3997
        %v3999 = vrot.slane %v3995, %v3998
        %v4000 = vmul.f32 %v3999, %v3992
        %v4001 = vlaneseq
        %v4002 = vshrl.u32 %v4001, 7
        %v4003 = vsub.s32 0, %v4002
        %v4004 = vrot.slane %v1496, %v4003
        %4006 = vrot.lane.b32.xlu0 %v4004, 96
        %v4007 = vpop.permute.xlu0 %4006
        %v4009 = vadd.f32 %v4000, %v4007
        %v4010 = vadd.f32 %v3785, %v4009
        %4011 = vst.msk [vmem:[#allocation2] sm:$0xff] %vm1423, %v4010
        %p4012 = scmp.eq.s32.totalorder %s78, 1
        // Predicated region
        $region141: #{_lambda_.3} parent=135 // pred_check
          %p4013 = pneg %p4012
        $region142: #{_lambda_.3} parent=135 // pred_check_branch
          %4015 = sbr.rel (%p4013) target = $region144
        $region143: #{_lambda_.3} parent=135 // pred_region
          %v4016 = vld [vmem:[%s55] sm:$0xff]
          %v4017 = vld [vmem:[%s55 + $0x8] sm:$0xff]
          %v4018 = vld [vmem:[%s55 + $0x10] sm:$0xff]
          %v4019 = vld [vmem:[%s55 + $0x18] sm:$0xff]
          %v4020 = vld [vmem:[%s57] sm:$0x1]
          %v4022 = vlaneseq
          %v4023 = vshrl.u32 %v4022, 7
          %v4024 = vsub.s32 0, %v4023
          %v4025 = vrot.slane %v4020, %v4024
          %v4028 = vsel %vm1423, %v4010, 0
          %4030 = vmatprep.subr.mxu0 0.0
          %4031 = vmatpush1.msra.mxu0 %v4016
          %4032 = vmatprep.subr.mxu0 0.0
          %4033 = vmatpush1.msra.mxu0 %v4017
          %4034 = vmatprep.subr.mxu0 0.0
          %4035 = vmatpush1.msra.mxu0 %v4018
          %4036 = vmatprep.subr.mxu0 0.0
          %4037 = vmatpush1.msra.mxu0 %v4019
          %4038 = vmatprep.subr.mxu0 0.0
          %4039 = vmatpush1.msra.mxu0 0.0
          %4040 = vmatprep.subr.mxu0 0.0
          %4041 = vmatpush1.msra.mxu0 0.0
          %4042 = vmatprep.subr.mxu0 0.0
          %4043 = vmatpush1.msra.mxu0 0.0
          %4044 = vmatprep.subr.mxu0 0.0
          %4045 = vmatpush1.msra.mxu0 0.0
          %4046 = vmatprep.subr.mxu0 0.0
          %4047 = vmatpush1.msra.mxu0 0.0
          %4048 = vmatprep.subr.mxu0 0.0
          %4049 = vmatpush1.msra.mxu0 0.0
          %4050 = vmatprep.subr.mxu0 0.0
          %4051 = vmatpush1.msra.mxu0 0.0
          %4052 = vmatprep.subr.mxu0 0.0
          %4053 = vmatpush1.msra.mxu0 0.0
          %4054 = vmatprep.subr.mxu0 0.0
          %4055 = vmatpush1.msra.mxu0 0.0
          %4056 = vmatprep.subr.mxu0 0.0
          %4057 = vmatpush1.msra.mxu0 0.0
          %4058 = vmatprep.subr.mxu0 0.0
          %4059 = vmatpush1.msra.mxu0 0.0
          %4060 = vmatprep.subr.mxu0 0.0
          %4061 = vmatpush1.msra.mxu0 0.0
          %4062 = vmatprep.subr.mxu0 0.0
          %4063 = vmatpush1.msra.mxu0 0.0
          %4064 = vmatprep.subr.mxu0 0.0
          %4065 = vmatpush1.msra.mxu0 0.0
          %4066 = vmatprep.subr.mxu0 0.0
          %4067 = vmatpush1.msra.mxu0 0.0
          %4068 = vmatprep.subr.mxu0 0.0
          %4069 = vmatpush1.msra.mxu0 0.0
          %4070 = vmatprep.subr.mxu0 0.0
          %4071 = vmatpush1.msra.mxu0 0.0
          %4072 = vmatprep.subr.mxu0 0.0
          %4073 = vmatpush1.msra.mxu0 0.0
          %4074 = vmatprep.subr.mxu0 0.0
          %4075 = vmatpush1.msra.mxu0 0.0
          %4076 = vmatprep.subr.mxu0 0.0
          %4077 = vmatpush1.msra.mxu0 0.0
          %4078 = vmatprep.subr.mxu0 0.0
          %4079 = vmatpush1.msra.mxu0 0.0
          %4080 = vmatprep.subr.mxu0 0.0
          %4081 = vmatpush1.msra.mxu0 0.0
          %4082 = vmatprep.subr.mxu0 0.0
          %4083 = vmatpush1.msra.mxu0 0.0
          %4084 = vmatprep.subr.mxu0 0.0
          %4085 = vmatpush1.msra.mxu0 0.0
          %4086 = vmatprep.subr.mxu0 0.0
          %4087 = vmatpush1.msra.mxu0 0.0
          %4088 = vmatprep.subr.mxu0 0.0
          %4089 = vmatpush1.msra.mxu0 0.0
          %4090 = vmatprep.subr.mxu0 0.0
          %4091 = vmatpush1.msra.mxu0 0.0
          %4092 = vmatprep.subr.mxu0 0.0
          %4093 = vmatpush1.msra.mxu0 0.0
          %4094 = vmatprep.mubr.f32.mxu0 0.0
          %4095 = vmatmul.mubr.f32.gmra.mrb[0].mxu0 %v4028
          %v4096 = vpop.f32.mrb[0].mxu0
          %v4097 = vadd.f32 %v4025, %v4096
          %v4098 = vpop.f32.mrb[0].mxu0
          %4099 = vdwg.mxu0
          %4100 = vst.msk [vmem:[%s1119] sm:$0xff] %vm2433, %v4097
        $region144: #{_lambda_.3} parent=135 // pred_fallthru
          _
        %s4101 = sand.u32 %s787, 1
        %s4102 = scalar_lea.sflag [#allocation5], %s4101
        %s4103 = sand.u32 %s787, 1
        %s4104 = smul.addr %s4103, 8
        %s4105 = scalar_lea.vmem [#allocation4], %s4104
        // Predicated region
        $region145: #{_lambda_.3} parent=135 // pred_check
          %p4106 = pneg %p797
        $region146: #{_lambda_.3} parent=135 // pred_check_branch
          %4108 = sbr.rel (%p4106) target = $region148
        $region147: #{_lambda_.3} parent=135 // pred_region
          %s4110 = ssub.s32 128, 128
          %4111 = vsyncadd %s4102, %s4110
          %s4112 = smul.addr %s77, 128
          %s4113 = scalar_lea.hbm %s59, %s4112
          %s4115 = sshll.u32 %s4105, 4
          %s4116 = int_to_ptr.vmem [resolvable:$true] %s4115
          %4118 = dma.vmem_to_hbm [thread:$0]  %s4116, 128, %s4113, %s4102
        $region148: #{_lambda_.3} parent=135 // pred_fallthru
          _
      $region136: #{_lambda_.3} parent=5 // pred_fallthru
        _
      %p4119 = scmp.le.s32.totalorder 2, %s68
      // Predicated region
      $region149: #{_lambda_.3} parent=5 // pred_check
        %p4120 = pneg %p4119
      $region150: #{_lambda_.3} parent=5 // pred_check_branch
        %4122 = sbr.rel (%p4120) target = $region152
      $region151: #{_lambda_.3} parent=5 // pred_region
        %s4123 = ssub.s32 %s68, 2
        // Predicated region
        $region153: #{_lambda_.3} parent=151 // pred_check
          %p4124 = pneg %p803
        $region154: #{_lambda_.3} parent=151 // pred_check_branch
          %4126 = sbr.rel (%p4124) target = $region156
        $region155: #{_lambda_.3} parent=151 // pred_region
          %s4127 = sand.u32 %s788, 1
          %s4128 = scalar_lea.sflag [#allocation5], %s4127
          %s4129 = sand.u32 %s788, 1
          %s4130 = smul.addr %s4129, 8
          %s4131 = scalar_lea.vmem [#allocation4], %s4130
          %4132 = dma.done %s4128, 128
        $region156: #{_lambda_.3} parent=151 // pred_fallthru
          _
      $region152: #{_lambda_.3} parent=5 // pred_fallthru
        _
    $region6: #{_lambda_.3} parent=1 // loop_footer
      %s72 = sadd.s32 1, %s68
    $region7: #{_lambda_.3} parent=1 // loop_footer_branch
      %67 = sbr.rel target = $region3
    $region8: #{_lambda_.3} parent=1 // loop_exit
      _
    %4133 = vsyncpa [#allocation5], 1
    %s4134 = scalar_lea.sflag [#allocation5], 1
    %4135 = vsyncpa %s4134, 1

</llo_original>
